<compile_context>
chip_gen: v7x
topology: tpu7x:2x2x1
jax: 0.10.0
libtpu: 0.0.40
codegen_flags: <defaults>
</compile_context>

<pallas_src>
import functools

import jax
import jax.numpy as jnp
import numpy as np
from jax.experimental import pallas as pl
from jax.experimental.pallas import tpu as pltpu

F32 = jnp.float32
_INV_SQRT2 = 0.7071067811865475
_NEG_BIG = -1e30


class _Slot:
    """Static locator (row offset / rows / cols) of one tensor in the packed buffer."""
    __slots__ = ("off", "r", "c")

    def __init__(self, off, r, c):
        self.off, self.r, self.c = int(off), int(r), int(c)


# --------------------------- in-kernel building blocks ---------------------------

def _erf(x):
    # Abramowitz & Stegun 7.1.26 polynomial, |abs err| <= 1.5e-7.
    p = 0.3275911
    a1, a2, a3, a4, a5 = 0.254829592, -0.284496736, 1.421413741, -1.453152027, 1.061405429
    sgn = jnp.where(x >= 0.0, 1.0, -1.0)
    z = jnp.abs(x)
    t = 1.0 / (1.0 + p * z)
    poly = ((((a5 * t + a4) * t + a3) * t + a2) * t + a1) * t
    return sgn * (1.0 - poly * jnp.exp(-z * z))


def _gelu(x):
    # exact-erf GELU (via the polynomial above), matching nn.GELU() default.
    return 0.5 * x * (1.0 + _erf(x * _INV_SQRT2))


# --------------------------------- fused kernel ---------------------------------

def _transformer_kernel(slots, spec, *refs):
    n_ch = spec["n_channels"]
    B = spec["batch"]
    heads = spec["heads"]
    dim_head = spec["dim_head"]
    inner = heads * dim_head
    in_chans = spec["in_chans"]
    fg_kernels = spec["fg_kernels"]
    depth = spec["depth"]

    x_refs = refs[:n_ch]
    pbuf = refs[n_ch]          # single packed parameter buffer (rows, 128)
    out_ref = refs[n_ch + 1]

    def ld(s):
        # Lazy weight load at point of use: static slice of the packed VMEM buffer.
        return pbuf[s.off:s.off + s.r, :s.c]

    def layernorm(x, p):
        mu = jnp.mean(x, axis=-1, keepdims=True)
        xc = x - mu
        var = jnp.mean(xc * xc, axis=-1, keepdims=True)
        return xc * jax.lax.rsqrt(var + 1e-5) * ld(p["ln_g"]) + ld(p["ln_b"])

    def feedforward(x, p):
        # nn.Sequential(LayerNorm, Linear, GELU, Dropout(0), Linear, Dropout(0)/Identity)
        h = layernorm(x, p)
        h = _gelu(jnp.dot(h, ld(p["w1"]), preferred_element_type=F32) + ld(p["b1"]))
        return jnp.dot(h, ld(p["w2"]), preferred_element_type=F32) + ld(p["b2"])

    def mha(q2, k2, v2, mask):
        """All batches in ONE matmul per head; cross-batch blocks masked with -1e30.
        q2: (B*nq, inner), k2/v2: (B*nk, inner), mask: (B*nq, B*nk)."""
        outs = []
        for h in range(heads):
            sl = slice(h * dim_head, (h + 1) * dim_head)
            s = jax.lax.dot_general(q2[:, sl], k2[:, sl],
                                    (((1,), (1,)), ((), ())),
                                    preferred_element_type=F32) + mask
            s = s - jnp.max(s, axis=-1, keepdims=True)
            e = jnp.exp(s)
            e = e * pl.reciprocal(jnp.sum(e, axis=-1, keepdims=True), approx=True)
            outs.append(jnp.dot(e, v2[:, sl], preferred_element_type=F32))
        return jnp.concatenate(outs, axis=-1)                           # (B*nq, inner)

    def maxpool2(x, se, so):
        # MaxPool1d(kernel=2, stride=2) over the lane axis via 0/1 selection matmuls.
        return jnp.maximum(jnp.dot(x, se, preferred_element_type=F32),
                           jnp.dot(x, so, preferred_element_type=F32))

    # channel state: (B*C_i, L_i), rows ordered (batch, channel)
    states = [x_refs[i][...] for i in range(n_ch)]
    dense_feature = []

    for d in range(depth):
        layer = slots["layers"][d]
        infos = []
        # -------- per-channel coarse/fine stage --------
        for i in range(n_ch):
            lp = layer[i]
            ks = fg_kernels[i]
            x2 = states[i]
            L = x2.shape[-1]
            pmats = slots["aux"]["pool"]["L%d" % L]
            se, so = ld(pmats["se"]), ld(pmats["so"])

            # coarse branch: MaxPool1d(2,2) + self-attention (scale folded into wqkv)
            x_cg = maxpool2(x2, se, so)                                  # (B*C, L//2)
            qkv = jnp.dot(x_cg, ld(lp["attn"]["wqkv"]), preferred_element_type=F32)
            att = mha(qkv[:, :inner], qkv[:, inner:2 * inner], qkv[:, 2 * inner:],
                      ld(slots["aux"]["mask_self"][i]))
            x_cg = jnp.dot(att, ld(lp["attn"]["wo"]), preferred_element_type=F32) \
                + ld(lp["attn"]["bo"]) + x_cg

            # fine branch: Conv1d + BN(eval, folded) + ELU + MaxPool1d + get_info,
            # conv as one (B*C, ks*B*C) x (ks*B*C, L) matmul on lane-shifted taps
            pad = (ks - 1) // 2
            if pad > 0:
                z = jnp.zeros((x2.shape[0], pad), F32)
                xp = jnp.concatenate([z, x2, z], axis=1)                 # zero halo
            else:
                xp = x2
            taps = jnp.concatenate([xp[:, t:t + L] for t in range(ks)], axis=0)
            y = jnp.dot(ld(lp["cnn"]["wmat"]), taps, preferred_element_type=F32) \
                + ld(lp["cnn"]["shift"])
            y = jnp.where(y > 0.0, y, jnp.exp(jnp.minimum(y, 0.0)) - 1.0)   # ELU(alpha=1)
            x_fg = maxpool2(y, se, so)                                   # (B*C, L//2)
            infos.append(jnp.log(jnp.mean(x_fg * x_fg, axis=-1, keepdims=True)))

            # feedforward + fine residual, then head_creator (bias-free Linear)
            xx = feedforward(x_cg, lp["ff"]) + x_fg
            states[i] = jnp.dot(xx, ld(lp["head_w"]), preferred_element_type=F32)
        dense_feature.append(infos)

        # -------- cross-channel stage --------
        new_states = []
        for i in range(n_ch):
            lp = layer[i]
            x2 = states[i]
            others = [j for j in range(n_ch) if j != i]
            if len(others) == 1:
                agg = states[others[0]]                     # already (batch, channel) order
            else:
                agg = jnp.concatenate(
                    [jnp.concatenate([states[j][b * in_chans[j]:(b + 1) * in_chans[j], :]
                                      for j in others], axis=0)
                     for b in range(B)], axis=0)
            sa = mha(x2 * (dim_head ** -0.5), agg, agg,
                     ld(slots["aux"]["mask_cross"][i]))
            sa = jnp.dot(sa, ld(lp["cross_sa"]["wo"]), preferred_element_type=F32) \
                + ld(lp["cross_sa"]["bo"])
            new_states.append(feedforward(x2 + sa, lp["cross_ff"]))      # (B*C, new dim)
        states = new_states

    # -------- tail: flatten (.view(B,-1)) + dense_feature concat + compression + head --------
    mods = []
    for i in range(n_ch):
        C = in_chans[i]
        xi = states[i]                                      # (B*C, Df)
        rows = []
        for b in range(B):
            pieces = [xi[b * C + c:b * C + c + 1, :] for c in range(C)]
            for d in range(depth):
                pieces += [dense_feature[d][i][b * C + c:b * C + c + 1, :]
                           for c in range(C)]
            rows.append(jnp.concatenate(pieces, axis=-1))
        comps = jnp.concatenate(rows, axis=0)               # (B, C*Df + C*depth)
        mods.append(feedforward(comps, slots["compress"][i]))
    out_ref[...] = feedforward(jnp.concatenate(mods, axis=-1), slots["out_ffwd"])


# ------------------------- host-side weight fusion + packing -------------------------

def prepare_and_pack(params, spec):
    """One-time host-side weight fusion and packing.

    * attention scale folded into the q columns of a fused (dim, 3*inner) QKV weight
    * Conv1d weight -> batch-block-diagonal (B*C, ks*B*C) matrix with eval-mode
      BatchNorm scale folded in; bias/mean/beta folded into a (B*C, 1) shift
    * MaxPool selection matrices and cross-batch softmax masks precomputed
    * every 2-D leaf padded to 128 lanes, rows 8-aligned, stacked into ONE buffer
      so the kernel issues a single parameter DMA instead of ~100.
    """
    B = spec["batch"]
    n_ch = spec["n_channels"]
    in_chans = spec["in_chans"]
    depth = spec["depth"]
    dims = spec["dims"]
    scale = spec["dim_head"] ** -0.5

    prepared = {"layers": [], "compress": params["compress"],
                "out_ffwd": params["out_ffwd"]}
    for layer in params["layers"]:
        new_layer = []
        for k, lp in enumerate(layer):
            C = in_chans[k]
            attn = lp["attn"]
            wqkv = jnp.concatenate([attn["wq"] * scale, attn["wk"], attn["wv"]], axis=1)
            cnn = lp["cnn"]
            ks = cnn["w"].shape[0]
            bn_scale = cnn["g"] / jnp.sqrt(cnn["var"] + 1e-5)            # (1, C) over c_out
            # batch-block-diagonal conv matrix: rows (b, c_out), cols (tap, b, c_in)
            M = jnp.zeros((B * C, ks * B * C), F32)
            for t in range(ks):
                blk = cnn["w"][t].T * bn_scale.T                         # (c_out, c_in)
                for b in range(B):
                    M = M.at[b * C:(b + 1) * C,
                             t * B * C + b * C:t * B * C + (b + 1) * C].set(blk)
            shift = jnp.tile(((cnn["b"] - cnn["mu"]) * bn_scale + cnn["beta"]).T,
                             (B, 1))                                      # (B*C, 1)
            new_layer.append({
                "attn": {"wqkv": wqkv, "wo": attn["wo"], "bo": attn["bo"]},
                "ff": lp["ff"],
                "cnn": {"wmat": M, "shift": shift},
                "head_w": lp["head_w"],
                "cross_sa": lp["cross_sa"],
                "cross_ff": lp["cross_ff"],
            })
        prepared["layers"].append(new_layer)

    # MaxPool1d(2,2) selection matrices, one pair per distinct sequence length.
    pool = {}
    lengths = list(dims)
    for _ in range(depth):
        for L in lengths:
            key = "L%d" % L
            if key not in pool:
                Lh = L // 2
                se = np.zeros((L, Lh), np.float32)
                so = np.zeros((L, Lh), np.float32)
                se[2 * np.arange(Lh), np.arange(Lh)] = 1.0
                so[2 * np.arange(Lh) + 1, np.arange(Lh)] = 1.0
                pool[key] = {"se": jnp.asarray(se), "so": jnp.asarray(so)}
        lengths = [l // 2 for l in lengths]

    def batch_mask(nq, nk):
        rq = np.repeat(np.arange(B), nq)
        rk = np.repeat(np.arange(B), nk)
        return jnp.asarray(
            np.where(rq[:, None] == rk[None, :], 0.0, _NEG_BIG).astype(np.float32))

    prepared["aux"] = {
        "pool": pool,
        "mask_self": [batch_mask(C, C) for C in in_chans],
        "mask_cross": [batch_mask(in_chans[i], sum(in_chans) - in_chans[i])
                       for i in range(n_ch)],
    }

    leaves, treedef = jax.tree_util.tree_flatten(prepared)
    chunks, slot_list, off = [], [], 0
    for leaf in leaves:
        leaf = jnp.asarray(leaf, F32)
        r, c = leaf.shape
        assert c <= 128, "packing supports trailing dims <= 128"  # TODO(synk): multi-tile packing for wide weights
        rpad = (-r) % 8                      # keep every weight sublane-aligned
        chunks.append(jnp.pad(leaf, ((0, rpad), (0, 128 - c))))
        slot_list.append(_Slot(off, r, c))
        off += r + rpad
    packed = jnp.concatenate(chunks, axis=0)                  # (total_rows, 128)
    slot_tree = jax.tree_util.tree_unflatten(treedef, slot_list)
    return packed, slot_tree


# --------------------------------- host wrapper ---------------------------------

def transformer_forward(channels_output, packed_params, slot_tree, spec):
    n_ch = spec["n_channels"]
    # (B, C, L) -> (B*C, L): metadata-only reshape, rows ordered (batch, channel)
    xs = [co.reshape(co.shape[0] * co.shape[1], co.shape[2]) for co in channels_output]
    vmem = pl.BlockSpec(memory_space=pltpu.MemorySpace.VMEM)
    return pl.pallas_call(
        functools.partial(_transformer_kernel, slot_tree, spec),
        out_shape=jax.ShapeDtypeStruct((spec["batch"], spec["out_dim"]), F32),
        in_specs=[vmem] * (n_ch + 1),
        out_specs=vmem,
    )(*xs, packed_params)


# --------------------------------- parameter init -------------------------------

class ParamGen:
    def __init__(self, seed=0):
        self._key = jax.random.PRNGKey(seed)

    def normal(self, shape, scale=0.1):
        self._key, sub = jax.random.split(self._key)
        return (scale * jax.random.normal(sub, shape)).astype(F32)


def make_ff(pg, dim, hidden, out):
    return {
        "ln_g": (1.0 + pg.normal((1, dim))).astype(F32),
        "ln_b": pg.normal((1, dim)),
        "w1": pg.normal((dim, hidden)),
        "b1": pg.normal((1, hidden)),
        "w2": pg.normal((hidden, out)),
        "b2": pg.normal((1, out)),
    }


def init_params(pg, dims, depth, heads, dim_head, mlp_dims, in_chans, emb_dims,
                out_dim, fg_kernels):
    inner = heads * dim_head
    params = {"layers": []}
    cur = list(dims)
    for _ in range(depth):
        cur = [int(d * 0.5) for d in cur]
        layer = []
        for k in range(len(cur)):
            dim, C, ks, mlp_dim = cur[k], in_chans[k], fg_kernels[k], mlp_dims[k]
            layer.append({
                "attn": {
                    "wq": pg.normal((dim, inner)),
                    "wk": pg.normal((dim, inner)),
                    "wv": pg.normal((dim, inner)),
                    "wo": pg.normal((inner, dim)),
                    "bo": pg.normal((1, dim)),
                },
                "ff": make_ff(pg, dim, mlp_dim, dim),
                "cnn": {
                    "w": pg.normal((ks, C, C)),     # w[t,c,o] == torch conv.weight[o,c,t]
                    "b": pg.normal((1, C)),
                    "g": (1.0 + pg.normal((1, C))).astype(F32),
                    "beta": pg.normal((1, C)),
                    "mu": pg.normal((1, C)),
                    "var": (1.0 + jnp.abs(pg.normal((1, C)))).astype(F32),
                },
                "head_w": pg.normal((dim, inner)),
                "cross_sa": {
                    "wo": pg.normal((inner, inner)),
                    "bo": pg.normal((1, inner)),
                },
                "cross_ff": make_ff(pg, inner, sum(mlp_dims), dim),
            })
        params["layers"].append(layer)
    mod_sizes = [int(d * 0.5 ** depth) * c + c * depth for d, c in zip(dims, in_chans)]
    params["compress"] = [make_ff(pg, s, e, e) for s, e in zip(mod_sizes, emb_dims)]
    params["out_ffwd"] = make_ff(pg, sum(emb_dims), sum(emb_dims), out_dim)
    return params


# --------------------------------------- main -----------------------------------

if __name__ == "__main__":
    dims = [32, 32]
    depth = 2
    heads = 2
    dim_head = 8
    mlp_dims = [16, 16]
    in_chans = [4, 4]
    emb_dims = [8, 8]
    out_dim = 10
    fg_kernels = [3, 5]
    B = 2

    pg = ParamGen(seed=0)
    params = init_params(pg, dims, depth, heads, dim_head, mlp_dims, in_chans,
                         emb_dims, out_dim, fg_kernels)
    spec = dict(n_channels=len(dims), batch=B, depth=depth, heads=heads,
                dim_head=dim_head, in_chans=tuple(in_chans),
                fg_kernels=tuple(fg_kernels), dims=tuple(dims), out_dim=out_dim)

    # One-time weight fusion + packing (outside jit / the timed path).
    packed, slot_tree = prepare_and_pack(params, spec)

    key = jax.random.PRNGKey(0)
    keys = jax.random.split(key, len(dims))
    channels_output = tuple(
        jax.random.normal(keys[i], (B, in_chans[i], dims[i]), dtype=F32)
        for i in range(len(dims)))

    fwd = jax.jit(lambda co, pk: transformer_forward(co, pk, slot_tree, spec))
    emb = fwd(channels_output, packed)
    jax.block_until_ready(emb)
    assert emb.shape == (B, out_dim), emb.shape
    print("KERNEL_OK")
</pallas_src>

<mosaic_0001>
module attributes {stable_mosaic.version = 11 : i64} {
  func.func @_transformer_kernel(%arg0: memref<8x32xf32, #tpu.memory_space<vmem>>, %arg1: memref<8x32xf32, #tpu.memory_space<vmem>>, %arg2: memref<1264x128xf32, #tpu.memory_space<vmem>>, %arg3: memref<2x10xf32, #tpu.memory_space<vmem>>) attributes {dimension_semantics = [], scalar_prefetch = 0 : i64, scratch_operands = 0 : i64, tpu.core_type = #tpu.core_type<tc>} {
    %c0 = arith.constant 0 : index
    %c0_0 = arith.constant 0 : index
    %0 = vector.load %arg0[%c0, %c0_0] : memref<8x32xf32, #tpu.memory_space<vmem>>, vector<8x32xf32>
    %c0_1 = arith.constant 0 : index
    %c0_2 = arith.constant 0 : index
    %1 = vector.load %arg1[%c0_1, %c0_2] : memref<8x32xf32, #tpu.memory_space<vmem>>, vector<8x32xf32>
    %c64 = arith.constant 64 : index
    %c0_3 = arith.constant 0 : index
    %2 = vector.load %arg2[%c64, %c0_3] : memref<1264x128xf32, #tpu.memory_space<vmem>>, vector<32x16xf32>
    %c96 = arith.constant 96 : index
    %c0_4 = arith.constant 0 : index
    %3 = vector.load %arg2[%c96, %c0_4] : memref<1264x128xf32, #tpu.memory_space<vmem>>, vector<32x16xf32>
    %cst = arith.constant dense<0.000000e+00> : vector<8x16xf32>
    %4 = tpu.matmul %0, %2, %cst {dimension_numbers = #tpu.dot_dimension_numbers<[1], [0], [0], [1], [0, 0, 1, 1], [], []>} : vector<8x32xf32>, vector<32x16xf32>, vector<8x16xf32> -> vector<8x16xf32>
    %cst_5 = arith.constant dense<0.000000e+00> : vector<8x16xf32>
    %5 = tpu.matmul %0, %3, %cst_5 {dimension_numbers = #tpu.dot_dimension_numbers<[1], [0], [0], [1], [0, 0, 1, 1], [], []>} : vector<8x32xf32>, vector<32x16xf32>, vector<8x16xf32> -> vector<8x16xf32>
    %6 = arith.maximumf %4, %5 : vector<8x16xf32>
    %c312 = arith.constant 312 : index
    %c0_6 = arith.constant 0 : index
    %7 = vector.load %arg2[%c312, %c0_6] : memref<1264x128xf32, #tpu.memory_space<vmem>>, vector<16x48xf32>
    %cst_7 = arith.constant dense<0.000000e+00> : vector<8x48xf32>
    %8 = tpu.matmul %6, %7, %cst_7 {dimension_numbers = #tpu.dot_dimension_numbers<[1], [0], [0], [1], [0, 0, 1, 1], [], []>} : vector<8x16xf32>, vector<16x48xf32>, vector<8x48xf32> -> vector<8x48xf32>
    %9 = vector.extract_strided_slice %8 {offsets = [0, 0], sizes = [8, 16], strides = [1, 1]} : vector<8x48xf32> to vector<8x16xf32>
    %10 = vector.extract_strided_slice %8 {offsets = [0, 16], sizes = [8, 16], strides = [1, 1]} : vector<8x48xf32> to vector<8x16xf32>
    %11 = vector.extract_strided_slice %8 {offsets = [0, 32], sizes = [8, 16], strides = [1, 1]} : vector<8x48xf32> to vector<8x16xf32>
    %c16 = arith.constant 16 : index
    %c0_8 = arith.constant 0 : index
    %12 = vector.load %arg2[%c16, %c0_8] : memref<1264x128xf32, #tpu.memory_space<vmem>>, vector<8x8xf32>
    %13 = vector.extract_strided_slice %9 {offsets = [0, 0], sizes = [8, 8], strides = [1, 1]} : vector<8x16xf32> to vector<8x8xf32>
    %14 = vector.extract_strided_slice %10 {offsets = [0, 0], sizes = [8, 8], strides = [1, 1]} : vector<8x16xf32> to vector<8x8xf32>
    %cst_9 = arith.constant dense<0.000000e+00> : vector<8x8xf32>
    %15 = tpu.matmul %13, %14, %cst_9 {dimension_numbers = #tpu.dot_dimension_numbers<[1], [1], [0], [0], [0, 0, 1, 0], [], []>} : vector<8x8xf32>, vector<8x8xf32>, vector<8x8xf32> -> vector<8x8xf32>
    %16 = arith.addf %15, %12 : vector<8x8xf32>
    %cst_10 = arith.constant dense<0xFF800000> : vector<8xf32>
    %17 = vector.multi_reduction <maximumf>, %16, %cst_10 [1] : vector<8x8xf32> to vector<8xf32>
    %18 = vector.shape_cast %17 : vector<8xf32> to vector<8x1xf32>
    %19 = vector.broadcast %18 : vector<8x1xf32> to vector<8x8xf32>
    %20 = arith.subf %16, %19 : vector<8x8xf32>
    %21 = math.exp %20 : vector<8x8xf32>
    %cst_11 = arith.constant dense<0.000000e+00> : vector<8xf32>
    %22 = vector.multi_reduction <add>, %21, %cst_11 [1] : vector<8x8xf32> to vector<8xf32>
    %23 = vector.shape_cast %22 : vector<8xf32> to vector<8x1xf32>
    %24 = tpu.reciprocal %23 {approx = true} : vector<8x1xf32> -> vector<8x1xf32>
    %25 = vector.broadcast %24 : vector<8x1xf32> to vector<8x8xf32>
    %26 = arith.mulf %21, %25 : vector<8x8xf32>
    %27 = vector.extract_strided_slice %11 {offsets = [0, 0], sizes = [8, 8], strides = [1, 1]} : vector<8x16xf32> to vector<8x8xf32>
    %cst_12 = arith.constant dense<0.000000e+00> : vector<8x8xf32>
    %28 = tpu.matmul %26, %27, %cst_12 {dimension_numbers = #tpu.dot_dimension_numbers<[1], [0], [0], [1], [0, 0, 1, 1], [], []>} : vector<8x8xf32>, vector<8x8xf32>, vector<8x8xf32> -> vector<8x8xf32>
    %29 = vector.extract_strided_slice %9 {offsets = [0, 8], sizes = [8, 8], strides = [1, 1]} : vector<8x16xf32> to vector<8x8xf32>
    %30 = vector.extract_strided_slice %10 {offsets = [0, 8], sizes = [8, 8], strides = [1, 1]} : vector<8x16xf32> to vector<8x8xf32>
    %cst_13 = arith.constant dense<0.000000e+00> : vector<8x8xf32>
    %31 = tpu.matmul %29, %30, %cst_13 {dimension_numbers = #tpu.dot_dimension_numbers<[1], [1], [0], [0], [0, 0, 1, 0], [], []>} : vector<8x8xf32>, vector<8x8xf32>, vector<8x8xf32> -> vector<8x8xf32>
    %32 = arith.addf %31, %12 : vector<8x8xf32>
    %cst_14 = arith.constant dense<0xFF800000> : vector<8xf32>
    %33 = vector.multi_reduction <maximumf>, %32, %cst_14 [1] : vector<8x8xf32> to vector<8xf32>
    %34 = vector.shape_cast %33 : vector<8xf32> to vector<8x1xf32>
    %35 = vector.broadcast %34 : vector<8x1xf32> to vector<8x8xf32>
    %36 = arith.subf %32, %35 : vector<8x8xf32>
    %37 = math.exp %36 : vector<8x8xf32>
    %cst_15 = arith.constant dense<0.000000e+00> : vector<8xf32>
    %38 = vector.multi_reduction <add>, %37, %cst_15 [1] : vector<8x8xf32> to vector<8xf32>
    %39 = vector.shape_cast %38 : vector<8xf32> to vector<8x1xf32>
    %40 = tpu.reciprocal %39 {approx = true} : vector<8x1xf32> -> vector<8x1xf32>
    %41 = vector.broadcast %40 : vector<8x1xf32> to vector<8x8xf32>
    %42 = arith.mulf %37, %41 : vector<8x8xf32>
    %43 = vector.extract_strided_slice %11 {offsets = [0, 8], sizes = [8, 8], strides = [1, 1]} : vector<8x16xf32> to vector<8x8xf32>
    %cst_16 = arith.constant dense<0.000000e+00> : vector<8x8xf32>
    %44 = tpu.matmul %42, %43, %cst_16 {dimension_numbers = #tpu.dot_dimension_numbers<[1], [0], [0], [1], [0, 0, 1, 1], [], []>} : vector<8x8xf32>, vector<8x8xf32>, vector<8x8xf32> -> vector<8x8xf32>
    %45 = tpu.concatenate %28, %44 in 1 : vector<8x8xf32>, vector<8x8xf32> -> vector<8x16xf32>
    %c296 = arith.constant 296 : index
    %c0_17 = arith.constant 0 : index
    %46 = vector.load %arg2[%c296, %c0_17] : memref<1264x128xf32, #tpu.memory_space<vmem>>, vector<16x16xf32>
    %cst_18 = arith.constant dense<0.000000e+00> : vector<8x16xf32>
    %47 = tpu.matmul %45, %46, %cst_18 {dimension_numbers = #tpu.dot_dimension_numbers<[1], [0], [0], [1], [0, 0, 1, 1], [], []>} : vector<8x16xf32>, vector<16x16xf32>, vector<8x16xf32> -> vector<8x16xf32>
    %c288 = arith.constant 288 : index
    %c0_19 = arith.constant 0 : index
    %48 = vector.load %arg2[%c288, %c0_19] : memref<1264x128xf32, #tpu.memory_space<vmem>>, vector<1x16xf32>
    %49 = vector.broadcast %48 : vector<1x16xf32> to vector<8x16xf32>
    %50 = arith.addf %47, %49 : vector<8x16xf32>
    %51 = arith.addf %50, %6 : vector<8x16xf32>
    %cst_20 = arith.constant 0.000000e+00 : f32
    %52 = vector.broadcast %cst_20 : f32 to vector<8x1xf32>
    %53 = tpu.concatenate %52, %0, %52 in 1 : vector<8x1xf32>, vector<8x32xf32>, vector<8x1xf32> -> vector<8x34xf32>
    %54 = vector.extract_strided_slice %53 {offsets = [0, 0], sizes = [8, 32], strides = [1, 1]} : vector<8x34xf32> to vector<8x32xf32>
    %55 = vector.extract_strided_slice %53 {offsets = [0, 1], sizes = [8, 32], strides = [1, 1]} : vector<8x34xf32> to vector<8x32xf32>
    %56 = vector.extract_strided_slice %53 {offsets = [0, 2], sizes = [8, 32], strides = [1, 1]} : vector<8x34xf32> to vector<8x32xf32>
    %57 = tpu.concatenate %54, %55, %56 in 0 : vector<8x32xf32>, vector<8x32xf32>, vector<8x32xf32> -> vector<24x32xf32>
    %c336 = arith.constant 336 : index
    %c0_21 = arith.constant 0 : index
    %58 = vector.load %arg2[%c336, %c0_21] : memref<1264x128xf32, #tpu.memory_space<vmem>>, vector<8x24xf32>
    %cst_22 = arith.constant dense<0.000000e+00> : vector<8x32xf32>
    %59 = tpu.matmul %58, %57, %cst_22 {dimension_numbers = #tpu.dot_dimension_numbers<[1], [0], [0], [1], [0, 0, 1, 1], [], []>} : vector<8x24xf32>, vector<24x32xf32>, vector<8x32xf32> -> vector<8x32xf32>
    %c328 = arith.constant 328 : index
    %c0_23 = arith.constant 0 : index
    %60 = vector.load %arg2[%c328, %c0_23] : memref<1264x128xf32, #tpu.memory_space<vmem>>, vector<8x1xf32>
    %61 = vector.broadcast %60 : vector<8x1xf32> to vector<8x32xf32>
    %62 = arith.addf %59, %61 : vector<8x32xf32>
    %cst_24 = arith.constant 0.000000e+00 : f32
    %63 = vector.broadcast %cst_24 : f32 to vector<8x32xf32>
    %64 = arith.cmpf ogt, %62, %63 : vector<8x32xf32>
    %cst_25 = arith.constant 0.000000e+00 : f32
    %65 = vector.broadcast %cst_25 : f32 to vector<8x32xf32>
    %66 = arith.minimumf %62, %65 : vector<8x32xf32>
    %67 = math.exp %66 : vector<8x32xf32>
    %cst_26 = arith.constant 1.000000e+00 : f32
    %68 = vector.broadcast %cst_26 : f32 to vector<8x32xf32>
    %69 = arith.subf %67, %68 : vector<8x32xf32>
    %70 = arith.select %64, %62, %69 : vector<8x32xi1>, vector<8x32xf32>
    %cst_27 = arith.constant dense<0.000000e+00> : vector<8x16xf32>
    %71 = tpu.matmul %70, %2, %cst_27 {dimension_numbers = #tpu.dot_dimension_numbers<[1], [0], [0], [1], [0, 0, 1, 1], [], []>} : vector<8x32xf32>, vector<32x16xf32>, vector<8x16xf32> -> vector<8x16xf32>
    %cst_28 = arith.constant dense<0.000000e+00> : vector<8x16xf32>
    %72 = tpu.matmul %70, %3, %cst_28 {dimension_numbers = #tpu.dot_dimension_numbers<[1], [0], [0], [1], [0, 0, 1, 1], [], []>} : vector<8x32xf32>, vector<32x16xf32>, vector<8x16xf32> -> vector<8x16xf32>
    %73 = arith.maximumf %71, %72 : vector<8x16xf32>
    %74 = arith.mulf %73, %73 : vector<8x16xf32>
    %cst_29 = arith.constant dense<0.000000e+00> : vector<8xf32>
    %75 = vector.multi_reduction <add>, %74, %cst_29 [1] : vector<8x16xf32> to vector<8xf32>
    %76 = vector.shape_cast %75 : vector<8xf32> to vector<8x1xf32>
    %cst_30 = arith.constant 1.600000e+01 : f32
    %77 = vector.broadcast %cst_30 : f32 to vector<8x1xf32>
    %78 = arith.divf %76, %77 : vector<8x1xf32>
    %79 = math.log %78 : vector<8x1xf32>
    %cst_31 = arith.constant dense<0.000000e+00> : vector<8xf32>
    %80 = vector.multi_reduction <add>, %51, %cst_31 [1] : vector<8x16xf32> to vector<8xf32>
    %81 = vector.shape_cast %80 : vector<8xf32> to vector<8x1xf32>
    %cst_32 = arith.constant 1.600000e+01 : f32
    %82 = vector.broadcast %cst_32 : f32 to vector<8x1xf32>
    %83 = arith.divf %81, %82 : vector<8x1xf32>
    %84 = vector.broadcast %83 : vector<8x1xf32> to vector<8x16xf32>
    %85 = arith.subf %51, %84 : vector<8x16xf32>
    %86 = arith.mulf %85, %85 : vector<8x16xf32>
    %cst_33 = arith.constant dense<0.000000e+00> : vector<8xf32>
    %87 = vector.multi_reduction <add>, %86, %cst_33 [1] : vector<8x16xf32> to vector<8xf32>
    %88 = vector.shape_cast %87 : vector<8xf32> to vector<8x1xf32>
    %cst_34 = arith.constant 1.600000e+01 : f32
    %89 = vector.broadcast %cst_34 : f32 to vector<8x1xf32>
    %90 = arith.divf %88, %89 : vector<8x1xf32>
    %cst_35 = arith.constant 9.99999974E-6 : f32
    %91 = vector.broadcast %cst_35 : f32 to vector<8x1xf32>
    %92 = arith.addf %90, %91 : vector<8x1xf32>
    %93 = math.rsqrt %92 : vector<8x1xf32>
    %94 = vector.broadcast %93 : vector<8x1xf32> to vector<8x16xf32>
    %95 = arith.mulf %85, %94 : vector<8x16xf32>
    %c472 = arith.constant 472 : index
    %c0_36 = arith.constant 0 : index
    %96 = vector.load %arg2[%c472, %c0_36] : memref<1264x128xf32, #tpu.memory_space<vmem>>, vector<1x16xf32>
    %97 = vector.broadcast %96 : vector<1x16xf32> to vector<8x16xf32>
    %98 = arith.mulf %95, %97 : vector<8x16xf32>
    %c464 = arith.constant 464 : index
    %c0_37 = arith.constant 0 : index
    %99 = vector.load %arg2[%c464, %c0_37] : memref<1264x128xf32, #tpu.memory_space<vmem>>, vector<1x16xf32>
    %100 = vector.broadcast %99 : vector<1x16xf32> to vector<8x16xf32>
    %101 = arith.addf %98, %100 : vector<8x16xf32>
    %c480 = arith.constant 480 : index
    %c0_38 = arith.constant 0 : index
    %102 = vector.load %arg2[%c480, %c0_38] : memref<1264x128xf32, #tpu.memory_space<vmem>>, vector<16x16xf32>
    %cst_39 = arith.constant dense<0.000000e+00> : vector<8x16xf32>
    %103 = tpu.matmul %101, %102, %cst_39 {dimension_numbers = #tpu.dot_dimension_numbers<[1], [0], [0], [1], [0, 0, 1, 1], [], []>} : vector<8x16xf32>, vector<16x16xf32>, vector<8x16xf32> -> vector<8x16xf32>
    %c448 = arith.constant 448 : index
    %c0_40 = arith.constant 0 : index
    %104 = vector.load %arg2[%c448, %c0_40] : memref<1264x128xf32, #tpu.memory_space<vmem>>, vector<1x16xf32>
    %105 = vector.broadcast %104 : vector<1x16xf32> to vector<8x16xf32>
    %106 = arith.addf %103, %105 : vector<8x16xf32>
    %cst_41 = arith.constant 5.000000e-01 : f32
    %107 = vector.broadcast %cst_41 : f32 to vector<8x16xf32>
    %108 = arith.mulf %107, %106 : vector<8x16xf32>
    %cst_42 = arith.constant 0.707106769 : f32
    %109 = vector.broadcast %cst_42 : f32 to vector<8x16xf32>
    %110 = arith.mulf %106, %109 : vector<8x16xf32>
    %cst_43 = arith.constant 0.000000e+00 : f32
    %111 = vector.broadcast %cst_43 : f32 to vector<8x16xf32>
    %112 = arith.cmpf oge, %110, %111 : vector<8x16xf32>
    %cst_44 = arith.constant 1.000000e+00 : f32
    %cst_45 = arith.constant -1.000000e+00 : f32
    %113 = vector.broadcast %cst_44 : f32 to vector<8x16xf32>
    %114 = vector.broadcast %cst_45 : f32 to vector<8x16xf32>
    %115 = arith.select %112, %113, %114 : vector<8x16xi1>, vector<8x16xf32>
    %116 = math.absf %110 : vector<8x16xf32>
    %cst_46 = arith.constant 0.327591091 : f32
    %117 = vector.broadcast %cst_46 : f32 to vector<8x16xf32>
    %118 = arith.mulf %117, %116 : vector<8x16xf32>
    %cst_47 = arith.constant 1.000000e+00 : f32
    %119 = vector.broadcast %cst_47 : f32 to vector<8x16xf32>
    %120 = arith.addf %119, %118 : vector<8x16xf32>
    %cst_48 = arith.constant 1.000000e+00 : f32
    %121 = vector.broadcast %cst_48 : f32 to vector<8x16xf32>
    %122 = arith.divf %121, %120 : vector<8x16xf32>
    %cst_49 = arith.constant 1.06140542 : f32
    %123 = vector.broadcast %cst_49 : f32 to vector<8x16xf32>
    %124 = arith.mulf %123, %122 : vector<8x16xf32>
    %cst_50 = arith.constant -1.45315206 : f32
    %125 = vector.broadcast %cst_50 : f32 to vector<8x16xf32>
    %126 = arith.addf %124, %125 : vector<8x16xf32>
    %127 = arith.mulf %126, %122 : vector<8x16xf32>
    %cst_51 = arith.constant 1.42141378 : f32
    %128 = vector.broadcast %cst_51 : f32 to vector<8x16xf32>
    %129 = arith.addf %127, %128 : vector<8x16xf32>
    %130 = arith.mulf %129, %122 : vector<8x16xf32>
    %cst_52 = arith.constant -0.284496725 : f32
    %131 = vector.broadcast %cst_52 : f32 to vector<8x16xf32>
    %132 = arith.addf %130, %131 : vector<8x16xf32>
    %133 = arith.mulf %132, %122 : vector<8x16xf32>
    %cst_53 = arith.constant 0.254829586 : f32
    %134 = vector.broadcast %cst_53 : f32 to vector<8x16xf32>
    %135 = arith.addf %133, %134 : vector<8x16xf32>
    %136 = arith.mulf %135, %122 : vector<8x16xf32>
    %cst_54 = arith.constant 0.000000e+00 : f32
    %137 = vector.broadcast %cst_54 : f32 to vector<8x16xf32>
    %138 = arith.subf %137, %116 : vector<8x16xf32>
    %139 = arith.mulf %138, %116 : vector<8x16xf32>
    %140 = math.exp %139 : vector<8x16xf32>
    %141 = arith.mulf %136, %140 : vector<8x16xf32>
    %cst_55 = arith.constant 1.000000e+00 : f32
    %142 = vector.broadcast %cst_55 : f32 to vector<8x16xf32>
    %143 = arith.subf %142, %141 : vector<8x16xf32>
    %144 = arith.mulf %115, %143 : vector<8x16xf32>
    %cst_56 = arith.constant 1.000000e+00 : f32
    %145 = vector.broadcast %cst_56 : f32 to vector<8x16xf32>
    %146 = arith.addf %145, %144 : vector<8x16xf32>
    %147 = arith.mulf %108, %146 : vector<8x16xf32>
    %c496 = arith.constant 496 : index
    %c0_57 = arith.constant 0 : index
    %148 = vector.load %arg2[%c496, %c0_57] : memref<1264x128xf32, #tpu.memory_space<vmem>>, vector<16x16xf32>
    %cst_58 = arith.constant dense<0.000000e+00> : vector<8x16xf32>
    %149 = tpu.matmul %147, %148, %cst_58 {dimension_numbers = #tpu.dot_dimension_numbers<[1], [0], [0], [1], [0, 0, 1, 1], [], []>} : vector<8x16xf32>, vector<16x16xf32>, vector<8x16xf32> -> vector<8x16xf32>
    %c456 = arith.constant 456 : index
    %c0_59 = arith.constant 0 : index
    %150 = vector.load %arg2[%c456, %c0_59] : memref<1264x128xf32, #tpu.memory_space<vmem>>, vector<1x16xf32>
    %151 = vector.broadcast %150 : vector<1x16xf32> to vector<8x16xf32>
    %152 = arith.addf %149, %151 : vector<8x16xf32>
    %153 = arith.addf %152, %73 : vector<8x16xf32>
    %c512 = arith.constant 512 : index
    %c0_60 = arith.constant 0 : index
    %154 = vector.load %arg2[%c512, %c0_60] : memref<1264x128xf32, #tpu.memory_space<vmem>>, vector<16x16xf32>
    %cst_61 = arith.constant dense<0.000000e+00> : vector<8x16xf32>
    %155 = tpu.matmul %153, %154, %cst_61 {dimension_numbers = #tpu.dot_dimension_numbers<[1], [0], [0], [1], [0, 0, 1, 1], [], []>} : vector<8x16xf32>, vector<16x16xf32>, vector<8x16xf32> -> vector<8x16xf32>
    %c64_62 = arith.constant 64 : index
    %c0_63 = arith.constant 0 : index
    %156 = vector.load %arg2[%c64_62, %c0_63] : memref<1264x128xf32, #tpu.memory_space<vmem>>, vector<32x16xf32>
    %c96_64 = arith.constant 96 : index
    %c0_65 = arith.constant 0 : index
    %157 = vector.load %arg2[%c96_64, %c0_65] : memref<1264x128xf32, #tpu.memory_space<vmem>>, vector<32x16xf32>
    %cst_66 = arith.constant dense<0.000000e+00> : vector<8x16xf32>
    %158 = tpu.matmul %1, %156, %cst_66 {dimension_numbers = #tpu.dot_dimension_numbers<[1], [0], [0], [1], [0, 0, 1, 1], [], []>} : vector<8x32xf32>, vector<32x16xf32>, vector<8x16xf32> -> vector<8x16xf32>
    %cst_67 = arith.constant dense<0.000000e+00> : vector<8x16xf32>
    %159 = tpu.matmul %1, %157, %cst_67 {dimension_numbers = #tpu.dot_dimension_numbers<[1], [0], [0], [1], [0, 0, 1, 1], [], []>} : vector<8x32xf32>, vector<32x16xf32>, vector<8x16xf32> -> vector<8x16xf32>
    %160 = arith.maximumf %158, %159 : vector<8x16xf32>
    %c552 = arith.constant 552 : index
    %c0_68 = arith.constant 0 : index
    %161 = vector.load %arg2[%c552, %c0_68] : memref<1264x128xf32, #tpu.memory_space<vmem>>, vector<16x48xf32>
    %cst_69 = arith.constant dense<0.000000e+00> : vector<8x48xf32>
    %162 = tpu.matmul %160, %161, %cst_69 {dimension_numbers = #tpu.dot_dimension_numbers<[1], [0], [0], [1], [0, 0, 1, 1], [], []>} : vector<8x16xf32>, vector<16x48xf32>, vector<8x48xf32> -> vector<8x48xf32>
    %163 = vector.extract_strided_slice %162 {offsets = [0, 0], sizes = [8, 16], strides = [1, 1]} : vector<8x48xf32> to vector<8x16xf32>
    %164 = vector.extract_strided_slice %162 {offsets = [0, 16], sizes = [8, 16], strides = [1, 1]} : vector<8x48xf32> to vector<8x16xf32>
    %165 = vector.extract_strided_slice %162 {offsets = [0, 32], sizes = [8, 16], strides = [1, 1]} : vector<8x48xf32> to vector<8x16xf32>
    %c24 = arith.constant 24 : index
    %c0_70 = arith.constant 0 : index
    %166 = vector.load %arg2[%c24, %c0_70] : memref<1264x128xf32, #tpu.memory_space<vmem>>, vector<8x8xf32>
    %167 = vector.extract_strided_slice %163 {offsets = [0, 0], sizes = [8, 8], strides = [1, 1]} : vector<8x16xf32> to vector<8x8xf32>
    %168 = vector.extract_strided_slice %164 {offsets = [0, 0], sizes = [8, 8], strides = [1, 1]} : vector<8x16xf32> to vector<8x8xf32>
    %cst_71 = arith.constant dense<0.000000e+00> : vector<8x8xf32>
    %169 = tpu.matmul %167, %168, %cst_71 {dimension_numbers = #tpu.dot_dimension_numbers<[1], [1], [0], [0], [0, 0, 1, 0], [], []>} : vector<8x8xf32>, vector<8x8xf32>, vector<8x8xf32> -> vector<8x8xf32>
    %170 = arith.addf %169, %166 : vector<8x8xf32>
    %cst_72 = arith.constant dense<0xFF800000> : vector<8xf32>
    %171 = vector.multi_reduction <maximumf>, %170, %cst_72 [1] : vector<8x8xf32> to vector<8xf32>
    %172 = vector.shape_cast %171 : vector<8xf32> to vector<8x1xf32>
    %173 = vector.broadcast %172 : vector<8x1xf32> to vector<8x8xf32>
    %174 = arith.subf %170, %173 : vector<8x8xf32>
    %175 = math.exp %174 : vector<8x8xf32>
    %cst_73 = arith.constant dense<0.000000e+00> : vector<8xf32>
    %176 = vector.multi_reduction <add>, %175, %cst_73 [1] : vector<8x8xf32> to vector<8xf32>
    %177 = vector.shape_cast %176 : vector<8xf32> to vector<8x1xf32>
    %178 = tpu.reciprocal %177 {approx = true} : vector<8x1xf32> -> vector<8x1xf32>
    %179 = vector.broadcast %178 : vector<8x1xf32> to vector<8x8xf32>
    %180 = arith.mulf %175, %179 : vector<8x8xf32>
    %181 = vector.extract_strided_slice %165 {offsets = [0, 0], sizes = [8, 8], strides = [1, 1]} : vector<8x16xf32> to vector<8x8xf32>
    %cst_74 = arith.constant dense<0.000000e+00> : vector<8x8xf32>
    %182 = tpu.matmul %180, %181, %cst_74 {dimension_numbers = #tpu.dot_dimension_numbers<[1], [0], [0], [1], [0, 0, 1, 1], [], []>} : vector<8x8xf32>, vector<8x8xf32>, vector<8x8xf32> -> vector<8x8xf32>
    %183 = vector.extract_strided_slice %163 {offsets = [0, 8], sizes = [8, 8], strides = [1, 1]} : vector<8x16xf32> to vector<8x8xf32>
    %184 = vector.extract_strided_slice %164 {offsets = [0, 8], sizes = [8, 8], strides = [1, 1]} : vector<8x16xf32> to vector<8x8xf32>
    %cst_75 = arith.constant dense<0.000000e+00> : vector<8x8xf32>
    %185 = tpu.matmul %183, %184, %cst_75 {dimension_numbers = #tpu.dot_dimension_numbers<[1], [1], [0], [0], [0, 0, 1, 0], [], []>} : vector<8x8xf32>, vector<8x8xf32>, vector<8x8xf32> -> vector<8x8xf32>
    %186 = arith.addf %185, %166 : vector<8x8xf32>
    %cst_76 = arith.constant dense<0xFF800000> : vector<8xf32>
    %187 = vector.multi_reduction <maximumf>, %186, %cst_76 [1] : vector<8x8xf32> to vector<8xf32>
    %188 = vector.shape_cast %187 : vector<8xf32> to vector<8x1xf32>
    %189 = vector.broadcast %188 : vector<8x1xf32> to vector<8x8xf32>
    %190 = arith.subf %186, %189 : vector<8x8xf32>
    %191 = math.exp %190 : vector<8x8xf32>
    %cst_77 = arith.constant dense<0.000000e+00> : vector<8xf32>
    %192 = vector.multi_reduction <add>, %191, %cst_77 [1] : vector<8x8xf32> to vector<8xf32>
    %193 = vector.shape_cast %192 : vector<8xf32> to vector<8x1xf32>
    %194 = tpu.reciprocal %193 {approx = true} : vector<8x1xf32> -> vector<8x1xf32>
    %195 = vector.broadcast %194 : vector<8x1xf32> to vector<8x8xf32>
    %196 = arith.mulf %191, %195 : vector<8x8xf32>
    %197 = vector.extract_strided_slice %165 {offsets = [0, 8], sizes = [8, 8], strides = [1, 1]} : vector<8x16xf32> to vector<8x8xf32>
    %cst_78 = arith.constant dense<0.000000e+00> : vector<8x8xf32>
    %198 = tpu.matmul %196, %197, %cst_78 {dimension_numbers = #tpu.dot_dimension_numbers<[1], [0], [0], [1], [0, 0, 1, 1], [], []>} : vector<8x8xf32>, vector<8x8xf32>, vector<8x8xf32> -> vector<8x8xf32>
    %199 = tpu.concatenate %182, %198 in 1 : vector<8x8xf32>, vector<8x8xf32> -> vector<8x16xf32>
    %c536 = arith.constant 536 : index
    %c0_79 = arith.constant 0 : index
    %200 = vector.load %arg2[%c536, %c0_79] : memref<1264x128xf32, #tpu.memory_space<vmem>>, vector<16x16xf32>
    %cst_80 = arith.constant dense<0.000000e+00> : vector<8x16xf32>
    %201 = tpu.matmul %199, %200, %cst_80 {dimension_numbers = #tpu.dot_dimension_numbers<[1], [0], [0], [1], [0, 0, 1, 1], [], []>} : vector<8x16xf32>, vector<16x16xf32>, vector<8x16xf32> -> vector<8x16xf32>
    %c528 = arith.constant 528 : index
    %c0_81 = arith.constant 0 : index
    %202 = vector.load %arg2[%c528, %c0_81] : memref<1264x128xf32, #tpu.memory_space<vmem>>, vector<1x16xf32>
    %203 = vector.broadcast %202 : vector<1x16xf32> to vector<8x16xf32>
    %204 = arith.addf %201, %203 : vector<8x16xf32>
    %205 = arith.addf %204, %160 : vector<8x16xf32>
    %cst_82 = arith.constant 0.000000e+00 : f32
    %206 = vector.broadcast %cst_82 : f32 to vector<8x2xf32>
    %207 = tpu.concatenate %206, %1, %206 in 1 : vector<8x2xf32>, vector<8x32xf32>, vector<8x2xf32> -> vector<8x36xf32>
    %208 = vector.extract_strided_slice %207 {offsets = [0, 0], sizes = [8, 32], strides = [1, 1]} : vector<8x36xf32> to vector<8x32xf32>
    %209 = vector.extract_strided_slice %207 {offsets = [0, 1], sizes = [8, 32], strides = [1, 1]} : vector<8x36xf32> to vector<8x32xf32>
    %210 = vector.extract_strided_slice %207 {offsets = [0, 2], sizes = [8, 32], strides = [1, 1]} : vector<8x36xf32> to vector<8x32xf32>
    %211 = vector.extract_strided_slice %207 {offsets = [0, 3], sizes = [8, 32], strides = [1, 1]} : vector<8x36xf32> to vector<8x32xf32>
    %212 = vector.extract_strided_slice %207 {offsets = [0, 4], sizes = [8, 32], strides = [1, 1]} : vector<8x36xf32> to vector<8x32xf32>
    %213 = tpu.concatenate %208, %209, %210, %211, %212 in 0 : vector<8x32xf32>, vector<8x32xf32>, vector<8x32xf32>, vector<8x32xf32>, vector<8x32xf32> -> vector<40x32xf32>
    %c576 = arith.constant 576 : index
    %c0_83 = arith.constant 0 : index
    %214 = vector.load %arg2[%c576, %c0_83] : memref<1264x128xf32, #tpu.memory_space<vmem>>, vector<8x40xf32>
    %cst_84 = arith.constant dense<0.000000e+00> : vector<8x32xf32>
    %215 = tpu.matmul %214, %213, %cst_84 {dimension_numbers = #tpu.dot_dimension_numbers<[1], [0], [0], [1], [0, 0, 1, 1], [], []>} : vector<8x40xf32>, vector<40x32xf32>, vector<8x32xf32> -> vector<8x32xf32>
    %c568 = arith.constant 568 : index
    %c0_85 = arith.constant 0 : index
    %216 = vector.load %arg2[%c568, %c0_85] : memref<1264x128xf32, #tpu.memory_space<vmem>>, vector<8x1xf32>
    %217 = vector.broadcast %216 : vector<8x1xf32> to vector<8x32xf32>
    %218 = arith.addf %215, %217 : vector<8x32xf32>
    %cst_86 = arith.constant 0.000000e+00 : f32
    %219 = vector.broadcast %cst_86 : f32 to vector<8x32xf32>
    %220 = arith.cmpf ogt, %218, %219 : vector<8x32xf32>
    %cst_87 = arith.constant 0.000000e+00 : f32
    %221 = vector.broadcast %cst_87 : f32 to vector<8x32xf32>
    %222 = arith.minimumf %218, %221 : vector<8x32xf32>
    %223 = math.exp %222 : vector<8x32xf32>
    %cst_88 = arith.constant 1.000000e+00 : f32
    %224 = vector.broadcast %cst_88 : f32 to vector<8x32xf32>
    %225 = arith.subf %223, %224 : vector<8x32xf32>
    %226 = arith.select %220, %218, %225 : vector<8x32xi1>, vector<8x32xf32>
    %cst_89 = arith.constant dense<0.000000e+00> : vector<8x16xf32>
    %227 = tpu.matmul %226, %156, %cst_89 {dimension_numbers = #tpu.dot_dimension_numbers<[1], [0], [0], [1], [0, 0, 1, 1], [], []>} : vector<8x32xf32>, vector<32x16xf32>, vector<8x16xf32> -> vector<8x16xf32>
    %cst_90 = arith.constant dense<0.000000e+00> : vector<8x16xf32>
    %228 = tpu.matmul %226, %157, %cst_90 {dimension_numbers = #tpu.dot_dimension_numbers<[1], [0], [0], [1], [0, 0, 1, 1], [], []>} : vector<8x32xf32>, vector<32x16xf32>, vector<8x16xf32> -> vector<8x16xf32>
    %229 = arith.maximumf %227, %228 : vector<8x16xf32>
    %230 = arith.mulf %229, %229 : vector<8x16xf32>
    %cst_91 = arith.constant dense<0.000000e+00> : vector<8xf32>
    %231 = vector.multi_reduction <add>, %230, %cst_91 [1] : vector<8x16xf32> to vector<8xf32>
    %232 = vector.shape_cast %231 : vector<8xf32> to vector<8x1xf32>
    %cst_92 = arith.constant 1.600000e+01 : f32
    %233 = vector.broadcast %cst_92 : f32 to vector<8x1xf32>
    %234 = arith.divf %232, %233 : vector<8x1xf32>
    %235 = math.log %234 : vector<8x1xf32>
    %cst_93 = arith.constant dense<0.000000e+00> : vector<8xf32>
    %236 = vector.multi_reduction <add>, %205, %cst_93 [1] : vector<8x16xf32> to vector<8xf32>
    %237 = vector.shape_cast %236 : vector<8xf32> to vector<8x1xf32>
    %cst_94 = arith.constant 1.600000e+01 : f32
    %238 = vector.broadcast %cst_94 : f32 to vector<8x1xf32>
    %239 = arith.divf %237, %238 : vector<8x1xf32>
    %240 = vector.broadcast %239 : vector<8x1xf32> to vector<8x16xf32>
    %241 = arith.subf %205, %240 : vector<8x16xf32>
    %242 = arith.mulf %241, %241 : vector<8x16xf32>
    %cst_95 = arith.constant dense<0.000000e+00> : vector<8xf32>
    %243 = vector.multi_reduction <add>, %242, %cst_95 [1] : vector<8x16xf32> to vector<8xf32>
    %244 = vector.shape_cast %243 : vector<8xf32> to vector<8x1xf32>
    %cst_96 = arith.constant 1.600000e+01 : f32
    %245 = vector.broadcast %cst_96 : f32 to vector<8x1xf32>
    %246 = arith.divf %244, %245 : vector<8x1xf32>
    %cst_97 = arith.constant 9.99999974E-6 : f32
    %247 = vector.broadcast %cst_97 : f32 to vector<8x1xf32>
    %248 = arith.addf %246, %247 : vector<8x1xf32>
    %249 = math.rsqrt %248 : vector<8x1xf32>
    %250 = vector.broadcast %249 : vector<8x1xf32> to vector<8x16xf32>
    %251 = arith.mulf %241, %250 : vector<8x16xf32>
    %c712 = arith.constant 712 : index
    %c0_98 = arith.constant 0 : index
    %252 = vector.load %arg2[%c712, %c0_98] : memref<1264x128xf32, #tpu.memory_space<vmem>>, vector<1x16xf32>
    %253 = vector.broadcast %252 : vector<1x16xf32> to vector<8x16xf32>
    %254 = arith.mulf %251, %253 : vector<8x16xf32>
    %c704 = arith.constant 704 : index
    %c0_99 = arith.constant 0 : index
    %255 = vector.load %arg2[%c704, %c0_99] : memref<1264x128xf32, #tpu.memory_space<vmem>>, vector<1x16xf32>
    %256 = vector.broadcast %255 : vector<1x16xf32> to vector<8x16xf32>
    %257 = arith.addf %254, %256 : vector<8x16xf32>
    %c720 = arith.constant 720 : index
    %c0_100 = arith.constant 0 : index
    %258 = vector.load %arg2[%c720, %c0_100] : memref<1264x128xf32, #tpu.memory_space<vmem>>, vector<16x16xf32>
    %cst_101 = arith.constant dense<0.000000e+00> : vector<8x16xf32>
    %259 = tpu.matmul %257, %258, %cst_101 {dimension_numbers = #tpu.dot_dimension_numbers<[1], [0], [0], [1], [0, 0, 1, 1], [], []>} : vector<8x16xf32>, vector<16x16xf32>, vector<8x16xf32> -> vector<8x16xf32>
    %c688 = arith.constant 688 : index
    %c0_102 = arith.constant 0 : index
    %260 = vector.load %arg2[%c688, %c0_102] : memref<1264x128xf32, #tpu.memory_space<vmem>>, vector<1x16xf32>
    %261 = vector.broadcast %260 : vector<1x16xf32> to vector<8x16xf32>
    %262 = arith.addf %259, %261 : vector<8x16xf32>
    %cst_103 = arith.constant 5.000000e-01 : f32
    %263 = vector.broadcast %cst_103 : f32 to vector<8x16xf32>
    %264 = arith.mulf %263, %262 : vector<8x16xf32>
    %cst_104 = arith.constant 0.707106769 : f32
    %265 = vector.broadcast %cst_104 : f32 to vector<8x16xf32>
    %266 = arith.mulf %262, %265 : vector<8x16xf32>
    %cst_105 = arith.constant 0.000000e+00 : f32
    %267 = vector.broadcast %cst_105 : f32 to vector<8x16xf32>
    %268 = arith.cmpf oge, %266, %267 : vector<8x16xf32>
    %cst_106 = arith.constant 1.000000e+00 : f32
    %cst_107 = arith.constant -1.000000e+00 : f32
    %269 = vector.broadcast %cst_106 : f32 to vector<8x16xf32>
    %270 = vector.broadcast %cst_107 : f32 to vector<8x16xf32>
    %271 = arith.select %268, %269, %270 : vector<8x16xi1>, vector<8x16xf32>
    %272 = math.absf %266 : vector<8x16xf32>
    %cst_108 = arith.constant 0.327591091 : f32
    %273 = vector.broadcast %cst_108 : f32 to vector<8x16xf32>
    %274 = arith.mulf %273, %272 : vector<8x16xf32>
    %cst_109 = arith.constant 1.000000e+00 : f32
    %275 = vector.broadcast %cst_109 : f32 to vector<8x16xf32>
    %276 = arith.addf %275, %274 : vector<8x16xf32>
    %cst_110 = arith.constant 1.000000e+00 : f32
    %277 = vector.broadcast %cst_110 : f32 to vector<8x16xf32>
    %278 = arith.divf %277, %276 : vector<8x16xf32>
    %cst_111 = arith.constant 1.06140542 : f32
    %279 = vector.broadcast %cst_111 : f32 to vector<8x16xf32>
    %280 = arith.mulf %279, %278 : vector<8x16xf32>
    %cst_112 = arith.constant -1.45315206 : f32
    %281 = vector.broadcast %cst_112 : f32 to vector<8x16xf32>
    %282 = arith.addf %280, %281 : vector<8x16xf32>
    %283 = arith.mulf %282, %278 : vector<8x16xf32>
    %cst_113 = arith.constant 1.42141378 : f32
    %284 = vector.broadcast %cst_113 : f32 to vector<8x16xf32>
    %285 = arith.addf %283, %284 : vector<8x16xf32>
    %286 = arith.mulf %285, %278 : vector<8x16xf32>
    %cst_114 = arith.constant -0.284496725 : f32
    %287 = vector.broadcast %cst_114 : f32 to vector<8x16xf32>
    %288 = arith.addf %286, %287 : vector<8x16xf32>
    %289 = arith.mulf %288, %278 : vector<8x16xf32>
    %cst_115 = arith.constant 0.254829586 : f32
    %290 = vector.broadcast %cst_115 : f32 to vector<8x16xf32>
    %291 = arith.addf %289, %290 : vector<8x16xf32>
    %292 = arith.mulf %291, %278 : vector<8x16xf32>
    %cst_116 = arith.constant 0.000000e+00 : f32
    %293 = vector.broadcast %cst_116 : f32 to vector<8x16xf32>
    %294 = arith.subf %293, %272 : vector<8x16xf32>
    %295 = arith.mulf %294, %272 : vector<8x16xf32>
    %296 = math.exp %295 : vector<8x16xf32>
    %297 = arith.mulf %292, %296 : vector<8x16xf32>
    %cst_117 = arith.constant 1.000000e+00 : f32
    %298 = vector.broadcast %cst_117 : f32 to vector<8x16xf32>
    %299 = arith.subf %298, %297 : vector<8x16xf32>
    %300 = arith.mulf %271, %299 : vector<8x16xf32>
    %cst_118 = arith.constant 1.000000e+00 : f32
    %301 = vector.broadcast %cst_118 : f32 to vector<8x16xf32>
    %302 = arith.addf %301, %300 : vector<8x16xf32>
    %303 = arith.mulf %264, %302 : vector<8x16xf32>
    %c736 = arith.constant 736 : index
    %c0_119 = arith.constant 0 : index
    %304 = vector.load %arg2[%c736, %c0_119] : memref<1264x128xf32, #tpu.memory_space<vmem>>, vector<16x16xf32>
    %cst_120 = arith.constant dense<0.000000e+00> : vector<8x16xf32>
    %305 = tpu.matmul %303, %304, %cst_120 {dimension_numbers = #tpu.dot_dimension_numbers<[1], [0], [0], [1], [0, 0, 1, 1], [], []>} : vector<8x16xf32>, vector<16x16xf32>, vector<8x16xf32> -> vector<8x16xf32>
    %c696 = arith.constant 696 : index
    %c0_121 = arith.constant 0 : index
    %306 = vector.load %arg2[%c696, %c0_121] : memref<1264x128xf32, #tpu.memory_space<vmem>>, vector<1x16xf32>
    %307 = vector.broadcast %306 : vector<1x16xf32> to vector<8x16xf32>
    %308 = arith.addf %305, %307 : vector<8x16xf32>
    %309 = arith.addf %308, %229 : vector<8x16xf32>
    %c752 = arith.constant 752 : index
    %c0_122 = arith.constant 0 : index
    %310 = vector.load %arg2[%c752, %c0_122] : memref<1264x128xf32, #tpu.memory_space<vmem>>, vector<16x16xf32>
    %cst_123 = arith.constant dense<0.000000e+00> : vector<8x16xf32>
    %311 = tpu.matmul %309, %310, %cst_123 {dimension_numbers = #tpu.dot_dimension_numbers<[1], [0], [0], [1], [0, 0, 1, 1], [], []>} : vector<8x16xf32>, vector<16x16xf32>, vector<8x16xf32> -> vector<8x16xf32>
    %cst_124 = arith.constant 0.353553385 : f32
    %312 = vector.broadcast %cst_124 : f32 to vector<8x16xf32>
    %313 = arith.mulf %155, %312 : vector<8x16xf32>
    %c0_125 = arith.constant 0 : index
    %c0_126 = arith.constant 0 : index
    %314 = vector.load %arg2[%c0_125, %c0_126] : memref<1264x128xf32, #tpu.memory_space<vmem>>, vector<8x8xf32>
    %315 = vector.extract_strided_slice %313 {offsets = [0, 0], sizes = [8, 8], strides = [1, 1]} : vector<8x16xf32> to vector<8x8xf32>
    %316 = vector.extract_strided_slice %311 {offsets = [0, 0], sizes = [8, 8], strides = [1, 1]} : vector<8x16xf32> to vector<8x8xf32>
    %cst_127 = arith.constant dense<0.000000e+00> : vector<8x8xf32>
    %317 = tpu.matmul %315, %316, %cst_127 {dimension_numbers = #tpu.dot_dimension_numbers<[1], [1], [0], [0], [0, 0, 1, 0], [], []>} : vector<8x8xf32>, vector<8x8xf32>, vector<8x8xf32> -> vector<8x8xf32>
    %318 = arith.addf %317, %314 : vector<8x8xf32>
    %cst_128 = arith.constant dense<0xFF800000> : vector<8xf32>
    %319 = vector.multi_reduction <maximumf>, %318, %cst_128 [1] : vector<8x8xf32> to vector<8xf32>
    %320 = vector.shape_cast %319 : vector<8xf32> to vector<8x1xf32>
    %321 = vector.broadcast %320 : vector<8x1xf32> to vector<8x8xf32>
    %322 = arith.subf %318, %321 : vector<8x8xf32>
    %323 = math.exp %322 : vector<8x8xf32>
    %cst_129 = arith.constant dense<0.000000e+00> : vector<8xf32>
    %324 = vector.multi_reduction <add>, %323, %cst_129 [1] : vector<8x8xf32> to vector<8xf32>
    %325 = vector.shape_cast %324 : vector<8xf32> to vector<8x1xf32>
    %326 = tpu.reciprocal %325 {approx = true} : vector<8x1xf32> -> vector<8x1xf32>
    %327 = vector.broadcast %326 : vector<8x1xf32> to vector<8x8xf32>
    %328 = arith.mulf %323, %327 : vector<8x8xf32>
    %329 = vector.extract_strided_slice %311 {offsets = [0, 0], sizes = [8, 8], strides = [1, 1]} : vector<8x16xf32> to vector<8x8xf32>
    %cst_130 = arith.constant dense<0.000000e+00> : vector<8x8xf32>
    %330 = tpu.matmul %328, %329, %cst_130 {dimension_numbers = #tpu.dot_dimension_numbers<[1], [0], [0], [1], [0, 0, 1, 1], [], []>} : vector<8x8xf32>, vector<8x8xf32>, vector<8x8xf32> -> vector<8x8xf32>
    %331 = vector.extract_strided_slice %313 {offsets = [0, 8], sizes = [8, 8], strides = [1, 1]} : vector<8x16xf32> to vector<8x8xf32>
    %332 = vector.extract_strided_slice %311 {offsets = [0, 8], sizes = [8, 8], strides = [1, 1]} : vector<8x16xf32> to vector<8x8xf32>
    %cst_131 = arith.constant dense<0.000000e+00> : vector<8x8xf32>
    %333 = tpu.matmul %331, %332, %cst_131 {dimension_numbers = #tpu.dot_dimension_numbers<[1], [1], [0], [0], [0, 0, 1, 0], [], []>} : vector<8x8xf32>, vector<8x8xf32>, vector<8x8xf32> -> vector<8x8xf32>
    %334 = arith.addf %333, %314 : vector<8x8xf32>
    %cst_132 = arith.constant dense<0xFF800000> : vector<8xf32>
    %335 = vector.multi_reduction <maximumf>, %334, %cst_132 [1] : vector<8x8xf32> to vector<8xf32>
    %336 = vector.shape_cast %335 : vector<8xf32> to vector<8x1xf32>
    %337 = vector.broadcast %336 : vector<8x1xf32> to vector<8x8xf32>
    %338 = arith.subf %334, %337 : vector<8x8xf32>
    %339 = math.exp %338 : vector<8x8xf32>
    %cst_133 = arith.constant dense<0.000000e+00> : vector<8xf32>
    %340 = vector.multi_reduction <add>, %339, %cst_133 [1] : vector<8x8xf32> to vector<8xf32>
    %341 = vector.shape_cast %340 : vector<8xf32> to vector<8x1xf32>
    %342 = tpu.reciprocal %341 {approx = true} : vector<8x1xf32> -> vector<8x1xf32>
    %343 = vector.broadcast %342 : vector<8x1xf32> to vector<8x8xf32>
    %344 = arith.mulf %339, %343 : vector<8x8xf32>
    %345 = vector.extract_strided_slice %311 {offsets = [0, 8], sizes = [8, 8], strides = [1, 1]} : vector<8x16xf32> to vector<8x8xf32>
    %cst_134 = arith.constant dense<0.000000e+00> : vector<8x8xf32>
    %346 = tpu.matmul %344, %345, %cst_134 {dimension_numbers = #tpu.dot_dimension_numbers<[1], [0], [0], [1], [0, 0, 1, 1], [], []>} : vector<8x8xf32>, vector<8x8xf32>, vector<8x8xf32> -> vector<8x8xf32>
    %347 = tpu.concatenate %330, %346 in 1 : vector<8x8xf32>, vector<8x8xf32> -> vector<8x16xf32>
    %c432 = arith.constant 432 : index
    %c0_135 = arith.constant 0 : index
    %348 = vector.load %arg2[%c432, %c0_135] : memref<1264x128xf32, #tpu.memory_space<vmem>>, vector<16x16xf32>
    %cst_136 = arith.constant dense<0.000000e+00> : vector<8x16xf32>
    %349 = tpu.matmul %347, %348, %cst_136 {dimension_numbers = #tpu.dot_dimension_numbers<[1], [0], [0], [1], [0, 0, 1, 1], [], []>} : vector<8x16xf32>, vector<16x16xf32>, vector<8x16xf32> -> vector<8x16xf32>
    %c424 = arith.constant 424 : index
    %c0_137 = arith.constant 0 : index
    %350 = vector.load %arg2[%c424, %c0_137] : memref<1264x128xf32, #tpu.memory_space<vmem>>, vector<1x16xf32>
    %351 = vector.broadcast %350 : vector<1x16xf32> to vector<8x16xf32>
    %352 = arith.addf %349, %351 : vector<8x16xf32>
    %353 = arith.addf %155, %352 : vector<8x16xf32>
    %cst_138 = arith.constant dense<0.000000e+00> : vector<8xf32>
    %354 = vector.multi_reduction <add>, %353, %cst_138 [1] : vector<8x16xf32> to vector<8xf32>
    %355 = vector.shape_cast %354 : vector<8xf32> to vector<8x1xf32>
    %cst_139 = arith.constant 1.600000e+01 : f32
    %356 = vector.broadcast %cst_139 : f32 to vector<8x1xf32>
    %357 = arith.divf %355, %356 : vector<8x1xf32>
    %358 = vector.broadcast %357 : vector<8x1xf32> to vector<8x16xf32>
    %359 = arith.subf %353, %358 : vector<8x16xf32>
    %360 = arith.mulf %359, %359 : vector<8x16xf32>
    %cst_140 = arith.constant dense<0.000000e+00> : vector<8xf32>
    %361 = vector.multi_reduction <add>, %360, %cst_140 [1] : vector<8x16xf32> to vector<8xf32>
    %362 = vector.shape_cast %361 : vector<8xf32> to vector<8x1xf32>
    %cst_141 = arith.constant 1.600000e+01 : f32
    %363 = vector.broadcast %cst_141 : f32 to vector<8x1xf32>
    %364 = arith.divf %362, %363 : vector<8x1xf32>
    %cst_142 = arith.constant 9.99999974E-6 : f32
    %365 = vector.broadcast %cst_142 : f32 to vector<8x1xf32>
    %366 = arith.addf %364, %365 : vector<8x1xf32>
    %367 = math.rsqrt %366 : vector<8x1xf32>
    %368 = vector.broadcast %367 : vector<8x1xf32> to vector<8x16xf32>
    %369 = arith.mulf %359, %368 : vector<8x16xf32>
    %c368 = arith.constant 368 : index
    %c0_143 = arith.constant 0 : index
    %370 = vector.load %arg2[%c368, %c0_143] : memref<1264x128xf32, #tpu.memory_space<vmem>>, vector<1x16xf32>
    %371 = vector.broadcast %370 : vector<1x16xf32> to vector<8x16xf32>
    %372 = arith.mulf %369, %371 : vector<8x16xf32>
    %c360 = arith.constant 360 : index
    %c0_144 = arith.constant 0 : index
    %373 = vector.load %arg2[%c360, %c0_144] : memref<1264x128xf32, #tpu.memory_space<vmem>>, vector<1x16xf32>
    %374 = vector.broadcast %373 : vector<1x16xf32> to vector<8x16xf32>
    %375 = arith.addf %372, %374 : vector<8x16xf32>
    %c376 = arith.constant 376 : index
    %c0_145 = arith.constant 0 : index
    %376 = vector.load %arg2[%c376, %c0_145] : memref<1264x128xf32, #tpu.memory_space<vmem>>, vector<16x32xf32>
    %cst_146 = arith.constant dense<0.000000e+00> : vector<8x32xf32>
    %377 = tpu.matmul %375, %376, %cst_146 {dimension_numbers = #tpu.dot_dimension_numbers<[1], [0], [0], [1], [0, 0, 1, 1], [], []>} : vector<8x16xf32>, vector<16x32xf32>, vector<8x32xf32> -> vector<8x32xf32>
    %c344 = arith.constant 344 : index
    %c0_147 = arith.constant 0 : index
    %378 = vector.load %arg2[%c344, %c0_147] : memref<1264x128xf32, #tpu.memory_space<vmem>>, vector<1x32xf32>
    %379 = vector.broadcast %378 : vector<1x32xf32> to vector<8x32xf32>
    %380 = arith.addf %377, %379 : vector<8x32xf32>
    %cst_148 = arith.constant 5.000000e-01 : f32
    %381 = vector.broadcast %cst_148 : f32 to vector<8x32xf32>
    %382 = arith.mulf %381, %380 : vector<8x32xf32>
    %cst_149 = arith.constant 0.707106769 : f32
    %383 = vector.broadcast %cst_149 : f32 to vector<8x32xf32>
    %384 = arith.mulf %380, %383 : vector<8x32xf32>
    %cst_150 = arith.constant 0.000000e+00 : f32
    %385 = vector.broadcast %cst_150 : f32 to vector<8x32xf32>
    %386 = arith.cmpf oge, %384, %385 : vector<8x32xf32>
    %cst_151 = arith.constant 1.000000e+00 : f32
    %cst_152 = arith.constant -1.000000e+00 : f32
    %387 = vector.broadcast %cst_151 : f32 to vector<8x32xf32>
    %388 = vector.broadcast %cst_152 : f32 to vector<8x32xf32>
    %389 = arith.select %386, %387, %388 : vector<8x32xi1>, vector<8x32xf32>
    %390 = math.absf %384 : vector<8x32xf32>
    %cst_153 = arith.constant 0.327591091 : f32
    %391 = vector.broadcast %cst_153 : f32 to vector<8x32xf32>
    %392 = arith.mulf %391, %390 : vector<8x32xf32>
    %cst_154 = arith.constant 1.000000e+00 : f32
    %393 = vector.broadcast %cst_154 : f32 to vector<8x32xf32>
    %394 = arith.addf %393, %392 : vector<8x32xf32>
    %cst_155 = arith.constant 1.000000e+00 : f32
    %395 = vector.broadcast %cst_155 : f32 to vector<8x32xf32>
    %396 = arith.divf %395, %394 : vector<8x32xf32>
    %cst_156 = arith.constant 1.06140542 : f32
    %397 = vector.broadcast %cst_156 : f32 to vector<8x32xf32>
    %398 = arith.mulf %397, %396 : vector<8x32xf32>
    %cst_157 = arith.constant -1.45315206 : f32
    %399 = vector.broadcast %cst_157 : f32 to vector<8x32xf32>
    %400 = arith.addf %398, %399 : vector<8x32xf32>
    %401 = arith.mulf %400, %396 : vector<8x32xf32>
    %cst_158 = arith.constant 1.42141378 : f32
    %402 = vector.broadcast %cst_158 : f32 to vector<8x32xf32>
    %403 = arith.addf %401, %402 : vector<8x32xf32>
    %404 = arith.mulf %403, %396 : vector<8x32xf32>
    %cst_159 = arith.constant -0.284496725 : f32
    %405 = vector.broadcast %cst_159 : f32 to vector<8x32xf32>
    %406 = arith.addf %404, %405 : vector<8x32xf32>
    %407 = arith.mulf %406, %396 : vector<8x32xf32>
    %cst_160 = arith.constant 0.254829586 : f32
    %408 = vector.broadcast %cst_160 : f32 to vector<8x32xf32>
    %409 = arith.addf %407, %408 : vector<8x32xf32>
    %410 = arith.mulf %409, %396 : vector<8x32xf32>
    %cst_161 = arith.constant 0.000000e+00 : f32
    %411 = vector.broadcast %cst_161 : f32 to vector<8x32xf32>
    %412 = arith.subf %411, %390 : vector<8x32xf32>
    %413 = arith.mulf %412, %390 : vector<8x32xf32>
    %414 = math.exp %413 : vector<8x32xf32>
    %415 = arith.mulf %410, %414 : vector<8x32xf32>
    %cst_162 = arith.constant 1.000000e+00 : f32
    %416 = vector.broadcast %cst_162 : f32 to vector<8x32xf32>
    %417 = arith.subf %416, %415 : vector<8x32xf32>
    %418 = arith.mulf %389, %417 : vector<8x32xf32>
    %cst_163 = arith.constant 1.000000e+00 : f32
    %419 = vector.broadcast %cst_163 : f32 to vector<8x32xf32>
    %420 = arith.addf %419, %418 : vector<8x32xf32>
    %421 = arith.mulf %382, %420 : vector<8x32xf32>
    %c392 = arith.constant 392 : index
    %c0_164 = arith.constant 0 : index
    %422 = vector.load %arg2[%c392, %c0_164] : memref<1264x128xf32, #tpu.memory_space<vmem>>, vector<32x16xf32>
    %cst_165 = arith.constant dense<0.000000e+00> : vector<8x16xf32>
    %423 = tpu.matmul %421, %422, %cst_165 {dimension_numbers = #tpu.dot_dimension_numbers<[1], [0], [0], [1], [0, 0, 1, 1], [], []>} : vector<8x32xf32>, vector<32x16xf32>, vector<8x16xf32> -> vector<8x16xf32>
    %c352 = arith.constant 352 : index
    %c0_166 = arith.constant 0 : index
    %424 = vector.load %arg2[%c352, %c0_166] : memref<1264x128xf32, #tpu.memory_space<vmem>>, vector<1x16xf32>
    %425 = vector.broadcast %424 : vector<1x16xf32> to vector<8x16xf32>
    %426 = arith.addf %423, %425 : vector<8x16xf32>
    %cst_167 = arith.constant 0.353553385 : f32
    %427 = vector.broadcast %cst_167 : f32 to vector<8x16xf32>
    %428 = arith.mulf %311, %427 : vector<8x16xf32>
    %c8 = arith.constant 8 : index
    %c0_168 = arith.constant 0 : index
    %429 = vector.load %arg2[%c8, %c0_168] : memref<1264x128xf32, #tpu.memory_space<vmem>>, vector<8x8xf32>
    %430 = vector.extract_strided_slice %428 {offsets = [0, 0], sizes = [8, 8], strides = [1, 1]} : vector<8x16xf32> to vector<8x8xf32>
    %431 = vector.extract_strided_slice %155 {offsets = [0, 0], sizes = [8, 8], strides = [1, 1]} : vector<8x16xf32> to vector<8x8xf32>
    %cst_169 = arith.constant dense<0.000000e+00> : vector<8x8xf32>
    %432 = tpu.matmul %430, %431, %cst_169 {dimension_numbers = #tpu.dot_dimension_numbers<[1], [1], [0], [0], [0, 0, 1, 0], [], []>} : vector<8x8xf32>, vector<8x8xf32>, vector<8x8xf32> -> vector<8x8xf32>
    %433 = arith.addf %432, %429 : vector<8x8xf32>
    %cst_170 = arith.constant dense<0xFF800000> : vector<8xf32>
    %434 = vector.multi_reduction <maximumf>, %433, %cst_170 [1] : vector<8x8xf32> to vector<8xf32>
    %435 = vector.shape_cast %434 : vector<8xf32> to vector<8x1xf32>
    %436 = vector.broadcast %435 : vector<8x1xf32> to vector<8x8xf32>
    %437 = arith.subf %433, %436 : vector<8x8xf32>
    %438 = math.exp %437 : vector<8x8xf32>
    %cst_171 = arith.constant dense<0.000000e+00> : vector<8xf32>
    %439 = vector.multi_reduction <add>, %438, %cst_171 [1] : vector<8x8xf32> to vector<8xf32>
    %440 = vector.shape_cast %439 : vector<8xf32> to vector<8x1xf32>
    %441 = tpu.reciprocal %440 {approx = true} : vector<8x1xf32> -> vector<8x1xf32>
    %442 = vector.broadcast %441 : vector<8x1xf32> to vector<8x8xf32>
    %443 = arith.mulf %438, %442 : vector<8x8xf32>
    %444 = vector.extract_strided_slice %155 {offsets = [0, 0], sizes = [8, 8], strides = [1, 1]} : vector<8x16xf32> to vector<8x8xf32>
    %cst_172 = arith.constant dense<0.000000e+00> : vector<8x8xf32>
    %445 = tpu.matmul %443, %444, %cst_172 {dimension_numbers = #tpu.dot_dimension_numbers<[1], [0], [0], [1], [0, 0, 1, 1], [], []>} : vector<8x8xf32>, vector<8x8xf32>, vector<8x8xf32> -> vector<8x8xf32>
    %446 = vector.extract_strided_slice %428 {offsets = [0, 8], sizes = [8, 8], strides = [1, 1]} : vector<8x16xf32> to vector<8x8xf32>
    %447 = vector.extract_strided_slice %155 {offsets = [0, 8], sizes = [8, 8], strides = [1, 1]} : vector<8x16xf32> to vector<8x8xf32>
    %cst_173 = arith.constant dense<0.000000e+00> : vector<8x8xf32>
    %448 = tpu.matmul %446, %447, %cst_173 {dimension_numbers = #tpu.dot_dimension_numbers<[1], [1], [0], [0], [0, 0, 1, 0], [], []>} : vector<8x8xf32>, vector<8x8xf32>, vector<8x8xf32> -> vector<8x8xf32>
    %449 = arith.addf %448, %429 : vector<8x8xf32>
    %cst_174 = arith.constant dense<0xFF800000> : vector<8xf32>
    %450 = vector.multi_reduction <maximumf>, %449, %cst_174 [1] : vector<8x8xf32> to vector<8xf32>
    %451 = vector.shape_cast %450 : vector<8xf32> to vector<8x1xf32>
    %452 = vector.broadcast %451 : vector<8x1xf32> to vector<8x8xf32>
    %453 = arith.subf %449, %452 : vector<8x8xf32>
    %454 = math.exp %453 : vector<8x8xf32>
    %cst_175 = arith.constant dense<0.000000e+00> : vector<8xf32>
    %455 = vector.multi_reduction <add>, %454, %cst_175 [1] : vector<8x8xf32> to vector<8xf32>
    %456 = vector.shape_cast %455 : vector<8xf32> to vector<8x1xf32>
    %457 = tpu.reciprocal %456 {approx = true} : vector<8x1xf32> -> vector<8x1xf32>
    %458 = vector.broadcast %457 : vector<8x1xf32> to vector<8x8xf32>
    %459 = arith.mulf %454, %458 : vector<8x8xf32>
    %460 = vector.extract_strided_slice %155 {offsets = [0, 8], sizes = [8, 8], strides = [1, 1]} : vector<8x16xf32> to vector<8x8xf32>
    %cst_176 = arith.constant dense<0.000000e+00> : vector<8x8xf32>
    %461 = tpu.matmul %459, %460, %cst_176 {dimension_numbers = #tpu.dot_dimension_numbers<[1], [0], [0], [1], [0, 0, 1, 1], [], []>} : vector<8x8xf32>, vector<8x8xf32>, vector<8x8xf32> -> vector<8x8xf32>
    %462 = tpu.concatenate %445, %461 in 1 : vector<8x8xf32>, vector<8x8xf32> -> vector<8x16xf32>
    %c672 = arith.constant 672 : index
    %c0_177 = arith.constant 0 : index
    %463 = vector.load %arg2[%c672, %c0_177] : memref<1264x128xf32, #tpu.memory_space<vmem>>, vector<16x16xf32>
    %cst_178 = arith.constant dense<0.000000e+00> : vector<8x16xf32>
    %464 = tpu.matmul %462, %463, %cst_178 {dimension_numbers = #tpu.dot_dimension_numbers<[1], [0], [0], [1], [0, 0, 1, 1], [], []>} : vector<8x16xf32>, vector<16x16xf32>, vector<8x16xf32> -> vector<8x16xf32>
    %c664 = arith.constant 664 : index
    %c0_179 = arith.constant 0 : index
    %465 = vector.load %arg2[%c664, %c0_179] : memref<1264x128xf32, #tpu.memory_space<vmem>>, vector<1x16xf32>
    %466 = vector.broadcast %465 : vector<1x16xf32> to vector<8x16xf32>
    %467 = arith.addf %464, %466 : vector<8x16xf32>
    %468 = arith.addf %311, %467 : vector<8x16xf32>
    %cst_180 = arith.constant dense<0.000000e+00> : vector<8xf32>
    %469 = vector.multi_reduction <add>, %468, %cst_180 [1] : vector<8x16xf32> to vector<8xf32>
    %470 = vector.shape_cast %469 : vector<8xf32> to vector<8x1xf32>
    %cst_181 = arith.constant 1.600000e+01 : f32
    %471 = vector.broadcast %cst_181 : f32 to vector<8x1xf32>
    %472 = arith.divf %470, %471 : vector<8x1xf32>
    %473 = vector.broadcast %472 : vector<8x1xf32> to vector<8x16xf32>
    %474 = arith.subf %468, %473 : vector<8x16xf32>
    %475 = arith.mulf %474, %474 : vector<8x16xf32>
    %cst_182 = arith.constant dense<0.000000e+00> : vector<8xf32>
    %476 = vector.multi_reduction <add>, %475, %cst_182 [1] : vector<8x16xf32> to vector<8xf32>
    %477 = vector.shape_cast %476 : vector<8xf32> to vector<8x1xf32>
    %cst_183 = arith.constant 1.600000e+01 : f32
    %478 = vector.broadcast %cst_183 : f32 to vector<8x1xf32>
    %479 = arith.divf %477, %478 : vector<8x1xf32>
    %cst_184 = arith.constant 9.99999974E-6 : f32
    %480 = vector.broadcast %cst_184 : f32 to vector<8x1xf32>
    %481 = arith.addf %479, %480 : vector<8x1xf32>
    %482 = math.rsqrt %481 : vector<8x1xf32>
    %483 = vector.broadcast %482 : vector<8x1xf32> to vector<8x16xf32>
    %484 = arith.mulf %474, %483 : vector<8x16xf32>
    %c608 = arith.constant 608 : index
    %c0_185 = arith.constant 0 : index
    %485 = vector.load %arg2[%c608, %c0_185] : memref<1264x128xf32, #tpu.memory_space<vmem>>, vector<1x16xf32>
    %486 = vector.broadcast %485 : vector<1x16xf32> to vector<8x16xf32>
    %487 = arith.mulf %484, %486 : vector<8x16xf32>
    %c600 = arith.constant 600 : index
    %c0_186 = arith.constant 0 : index
    %488 = vector.load %arg2[%c600, %c0_186] : memref<1264x128xf32, #tpu.memory_space<vmem>>, vector<1x16xf32>
    %489 = vector.broadcast %488 : vector<1x16xf32> to vector<8x16xf32>
    %490 = arith.addf %487, %489 : vector<8x16xf32>
    %c616 = arith.constant 616 : index
    %c0_187 = arith.constant 0 : index
    %491 = vector.load %arg2[%c616, %c0_187] : memref<1264x128xf32, #tpu.memory_space<vmem>>, vector<16x32xf32>
    %cst_188 = arith.constant dense<0.000000e+00> : vector<8x32xf32>
    %492 = tpu.matmul %490, %491, %cst_188 {dimension_numbers = #tpu.dot_dimension_numbers<[1], [0], [0], [1], [0, 0, 1, 1], [], []>} : vector<8x16xf32>, vector<16x32xf32>, vector<8x32xf32> -> vector<8x32xf32>
    %c584 = arith.constant 584 : index
    %c0_189 = arith.constant 0 : index
    %493 = vector.load %arg2[%c584, %c0_189] : memref<1264x128xf32, #tpu.memory_space<vmem>>, vector<1x32xf32>
    %494 = vector.broadcast %493 : vector<1x32xf32> to vector<8x32xf32>
    %495 = arith.addf %492, %494 : vector<8x32xf32>
    %cst_190 = arith.constant 5.000000e-01 : f32
    %496 = vector.broadcast %cst_190 : f32 to vector<8x32xf32>
    %497 = arith.mulf %496, %495 : vector<8x32xf32>
    %cst_191 = arith.constant 0.707106769 : f32
    %498 = vector.broadcast %cst_191 : f32 to vector<8x32xf32>
    %499 = arith.mulf %495, %498 : vector<8x32xf32>
    %cst_192 = arith.constant 0.000000e+00 : f32
    %500 = vector.broadcast %cst_192 : f32 to vector<8x32xf32>
    %501 = arith.cmpf oge, %499, %500 : vector<8x32xf32>
    %cst_193 = arith.constant 1.000000e+00 : f32
    %cst_194 = arith.constant -1.000000e+00 : f32
    %502 = vector.broadcast %cst_193 : f32 to vector<8x32xf32>
    %503 = vector.broadcast %cst_194 : f32 to vector<8x32xf32>
    %504 = arith.select %501, %502, %503 : vector<8x32xi1>, vector<8x32xf32>
    %505 = math.absf %499 : vector<8x32xf32>
    %cst_195 = arith.constant 0.327591091 : f32
    %506 = vector.broadcast %cst_195 : f32 to vector<8x32xf32>
    %507 = arith.mulf %506, %505 : vector<8x32xf32>
    %cst_196 = arith.constant 1.000000e+00 : f32
    %508 = vector.broadcast %cst_196 : f32 to vector<8x32xf32>
    %509 = arith.addf %508, %507 : vector<8x32xf32>
    %cst_197 = arith.constant 1.000000e+00 : f32
    %510 = vector.broadcast %cst_197 : f32 to vector<8x32xf32>
    %511 = arith.divf %510, %509 : vector<8x32xf32>
    %cst_198 = arith.constant 1.06140542 : f32
    %512 = vector.broadcast %cst_198 : f32 to vector<8x32xf32>
    %513 = arith.mulf %512, %511 : vector<8x32xf32>
    %cst_199 = arith.constant -1.45315206 : f32
    %514 = vector.broadcast %cst_199 : f32 to vector<8x32xf32>
    %515 = arith.addf %513, %514 : vector<8x32xf32>
    %516 = arith.mulf %515, %511 : vector<8x32xf32>
    %cst_200 = arith.constant 1.42141378 : f32
    %517 = vector.broadcast %cst_200 : f32 to vector<8x32xf32>
    %518 = arith.addf %516, %517 : vector<8x32xf32>
    %519 = arith.mulf %518, %511 : vector<8x32xf32>
    %cst_201 = arith.constant -0.284496725 : f32
    %520 = vector.broadcast %cst_201 : f32 to vector<8x32xf32>
    %521 = arith.addf %519, %520 : vector<8x32xf32>
    %522 = arith.mulf %521, %511 : vector<8x32xf32>
    %cst_202 = arith.constant 0.254829586 : f32
    %523 = vector.broadcast %cst_202 : f32 to vector<8x32xf32>
    %524 = arith.addf %522, %523 : vector<8x32xf32>
    %525 = arith.mulf %524, %511 : vector<8x32xf32>
    %cst_203 = arith.constant 0.000000e+00 : f32
    %526 = vector.broadcast %cst_203 : f32 to vector<8x32xf32>
    %527 = arith.subf %526, %505 : vector<8x32xf32>
    %528 = arith.mulf %527, %505 : vector<8x32xf32>
    %529 = math.exp %528 : vector<8x32xf32>
    %530 = arith.mulf %525, %529 : vector<8x32xf32>
    %cst_204 = arith.constant 1.000000e+00 : f32
    %531 = vector.broadcast %cst_204 : f32 to vector<8x32xf32>
    %532 = arith.subf %531, %530 : vector<8x32xf32>
    %533 = arith.mulf %504, %532 : vector<8x32xf32>
    %cst_205 = arith.constant 1.000000e+00 : f32
    %534 = vector.broadcast %cst_205 : f32 to vector<8x32xf32>
    %535 = arith.addf %534, %533 : vector<8x32xf32>
    %536 = arith.mulf %497, %535 : vector<8x32xf32>
    %c632 = arith.constant 632 : index
    %c0_206 = arith.constant 0 : index
    %537 = vector.load %arg2[%c632, %c0_206] : memref<1264x128xf32, #tpu.memory_space<vmem>>, vector<32x16xf32>
    %cst_207 = arith.constant dense<0.000000e+00> : vector<8x16xf32>
    %538 = tpu.matmul %536, %537, %cst_207 {dimension_numbers = #tpu.dot_dimension_numbers<[1], [0], [0], [1], [0, 0, 1, 1], [], []>} : vector<8x32xf32>, vector<32x16xf32>, vector<8x16xf32> -> vector<8x16xf32>
    %c592 = arith.constant 592 : index
    %c0_208 = arith.constant 0 : index
    %539 = vector.load %arg2[%c592, %c0_208] : memref<1264x128xf32, #tpu.memory_space<vmem>>, vector<1x16xf32>
    %540 = vector.broadcast %539 : vector<1x16xf32> to vector<8x16xf32>
    %541 = arith.addf %538, %540 : vector<8x16xf32>
    %c32 = arith.constant 32 : index
    %c0_209 = arith.constant 0 : index
    %542 = vector.load %arg2[%c32, %c0_209] : memref<1264x128xf32, #tpu.memory_space<vmem>>, vector<16x8xf32>
    %c48 = arith.constant 48 : index
    %c0_210 = arith.constant 0 : index
    %543 = vector.load %arg2[%c48, %c0_210] : memref<1264x128xf32, #tpu.memory_space<vmem>>, vector<16x8xf32>
    %cst_211 = arith.constant dense<0.000000e+00> : vector<8x8xf32>
    %544 = tpu.matmul %426, %542, %cst_211 {dimension_numbers = #tpu.dot_dimension_numbers<[1], [0], [0], [1], [0, 0, 1, 1], [], []>} : vector<8x16xf32>, vector<16x8xf32>, vector<8x8xf32> -> vector<8x8xf32>
    %cst_212 = arith.constant dense<0.000000e+00> : vector<8x8xf32>
    %545 = tpu.matmul %426, %543, %cst_212 {dimension_numbers = #tpu.dot_dimension_numbers<[1], [0], [0], [1], [0, 0, 1, 1], [], []>} : vector<8x16xf32>, vector<16x8xf32>, vector<8x8xf32> -> vector<8x8xf32>
    %546 = arith.maximumf %544, %545 : vector<8x8xf32>
    %c792 = arith.constant 792 : index
    %c0_213 = arith.constant 0 : index
    %547 = vector.load %arg2[%c792, %c0_213] : memref<1264x128xf32, #tpu.memory_space<vmem>>, vector<8x48xf32>
    %cst_214 = arith.constant dense<0.000000e+00> : vector<8x48xf32>
    %548 = tpu.matmul %546, %547, %cst_214 {dimension_numbers = #tpu.dot_dimension_numbers<[1], [0], [0], [1], [0, 0, 1, 1], [], []>} : vector<8x8xf32>, vector<8x48xf32>, vector<8x48xf32> -> vector<8x48xf32>
    %549 = vector.extract_strided_slice %548 {offsets = [0, 0], sizes = [8, 16], strides = [1, 1]} : vector<8x48xf32> to vector<8x16xf32>
    %550 = vector.extract_strided_slice %548 {offsets = [0, 16], sizes = [8, 16], strides = [1, 1]} : vector<8x48xf32> to vector<8x16xf32>
    %551 = vector.extract_strided_slice %548 {offsets = [0, 32], sizes = [8, 16], strides = [1, 1]} : vector<8x48xf32> to vector<8x16xf32>
    %c16_215 = arith.constant 16 : index
    %c0_216 = arith.constant 0 : index
    %552 = vector.load %arg2[%c16_215, %c0_216] : memref<1264x128xf32, #tpu.memory_space<vmem>>, vector<8x8xf32>
    %553 = vector.extract_strided_slice %549 {offsets = [0, 0], sizes = [8, 8], strides = [1, 1]} : vector<8x16xf32> to vector<8x8xf32>
    %554 = vector.extract_strided_slice %550 {offsets = [0, 0], sizes = [8, 8], strides = [1, 1]} : vector<8x16xf32> to vector<8x8xf32>
    %cst_217 = arith.constant dense<0.000000e+00> : vector<8x8xf32>
    %555 = tpu.matmul %553, %554, %cst_217 {dimension_numbers = #tpu.dot_dimension_numbers<[1], [1], [0], [0], [0, 0, 1, 0], [], []>} : vector<8x8xf32>, vector<8x8xf32>, vector<8x8xf32> -> vector<8x8xf32>
    %556 = arith.addf %555, %552 : vector<8x8xf32>
    %cst_218 = arith.constant dense<0xFF800000> : vector<8xf32>
    %557 = vector.multi_reduction <maximumf>, %556, %cst_218 [1] : vector<8x8xf32> to vector<8xf32>
    %558 = vector.shape_cast %557 : vector<8xf32> to vector<8x1xf32>
    %559 = vector.broadcast %558 : vector<8x1xf32> to vector<8x8xf32>
    %560 = arith.subf %556, %559 : vector<8x8xf32>
    %561 = math.exp %560 : vector<8x8xf32>
    %cst_219 = arith.constant dense<0.000000e+00> : vector<8xf32>
    %562 = vector.multi_reduction <add>, %561, %cst_219 [1] : vector<8x8xf32> to vector<8xf32>
    %563 = vector.shape_cast %562 : vector<8xf32> to vector<8x1xf32>
    %564 = tpu.reciprocal %563 {approx = true} : vector<8x1xf32> -> vector<8x1xf32>
    %565 = vector.broadcast %564 : vector<8x1xf32> to vector<8x8xf32>
    %566 = arith.mulf %561, %565 : vector<8x8xf32>
    %567 = vector.extract_strided_slice %551 {offsets = [0, 0], sizes = [8, 8], strides = [1, 1]} : vector<8x16xf32> to vector<8x8xf32>
    %cst_220 = arith.constant dense<0.000000e+00> : vector<8x8xf32>
    %568 = tpu.matmul %566, %567, %cst_220 {dimension_numbers = #tpu.dot_dimension_numbers<[1], [0], [0], [1], [0, 0, 1, 1], [], []>} : vector<8x8xf32>, vector<8x8xf32>, vector<8x8xf32> -> vector<8x8xf32>
    %569 = vector.extract_strided_slice %549 {offsets = [0, 8], sizes = [8, 8], strides = [1, 1]} : vector<8x16xf32> to vector<8x8xf32>
    %570 = vector.extract_strided_slice %550 {offsets = [0, 8], sizes = [8, 8], strides = [1, 1]} : vector<8x16xf32> to vector<8x8xf32>
    %cst_221 = arith.constant dense<0.000000e+00> : vector<8x8xf32>
    %571 = tpu.matmul %569, %570, %cst_221 {dimension_numbers = #tpu.dot_dimension_numbers<[1], [1], [0], [0], [0, 0, 1, 0], [], []>} : vector<8x8xf32>, vector<8x8xf32>, vector<8x8xf32> -> vector<8x8xf32>
    %572 = arith.addf %571, %552 : vector<8x8xf32>
    %cst_222 = arith.constant dense<0xFF800000> : vector<8xf32>
    %573 = vector.multi_reduction <maximumf>, %572, %cst_222 [1] : vector<8x8xf32> to vector<8xf32>
    %574 = vector.shape_cast %573 : vector<8xf32> to vector<8x1xf32>
    %575 = vector.broadcast %574 : vector<8x1xf32> to vector<8x8xf32>
    %576 = arith.subf %572, %575 : vector<8x8xf32>
    %577 = math.exp %576 : vector<8x8xf32>
    %cst_223 = arith.constant dense<0.000000e+00> : vector<8xf32>
    %578 = vector.multi_reduction <add>, %577, %cst_223 [1] : vector<8x8xf32> to vector<8xf32>
    %579 = vector.shape_cast %578 : vector<8xf32> to vector<8x1xf32>
    %580 = tpu.reciprocal %579 {approx = true} : vector<8x1xf32> -> vector<8x1xf32>
    %581 = vector.broadcast %580 : vector<8x1xf32> to vector<8x8xf32>
    %582 = arith.mulf %577, %581 : vector<8x8xf32>
    %583 = vector.extract_strided_slice %551 {offsets = [0, 8], sizes = [8, 8], strides = [1, 1]} : vector<8x16xf32> to vector<8x8xf32>
    %cst_224 = arith.constant dense<0.000000e+00> : vector<8x8xf32>
    %584 = tpu.matmul %582, %583, %cst_224 {dimension_numbers = #tpu.dot_dimension_numbers<[1], [0], [0], [1], [0, 0, 1, 1], [], []>} : vector<8x8xf32>, vector<8x8xf32>, vector<8x8xf32> -> vector<8x8xf32>
    %585 = tpu.concatenate %568, %584 in 1 : vector<8x8xf32>, vector<8x8xf32> -> vector<8x16xf32>
    %c776 = arith.constant 776 : index
    %c0_225 = arith.constant 0 : index
    %586 = vector.load %arg2[%c776, %c0_225] : memref<1264x128xf32, #tpu.memory_space<vmem>>, vector<16x8xf32>
    %cst_226 = arith.constant dense<0.000000e+00> : vector<8x8xf32>
    %587 = tpu.matmul %585, %586, %cst_226 {dimension_numbers = #tpu.dot_dimension_numbers<[1], [0], [0], [1], [0, 0, 1, 1], [], []>} : vector<8x16xf32>, vector<16x8xf32>, vector<8x8xf32> -> vector<8x8xf32>
    %c768 = arith.constant 768 : index
    %c0_227 = arith.constant 0 : index
    %588 = vector.load %arg2[%c768, %c0_227] : memref<1264x128xf32, #tpu.memory_space<vmem>>, vector<1x8xf32>
    %589 = vector.broadcast %588 : vector<1x8xf32> to vector<8x8xf32>
    %590 = arith.addf %587, %589 : vector<8x8xf32>
    %591 = arith.addf %590, %546 : vector<8x8xf32>
    %cst_228 = arith.constant 0.000000e+00 : f32
    %592 = vector.broadcast %cst_228 : f32 to vector<8x1xf32>
    %593 = tpu.concatenate %592, %426, %592 in 1 : vector<8x1xf32>, vector<8x16xf32>, vector<8x1xf32> -> vector<8x18xf32>
    %594 = vector.extract_strided_slice %593 {offsets = [0, 0], sizes = [8, 16], strides = [1, 1]} : vector<8x18xf32> to vector<8x16xf32>
    %595 = vector.extract_strided_slice %593 {offsets = [0, 1], sizes = [8, 16], strides = [1, 1]} : vector<8x18xf32> to vector<8x16xf32>
    %596 = vector.extract_strided_slice %593 {offsets = [0, 2], sizes = [8, 16], strides = [1, 1]} : vector<8x18xf32> to vector<8x16xf32>
    %597 = tpu.concatenate %594, %595, %596 in 0 : vector<8x16xf32>, vector<8x16xf32>, vector<8x16xf32> -> vector<24x16xf32>
    %c808 = arith.constant 808 : index
    %c0_229 = arith.constant 0 : index
    %598 = vector.load %arg2[%c808, %c0_229] : memref<1264x128xf32, #tpu.memory_space<vmem>>, vector<8x24xf32>
    %cst_230 = arith.constant dense<0.000000e+00> : vector<8x16xf32>
    %599 = tpu.matmul %598, %597, %cst_230 {dimension_numbers = #tpu.dot_dimension_numbers<[1], [0], [0], [1], [0, 0, 1, 1], [], []>} : vector<8x24xf32>, vector<24x16xf32>, vector<8x16xf32> -> vector<8x16xf32>
    %c800 = arith.constant 800 : index
    %c0_231 = arith.constant 0 : index
    %600 = vector.load %arg2[%c800, %c0_231] : memref<1264x128xf32, #tpu.memory_space<vmem>>, vector<8x1xf32>
    %601 = vector.broadcast %600 : vector<8x1xf32> to vector<8x16xf32>
    %602 = arith.addf %599, %601 : vector<8x16xf32>
    %cst_232 = arith.constant 0.000000e+00 : f32
    %603 = vector.broadcast %cst_232 : f32 to vector<8x16xf32>
    %604 = arith.cmpf ogt, %602, %603 : vector<8x16xf32>
    %cst_233 = arith.constant 0.000000e+00 : f32
    %605 = vector.broadcast %cst_233 : f32 to vector<8x16xf32>
    %606 = arith.minimumf %602, %605 : vector<8x16xf32>
    %607 = math.exp %606 : vector<8x16xf32>
    %cst_234 = arith.constant 1.000000e+00 : f32
    %608 = vector.broadcast %cst_234 : f32 to vector<8x16xf32>
    %609 = arith.subf %607, %608 : vector<8x16xf32>
    %610 = arith.select %604, %602, %609 : vector<8x16xi1>, vector<8x16xf32>
    %cst_235 = arith.constant dense<0.000000e+00> : vector<8x8xf32>
    %611 = tpu.matmul %610, %542, %cst_235 {dimension_numbers = #tpu.dot_dimension_numbers<[1], [0], [0], [1], [0, 0, 1, 1], [], []>} : vector<8x16xf32>, vector<16x8xf32>, vector<8x8xf32> -> vector<8x8xf32>
    %cst_236 = arith.constant dense<0.000000e+00> : vector<8x8xf32>
    %612 = tpu.matmul %610, %543, %cst_236 {dimension_numbers = #tpu.dot_dimension_numbers<[1], [0], [0], [1], [0, 0, 1, 1], [], []>} : vector<8x16xf32>, vector<16x8xf32>, vector<8x8xf32> -> vector<8x8xf32>
    %613 = arith.maximumf %611, %612 : vector<8x8xf32>
    %614 = arith.mulf %613, %613 : vector<8x8xf32>
    %cst_237 = arith.constant dense<0.000000e+00> : vector<8xf32>
    %615 = vector.multi_reduction <add>, %614, %cst_237 [1] : vector<8x8xf32> to vector<8xf32>
    %616 = vector.shape_cast %615 : vector<8xf32> to vector<8x1xf32>
    %cst_238 = arith.constant 8.000000e+00 : f32
    %617 = vector.broadcast %cst_238 : f32 to vector<8x1xf32>
    %618 = arith.divf %616, %617 : vector<8x1xf32>
    %619 = math.log %618 : vector<8x1xf32>
    %cst_239 = arith.constant dense<0.000000e+00> : vector<8xf32>
    %620 = vector.multi_reduction <add>, %591, %cst_239 [1] : vector<8x8xf32> to vector<8xf32>
    %621 = vector.shape_cast %620 : vector<8xf32> to vector<8x1xf32>
    %cst_240 = arith.constant 8.000000e+00 : f32
    %622 = vector.broadcast %cst_240 : f32 to vector<8x1xf32>
    %623 = arith.divf %621, %622 : vector<8x1xf32>
    %624 = vector.broadcast %623 : vector<8x1xf32> to vector<8x8xf32>
    %625 = arith.subf %591, %624 : vector<8x8xf32>
    %626 = arith.mulf %625, %625 : vector<8x8xf32>
    %cst_241 = arith.constant dense<0.000000e+00> : vector<8xf32>
    %627 = vector.multi_reduction <add>, %626, %cst_241 [1] : vector<8x8xf32> to vector<8xf32>
    %628 = vector.shape_cast %627 : vector<8xf32> to vector<8x1xf32>
    %cst_242 = arith.constant 8.000000e+00 : f32
    %629 = vector.broadcast %cst_242 : f32 to vector<8x1xf32>
    %630 = arith.divf %628, %629 : vector<8x1xf32>
    %cst_243 = arith.constant 9.99999974E-6 : f32
    %631 = vector.broadcast %cst_243 : f32 to vector<8x1xf32>
    %632 = arith.addf %630, %631 : vector<8x1xf32>
    %633 = math.rsqrt %632 : vector<8x1xf32>
    %634 = vector.broadcast %633 : vector<8x1xf32> to vector<8x8xf32>
    %635 = arith.mulf %625, %634 : vector<8x8xf32>
    %c944 = arith.constant 944 : index
    %c0_244 = arith.constant 0 : index
    %636 = vector.load %arg2[%c944, %c0_244] : memref<1264x128xf32, #tpu.memory_space<vmem>>, vector<1x8xf32>
    %637 = vector.broadcast %636 : vector<1x8xf32> to vector<8x8xf32>
    %638 = arith.mulf %635, %637 : vector<8x8xf32>
    %c936 = arith.constant 936 : index
    %c0_245 = arith.constant 0 : index
    %639 = vector.load %arg2[%c936, %c0_245] : memref<1264x128xf32, #tpu.memory_space<vmem>>, vector<1x8xf32>
    %640 = vector.broadcast %639 : vector<1x8xf32> to vector<8x8xf32>
    %641 = arith.addf %638, %640 : vector<8x8xf32>
    %c952 = arith.constant 952 : index
    %c0_246 = arith.constant 0 : index
    %642 = vector.load %arg2[%c952, %c0_246] : memref<1264x128xf32, #tpu.memory_space<vmem>>, vector<8x16xf32>
    %cst_247 = arith.constant dense<0.000000e+00> : vector<8x16xf32>
    %643 = tpu.matmul %641, %642, %cst_247 {dimension_numbers = #tpu.dot_dimension_numbers<[1], [0], [0], [1], [0, 0, 1, 1], [], []>} : vector<8x8xf32>, vector<8x16xf32>, vector<8x16xf32> -> vector<8x16xf32>
    %c920 = arith.constant 920 : index
    %c0_248 = arith.constant 0 : index
    %644 = vector.load %arg2[%c920, %c0_248] : memref<1264x128xf32, #tpu.memory_space<vmem>>, vector<1x16xf32>
    %645 = vector.broadcast %644 : vector<1x16xf32> to vector<8x16xf32>
    %646 = arith.addf %643, %645 : vector<8x16xf32>
    %cst_249 = arith.constant 5.000000e-01 : f32
    %647 = vector.broadcast %cst_249 : f32 to vector<8x16xf32>
    %648 = arith.mulf %647, %646 : vector<8x16xf32>
    %cst_250 = arith.constant 0.707106769 : f32
    %649 = vector.broadcast %cst_250 : f32 to vector<8x16xf32>
    %650 = arith.mulf %646, %649 : vector<8x16xf32>
    %cst_251 = arith.constant 0.000000e+00 : f32
    %651 = vector.broadcast %cst_251 : f32 to vector<8x16xf32>
    %652 = arith.cmpf oge, %650, %651 : vector<8x16xf32>
    %cst_252 = arith.constant 1.000000e+00 : f32
    %cst_253 = arith.constant -1.000000e+00 : f32
    %653 = vector.broadcast %cst_252 : f32 to vector<8x16xf32>
    %654 = vector.broadcast %cst_253 : f32 to vector<8x16xf32>
    %655 = arith.select %652, %653, %654 : vector<8x16xi1>, vector<8x16xf32>
    %656 = math.absf %650 : vector<8x16xf32>
    %cst_254 = arith.constant 0.327591091 : f32
    %657 = vector.broadcast %cst_254 : f32 to vector<8x16xf32>
    %658 = arith.mulf %657, %656 : vector<8x16xf32>
    %cst_255 = arith.constant 1.000000e+00 : f32
    %659 = vector.broadcast %cst_255 : f32 to vector<8x16xf32>
    %660 = arith.addf %659, %658 : vector<8x16xf32>
    %cst_256 = arith.constant 1.000000e+00 : f32
    %661 = vector.broadcast %cst_256 : f32 to vector<8x16xf32>
    %662 = arith.divf %661, %660 : vector<8x16xf32>
    %cst_257 = arith.constant 1.06140542 : f32
    %663 = vector.broadcast %cst_257 : f32 to vector<8x16xf32>
    %664 = arith.mulf %663, %662 : vector<8x16xf32>
    %cst_258 = arith.constant -1.45315206 : f32
    %665 = vector.broadcast %cst_258 : f32 to vector<8x16xf32>
    %666 = arith.addf %664, %665 : vector<8x16xf32>
    %667 = arith.mulf %666, %662 : vector<8x16xf32>
    %cst_259 = arith.constant 1.42141378 : f32
    %668 = vector.broadcast %cst_259 : f32 to vector<8x16xf32>
    %669 = arith.addf %667, %668 : vector<8x16xf32>
    %670 = arith.mulf %669, %662 : vector<8x16xf32>
    %cst_260 = arith.constant -0.284496725 : f32
    %671 = vector.broadcast %cst_260 : f32 to vector<8x16xf32>
    %672 = arith.addf %670, %671 : vector<8x16xf32>
    %673 = arith.mulf %672, %662 : vector<8x16xf32>
    %cst_261 = arith.constant 0.254829586 : f32
    %674 = vector.broadcast %cst_261 : f32 to vector<8x16xf32>
    %675 = arith.addf %673, %674 : vector<8x16xf32>
    %676 = arith.mulf %675, %662 : vector<8x16xf32>
    %cst_262 = arith.constant 0.000000e+00 : f32
    %677 = vector.broadcast %cst_262 : f32 to vector<8x16xf32>
    %678 = arith.subf %677, %656 : vector<8x16xf32>
    %679 = arith.mulf %678, %656 : vector<8x16xf32>
    %680 = math.exp %679 : vector<8x16xf32>
    %681 = arith.mulf %676, %680 : vector<8x16xf32>
    %cst_263 = arith.constant 1.000000e+00 : f32
    %682 = vector.broadcast %cst_263 : f32 to vector<8x16xf32>
    %683 = arith.subf %682, %681 : vector<8x16xf32>
    %684 = arith.mulf %655, %683 : vector<8x16xf32>
    %cst_264 = arith.constant 1.000000e+00 : f32
    %685 = vector.broadcast %cst_264 : f32 to vector<8x16xf32>
    %686 = arith.addf %685, %684 : vector<8x16xf32>
    %687 = arith.mulf %648, %686 : vector<8x16xf32>
    %c960 = arith.constant 960 : index
    %c0_265 = arith.constant 0 : index
    %688 = vector.load %arg2[%c960, %c0_265] : memref<1264x128xf32, #tpu.memory_space<vmem>>, vector<16x8xf32>
    %cst_266 = arith.constant dense<0.000000e+00> : vector<8x8xf32>
    %689 = tpu.matmul %687, %688, %cst_266 {dimension_numbers = #tpu.dot_dimension_numbers<[1], [0], [0], [1], [0, 0, 1, 1], [], []>} : vector<8x16xf32>, vector<16x8xf32>, vector<8x8xf32> -> vector<8x8xf32>
    %c928 = arith.constant 928 : index
    %c0_267 = arith.constant 0 : index
    %690 = vector.load %arg2[%c928, %c0_267] : memref<1264x128xf32, #tpu.memory_space<vmem>>, vector<1x8xf32>
    %691 = vector.broadcast %690 : vector<1x8xf32> to vector<8x8xf32>
    %692 = arith.addf %689, %691 : vector<8x8xf32>
    %693 = arith.addf %692, %613 : vector<8x8xf32>
    %c976 = arith.constant 976 : index
    %c0_268 = arith.constant 0 : index
    %694 = vector.load %arg2[%c976, %c0_268] : memref<1264x128xf32, #tpu.memory_space<vmem>>, vector<8x16xf32>
    %cst_269 = arith.constant dense<0.000000e+00> : vector<8x16xf32>
    %695 = tpu.matmul %693, %694, %cst_269 {dimension_numbers = #tpu.dot_dimension_numbers<[1], [0], [0], [1], [0, 0, 1, 1], [], []>} : vector<8x8xf32>, vector<8x16xf32>, vector<8x16xf32> -> vector<8x16xf32>
    %c32_270 = arith.constant 32 : index
    %c0_271 = arith.constant 0 : index
    %696 = vector.load %arg2[%c32_270, %c0_271] : memref<1264x128xf32, #tpu.memory_space<vmem>>, vector<16x8xf32>
    %c48_272 = arith.constant 48 : index
    %c0_273 = arith.constant 0 : index
    %697 = vector.load %arg2[%c48_272, %c0_273] : memref<1264x128xf32, #tpu.memory_space<vmem>>, vector<16x8xf32>
    %cst_274 = arith.constant dense<0.000000e+00> : vector<8x8xf32>
    %698 = tpu.matmul %541, %696, %cst_274 {dimension_numbers = #tpu.dot_dimension_numbers<[1], [0], [0], [1], [0, 0, 1, 1], [], []>} : vector<8x16xf32>, vector<16x8xf32>, vector<8x8xf32> -> vector<8x8xf32>
    %cst_275 = arith.constant dense<0.000000e+00> : vector<8x8xf32>
    %699 = tpu.matmul %541, %697, %cst_275 {dimension_numbers = #tpu.dot_dimension_numbers<[1], [0], [0], [1], [0, 0, 1, 1], [], []>} : vector<8x16xf32>, vector<16x8xf32>, vector<8x8xf32> -> vector<8x8xf32>
    %700 = arith.maximumf %698, %699 : vector<8x8xf32>
    %c1008 = arith.constant 1008 : index
    %c0_276 = arith.constant 0 : index
    %701 = vector.load %arg2[%c1008, %c0_276] : memref<1264x128xf32, #tpu.memory_space<vmem>>, vector<8x48xf32>
    %cst_277 = arith.constant dense<0.000000e+00> : vector<8x48xf32>
    %702 = tpu.matmul %700, %701, %cst_277 {dimension_numbers = #tpu.dot_dimension_numbers<[1], [0], [0], [1], [0, 0, 1, 1], [], []>} : vector<8x8xf32>, vector<8x48xf32>, vector<8x48xf32> -> vector<8x48xf32>
    %703 = vector.extract_strided_slice %702 {offsets = [0, 0], sizes = [8, 16], strides = [1, 1]} : vector<8x48xf32> to vector<8x16xf32>
    %704 = vector.extract_strided_slice %702 {offsets = [0, 16], sizes = [8, 16], strides = [1, 1]} : vector<8x48xf32> to vector<8x16xf32>
    %705 = vector.extract_strided_slice %702 {offsets = [0, 32], sizes = [8, 16], strides = [1, 1]} : vector<8x48xf32> to vector<8x16xf32>
    %c24_278 = arith.constant 24 : index
    %c0_279 = arith.constant 0 : index
    %706 = vector.load %arg2[%c24_278, %c0_279] : memref<1264x128xf32, #tpu.memory_space<vmem>>, vector<8x8xf32>
    %707 = vector.extract_strided_slice %703 {offsets = [0, 0], sizes = [8, 8], strides = [1, 1]} : vector<8x16xf32> to vector<8x8xf32>
    %708 = vector.extract_strided_slice %704 {offsets = [0, 0], sizes = [8, 8], strides = [1, 1]} : vector<8x16xf32> to vector<8x8xf32>
    %cst_280 = arith.constant dense<0.000000e+00> : vector<8x8xf32>
    %709 = tpu.matmul %707, %708, %cst_280 {dimension_numbers = #tpu.dot_dimension_numbers<[1], [1], [0], [0], [0, 0, 1, 0], [], []>} : vector<8x8xf32>, vector<8x8xf32>, vector<8x8xf32> -> vector<8x8xf32>
    %710 = arith.addf %709, %706 : vector<8x8xf32>
    %cst_281 = arith.constant dense<0xFF800000> : vector<8xf32>
    %711 = vector.multi_reduction <maximumf>, %710, %cst_281 [1] : vector<8x8xf32> to vector<8xf32>
    %712 = vector.shape_cast %711 : vector<8xf32> to vector<8x1xf32>
    %713 = vector.broadcast %712 : vector<8x1xf32> to vector<8x8xf32>
    %714 = arith.subf %710, %713 : vector<8x8xf32>
    %715 = math.exp %714 : vector<8x8xf32>
    %cst_282 = arith.constant dense<0.000000e+00> : vector<8xf32>
    %716 = vector.multi_reduction <add>, %715, %cst_282 [1] : vector<8x8xf32> to vector<8xf32>
    %717 = vector.shape_cast %716 : vector<8xf32> to vector<8x1xf32>
    %718 = tpu.reciprocal %717 {approx = true} : vector<8x1xf32> -> vector<8x1xf32>
    %719 = vector.broadcast %718 : vector<8x1xf32> to vector<8x8xf32>
    %720 = arith.mulf %715, %719 : vector<8x8xf32>
    %721 = vector.extract_strided_slice %705 {offsets = [0, 0], sizes = [8, 8], strides = [1, 1]} : vector<8x16xf32> to vector<8x8xf32>
    %cst_283 = arith.constant dense<0.000000e+00> : vector<8x8xf32>
    %722 = tpu.matmul %720, %721, %cst_283 {dimension_numbers = #tpu.dot_dimension_numbers<[1], [0], [0], [1], [0, 0, 1, 1], [], []>} : vector<8x8xf32>, vector<8x8xf32>, vector<8x8xf32> -> vector<8x8xf32>
    %723 = vector.extract_strided_slice %703 {offsets = [0, 8], sizes = [8, 8], strides = [1, 1]} : vector<8x16xf32> to vector<8x8xf32>
    %724 = vector.extract_strided_slice %704 {offsets = [0, 8], sizes = [8, 8], strides = [1, 1]} : vector<8x16xf32> to vector<8x8xf32>
    %cst_284 = arith.constant dense<0.000000e+00> : vector<8x8xf32>
    %725 = tpu.matmul %723, %724, %cst_284 {dimension_numbers = #tpu.dot_dimension_numbers<[1], [1], [0], [0], [0, 0, 1, 0], [], []>} : vector<8x8xf32>, vector<8x8xf32>, vector<8x8xf32> -> vector<8x8xf32>
    %726 = arith.addf %725, %706 : vector<8x8xf32>
    %cst_285 = arith.constant dense<0xFF800000> : vector<8xf32>
    %727 = vector.multi_reduction <maximumf>, %726, %cst_285 [1] : vector<8x8xf32> to vector<8xf32>
    %728 = vector.shape_cast %727 : vector<8xf32> to vector<8x1xf32>
    %729 = vector.broadcast %728 : vector<8x1xf32> to vector<8x8xf32>
    %730 = arith.subf %726, %729 : vector<8x8xf32>
    %731 = math.exp %730 : vector<8x8xf32>
    %cst_286 = arith.constant dense<0.000000e+00> : vector<8xf32>
    %732 = vector.multi_reduction <add>, %731, %cst_286 [1] : vector<8x8xf32> to vector<8xf32>
    %733 = vector.shape_cast %732 : vector<8xf32> to vector<8x1xf32>
    %734 = tpu.reciprocal %733 {approx = true} : vector<8x1xf32> -> vector<8x1xf32>
    %735 = vector.broadcast %734 : vector<8x1xf32> to vector<8x8xf32>
    %736 = arith.mulf %731, %735 : vector<8x8xf32>
    %737 = vector.extract_strided_slice %705 {offsets = [0, 8], sizes = [8, 8], strides = [1, 1]} : vector<8x16xf32> to vector<8x8xf32>
    %cst_287 = arith.constant dense<0.000000e+00> : vector<8x8xf32>
    %738 = tpu.matmul %736, %737, %cst_287 {dimension_numbers = #tpu.dot_dimension_numbers<[1], [0], [0], [1], [0, 0, 1, 1], [], []>} : vector<8x8xf32>, vector<8x8xf32>, vector<8x8xf32> -> vector<8x8xf32>
    %739 = tpu.concatenate %722, %738 in 1 : vector<8x8xf32>, vector<8x8xf32> -> vector<8x16xf32>
    %c992 = arith.constant 992 : index
    %c0_288 = arith.constant 0 : index
    %740 = vector.load %arg2[%c992, %c0_288] : memref<1264x128xf32, #tpu.memory_space<vmem>>, vector<16x8xf32>
    %cst_289 = arith.constant dense<0.000000e+00> : vector<8x8xf32>
    %741 = tpu.matmul %739, %740, %cst_289 {dimension_numbers = #tpu.dot_dimension_numbers<[1], [0], [0], [1], [0, 0, 1, 1], [], []>} : vector<8x16xf32>, vector<16x8xf32>, vector<8x8xf32> -> vector<8x8xf32>
    %c984 = arith.constant 984 : index
    %c0_290 = arith.constant 0 : index
    %742 = vector.load %arg2[%c984, %c0_290] : memref<1264x128xf32, #tpu.memory_space<vmem>>, vector<1x8xf32>
    %743 = vector.broadcast %742 : vector<1x8xf32> to vector<8x8xf32>
    %744 = arith.addf %741, %743 : vector<8x8xf32>
    %745 = arith.addf %744, %700 : vector<8x8xf32>
    %cst_291 = arith.constant 0.000000e+00 : f32
    %746 = vector.broadcast %cst_291 : f32 to vector<8x2xf32>
    %747 = tpu.concatenate %746, %541, %746 in 1 : vector<8x2xf32>, vector<8x16xf32>, vector<8x2xf32> -> vector<8x20xf32>
    %748 = vector.extract_strided_slice %747 {offsets = [0, 0], sizes = [8, 16], strides = [1, 1]} : vector<8x20xf32> to vector<8x16xf32>
    %749 = vector.extract_strided_slice %747 {offsets = [0, 1], sizes = [8, 16], strides = [1, 1]} : vector<8x20xf32> to vector<8x16xf32>
    %750 = vector.extract_strided_slice %747 {offsets = [0, 2], sizes = [8, 16], strides = [1, 1]} : vector<8x20xf32> to vector<8x16xf32>
    %751 = vector.extract_strided_slice %747 {offsets = [0, 3], sizes = [8, 16], strides = [1, 1]} : vector<8x20xf32> to vector<8x16xf32>
    %752 = vector.extract_strided_slice %747 {offsets = [0, 4], sizes = [8, 16], strides = [1, 1]} : vector<8x20xf32> to vector<8x16xf32>
    %753 = tpu.concatenate %748, %749, %750, %751, %752 in 0 : vector<8x16xf32>, vector<8x16xf32>, vector<8x16xf32>, vector<8x16xf32>, vector<8x16xf32> -> vector<40x16xf32>
    %c1024 = arith.constant 1024 : index
    %c0_292 = arith.constant 0 : index
    %754 = vector.load %arg2[%c1024, %c0_292] : memref<1264x128xf32, #tpu.memory_space<vmem>>, vector<8x40xf32>
    %cst_293 = arith.constant dense<0.000000e+00> : vector<8x16xf32>
    %755 = tpu.matmul %754, %753, %cst_293 {dimension_numbers = #tpu.dot_dimension_numbers<[1], [0], [0], [1], [0, 0, 1, 1], [], []>} : vector<8x40xf32>, vector<40x16xf32>, vector<8x16xf32> -> vector<8x16xf32>
    %c1016 = arith.constant 1016 : index
    %c0_294 = arith.constant 0 : index
    %756 = vector.load %arg2[%c1016, %c0_294] : memref<1264x128xf32, #tpu.memory_space<vmem>>, vector<8x1xf32>
    %757 = vector.broadcast %756 : vector<8x1xf32> to vector<8x16xf32>
    %758 = arith.addf %755, %757 : vector<8x16xf32>
    %cst_295 = arith.constant 0.000000e+00 : f32
    %759 = vector.broadcast %cst_295 : f32 to vector<8x16xf32>
    %760 = arith.cmpf ogt, %758, %759 : vector<8x16xf32>
    %cst_296 = arith.constant 0.000000e+00 : f32
    %761 = vector.broadcast %cst_296 : f32 to vector<8x16xf32>
    %762 = arith.minimumf %758, %761 : vector<8x16xf32>
    %763 = math.exp %762 : vector<8x16xf32>
    %cst_297 = arith.constant 1.000000e+00 : f32
    %764 = vector.broadcast %cst_297 : f32 to vector<8x16xf32>
    %765 = arith.subf %763, %764 : vector<8x16xf32>
    %766 = arith.select %760, %758, %765 : vector<8x16xi1>, vector<8x16xf32>
    %cst_298 = arith.constant dense<0.000000e+00> : vector<8x8xf32>
    %767 = tpu.matmul %766, %696, %cst_298 {dimension_numbers = #tpu.dot_dimension_numbers<[1], [0], [0], [1], [0, 0, 1, 1], [], []>} : vector<8x16xf32>, vector<16x8xf32>, vector<8x8xf32> -> vector<8x8xf32>
    %cst_299 = arith.constant dense<0.000000e+00> : vector<8x8xf32>
    %768 = tpu.matmul %766, %697, %cst_299 {dimension_numbers = #tpu.dot_dimension_numbers<[1], [0], [0], [1], [0, 0, 1, 1], [], []>} : vector<8x16xf32>, vector<16x8xf32>, vector<8x8xf32> -> vector<8x8xf32>
    %769 = arith.maximumf %767, %768 : vector<8x8xf32>
    %770 = arith.mulf %769, %769 : vector<8x8xf32>
    %cst_300 = arith.constant dense<0.000000e+00> : vector<8xf32>
    %771 = vector.multi_reduction <add>, %770, %cst_300 [1] : vector<8x8xf32> to vector<8xf32>
    %772 = vector.shape_cast %771 : vector<8xf32> to vector<8x1xf32>
    %cst_301 = arith.constant 8.000000e+00 : f32
    %773 = vector.broadcast %cst_301 : f32 to vector<8x1xf32>
    %774 = arith.divf %772, %773 : vector<8x1xf32>
    %775 = math.log %774 : vector<8x1xf32>
    %cst_302 = arith.constant dense<0.000000e+00> : vector<8xf32>
    %776 = vector.multi_reduction <add>, %745, %cst_302 [1] : vector<8x8xf32> to vector<8xf32>
    %777 = vector.shape_cast %776 : vector<8xf32> to vector<8x1xf32>
    %cst_303 = arith.constant 8.000000e+00 : f32
    %778 = vector.broadcast %cst_303 : f32 to vector<8x1xf32>
    %779 = arith.divf %777, %778 : vector<8x1xf32>
    %780 = vector.broadcast %779 : vector<8x1xf32> to vector<8x8xf32>
    %781 = arith.subf %745, %780 : vector<8x8xf32>
    %782 = arith.mulf %781, %781 : vector<8x8xf32>
    %cst_304 = arith.constant dense<0.000000e+00> : vector<8xf32>
    %783 = vector.multi_reduction <add>, %782, %cst_304 [1] : vector<8x8xf32> to vector<8xf32>
    %784 = vector.shape_cast %783 : vector<8xf32> to vector<8x1xf32>
    %cst_305 = arith.constant 8.000000e+00 : f32
    %785 = vector.broadcast %cst_305 : f32 to vector<8x1xf32>
    %786 = arith.divf %784, %785 : vector<8x1xf32>
    %cst_306 = arith.constant 9.99999974E-6 : f32
    %787 = vector.broadcast %cst_306 : f32 to vector<8x1xf32>
    %788 = arith.addf %786, %787 : vector<8x1xf32>
    %789 = math.rsqrt %788 : vector<8x1xf32>
    %790 = vector.broadcast %789 : vector<8x1xf32> to vector<8x8xf32>
    %791 = arith.mulf %781, %790 : vector<8x8xf32>
    %c1160 = arith.constant 1160 : index
    %c0_307 = arith.constant 0 : index
    %792 = vector.load %arg2[%c1160, %c0_307] : memref<1264x128xf32, #tpu.memory_space<vmem>>, vector<1x8xf32>
    %793 = vector.broadcast %792 : vector<1x8xf32> to vector<8x8xf32>
    %794 = arith.mulf %791, %793 : vector<8x8xf32>
    %c1152 = arith.constant 1152 : index
    %c0_308 = arith.constant 0 : index
    %795 = vector.load %arg2[%c1152, %c0_308] : memref<1264x128xf32, #tpu.memory_space<vmem>>, vector<1x8xf32>
    %796 = vector.broadcast %795 : vector<1x8xf32> to vector<8x8xf32>
    %797 = arith.addf %794, %796 : vector<8x8xf32>
    %c1168 = arith.constant 1168 : index
    %c0_309 = arith.constant 0 : index
    %798 = vector.load %arg2[%c1168, %c0_309] : memref<1264x128xf32, #tpu.memory_space<vmem>>, vector<8x16xf32>
    %cst_310 = arith.constant dense<0.000000e+00> : vector<8x16xf32>
    %799 = tpu.matmul %797, %798, %cst_310 {dimension_numbers = #tpu.dot_dimension_numbers<[1], [0], [0], [1], [0, 0, 1, 1], [], []>} : vector<8x8xf32>, vector<8x16xf32>, vector<8x16xf32> -> vector<8x16xf32>
    %c1136 = arith.constant 1136 : index
    %c0_311 = arith.constant 0 : index
    %800 = vector.load %arg2[%c1136, %c0_311] : memref<1264x128xf32, #tpu.memory_space<vmem>>, vector<1x16xf32>
    %801 = vector.broadcast %800 : vector<1x16xf32> to vector<8x16xf32>
    %802 = arith.addf %799, %801 : vector<8x16xf32>
    %cst_312 = arith.constant 5.000000e-01 : f32
    %803 = vector.broadcast %cst_312 : f32 to vector<8x16xf32>
    %804 = arith.mulf %803, %802 : vector<8x16xf32>
    %cst_313 = arith.constant 0.707106769 : f32
    %805 = vector.broadcast %cst_313 : f32 to vector<8x16xf32>
    %806 = arith.mulf %802, %805 : vector<8x16xf32>
    %cst_314 = arith.constant 0.000000e+00 : f32
    %807 = vector.broadcast %cst_314 : f32 to vector<8x16xf32>
    %808 = arith.cmpf oge, %806, %807 : vector<8x16xf32>
    %cst_315 = arith.constant 1.000000e+00 : f32
    %cst_316 = arith.constant -1.000000e+00 : f32
    %809 = vector.broadcast %cst_315 : f32 to vector<8x16xf32>
    %810 = vector.broadcast %cst_316 : f32 to vector<8x16xf32>
    %811 = arith.select %808, %809, %810 : vector<8x16xi1>, vector<8x16xf32>
    %812 = math.absf %806 : vector<8x16xf32>
    %cst_317 = arith.constant 0.327591091 : f32
    %813 = vector.broadcast %cst_317 : f32 to vector<8x16xf32>
    %814 = arith.mulf %813, %812 : vector<8x16xf32>
    %cst_318 = arith.constant 1.000000e+00 : f32
    %815 = vector.broadcast %cst_318 : f32 to vector<8x16xf32>
    %816 = arith.addf %815, %814 : vector<8x16xf32>
    %cst_319 = arith.constant 1.000000e+00 : f32
    %817 = vector.broadcast %cst_319 : f32 to vector<8x16xf32>
    %818 = arith.divf %817, %816 : vector<8x16xf32>
    %cst_320 = arith.constant 1.06140542 : f32
    %819 = vector.broadcast %cst_320 : f32 to vector<8x16xf32>
    %820 = arith.mulf %819, %818 : vector<8x16xf32>
    %cst_321 = arith.constant -1.45315206 : f32
    %821 = vector.broadcast %cst_321 : f32 to vector<8x16xf32>
    %822 = arith.addf %820, %821 : vector<8x16xf32>
    %823 = arith.mulf %822, %818 : vector<8x16xf32>
    %cst_322 = arith.constant 1.42141378 : f32
    %824 = vector.broadcast %cst_322 : f32 to vector<8x16xf32>
    %825 = arith.addf %823, %824 : vector<8x16xf32>
    %826 = arith.mulf %825, %818 : vector<8x16xf32>
    %cst_323 = arith.constant -0.284496725 : f32
    %827 = vector.broadcast %cst_323 : f32 to vector<8x16xf32>
    %828 = arith.addf %826, %827 : vector<8x16xf32>
    %829 = arith.mulf %828, %818 : vector<8x16xf32>
    %cst_324 = arith.constant 0.254829586 : f32
    %830 = vector.broadcast %cst_324 : f32 to vector<8x16xf32>
    %831 = arith.addf %829, %830 : vector<8x16xf32>
    %832 = arith.mulf %831, %818 : vector<8x16xf32>
    %cst_325 = arith.constant 0.000000e+00 : f32
    %833 = vector.broadcast %cst_325 : f32 to vector<8x16xf32>
    %834 = arith.subf %833, %812 : vector<8x16xf32>
    %835 = arith.mulf %834, %812 : vector<8x16xf32>
    %836 = math.exp %835 : vector<8x16xf32>
    %837 = arith.mulf %832, %836 : vector<8x16xf32>
    %cst_326 = arith.constant 1.000000e+00 : f32
    %838 = vector.broadcast %cst_326 : f32 to vector<8x16xf32>
    %839 = arith.subf %838, %837 : vector<8x16xf32>
    %840 = arith.mulf %811, %839 : vector<8x16xf32>
    %cst_327 = arith.constant 1.000000e+00 : f32
    %841 = vector.broadcast %cst_327 : f32 to vector<8x16xf32>
    %842 = arith.addf %841, %840 : vector<8x16xf32>
    %843 = arith.mulf %804, %842 : vector<8x16xf32>
    %c1176 = arith.constant 1176 : index
    %c0_328 = arith.constant 0 : index
    %844 = vector.load %arg2[%c1176, %c0_328] : memref<1264x128xf32, #tpu.memory_space<vmem>>, vector<16x8xf32>
    %cst_329 = arith.constant dense<0.000000e+00> : vector<8x8xf32>
    %845 = tpu.matmul %843, %844, %cst_329 {dimension_numbers = #tpu.dot_dimension_numbers<[1], [0], [0], [1], [0, 0, 1, 1], [], []>} : vector<8x16xf32>, vector<16x8xf32>, vector<8x8xf32> -> vector<8x8xf32>
    %c1144 = arith.constant 1144 : index
    %c0_330 = arith.constant 0 : index
    %846 = vector.load %arg2[%c1144, %c0_330] : memref<1264x128xf32, #tpu.memory_space<vmem>>, vector<1x8xf32>
    %847 = vector.broadcast %846 : vector<1x8xf32> to vector<8x8xf32>
    %848 = arith.addf %845, %847 : vector<8x8xf32>
    %849 = arith.addf %848, %769 : vector<8x8xf32>
    %c1192 = arith.constant 1192 : index
    %c0_331 = arith.constant 0 : index
    %850 = vector.load %arg2[%c1192, %c0_331] : memref<1264x128xf32, #tpu.memory_space<vmem>>, vector<8x16xf32>
    %cst_332 = arith.constant dense<0.000000e+00> : vector<8x16xf32>
    %851 = tpu.matmul %849, %850, %cst_332 {dimension_numbers = #tpu.dot_dimension_numbers<[1], [0], [0], [1], [0, 0, 1, 1], [], []>} : vector<8x8xf32>, vector<8x16xf32>, vector<8x16xf32> -> vector<8x16xf32>
    %cst_333 = arith.constant 0.353553385 : f32
    %852 = vector.broadcast %cst_333 : f32 to vector<8x16xf32>
    %853 = arith.mulf %695, %852 : vector<8x16xf32>
    %c0_334 = arith.constant 0 : index
    %c0_335 = arith.constant 0 : index
    %854 = vector.load %arg2[%c0_334, %c0_335] : memref<1264x128xf32, #tpu.memory_space<vmem>>, vector<8x8xf32>
    %855 = vector.extract_strided_slice %853 {offsets = [0, 0], sizes = [8, 8], strides = [1, 1]} : vector<8x16xf32> to vector<8x8xf32>
    %856 = vector.extract_strided_slice %851 {offsets = [0, 0], sizes = [8, 8], strides = [1, 1]} : vector<8x16xf32> to vector<8x8xf32>
    %cst_336 = arith.constant dense<0.000000e+00> : vector<8x8xf32>
    %857 = tpu.matmul %855, %856, %cst_336 {dimension_numbers = #tpu.dot_dimension_numbers<[1], [1], [0], [0], [0, 0, 1, 0], [], []>} : vector<8x8xf32>, vector<8x8xf32>, vector<8x8xf32> -> vector<8x8xf32>
    %858 = arith.addf %857, %854 : vector<8x8xf32>
    %cst_337 = arith.constant dense<0xFF800000> : vector<8xf32>
    %859 = vector.multi_reduction <maximumf>, %858, %cst_337 [1] : vector<8x8xf32> to vector<8xf32>
    %860 = vector.shape_cast %859 : vector<8xf32> to vector<8x1xf32>
    %861 = vector.broadcast %860 : vector<8x1xf32> to vector<8x8xf32>
    %862 = arith.subf %858, %861 : vector<8x8xf32>
    %863 = math.exp %862 : vector<8x8xf32>
    %cst_338 = arith.constant dense<0.000000e+00> : vector<8xf32>
    %864 = vector.multi_reduction <add>, %863, %cst_338 [1] : vector<8x8xf32> to vector<8xf32>
    %865 = vector.shape_cast %864 : vector<8xf32> to vector<8x1xf32>
    %866 = tpu.reciprocal %865 {approx = true} : vector<8x1xf32> -> vector<8x1xf32>
    %867 = vector.broadcast %866 : vector<8x1xf32> to vector<8x8xf32>
    %868 = arith.mulf %863, %867 : vector<8x8xf32>
    %869 = vector.extract_strided_slice %851 {offsets = [0, 0], sizes = [8, 8], strides = [1, 1]} : vector<8x16xf32> to vector<8x8xf32>
    %cst_339 = arith.constant dense<0.000000e+00> : vector<8x8xf32>
    %870 = tpu.matmul %868, %869, %cst_339 {dimension_numbers = #tpu.dot_dimension_numbers<[1], [0], [0], [1], [0, 0, 1, 1], [], []>} : vector<8x8xf32>, vector<8x8xf32>, vector<8x8xf32> -> vector<8x8xf32>
    %871 = vector.extract_strided_slice %853 {offsets = [0, 8], sizes = [8, 8], strides = [1, 1]} : vector<8x16xf32> to vector<8x8xf32>
    %872 = vector.extract_strided_slice %851 {offsets = [0, 8], sizes = [8, 8], strides = [1, 1]} : vector<8x16xf32> to vector<8x8xf32>
    %cst_340 = arith.constant dense<0.000000e+00> : vector<8x8xf32>
    %873 = tpu.matmul %871, %872, %cst_340 {dimension_numbers = #tpu.dot_dimension_numbers<[1], [1], [0], [0], [0, 0, 1, 0], [], []>} : vector<8x8xf32>, vector<8x8xf32>, vector<8x8xf32> -> vector<8x8xf32>
    %874 = arith.addf %873, %854 : vector<8x8xf32>
    %cst_341 = arith.constant dense<0xFF800000> : vector<8xf32>
    %875 = vector.multi_reduction <maximumf>, %874, %cst_341 [1] : vector<8x8xf32> to vector<8xf32>
    %876 = vector.shape_cast %875 : vector<8xf32> to vector<8x1xf32>
    %877 = vector.broadcast %876 : vector<8x1xf32> to vector<8x8xf32>
    %878 = arith.subf %874, %877 : vector<8x8xf32>
    %879 = math.exp %878 : vector<8x8xf32>
    %cst_342 = arith.constant dense<0.000000e+00> : vector<8xf32>
    %880 = vector.multi_reduction <add>, %879, %cst_342 [1] : vector<8x8xf32> to vector<8xf32>
    %881 = vector.shape_cast %880 : vector<8xf32> to vector<8x1xf32>
    %882 = tpu.reciprocal %881 {approx = true} : vector<8x1xf32> -> vector<8x1xf32>
    %883 = vector.broadcast %882 : vector<8x1xf32> to vector<8x8xf32>
    %884 = arith.mulf %879, %883 : vector<8x8xf32>
    %885 = vector.extract_strided_slice %851 {offsets = [0, 8], sizes = [8, 8], strides = [1, 1]} : vector<8x16xf32> to vector<8x8xf32>
    %cst_343 = arith.constant dense<0.000000e+00> : vector<8x8xf32>
    %886 = tpu.matmul %884, %885, %cst_343 {dimension_numbers = #tpu.dot_dimension_numbers<[1], [0], [0], [1], [0, 0, 1, 1], [], []>} : vector<8x8xf32>, vector<8x8xf32>, vector<8x8xf32> -> vector<8x8xf32>
    %887 = tpu.concatenate %870, %886 in 1 : vector<8x8xf32>, vector<8x8xf32> -> vector<8x16xf32>
    %c904 = arith.constant 904 : index
    %c0_344 = arith.constant 0 : index
    %888 = vector.load %arg2[%c904, %c0_344] : memref<1264x128xf32, #tpu.memory_space<vmem>>, vector<16x16xf32>
    %cst_345 = arith.constant dense<0.000000e+00> : vector<8x16xf32>
    %889 = tpu.matmul %887, %888, %cst_345 {dimension_numbers = #tpu.dot_dimension_numbers<[1], [0], [0], [1], [0, 0, 1, 1], [], []>} : vector<8x16xf32>, vector<16x16xf32>, vector<8x16xf32> -> vector<8x16xf32>
    %c896 = arith.constant 896 : index
    %c0_346 = arith.constant 0 : index
    %890 = vector.load %arg2[%c896, %c0_346] : memref<1264x128xf32, #tpu.memory_space<vmem>>, vector<1x16xf32>
    %891 = vector.broadcast %890 : vector<1x16xf32> to vector<8x16xf32>
    %892 = arith.addf %889, %891 : vector<8x16xf32>
    %893 = arith.addf %695, %892 : vector<8x16xf32>
    %cst_347 = arith.constant dense<0.000000e+00> : vector<8xf32>
    %894 = vector.multi_reduction <add>, %893, %cst_347 [1] : vector<8x16xf32> to vector<8xf32>
    %895 = vector.shape_cast %894 : vector<8xf32> to vector<8x1xf32>
    %cst_348 = arith.constant 1.600000e+01 : f32
    %896 = vector.broadcast %cst_348 : f32 to vector<8x1xf32>
    %897 = arith.divf %895, %896 : vector<8x1xf32>
    %898 = vector.broadcast %897 : vector<8x1xf32> to vector<8x16xf32>
    %899 = arith.subf %893, %898 : vector<8x16xf32>
    %900 = arith.mulf %899, %899 : vector<8x16xf32>
    %cst_349 = arith.constant dense<0.000000e+00> : vector<8xf32>
    %901 = vector.multi_reduction <add>, %900, %cst_349 [1] : vector<8x16xf32> to vector<8xf32>
    %902 = vector.shape_cast %901 : vector<8xf32> to vector<8x1xf32>
    %cst_350 = arith.constant 1.600000e+01 : f32
    %903 = vector.broadcast %cst_350 : f32 to vector<8x1xf32>
    %904 = arith.divf %902, %903 : vector<8x1xf32>
    %cst_351 = arith.constant 9.99999974E-6 : f32
    %905 = vector.broadcast %cst_351 : f32 to vector<8x1xf32>
    %906 = arith.addf %904, %905 : vector<8x1xf32>
    %907 = math.rsqrt %906 : vector<8x1xf32>
    %908 = vector.broadcast %907 : vector<8x1xf32> to vector<8x16xf32>
    %909 = arith.mulf %899, %908 : vector<8x16xf32>
    %c840 = arith.constant 840 : index
    %c0_352 = arith.constant 0 : index
    %910 = vector.load %arg2[%c840, %c0_352] : memref<1264x128xf32, #tpu.memory_space<vmem>>, vector<1x16xf32>
    %911 = vector.broadcast %910 : vector<1x16xf32> to vector<8x16xf32>
    %912 = arith.mulf %909, %911 : vector<8x16xf32>
    %c832 = arith.constant 832 : index
    %c0_353 = arith.constant 0 : index
    %913 = vector.load %arg2[%c832, %c0_353] : memref<1264x128xf32, #tpu.memory_space<vmem>>, vector<1x16xf32>
    %914 = vector.broadcast %913 : vector<1x16xf32> to vector<8x16xf32>
    %915 = arith.addf %912, %914 : vector<8x16xf32>
    %c848 = arith.constant 848 : index
    %c0_354 = arith.constant 0 : index
    %916 = vector.load %arg2[%c848, %c0_354] : memref<1264x128xf32, #tpu.memory_space<vmem>>, vector<16x32xf32>
    %cst_355 = arith.constant dense<0.000000e+00> : vector<8x32xf32>
    %917 = tpu.matmul %915, %916, %cst_355 {dimension_numbers = #tpu.dot_dimension_numbers<[1], [0], [0], [1], [0, 0, 1, 1], [], []>} : vector<8x16xf32>, vector<16x32xf32>, vector<8x32xf32> -> vector<8x32xf32>
    %c816 = arith.constant 816 : index
    %c0_356 = arith.constant 0 : index
    %918 = vector.load %arg2[%c816, %c0_356] : memref<1264x128xf32, #tpu.memory_space<vmem>>, vector<1x32xf32>
    %919 = vector.broadcast %918 : vector<1x32xf32> to vector<8x32xf32>
    %920 = arith.addf %917, %919 : vector<8x32xf32>
    %cst_357 = arith.constant 5.000000e-01 : f32
    %921 = vector.broadcast %cst_357 : f32 to vector<8x32xf32>
    %922 = arith.mulf %921, %920 : vector<8x32xf32>
    %cst_358 = arith.constant 0.707106769 : f32
    %923 = vector.broadcast %cst_358 : f32 to vector<8x32xf32>
    %924 = arith.mulf %920, %923 : vector<8x32xf32>
    %cst_359 = arith.constant 0.000000e+00 : f32
    %925 = vector.broadcast %cst_359 : f32 to vector<8x32xf32>
    %926 = arith.cmpf oge, %924, %925 : vector<8x32xf32>
    %cst_360 = arith.constant 1.000000e+00 : f32
    %cst_361 = arith.constant -1.000000e+00 : f32
    %927 = vector.broadcast %cst_360 : f32 to vector<8x32xf32>
    %928 = vector.broadcast %cst_361 : f32 to vector<8x32xf32>
    %929 = arith.select %926, %927, %928 : vector<8x32xi1>, vector<8x32xf32>
    %930 = math.absf %924 : vector<8x32xf32>
    %cst_362 = arith.constant 0.327591091 : f32
    %931 = vector.broadcast %cst_362 : f32 to vector<8x32xf32>
    %932 = arith.mulf %931, %930 : vector<8x32xf32>
    %cst_363 = arith.constant 1.000000e+00 : f32
    %933 = vector.broadcast %cst_363 : f32 to vector<8x32xf32>
    %934 = arith.addf %933, %932 : vector<8x32xf32>
    %cst_364 = arith.constant 1.000000e+00 : f32
    %935 = vector.broadcast %cst_364 : f32 to vector<8x32xf32>
    %936 = arith.divf %935, %934 : vector<8x32xf32>
    %cst_365 = arith.constant 1.06140542 : f32
    %937 = vector.broadcast %cst_365 : f32 to vector<8x32xf32>
    %938 = arith.mulf %937, %936 : vector<8x32xf32>
    %cst_366 = arith.constant -1.45315206 : f32
    %939 = vector.broadcast %cst_366 : f32 to vector<8x32xf32>
    %940 = arith.addf %938, %939 : vector<8x32xf32>
    %941 = arith.mulf %940, %936 : vector<8x32xf32>
    %cst_367 = arith.constant 1.42141378 : f32
    %942 = vector.broadcast %cst_367 : f32 to vector<8x32xf32>
    %943 = arith.addf %941, %942 : vector<8x32xf32>
    %944 = arith.mulf %943, %936 : vector<8x32xf32>
    %cst_368 = arith.constant -0.284496725 : f32
    %945 = vector.broadcast %cst_368 : f32 to vector<8x32xf32>
    %946 = arith.addf %944, %945 : vector<8x32xf32>
    %947 = arith.mulf %946, %936 : vector<8x32xf32>
    %cst_369 = arith.constant 0.254829586 : f32
    %948 = vector.broadcast %cst_369 : f32 to vector<8x32xf32>
    %949 = arith.addf %947, %948 : vector<8x32xf32>
    %950 = arith.mulf %949, %936 : vector<8x32xf32>
    %cst_370 = arith.constant 0.000000e+00 : f32
    %951 = vector.broadcast %cst_370 : f32 to vector<8x32xf32>
    %952 = arith.subf %951, %930 : vector<8x32xf32>
    %953 = arith.mulf %952, %930 : vector<8x32xf32>
    %954 = math.exp %953 : vector<8x32xf32>
    %955 = arith.mulf %950, %954 : vector<8x32xf32>
    %cst_371 = arith.constant 1.000000e+00 : f32
    %956 = vector.broadcast %cst_371 : f32 to vector<8x32xf32>
    %957 = arith.subf %956, %955 : vector<8x32xf32>
    %958 = arith.mulf %929, %957 : vector<8x32xf32>
    %cst_372 = arith.constant 1.000000e+00 : f32
    %959 = vector.broadcast %cst_372 : f32 to vector<8x32xf32>
    %960 = arith.addf %959, %958 : vector<8x32xf32>
    %961 = arith.mulf %922, %960 : vector<8x32xf32>
    %c864 = arith.constant 864 : index
    %c0_373 = arith.constant 0 : index
    %962 = vector.load %arg2[%c864, %c0_373] : memref<1264x128xf32, #tpu.memory_space<vmem>>, vector<32x8xf32>
    %cst_374 = arith.constant dense<0.000000e+00> : vector<8x8xf32>
    %963 = tpu.matmul %961, %962, %cst_374 {dimension_numbers = #tpu.dot_dimension_numbers<[1], [0], [0], [1], [0, 0, 1, 1], [], []>} : vector<8x32xf32>, vector<32x8xf32>, vector<8x8xf32> -> vector<8x8xf32>
    %c824 = arith.constant 824 : index
    %c0_375 = arith.constant 0 : index
    %964 = vector.load %arg2[%c824, %c0_375] : memref<1264x128xf32, #tpu.memory_space<vmem>>, vector<1x8xf32>
    %965 = vector.broadcast %964 : vector<1x8xf32> to vector<8x8xf32>
    %966 = arith.addf %963, %965 : vector<8x8xf32>
    %cst_376 = arith.constant 0.353553385 : f32
    %967 = vector.broadcast %cst_376 : f32 to vector<8x16xf32>
    %968 = arith.mulf %851, %967 : vector<8x16xf32>
    %c8_377 = arith.constant 8 : index
    %c0_378 = arith.constant 0 : index
    %969 = vector.load %arg2[%c8_377, %c0_378] : memref<1264x128xf32, #tpu.memory_space<vmem>>, vector<8x8xf32>
    %970 = vector.extract_strided_slice %968 {offsets = [0, 0], sizes = [8, 8], strides = [1, 1]} : vector<8x16xf32> to vector<8x8xf32>
    %971 = vector.extract_strided_slice %695 {offsets = [0, 0], sizes = [8, 8], strides = [1, 1]} : vector<8x16xf32> to vector<8x8xf32>
    %cst_379 = arith.constant dense<0.000000e+00> : vector<8x8xf32>
    %972 = tpu.matmul %970, %971, %cst_379 {dimension_numbers = #tpu.dot_dimension_numbers<[1], [1], [0], [0], [0, 0, 1, 0], [], []>} : vector<8x8xf32>, vector<8x8xf32>, vector<8x8xf32> -> vector<8x8xf32>
    %973 = arith.addf %972, %969 : vector<8x8xf32>
    %cst_380 = arith.constant dense<0xFF800000> : vector<8xf32>
    %974 = vector.multi_reduction <maximumf>, %973, %cst_380 [1] : vector<8x8xf32> to vector<8xf32>
    %975 = vector.shape_cast %974 : vector<8xf32> to vector<8x1xf32>
    %976 = vector.broadcast %975 : vector<8x1xf32> to vector<8x8xf32>
    %977 = arith.subf %973, %976 : vector<8x8xf32>
    %978 = math.exp %977 : vector<8x8xf32>
    %cst_381 = arith.constant dense<0.000000e+00> : vector<8xf32>
    %979 = vector.multi_reduction <add>, %978, %cst_381 [1] : vector<8x8xf32> to vector<8xf32>
    %980 = vector.shape_cast %979 : vector<8xf32> to vector<8x1xf32>
    %981 = tpu.reciprocal %980 {approx = true} : vector<8x1xf32> -> vector<8x1xf32>
    %982 = vector.broadcast %981 : vector<8x1xf32> to vector<8x8xf32>
    %983 = arith.mulf %978, %982 : vector<8x8xf32>
    %984 = vector.extract_strided_slice %695 {offsets = [0, 0], sizes = [8, 8], strides = [1, 1]} : vector<8x16xf32> to vector<8x8xf32>
    %cst_382 = arith.constant dense<0.000000e+00> : vector<8x8xf32>
    %985 = tpu.matmul %983, %984, %cst_382 {dimension_numbers = #tpu.dot_dimension_numbers<[1], [0], [0], [1], [0, 0, 1, 1], [], []>} : vector<8x8xf32>, vector<8x8xf32>, vector<8x8xf32> -> vector<8x8xf32>
    %986 = vector.extract_strided_slice %968 {offsets = [0, 8], sizes = [8, 8], strides = [1, 1]} : vector<8x16xf32> to vector<8x8xf32>
    %987 = vector.extract_strided_slice %695 {offsets = [0, 8], sizes = [8, 8], strides = [1, 1]} : vector<8x16xf32> to vector<8x8xf32>
    %cst_383 = arith.constant dense<0.000000e+00> : vector<8x8xf32>
    %988 = tpu.matmul %986, %987, %cst_383 {dimension_numbers = #tpu.dot_dimension_numbers<[1], [1], [0], [0], [0, 0, 1, 0], [], []>} : vector<8x8xf32>, vector<8x8xf32>, vector<8x8xf32> -> vector<8x8xf32>
    %989 = arith.addf %988, %969 : vector<8x8xf32>
    %cst_384 = arith.constant dense<0xFF800000> : vector<8xf32>
    %990 = vector.multi_reduction <maximumf>, %989, %cst_384 [1] : vector<8x8xf32> to vector<8xf32>
    %991 = vector.shape_cast %990 : vector<8xf32> to vector<8x1xf32>
    %992 = vector.broadcast %991 : vector<8x1xf32> to vector<8x8xf32>
    %993 = arith.subf %989, %992 : vector<8x8xf32>
    %994 = math.exp %993 : vector<8x8xf32>
    %cst_385 = arith.constant dense<0.000000e+00> : vector<8xf32>
    %995 = vector.multi_reduction <add>, %994, %cst_385 [1] : vector<8x8xf32> to vector<8xf32>
    %996 = vector.shape_cast %995 : vector<8xf32> to vector<8x1xf32>
    %997 = tpu.reciprocal %996 {approx = true} : vector<8x1xf32> -> vector<8x1xf32>
    %998 = vector.broadcast %997 : vector<8x1xf32> to vector<8x8xf32>
    %999 = arith.mulf %994, %998 : vector<8x8xf32>
    %1000 = vector.extract_strided_slice %695 {offsets = [0, 8], sizes = [8, 8], strides = [1, 1]} : vector<8x16xf32> to vector<8x8xf32>
    %cst_386 = arith.constant dense<0.000000e+00> : vector<8x8xf32>
    %1001 = tpu.matmul %999, %1000, %cst_386 {dimension_numbers = #tpu.dot_dimension_numbers<[1], [0], [0], [1], [0, 0, 1, 1], [], []>} : vector<8x8xf32>, vector<8x8xf32>, vector<8x8xf32> -> vector<8x8xf32>
    %1002 = tpu.concatenate %985, %1001 in 1 : vector<8x8xf32>, vector<8x8xf32> -> vector<8x16xf32>
    %c1120 = arith.constant 1120 : index
    %c0_387 = arith.constant 0 : index
    %1003 = vector.load %arg2[%c1120, %c0_387] : memref<1264x128xf32, #tpu.memory_space<vmem>>, vector<16x16xf32>
    %cst_388 = arith.constant dense<0.000000e+00> : vector<8x16xf32>
    %1004 = tpu.matmul %1002, %1003, %cst_388 {dimension_numbers = #tpu.dot_dimension_numbers<[1], [0], [0], [1], [0, 0, 1, 1], [], []>} : vector<8x16xf32>, vector<16x16xf32>, vector<8x16xf32> -> vector<8x16xf32>
    %c1112 = arith.constant 1112 : index
    %c0_389 = arith.constant 0 : index
    %1005 = vector.load %arg2[%c1112, %c0_389] : memref<1264x128xf32, #tpu.memory_space<vmem>>, vector<1x16xf32>
    %1006 = vector.broadcast %1005 : vector<1x16xf32> to vector<8x16xf32>
    %1007 = arith.addf %1004, %1006 : vector<8x16xf32>
    %1008 = arith.addf %851, %1007 : vector<8x16xf32>
    %cst_390 = arith.constant dense<0.000000e+00> : vector<8xf32>
    %1009 = vector.multi_reduction <add>, %1008, %cst_390 [1] : vector<8x16xf32> to vector<8xf32>
    %1010 = vector.shape_cast %1009 : vector<8xf32> to vector<8x1xf32>
    %cst_391 = arith.constant 1.600000e+01 : f32
    %1011 = vector.broadcast %cst_391 : f32 to vector<8x1xf32>
    %1012 = arith.divf %1010, %1011 : vector<8x1xf32>
    %1013 = vector.broadcast %1012 : vector<8x1xf32> to vector<8x16xf32>
    %1014 = arith.subf %1008, %1013 : vector<8x16xf32>
    %1015 = arith.mulf %1014, %1014 : vector<8x16xf32>
    %cst_392 = arith.constant dense<0.000000e+00> : vector<8xf32>
    %1016 = vector.multi_reduction <add>, %1015, %cst_392 [1] : vector<8x16xf32> to vector<8xf32>
    %1017 = vector.shape_cast %1016 : vector<8xf32> to vector<8x1xf32>
    %cst_393 = arith.constant 1.600000e+01 : f32
    %1018 = vector.broadcast %cst_393 : f32 to vector<8x1xf32>
    %1019 = arith.divf %1017, %1018 : vector<8x1xf32>
    %cst_394 = arith.constant 9.99999974E-6 : f32
    %1020 = vector.broadcast %cst_394 : f32 to vector<8x1xf32>
    %1021 = arith.addf %1019, %1020 : vector<8x1xf32>
    %1022 = math.rsqrt %1021 : vector<8x1xf32>
    %1023 = vector.broadcast %1022 : vector<8x1xf32> to vector<8x16xf32>
    %1024 = arith.mulf %1014, %1023 : vector<8x16xf32>
    %c1056 = arith.constant 1056 : index
    %c0_395 = arith.constant 0 : index
    %1025 = vector.load %arg2[%c1056, %c0_395] : memref<1264x128xf32, #tpu.memory_space<vmem>>, vector<1x16xf32>
    %1026 = vector.broadcast %1025 : vector<1x16xf32> to vector<8x16xf32>
    %1027 = arith.mulf %1024, %1026 : vector<8x16xf32>
    %c1048 = arith.constant 1048 : index
    %c0_396 = arith.constant 0 : index
    %1028 = vector.load %arg2[%c1048, %c0_396] : memref<1264x128xf32, #tpu.memory_space<vmem>>, vector<1x16xf32>
    %1029 = vector.broadcast %1028 : vector<1x16xf32> to vector<8x16xf32>
    %1030 = arith.addf %1027, %1029 : vector<8x16xf32>
    %c1064 = arith.constant 1064 : index
    %c0_397 = arith.constant 0 : index
    %1031 = vector.load %arg2[%c1064, %c0_397] : memref<1264x128xf32, #tpu.memory_space<vmem>>, vector<16x32xf32>
    %cst_398 = arith.constant dense<0.000000e+00> : vector<8x32xf32>
    %1032 = tpu.matmul %1030, %1031, %cst_398 {dimension_numbers = #tpu.dot_dimension_numbers<[1], [0], [0], [1], [0, 0, 1, 1], [], []>} : vector<8x16xf32>, vector<16x32xf32>, vector<8x32xf32> -> vector<8x32xf32>
    %c1032 = arith.constant 1032 : index
    %c0_399 = arith.constant 0 : index
    %1033 = vector.load %arg2[%c1032, %c0_399] : memref<1264x128xf32, #tpu.memory_space<vmem>>, vector<1x32xf32>
    %1034 = vector.broadcast %1033 : vector<1x32xf32> to vector<8x32xf32>
    %1035 = arith.addf %1032, %1034 : vector<8x32xf32>
    %cst_400 = arith.constant 5.000000e-01 : f32
    %1036 = vector.broadcast %cst_400 : f32 to vector<8x32xf32>
    %1037 = arith.mulf %1036, %1035 : vector<8x32xf32>
    %cst_401 = arith.constant 0.707106769 : f32
    %1038 = vector.broadcast %cst_401 : f32 to vector<8x32xf32>
    %1039 = arith.mulf %1035, %1038 : vector<8x32xf32>
    %cst_402 = arith.constant 0.000000e+00 : f32
    %1040 = vector.broadcast %cst_402 : f32 to vector<8x32xf32>
    %1041 = arith.cmpf oge, %1039, %1040 : vector<8x32xf32>
    %cst_403 = arith.constant 1.000000e+00 : f32
    %cst_404 = arith.constant -1.000000e+00 : f32
    %1042 = vector.broadcast %cst_403 : f32 to vector<8x32xf32>
    %1043 = vector.broadcast %cst_404 : f32 to vector<8x32xf32>
    %1044 = arith.select %1041, %1042, %1043 : vector<8x32xi1>, vector<8x32xf32>
    %1045 = math.absf %1039 : vector<8x32xf32>
    %cst_405 = arith.constant 0.327591091 : f32
    %1046 = vector.broadcast %cst_405 : f32 to vector<8x32xf32>
    %1047 = arith.mulf %1046, %1045 : vector<8x32xf32>
    %cst_406 = arith.constant 1.000000e+00 : f32
    %1048 = vector.broadcast %cst_406 : f32 to vector<8x32xf32>
    %1049 = arith.addf %1048, %1047 : vector<8x32xf32>
    %cst_407 = arith.constant 1.000000e+00 : f32
    %1050 = vector.broadcast %cst_407 : f32 to vector<8x32xf32>
    %1051 = arith.divf %1050, %1049 : vector<8x32xf32>
    %cst_408 = arith.constant 1.06140542 : f32
    %1052 = vector.broadcast %cst_408 : f32 to vector<8x32xf32>
    %1053 = arith.mulf %1052, %1051 : vector<8x32xf32>
    %cst_409 = arith.constant -1.45315206 : f32
    %1054 = vector.broadcast %cst_409 : f32 to vector<8x32xf32>
    %1055 = arith.addf %1053, %1054 : vector<8x32xf32>
    %1056 = arith.mulf %1055, %1051 : vector<8x32xf32>
    %cst_410 = arith.constant 1.42141378 : f32
    %1057 = vector.broadcast %cst_410 : f32 to vector<8x32xf32>
    %1058 = arith.addf %1056, %1057 : vector<8x32xf32>
    %1059 = arith.mulf %1058, %1051 : vector<8x32xf32>
    %cst_411 = arith.constant -0.284496725 : f32
    %1060 = vector.broadcast %cst_411 : f32 to vector<8x32xf32>
    %1061 = arith.addf %1059, %1060 : vector<8x32xf32>
    %1062 = arith.mulf %1061, %1051 : vector<8x32xf32>
    %cst_412 = arith.constant 0.254829586 : f32
    %1063 = vector.broadcast %cst_412 : f32 to vector<8x32xf32>
    %1064 = arith.addf %1062, %1063 : vector<8x32xf32>
    %1065 = arith.mulf %1064, %1051 : vector<8x32xf32>
    %cst_413 = arith.constant 0.000000e+00 : f32
    %1066 = vector.broadcast %cst_413 : f32 to vector<8x32xf32>
    %1067 = arith.subf %1066, %1045 : vector<8x32xf32>
    %1068 = arith.mulf %1067, %1045 : vector<8x32xf32>
    %1069 = math.exp %1068 : vector<8x32xf32>
    %1070 = arith.mulf %1065, %1069 : vector<8x32xf32>
    %cst_414 = arith.constant 1.000000e+00 : f32
    %1071 = vector.broadcast %cst_414 : f32 to vector<8x32xf32>
    %1072 = arith.subf %1071, %1070 : vector<8x32xf32>
    %1073 = arith.mulf %1044, %1072 : vector<8x32xf32>
    %cst_415 = arith.constant 1.000000e+00 : f32
    %1074 = vector.broadcast %cst_415 : f32 to vector<8x32xf32>
    %1075 = arith.addf %1074, %1073 : vector<8x32xf32>
    %1076 = arith.mulf %1037, %1075 : vector<8x32xf32>
    %c1080 = arith.constant 1080 : index
    %c0_416 = arith.constant 0 : index
    %1077 = vector.load %arg2[%c1080, %c0_416] : memref<1264x128xf32, #tpu.memory_space<vmem>>, vector<32x8xf32>
    %cst_417 = arith.constant dense<0.000000e+00> : vector<8x8xf32>
    %1078 = tpu.matmul %1076, %1077, %cst_417 {dimension_numbers = #tpu.dot_dimension_numbers<[1], [0], [0], [1], [0, 0, 1, 1], [], []>} : vector<8x32xf32>, vector<32x8xf32>, vector<8x8xf32> -> vector<8x8xf32>
    %c1040 = arith.constant 1040 : index
    %c0_418 = arith.constant 0 : index
    %1079 = vector.load %arg2[%c1040, %c0_418] : memref<1264x128xf32, #tpu.memory_space<vmem>>, vector<1x8xf32>
    %1080 = vector.broadcast %1079 : vector<1x8xf32> to vector<8x8xf32>
    %1081 = arith.addf %1078, %1080 : vector<8x8xf32>
    %1082 = vector.extract_strided_slice %966 {offsets = [0, 0], sizes = [1, 8], strides = [1, 1]} : vector<8x8xf32> to vector<1x8xf32>
    %1083 = vector.extract_strided_slice %966 {offsets = [1, 0], sizes = [1, 8], strides = [1, 1]} : vector<8x8xf32> to vector<1x8xf32>
    %1084 = vector.extract_strided_slice %966 {offsets = [2, 0], sizes = [1, 8], strides = [1, 1]} : vector<8x8xf32> to vector<1x8xf32>
    %1085 = vector.extract_strided_slice %966 {offsets = [3, 0], sizes = [1, 8], strides = [1, 1]} : vector<8x8xf32> to vector<1x8xf32>
    %1086 = vector.extract_strided_slice %79 {offsets = [0, 0], sizes = [1, 1], strides = [1, 1]} : vector<8x1xf32> to vector<1x1xf32>
    %1087 = vector.extract_strided_slice %79 {offsets = [1, 0], sizes = [1, 1], strides = [1, 1]} : vector<8x1xf32> to vector<1x1xf32>
    %1088 = vector.extract_strided_slice %79 {offsets = [2, 0], sizes = [1, 1], strides = [1, 1]} : vector<8x1xf32> to vector<1x1xf32>
    %1089 = vector.extract_strided_slice %79 {offsets = [3, 0], sizes = [1, 1], strides = [1, 1]} : vector<8x1xf32> to vector<1x1xf32>
    %1090 = vector.extract_strided_slice %619 {offsets = [0, 0], sizes = [1, 1], strides = [1, 1]} : vector<8x1xf32> to vector<1x1xf32>
    %1091 = vector.extract_strided_slice %619 {offsets = [1, 0], sizes = [1, 1], strides = [1, 1]} : vector<8x1xf32> to vector<1x1xf32>
    %1092 = vector.extract_strided_slice %619 {offsets = [2, 0], sizes = [1, 1], strides = [1, 1]} : vector<8x1xf32> to vector<1x1xf32>
    %1093 = vector.extract_strided_slice %619 {offsets = [3, 0], sizes = [1, 1], strides = [1, 1]} : vector<8x1xf32> to vector<1x1xf32>
    %1094 = tpu.concatenate %1082, %1083, %1084, %1085, %1086, %1087, %1088, %1089, %1090, %1091, %1092, %1093 in 1 : vector<1x8xf32>, vector<1x8xf32>, vector<1x8xf32>, vector<1x8xf32>, vector<1x1xf32>, vector<1x1xf32>, vector<1x1xf32>, vector<1x1xf32>, vector<1x1xf32>, vector<1x1xf32>, vector<1x1xf32>, vector<1x1xf32> -> vector<1x40xf32>
    %1095 = vector.extract_strided_slice %966 {offsets = [4, 0], sizes = [1, 8], strides = [1, 1]} : vector<8x8xf32> to vector<1x8xf32>
    %1096 = vector.extract_strided_slice %966 {offsets = [5, 0], sizes = [1, 8], strides = [1, 1]} : vector<8x8xf32> to vector<1x8xf32>
    %1097 = vector.extract_strided_slice %966 {offsets = [6, 0], sizes = [1, 8], strides = [1, 1]} : vector<8x8xf32> to vector<1x8xf32>
    %1098 = vector.extract_strided_slice %966 {offsets = [7, 0], sizes = [1, 8], strides = [1, 1]} : vector<8x8xf32> to vector<1x8xf32>
    %1099 = vector.extract_strided_slice %79 {offsets = [4, 0], sizes = [1, 1], strides = [1, 1]} : vector<8x1xf32> to vector<1x1xf32>
    %1100 = vector.extract_strided_slice %79 {offsets = [5, 0], sizes = [1, 1], strides = [1, 1]} : vector<8x1xf32> to vector<1x1xf32>
    %1101 = vector.extract_strided_slice %79 {offsets = [6, 0], sizes = [1, 1], strides = [1, 1]} : vector<8x1xf32> to vector<1x1xf32>
    %1102 = vector.extract_strided_slice %79 {offsets = [7, 0], sizes = [1, 1], strides = [1, 1]} : vector<8x1xf32> to vector<1x1xf32>
    %1103 = vector.extract_strided_slice %619 {offsets = [4, 0], sizes = [1, 1], strides = [1, 1]} : vector<8x1xf32> to vector<1x1xf32>
    %1104 = vector.extract_strided_slice %619 {offsets = [5, 0], sizes = [1, 1], strides = [1, 1]} : vector<8x1xf32> to vector<1x1xf32>
    %1105 = vector.extract_strided_slice %619 {offsets = [6, 0], sizes = [1, 1], strides = [1, 1]} : vector<8x1xf32> to vector<1x1xf32>
    %1106 = vector.extract_strided_slice %619 {offsets = [7, 0], sizes = [1, 1], strides = [1, 1]} : vector<8x1xf32> to vector<1x1xf32>
    %1107 = tpu.concatenate %1095, %1096, %1097, %1098, %1099, %1100, %1101, %1102, %1103, %1104, %1105, %1106 in 1 : vector<1x8xf32>, vector<1x8xf32>, vector<1x8xf32>, vector<1x8xf32>, vector<1x1xf32>, vector<1x1xf32>, vector<1x1xf32>, vector<1x1xf32>, vector<1x1xf32>, vector<1x1xf32>, vector<1x1xf32>, vector<1x1xf32> -> vector<1x40xf32>
    %1108 = tpu.concatenate %1094, %1107 in 0 : vector<1x40xf32>, vector<1x40xf32> -> vector<2x40xf32>
    %cst_419 = arith.constant dense<0.000000e+00> : vector<2xf32>
    %1109 = vector.multi_reduction <add>, %1108, %cst_419 [1] : vector<2x40xf32> to vector<2xf32>
    %1110 = vector.shape_cast %1109 : vector<2xf32> to vector<2x1xf32>
    %cst_420 = arith.constant 4.000000e+01 : f32
    %1111 = vector.broadcast %cst_420 : f32 to vector<2x1xf32>
    %1112 = arith.divf %1110, %1111 : vector<2x1xf32>
    %1113 = vector.broadcast %1112 : vector<2x1xf32> to vector<2x40xf32>
    %1114 = arith.subf %1108, %1113 : vector<2x40xf32>
    %1115 = arith.mulf %1114, %1114 : vector<2x40xf32>
    %cst_421 = arith.constant dense<0.000000e+00> : vector<2xf32>
    %1116 = vector.multi_reduction <add>, %1115, %cst_421 [1] : vector<2x40xf32> to vector<2xf32>
    %1117 = vector.shape_cast %1116 : vector<2xf32> to vector<2x1xf32>
    %cst_422 = arith.constant 4.000000e+01 : f32
    %1118 = vector.broadcast %cst_422 : f32 to vector<2x1xf32>
    %1119 = arith.divf %1117, %1118 : vector<2x1xf32>
    %cst_423 = arith.constant 9.99999974E-6 : f32
    %1120 = vector.broadcast %cst_423 : f32 to vector<2x1xf32>
    %1121 = arith.addf %1119, %1120 : vector<2x1xf32>
    %1122 = math.rsqrt %1121 : vector<2x1xf32>
    %1123 = vector.broadcast %1122 : vector<2x1xf32> to vector<2x40xf32>
    %1124 = arith.mulf %1114, %1123 : vector<2x40xf32>
    %c152 = arith.constant 152 : index
    %c0_424 = arith.constant 0 : index
    %1125 = vector.load %arg2[%c152, %c0_424] : memref<1264x128xf32, #tpu.memory_space<vmem>>, vector<1x40xf32>
    %1126 = vector.broadcast %1125 : vector<1x40xf32> to vector<2x40xf32>
    %1127 = arith.mulf %1124, %1126 : vector<2x40xf32>
    %c144 = arith.constant 144 : index
    %c0_425 = arith.constant 0 : index
    %1128 = vector.load %arg2[%c144, %c0_425] : memref<1264x128xf32, #tpu.memory_space<vmem>>, vector<1x40xf32>
    %1129 = vector.broadcast %1128 : vector<1x40xf32> to vector<2x40xf32>
    %1130 = arith.addf %1127, %1129 : vector<2x40xf32>
    %c160 = arith.constant 160 : index
    %c0_426 = arith.constant 0 : index
    %1131 = vector.load %arg2[%c160, %c0_426] : memref<1264x128xf32, #tpu.memory_space<vmem>>, vector<40x8xf32>
    %cst_427 = arith.constant dense<0.000000e+00> : vector<2x8xf32>
    %1132 = tpu.matmul %1130, %1131, %cst_427 {dimension_numbers = #tpu.dot_dimension_numbers<[1], [0], [0], [1], [0, 0, 1, 1], [], []>} : vector<2x40xf32>, vector<40x8xf32>, vector<2x8xf32> -> vector<2x8xf32>
    %c128 = arith.constant 128 : index
    %c0_428 = arith.constant 0 : index
    %1133 = vector.load %arg2[%c128, %c0_428] : memref<1264x128xf32, #tpu.memory_space<vmem>>, vector<1x8xf32>
    %1134 = vector.broadcast %1133 : vector<1x8xf32> to vector<2x8xf32>
    %1135 = arith.addf %1132, %1134 : vector<2x8xf32>
    %cst_429 = arith.constant 5.000000e-01 : f32
    %1136 = vector.broadcast %cst_429 : f32 to vector<2x8xf32>
    %1137 = arith.mulf %1136, %1135 : vector<2x8xf32>
    %cst_430 = arith.constant 0.707106769 : f32
    %1138 = vector.broadcast %cst_430 : f32 to vector<2x8xf32>
    %1139 = arith.mulf %1135, %1138 : vector<2x8xf32>
    %cst_431 = arith.constant 0.000000e+00 : f32
    %1140 = vector.broadcast %cst_431 : f32 to vector<2x8xf32>
    %1141 = arith.cmpf oge, %1139, %1140 : vector<2x8xf32>
    %cst_432 = arith.constant 1.000000e+00 : f32
    %cst_433 = arith.constant -1.000000e+00 : f32
    %1142 = vector.broadcast %cst_432 : f32 to vector<2x8xf32>
    %1143 = vector.broadcast %cst_433 : f32 to vector<2x8xf32>
    %1144 = arith.select %1141, %1142, %1143 : vector<2x8xi1>, vector<2x8xf32>
    %1145 = math.absf %1139 : vector<2x8xf32>
    %cst_434 = arith.constant 0.327591091 : f32
    %1146 = vector.broadcast %cst_434 : f32 to vector<2x8xf32>
    %1147 = arith.mulf %1146, %1145 : vector<2x8xf32>
    %cst_435 = arith.constant 1.000000e+00 : f32
    %1148 = vector.broadcast %cst_435 : f32 to vector<2x8xf32>
    %1149 = arith.addf %1148, %1147 : vector<2x8xf32>
    %cst_436 = arith.constant 1.000000e+00 : f32
    %1150 = vector.broadcast %cst_436 : f32 to vector<2x8xf32>
    %1151 = arith.divf %1150, %1149 : vector<2x8xf32>
    %cst_437 = arith.constant 1.06140542 : f32
    %1152 = vector.broadcast %cst_437 : f32 to vector<2x8xf32>
    %1153 = arith.mulf %1152, %1151 : vector<2x8xf32>
    %cst_438 = arith.constant -1.45315206 : f32
    %1154 = vector.broadcast %cst_438 : f32 to vector<2x8xf32>
    %1155 = arith.addf %1153, %1154 : vector<2x8xf32>
    %1156 = arith.mulf %1155, %1151 : vector<2x8xf32>
    %cst_439 = arith.constant 1.42141378 : f32
    %1157 = vector.broadcast %cst_439 : f32 to vector<2x8xf32>
    %1158 = arith.addf %1156, %1157 : vector<2x8xf32>
    %1159 = arith.mulf %1158, %1151 : vector<2x8xf32>
    %cst_440 = arith.constant -0.284496725 : f32
    %1160 = vector.broadcast %cst_440 : f32 to vector<2x8xf32>
    %1161 = arith.addf %1159, %1160 : vector<2x8xf32>
    %1162 = arith.mulf %1161, %1151 : vector<2x8xf32>
    %cst_441 = arith.constant 0.254829586 : f32
    %1163 = vector.broadcast %cst_441 : f32 to vector<2x8xf32>
    %1164 = arith.addf %1162, %1163 : vector<2x8xf32>
    %1165 = arith.mulf %1164, %1151 : vector<2x8xf32>
    %cst_442 = arith.constant 0.000000e+00 : f32
    %1166 = vector.broadcast %cst_442 : f32 to vector<2x8xf32>
    %1167 = arith.subf %1166, %1145 : vector<2x8xf32>
    %1168 = arith.mulf %1167, %1145 : vector<2x8xf32>
    %1169 = math.exp %1168 : vector<2x8xf32>
    %1170 = arith.mulf %1165, %1169 : vector<2x8xf32>
    %cst_443 = arith.constant 1.000000e+00 : f32
    %1171 = vector.broadcast %cst_443 : f32 to vector<2x8xf32>
    %1172 = arith.subf %1171, %1170 : vector<2x8xf32>
    %1173 = arith.mulf %1144, %1172 : vector<2x8xf32>
    %cst_444 = arith.constant 1.000000e+00 : f32
    %1174 = vector.broadcast %cst_444 : f32 to vector<2x8xf32>
    %1175 = arith.addf %1174, %1173 : vector<2x8xf32>
    %1176 = arith.mulf %1137, %1175 : vector<2x8xf32>
    %c200 = arith.constant 200 : index
    %c0_445 = arith.constant 0 : index
    %1177 = vector.load %arg2[%c200, %c0_445] : memref<1264x128xf32, #tpu.memory_space<vmem>>, vector<8x8xf32>
    %cst_446 = arith.constant dense<0.000000e+00> : vector<2x8xf32>
    %1178 = tpu.matmul %1176, %1177, %cst_446 {dimension_numbers = #tpu.dot_dimension_numbers<[1], [0], [0], [1], [0, 0, 1, 1], [], []>} : vector<2x8xf32>, vector<8x8xf32>, vector<2x8xf32> -> vector<2x8xf32>
    %c136 = arith.constant 136 : index
    %c0_447 = arith.constant 0 : index
    %1179 = vector.load %arg2[%c136, %c0_447] : memref<1264x128xf32, #tpu.memory_space<vmem>>, vector<1x8xf32>
    %1180 = vector.broadcast %1179 : vector<1x8xf32> to vector<2x8xf32>
    %1181 = arith.addf %1178, %1180 : vector<2x8xf32>
    %1182 = vector.extract_strided_slice %1081 {offsets = [0, 0], sizes = [1, 8], strides = [1, 1]} : vector<8x8xf32> to vector<1x8xf32>
    %1183 = vector.extract_strided_slice %1081 {offsets = [1, 0], sizes = [1, 8], strides = [1, 1]} : vector<8x8xf32> to vector<1x8xf32>
    %1184 = vector.extract_strided_slice %1081 {offsets = [2, 0], sizes = [1, 8], strides = [1, 1]} : vector<8x8xf32> to vector<1x8xf32>
    %1185 = vector.extract_strided_slice %1081 {offsets = [3, 0], sizes = [1, 8], strides = [1, 1]} : vector<8x8xf32> to vector<1x8xf32>
    %1186 = vector.extract_strided_slice %235 {offsets = [0, 0], sizes = [1, 1], strides = [1, 1]} : vector<8x1xf32> to vector<1x1xf32>
    %1187 = vector.extract_strided_slice %235 {offsets = [1, 0], sizes = [1, 1], strides = [1, 1]} : vector<8x1xf32> to vector<1x1xf32>
    %1188 = vector.extract_strided_slice %235 {offsets = [2, 0], sizes = [1, 1], strides = [1, 1]} : vector<8x1xf32> to vector<1x1xf32>
    %1189 = vector.extract_strided_slice %235 {offsets = [3, 0], sizes = [1, 1], strides = [1, 1]} : vector<8x1xf32> to vector<1x1xf32>
    %1190 = vector.extract_strided_slice %775 {offsets = [0, 0], sizes = [1, 1], strides = [1, 1]} : vector<8x1xf32> to vector<1x1xf32>
    %1191 = vector.extract_strided_slice %775 {offsets = [1, 0], sizes = [1, 1], strides = [1, 1]} : vector<8x1xf32> to vector<1x1xf32>
    %1192 = vector.extract_strided_slice %775 {offsets = [2, 0], sizes = [1, 1], strides = [1, 1]} : vector<8x1xf32> to vector<1x1xf32>
    %1193 = vector.extract_strided_slice %775 {offsets = [3, 0], sizes = [1, 1], strides = [1, 1]} : vector<8x1xf32> to vector<1x1xf32>
    %1194 = tpu.concatenate %1182, %1183, %1184, %1185, %1186, %1187, %1188, %1189, %1190, %1191, %1192, %1193 in 1 : vector<1x8xf32>, vector<1x8xf32>, vector<1x8xf32>, vector<1x8xf32>, vector<1x1xf32>, vector<1x1xf32>, vector<1x1xf32>, vector<1x1xf32>, vector<1x1xf32>, vector<1x1xf32>, vector<1x1xf32>, vector<1x1xf32> -> vector<1x40xf32>
    %1195 = vector.extract_strided_slice %1081 {offsets = [4, 0], sizes = [1, 8], strides = [1, 1]} : vector<8x8xf32> to vector<1x8xf32>
    %1196 = vector.extract_strided_slice %1081 {offsets = [5, 0], sizes = [1, 8], strides = [1, 1]} : vector<8x8xf32> to vector<1x8xf32>
    %1197 = vector.extract_strided_slice %1081 {offsets = [6, 0], sizes = [1, 8], strides = [1, 1]} : vector<8x8xf32> to vector<1x8xf32>
    %1198 = vector.extract_strided_slice %1081 {offsets = [7, 0], sizes = [1, 8], strides = [1, 1]} : vector<8x8xf32> to vector<1x8xf32>
    %1199 = vector.extract_strided_slice %235 {offsets = [4, 0], sizes = [1, 1], strides = [1, 1]} : vector<8x1xf32> to vector<1x1xf32>
    %1200 = vector.extract_strided_slice %235 {offsets = [5, 0], sizes = [1, 1], strides = [1, 1]} : vector<8x1xf32> to vector<1x1xf32>
    %1201 = vector.extract_strided_slice %235 {offsets = [6, 0], sizes = [1, 1], strides = [1, 1]} : vector<8x1xf32> to vector<1x1xf32>
    %1202 = vector.extract_strided_slice %235 {offsets = [7, 0], sizes = [1, 1], strides = [1, 1]} : vector<8x1xf32> to vector<1x1xf32>
    %1203 = vector.extract_strided_slice %775 {offsets = [4, 0], sizes = [1, 1], strides = [1, 1]} : vector<8x1xf32> to vector<1x1xf32>
    %1204 = vector.extract_strided_slice %775 {offsets = [5, 0], sizes = [1, 1], strides = [1, 1]} : vector<8x1xf32> to vector<1x1xf32>
    %1205 = vector.extract_strided_slice %775 {offsets = [6, 0], sizes = [1, 1], strides = [1, 1]} : vector<8x1xf32> to vector<1x1xf32>
    %1206 = vector.extract_strided_slice %775 {offsets = [7, 0], sizes = [1, 1], strides = [1, 1]} : vector<8x1xf32> to vector<1x1xf32>
    %1207 = tpu.concatenate %1195, %1196, %1197, %1198, %1199, %1200, %1201, %1202, %1203, %1204, %1205, %1206 in 1 : vector<1x8xf32>, vector<1x8xf32>, vector<1x8xf32>, vector<1x8xf32>, vector<1x1xf32>, vector<1x1xf32>, vector<1x1xf32>, vector<1x1xf32>, vector<1x1xf32>, vector<1x1xf32>, vector<1x1xf32>, vector<1x1xf32> -> vector<1x40xf32>
    %1208 = tpu.concatenate %1194, %1207 in 0 : vector<1x40xf32>, vector<1x40xf32> -> vector<2x40xf32>
    %cst_448 = arith.constant dense<0.000000e+00> : vector<2xf32>
    %1209 = vector.multi_reduction <add>, %1208, %cst_448 [1] : vector<2x40xf32> to vector<2xf32>
    %1210 = vector.shape_cast %1209 : vector<2xf32> to vector<2x1xf32>
    %cst_449 = arith.constant 4.000000e+01 : f32
    %1211 = vector.broadcast %cst_449 : f32 to vector<2x1xf32>
    %1212 = arith.divf %1210, %1211 : vector<2x1xf32>
    %1213 = vector.broadcast %1212 : vector<2x1xf32> to vector<2x40xf32>
    %1214 = arith.subf %1208, %1213 : vector<2x40xf32>
    %1215 = arith.mulf %1214, %1214 : vector<2x40xf32>
    %cst_450 = arith.constant dense<0.000000e+00> : vector<2xf32>
    %1216 = vector.multi_reduction <add>, %1215, %cst_450 [1] : vector<2x40xf32> to vector<2xf32>
    %1217 = vector.shape_cast %1216 : vector<2xf32> to vector<2x1xf32>
    %cst_451 = arith.constant 4.000000e+01 : f32
    %1218 = vector.broadcast %cst_451 : f32 to vector<2x1xf32>
    %1219 = arith.divf %1217, %1218 : vector<2x1xf32>
    %cst_452 = arith.constant 9.99999974E-6 : f32
    %1220 = vector.broadcast %cst_452 : f32 to vector<2x1xf32>
    %1221 = arith.addf %1219, %1220 : vector<2x1xf32>
    %1222 = math.rsqrt %1221 : vector<2x1xf32>
    %1223 = vector.broadcast %1222 : vector<2x1xf32> to vector<2x40xf32>
    %1224 = arith.mulf %1214, %1223 : vector<2x40xf32>
    %c232 = arith.constant 232 : index
    %c0_453 = arith.constant 0 : index
    %1225 = vector.load %arg2[%c232, %c0_453] : memref<1264x128xf32, #tpu.memory_space<vmem>>, vector<1x40xf32>
    %1226 = vector.broadcast %1225 : vector<1x40xf32> to vector<2x40xf32>
    %1227 = arith.mulf %1224, %1226 : vector<2x40xf32>
    %c224 = arith.constant 224 : index
    %c0_454 = arith.constant 0 : index
    %1228 = vector.load %arg2[%c224, %c0_454] : memref<1264x128xf32, #tpu.memory_space<vmem>>, vector<1x40xf32>
    %1229 = vector.broadcast %1228 : vector<1x40xf32> to vector<2x40xf32>
    %1230 = arith.addf %1227, %1229 : vector<2x40xf32>
    %c240 = arith.constant 240 : index
    %c0_455 = arith.constant 0 : index
    %1231 = vector.load %arg2[%c240, %c0_455] : memref<1264x128xf32, #tpu.memory_space<vmem>>, vector<40x8xf32>
    %cst_456 = arith.constant dense<0.000000e+00> : vector<2x8xf32>
    %1232 = tpu.matmul %1230, %1231, %cst_456 {dimension_numbers = #tpu.dot_dimension_numbers<[1], [0], [0], [1], [0, 0, 1, 1], [], []>} : vector<2x40xf32>, vector<40x8xf32>, vector<2x8xf32> -> vector<2x8xf32>
    %c208 = arith.constant 208 : index
    %c0_457 = arith.constant 0 : index
    %1233 = vector.load %arg2[%c208, %c0_457] : memref<1264x128xf32, #tpu.memory_space<vmem>>, vector<1x8xf32>
    %1234 = vector.broadcast %1233 : vector<1x8xf32> to vector<2x8xf32>
    %1235 = arith.addf %1232, %1234 : vector<2x8xf32>
    %cst_458 = arith.constant 5.000000e-01 : f32
    %1236 = vector.broadcast %cst_458 : f32 to vector<2x8xf32>
    %1237 = arith.mulf %1236, %1235 : vector<2x8xf32>
    %cst_459 = arith.constant 0.707106769 : f32
    %1238 = vector.broadcast %cst_459 : f32 to vector<2x8xf32>
    %1239 = arith.mulf %1235, %1238 : vector<2x8xf32>
    %cst_460 = arith.constant 0.000000e+00 : f32
    %1240 = vector.broadcast %cst_460 : f32 to vector<2x8xf32>
    %1241 = arith.cmpf oge, %1239, %1240 : vector<2x8xf32>
    %cst_461 = arith.constant 1.000000e+00 : f32
    %cst_462 = arith.constant -1.000000e+00 : f32
    %1242 = vector.broadcast %cst_461 : f32 to vector<2x8xf32>
    %1243 = vector.broadcast %cst_462 : f32 to vector<2x8xf32>
    %1244 = arith.select %1241, %1242, %1243 : vector<2x8xi1>, vector<2x8xf32>
    %1245 = math.absf %1239 : vector<2x8xf32>
    %cst_463 = arith.constant 0.327591091 : f32
    %1246 = vector.broadcast %cst_463 : f32 to vector<2x8xf32>
    %1247 = arith.mulf %1246, %1245 : vector<2x8xf32>
    %cst_464 = arith.constant 1.000000e+00 : f32
    %1248 = vector.broadcast %cst_464 : f32 to vector<2x8xf32>
    %1249 = arith.addf %1248, %1247 : vector<2x8xf32>
    %cst_465 = arith.constant 1.000000e+00 : f32
    %1250 = vector.broadcast %cst_465 : f32 to vector<2x8xf32>
    %1251 = arith.divf %1250, %1249 : vector<2x8xf32>
    %cst_466 = arith.constant 1.06140542 : f32
    %1252 = vector.broadcast %cst_466 : f32 to vector<2x8xf32>
    %1253 = arith.mulf %1252, %1251 : vector<2x8xf32>
    %cst_467 = arith.constant -1.45315206 : f32
    %1254 = vector.broadcast %cst_467 : f32 to vector<2x8xf32>
    %1255 = arith.addf %1253, %1254 : vector<2x8xf32>
    %1256 = arith.mulf %1255, %1251 : vector<2x8xf32>
    %cst_468 = arith.constant 1.42141378 : f32
    %1257 = vector.broadcast %cst_468 : f32 to vector<2x8xf32>
    %1258 = arith.addf %1256, %1257 : vector<2x8xf32>
    %1259 = arith.mulf %1258, %1251 : vector<2x8xf32>
    %cst_469 = arith.constant -0.284496725 : f32
    %1260 = vector.broadcast %cst_469 : f32 to vector<2x8xf32>
    %1261 = arith.addf %1259, %1260 : vector<2x8xf32>
    %1262 = arith.mulf %1261, %1251 : vector<2x8xf32>
    %cst_470 = arith.constant 0.254829586 : f32
    %1263 = vector.broadcast %cst_470 : f32 to vector<2x8xf32>
    %1264 = arith.addf %1262, %1263 : vector<2x8xf32>
    %1265 = arith.mulf %1264, %1251 : vector<2x8xf32>
    %cst_471 = arith.constant 0.000000e+00 : f32
    %1266 = vector.broadcast %cst_471 : f32 to vector<2x8xf32>
    %1267 = arith.subf %1266, %1245 : vector<2x8xf32>
    %1268 = arith.mulf %1267, %1245 : vector<2x8xf32>
    %1269 = math.exp %1268 : vector<2x8xf32>
    %1270 = arith.mulf %1265, %1269 : vector<2x8xf32>
    %cst_472 = arith.constant 1.000000e+00 : f32
    %1271 = vector.broadcast %cst_472 : f32 to vector<2x8xf32>
    %1272 = arith.subf %1271, %1270 : vector<2x8xf32>
    %1273 = arith.mulf %1244, %1272 : vector<2x8xf32>
    %cst_473 = arith.constant 1.000000e+00 : f32
    %1274 = vector.broadcast %cst_473 : f32 to vector<2x8xf32>
    %1275 = arith.addf %1274, %1273 : vector<2x8xf32>
    %1276 = arith.mulf %1237, %1275 : vector<2x8xf32>
    %c280 = arith.constant 280 : index
    %c0_474 = arith.constant 0 : index
    %1277 = vector.load %arg2[%c280, %c0_474] : memref<1264x128xf32, #tpu.memory_space<vmem>>, vector<8x8xf32>
    %cst_475 = arith.constant dense<0.000000e+00> : vector<2x8xf32>
    %1278 = tpu.matmul %1276, %1277, %cst_475 {dimension_numbers = #tpu.dot_dimension_numbers<[1], [0], [0], [1], [0, 0, 1, 1], [], []>} : vector<2x8xf32>, vector<8x8xf32>, vector<2x8xf32> -> vector<2x8xf32>
    %c216 = arith.constant 216 : index
    %c0_476 = arith.constant 0 : index
    %1279 = vector.load %arg2[%c216, %c0_476] : memref<1264x128xf32, #tpu.memory_space<vmem>>, vector<1x8xf32>
    %1280 = vector.broadcast %1279 : vector<1x8xf32> to vector<2x8xf32>
    %1281 = arith.addf %1278, %1280 : vector<2x8xf32>
    %1282 = tpu.concatenate %1181, %1281 in 1 : vector<2x8xf32>, vector<2x8xf32> -> vector<2x16xf32>
    %cst_477 = arith.constant dense<0.000000e+00> : vector<2xf32>
    %1283 = vector.multi_reduction <add>, %1282, %cst_477 [1] : vector<2x16xf32> to vector<2xf32>
    %1284 = vector.shape_cast %1283 : vector<2xf32> to vector<2x1xf32>
    %cst_478 = arith.constant 1.600000e+01 : f32
    %1285 = vector.broadcast %cst_478 : f32 to vector<2x1xf32>
    %1286 = arith.divf %1284, %1285 : vector<2x1xf32>
    %1287 = vector.broadcast %1286 : vector<2x1xf32> to vector<2x16xf32>
    %1288 = arith.subf %1282, %1287 : vector<2x16xf32>
    %1289 = arith.mulf %1288, %1288 : vector<2x16xf32>
    %cst_479 = arith.constant dense<0.000000e+00> : vector<2xf32>
    %1290 = vector.multi_reduction <add>, %1289, %cst_479 [1] : vector<2x16xf32> to vector<2xf32>
    %1291 = vector.shape_cast %1290 : vector<2xf32> to vector<2x1xf32>
    %cst_480 = arith.constant 1.600000e+01 : f32
    %1292 = vector.broadcast %cst_480 : f32 to vector<2x1xf32>
    %1293 = arith.divf %1291, %1292 : vector<2x1xf32>
    %cst_481 = arith.constant 9.99999974E-6 : f32
    %1294 = vector.broadcast %cst_481 : f32 to vector<2x1xf32>
    %1295 = arith.addf %1293, %1294 : vector<2x1xf32>
    %1296 = math.rsqrt %1295 : vector<2x1xf32>
    %1297 = vector.broadcast %1296 : vector<2x1xf32> to vector<2x16xf32>
    %1298 = arith.mulf %1288, %1297 : vector<2x16xf32>
    %c1224 = arith.constant 1224 : index
    %c0_482 = arith.constant 0 : index
    %1299 = vector.load %arg2[%c1224, %c0_482] : memref<1264x128xf32, #tpu.memory_space<vmem>>, vector<1x16xf32>
    %1300 = vector.broadcast %1299 : vector<1x16xf32> to vector<2x16xf32>
    %1301 = arith.mulf %1298, %1300 : vector<2x16xf32>
    %c1216 = arith.constant 1216 : index
    %c0_483 = arith.constant 0 : index
    %1302 = vector.load %arg2[%c1216, %c0_483] : memref<1264x128xf32, #tpu.memory_space<vmem>>, vector<1x16xf32>
    %1303 = vector.broadcast %1302 : vector<1x16xf32> to vector<2x16xf32>
    %1304 = arith.addf %1301, %1303 : vector<2x16xf32>
    %c1232 = arith.constant 1232 : index
    %c0_484 = arith.constant 0 : index
    %1305 = vector.load %arg2[%c1232, %c0_484] : memref<1264x128xf32, #tpu.memory_space<vmem>>, vector<16x16xf32>
    %cst_485 = arith.constant dense<0.000000e+00> : vector<2x16xf32>
    %1306 = tpu.matmul %1304, %1305, %cst_485 {dimension_numbers = #tpu.dot_dimension_numbers<[1], [0], [0], [1], [0, 0, 1, 1], [], []>} : vector<2x16xf32>, vector<16x16xf32>, vector<2x16xf32> -> vector<2x16xf32>
    %c1200 = arith.constant 1200 : index
    %c0_486 = arith.constant 0 : index
    %1307 = vector.load %arg2[%c1200, %c0_486] : memref<1264x128xf32, #tpu.memory_space<vmem>>, vector<1x16xf32>
    %1308 = vector.broadcast %1307 : vector<1x16xf32> to vector<2x16xf32>
    %1309 = arith.addf %1306, %1308 : vector<2x16xf32>
    %cst_487 = arith.constant 5.000000e-01 : f32
    %1310 = vector.broadcast %cst_487 : f32 to vector<2x16xf32>
    %1311 = arith.mulf %1310, %1309 : vector<2x16xf32>
    %cst_488 = arith.constant 0.707106769 : f32
    %1312 = vector.broadcast %cst_488 : f32 to vector<2x16xf32>
    %1313 = arith.mulf %1309, %1312 : vector<2x16xf32>
    %cst_489 = arith.constant 0.000000e+00 : f32
    %1314 = vector.broadcast %cst_489 : f32 to vector<2x16xf32>
    %1315 = arith.cmpf oge, %1313, %1314 : vector<2x16xf32>
    %cst_490 = arith.constant 1.000000e+00 : f32
    %cst_491 = arith.constant -1.000000e+00 : f32
    %1316 = vector.broadcast %cst_490 : f32 to vector<2x16xf32>
    %1317 = vector.broadcast %cst_491 : f32 to vector<2x16xf32>
    %1318 = arith.select %1315, %1316, %1317 : vector<2x16xi1>, vector<2x16xf32>
    %1319 = math.absf %1313 : vector<2x16xf32>
    %cst_492 = arith.constant 0.327591091 : f32
    %1320 = vector.broadcast %cst_492 : f32 to vector<2x16xf32>
    %1321 = arith.mulf %1320, %1319 : vector<2x16xf32>
    %cst_493 = arith.constant 1.000000e+00 : f32
    %1322 = vector.broadcast %cst_493 : f32 to vector<2x16xf32>
    %1323 = arith.addf %1322, %1321 : vector<2x16xf32>
    %cst_494 = arith.constant 1.000000e+00 : f32
    %1324 = vector.broadcast %cst_494 : f32 to vector<2x16xf32>
    %1325 = arith.divf %1324, %1323 : vector<2x16xf32>
    %cst_495 = arith.constant 1.06140542 : f32
    %1326 = vector.broadcast %cst_495 : f32 to vector<2x16xf32>
    %1327 = arith.mulf %1326, %1325 : vector<2x16xf32>
    %cst_496 = arith.constant -1.45315206 : f32
    %1328 = vector.broadcast %cst_496 : f32 to vector<2x16xf32>
    %1329 = arith.addf %1327, %1328 : vector<2x16xf32>
    %1330 = arith.mulf %1329, %1325 : vector<2x16xf32>
    %cst_497 = arith.constant 1.42141378 : f32
    %1331 = vector.broadcast %cst_497 : f32 to vector<2x16xf32>
    %1332 = arith.addf %1330, %1331 : vector<2x16xf32>
    %1333 = arith.mulf %1332, %1325 : vector<2x16xf32>
    %cst_498 = arith.constant -0.284496725 : f32
    %1334 = vector.broadcast %cst_498 : f32 to vector<2x16xf32>
    %1335 = arith.addf %1333, %1334 : vector<2x16xf32>
    %1336 = arith.mulf %1335, %1325 : vector<2x16xf32>
    %cst_499 = arith.constant 0.254829586 : f32
    %1337 = vector.broadcast %cst_499 : f32 to vector<2x16xf32>
    %1338 = arith.addf %1336, %1337 : vector<2x16xf32>
    %1339 = arith.mulf %1338, %1325 : vector<2x16xf32>
    %cst_500 = arith.constant 0.000000e+00 : f32
    %1340 = vector.broadcast %cst_500 : f32 to vector<2x16xf32>
    %1341 = arith.subf %1340, %1319 : vector<2x16xf32>
    %1342 = arith.mulf %1341, %1319 : vector<2x16xf32>
    %1343 = math.exp %1342 : vector<2x16xf32>
    %1344 = arith.mulf %1339, %1343 : vector<2x16xf32>
    %cst_501 = arith.constant 1.000000e+00 : f32
    %1345 = vector.broadcast %cst_501 : f32 to vector<2x16xf32>
    %1346 = arith.subf %1345, %1344 : vector<2x16xf32>
    %1347 = arith.mulf %1318, %1346 : vector<2x16xf32>
    %cst_502 = arith.constant 1.000000e+00 : f32
    %1348 = vector.broadcast %cst_502 : f32 to vector<2x16xf32>
    %1349 = arith.addf %1348, %1347 : vector<2x16xf32>
    %1350 = arith.mulf %1311, %1349 : vector<2x16xf32>
    %c1248 = arith.constant 1248 : index
    %c0_503 = arith.constant 0 : index
    %1351 = vector.load %arg2[%c1248, %c0_503] : memref<1264x128xf32, #tpu.memory_space<vmem>>, vector<16x10xf32>
    %cst_504 = arith.constant dense<0.000000e+00> : vector<2x10xf32>
    %1352 = tpu.matmul %1350, %1351, %cst_504 {dimension_numbers = #tpu.dot_dimension_numbers<[1], [0], [0], [1], [0, 0, 1, 1], [], []>} : vector<2x16xf32>, vector<16x10xf32>, vector<2x10xf32> -> vector<2x10xf32>
    %c1208 = arith.constant 1208 : index
    %c0_505 = arith.constant 0 : index
    %1353 = vector.load %arg2[%c1208, %c0_505] : memref<1264x128xf32, #tpu.memory_space<vmem>>, vector<1x10xf32>
    %1354 = vector.broadcast %1353 : vector<1x10xf32> to vector<2x10xf32>
    %1355 = arith.addf %1352, %1354 : vector<2x10xf32>
    %c0_506 = arith.constant 0 : index
    %c0_507 = arith.constant 0 : index
    %1356 = vector.load %arg3[%c0_506, %c0_507] : memref<2x10xf32, #tpu.memory_space<vmem>>, vector<2x10xf32>
    tpu.vector_store %arg3[%c0_506, %c0_507], %1355 {strides = array<i32>} : memref<2x10xf32, #tpu.memory_space<vmem>>, vector<2x10xf32>,
    return
  }
}

</mosaic_0001>

<llo_original>
// kernel: _lambda_.1
$region0: #{_lambda_.1}
  #allocation0 [shape = 'u32[]', space=smem, size = 0x4, offset = 0x4, fixed_abs, tag = 'smem constant byte address 0x4 - core index']
  #allocation1 [shape = 'u32[144,128]{1,0:T(1,128)}', space=vmem, size = 0x12000, scoped, tag = 'internal scratch']
  %s0 = inlined_call_operand.hbm [shape: f32[8,32], index: 0, kind: input, shape index: {}]
  %s1 = inlined_call_operand.vmem [shape: f32[8,32], index: 1, kind: input, shape index: {}]
  %s2 = inlined_call_operand.hbm [shape: f32[1264,128], index: 2, kind: input, shape index: {}]
  %s3 = inlined_call_operand.hbm [shape: f32[2,10], index: 3, kind: output, shape index: {}]
  %s4 = sld [smem:[#allocation0]]
  $region30: #{_lambda_.1} parent=0
    _
  %s6 = ssub.s32 1, %s4
  %s7 = scalar_select 0, %s6, %s4
  $region1: #{_lambda_.1} parent=0
    #allocation2 [shape = 'u8[4096]{0}', space=vmem, size = 0x1000, scoped, tag = 'input window, operand 0, single buffered']
    #allocation3 [shape = 's32[1]{0}', space=sflag, size = 0x4, scoped, tag = 'scoped memory for _lambda_.1']
    #allocation4 [shape = 's32[1]{0}', space=sflag, size = 0x4, scoped, tag = 'scoped memory for _lambda_.1']
    #allocation5 [shape = 'u8[647168]{0}', space=vmem, size = 0x9e000, scoped, tag = 'input window, operand 2, single buffered']
    #allocation6 [shape = 's32[1]{0}', space=sflag, size = 0x4, scoped, tag = 'scoped memory for _lambda_.1']
    #allocation7 [shape = 'u8[1024]{0}', space=vmem, size = 0x400, scoped, tag = 'output window, operand 0, single buffered']
    %8 = vsyncpa [#allocation3], 0
    %9 = vsyncpa [#allocation6], 0
    %10 = vsyncpa [#allocation4], 0
    // Predicated region
    $region2: #{_lambda_.1} parent=1 // pred_check
      _
    $region3: #{_lambda_.1} parent=1 // pred_check_branch
      %12 = sbr.rel (0) target = $region5
    $region4: #{_lambda_.1} parent=1 // pred_region
      %s14 = ssub.s32 128, 128
      %15 = vsyncadd [#allocation3], %s14
      %s17 = sshll.u32 [#allocation2], 4
      %s18 = int_to_ptr.vmem [resolvable:$true] %s17
      %20 = dma.hbm_to_vmem [thread:$0]  %s0, 128, %s18, [#allocation3]
    $region5: #{_lambda_.1} parent=1 // pred_fallthru
      _
    // Predicated region
    $region6: #{_lambda_.1} parent=1 // pred_check
      _
    $region7: #{_lambda_.1} parent=1 // pred_check_branch
      %22 = sbr.rel (0) target = $region9
    $region8: #{_lambda_.1} parent=1 // pred_region
      _
    $region9: #{_lambda_.1} parent=1 // pred_fallthru
      _
    // Predicated region
    $region10: #{_lambda_.1} parent=1 // pred_check
      _
    $region11: #{_lambda_.1} parent=1 // pred_check_branch
      %24 = sbr.rel (0) target = $region13
    $region12: #{_lambda_.1} parent=1 // pred_region
      %s26 = ssub.s32 20224, 20224
      %27 = vsyncadd [#allocation6], %s26
      %s28 = sshll.u32 [#allocation5], 4
      %s29 = int_to_ptr.vmem [resolvable:$true] %s28
      %34 = dma.hbm_to_vmem [thread:$0]  %s2, 20224, %s29, [#allocation6], 128, 128, 8
    $region13: #{_lambda_.1} parent=1 // pred_fallthru
      _
    // Predicated region
    $region14: #{_lambda_.1} parent=1 // pred_check
      _
    $region15: #{_lambda_.1} parent=1 // pred_check_branch
      %36 = sbr.rel (0) target = $region17
    $region16: #{_lambda_.1} parent=1 // pred_region
      %37 = dma.done [#allocation3], 128
    $region17: #{_lambda_.1} parent=1 // pred_fallthru
      _
    // Predicated region
    $region18: #{_lambda_.1} parent=1 // pred_check
      _
    $region19: #{_lambda_.1} parent=1 // pred_check_branch
      %39 = sbr.rel (0) target = $region21
    $region20: #{_lambda_.1} parent=1 // pred_region
      %40 = dma.done [#allocation6], 20224
    $region21: #{_lambda_.1} parent=1 // pred_fallthru
      _
    %v41 = vld [vmem:[#allocation2] sm:$0xff]
    %v42 = vld [vmem:[%s1] sm:$0xff]
    %v43 = vld [vmem:[#allocation5 + $0x40] sm:$0xff]
    %v44 = vld [vmem:[#allocation5 + $0x48] sm:$0xff]
    %v45 = vld [vmem:[#allocation5 + $0x50] sm:$0xff]
    %v46 = vld [vmem:[#allocation5 + $0x58] sm:$0xff]
    %v47 = vld [vmem:[#allocation5 + $0x60] sm:$0xff]
    %v48 = vld [vmem:[#allocation5 + $0x68] sm:$0xff]
    %v49 = vld [vmem:[#allocation5 + $0x70] sm:$0xff]
    %v50 = vld [vmem:[#allocation5 + $0x78] sm:$0xff]
    %vm51 = vcmask 261120
    %v53 = vsel %vm51, %v41, 0
    %55 = vmatprep.subr.mxu0 0.0
    %56 = vmatpush1.msra.mxu0 %v43
    %57 = vmatprep.subr.mxu0 0.0
    %58 = vmatpush1.msra.mxu0 %v44
    %59 = vmatprep.subr.mxu0 0.0
    %60 = vmatpush1.msra.mxu0 %v45
    %61 = vmatprep.subr.mxu0 0.0
    %62 = vmatpush1.msra.mxu0 %v46
    %63 = vmatprep.subr.mxu0 0.0
    %64 = vmatpush1.msra.mxu0 0.0
    %65 = vmatprep.subr.mxu0 0.0
    %66 = vmatpush1.msra.mxu0 0.0
    %67 = vmatprep.subr.mxu0 0.0
    %68 = vmatpush1.msra.mxu0 0.0
    %69 = vmatprep.subr.mxu0 0.0
    %70 = vmatpush1.msra.mxu0 0.0
    %71 = vmatprep.subr.mxu0 0.0
    %72 = vmatpush1.msra.mxu0 0.0
    %73 = vmatprep.subr.mxu0 0.0
    %74 = vmatpush1.msra.mxu0 0.0
    %75 = vmatprep.subr.mxu0 0.0
    %76 = vmatpush1.msra.mxu0 0.0
    %77 = vmatprep.subr.mxu0 0.0
    %78 = vmatpush1.msra.mxu0 0.0
    %79 = vmatprep.subr.mxu0 0.0
    %80 = vmatpush1.msra.mxu0 0.0
    %81 = vmatprep.subr.mxu0 0.0
    %82 = vmatpush1.msra.mxu0 0.0
    %83 = vmatprep.subr.mxu0 0.0
    %84 = vmatpush1.msra.mxu0 0.0
    %85 = vmatprep.subr.mxu0 0.0
    %86 = vmatpush1.msra.mxu0 0.0
    %87 = vmatprep.subr.mxu0 0.0
    %88 = vmatpush1.msra.mxu0 0.0
    %89 = vmatprep.subr.mxu0 0.0
    %90 = vmatpush1.msra.mxu0 0.0
    %91 = vmatprep.subr.mxu0 0.0
    %92 = vmatpush1.msra.mxu0 0.0
    %93 = vmatprep.subr.mxu0 0.0
    %94 = vmatpush1.msra.mxu0 0.0
    %95 = vmatprep.subr.mxu0 0.0
    %96 = vmatpush1.msra.mxu0 0.0
    %97 = vmatprep.subr.mxu0 0.0
    %98 = vmatpush1.msra.mxu0 0.0
    %99 = vmatprep.subr.mxu0 0.0
    %100 = vmatpush1.msra.mxu0 0.0
    %101 = vmatprep.subr.mxu0 0.0
    %102 = vmatpush1.msra.mxu0 0.0
    %103 = vmatprep.subr.mxu0 0.0
    %104 = vmatpush1.msra.mxu0 0.0
    %105 = vmatprep.subr.mxu0 0.0
    %106 = vmatpush1.msra.mxu0 0.0
    %107 = vmatprep.subr.mxu0 0.0
    %108 = vmatpush1.msra.mxu0 0.0
    %109 = vmatprep.subr.mxu0 0.0
    %110 = vmatpush1.msra.mxu0 0.0
    %111 = vmatprep.subr.mxu0 0.0
    %112 = vmatpush1.msra.mxu0 0.0
    %113 = vmatprep.subr.mxu0 0.0
    %114 = vmatpush1.msra.mxu0 0.0
    %115 = vmatprep.subr.mxu0 0.0
    %116 = vmatpush1.msra.mxu0 0.0
    %117 = vmatprep.subr.mxu0 0.0
    %118 = vmatpush1.msra.mxu0 0.0
    %119 = vmatprep.mubr.f32.mxu0 0.0
    %120 = vmatmul.mubr.f32.gmra.mrb[0].mxu0 %v53
    %v121 = vpop.f32.mrb[0].mxu0
    %v122 = vadd.f32 0.0, %v121
    %v123 = vpop.f32.mrb[0].mxu0
    %124 = vdwg.mxu0
    %125 = vmatprep.subr.mxu0 0.0
    %126 = vmatpush1.msra.mxu0 %v47
    %127 = vmatprep.subr.mxu0 0.0
    %128 = vmatpush1.msra.mxu0 %v48
    %129 = vmatprep.subr.mxu0 0.0
    %130 = vmatpush1.msra.mxu0 %v49
    %131 = vmatprep.subr.mxu0 0.0
    %132 = vmatpush1.msra.mxu0 %v50
    %133 = vmatprep.subr.mxu0 0.0
    %134 = vmatpush1.msra.mxu0 0.0
    %135 = vmatprep.subr.mxu0 0.0
    %136 = vmatpush1.msra.mxu0 0.0
    %137 = vmatprep.subr.mxu0 0.0
    %138 = vmatpush1.msra.mxu0 0.0
    %139 = vmatprep.subr.mxu0 0.0
    %140 = vmatpush1.msra.mxu0 0.0
    %141 = vmatprep.subr.mxu0 0.0
    %142 = vmatpush1.msra.mxu0 0.0
    %143 = vmatprep.subr.mxu0 0.0
    %144 = vmatpush1.msra.mxu0 0.0
    %145 = vmatprep.subr.mxu0 0.0
    %146 = vmatpush1.msra.mxu0 0.0
    %147 = vmatprep.subr.mxu0 0.0
    %148 = vmatpush1.msra.mxu0 0.0
    %149 = vmatprep.subr.mxu0 0.0
    %150 = vmatpush1.msra.mxu0 0.0
    %151 = vmatprep.subr.mxu0 0.0
    %152 = vmatpush1.msra.mxu0 0.0
    %153 = vmatprep.subr.mxu0 0.0
    %154 = vmatpush1.msra.mxu0 0.0
    %155 = vmatprep.subr.mxu0 0.0
    %156 = vmatpush1.msra.mxu0 0.0
    %157 = vmatprep.subr.mxu0 0.0
    %158 = vmatpush1.msra.mxu0 0.0
    %159 = vmatprep.subr.mxu0 0.0
    %160 = vmatpush1.msra.mxu0 0.0
    %161 = vmatprep.subr.mxu0 0.0
    %162 = vmatpush1.msra.mxu0 0.0
    %163 = vmatprep.subr.mxu0 0.0
    %164 = vmatpush1.msra.mxu0 0.0
    %165 = vmatprep.subr.mxu0 0.0
    %166 = vmatpush1.msra.mxu0 0.0
    %167 = vmatprep.subr.mxu0 0.0
    %168 = vmatpush1.msra.mxu0 0.0
    %169 = vmatprep.subr.mxu0 0.0
    %170 = vmatpush1.msra.mxu0 0.0
    %171 = vmatprep.subr.mxu0 0.0
    %172 = vmatpush1.msra.mxu0 0.0
    %173 = vmatprep.subr.mxu0 0.0
    %174 = vmatpush1.msra.mxu0 0.0
    %175 = vmatprep.subr.mxu0 0.0
    %176 = vmatpush1.msra.mxu0 0.0
    %177 = vmatprep.subr.mxu0 0.0
    %178 = vmatpush1.msra.mxu0 0.0
    %179 = vmatprep.subr.mxu0 0.0
    %180 = vmatpush1.msra.mxu0 0.0
    %181 = vmatprep.subr.mxu0 0.0
    %182 = vmatpush1.msra.mxu0 0.0
    %183 = vmatprep.subr.mxu0 0.0
    %184 = vmatpush1.msra.mxu0 0.0
    %185 = vmatprep.subr.mxu0 0.0
    %186 = vmatpush1.msra.mxu0 0.0
    %187 = vmatprep.subr.mxu0 0.0
    %188 = vmatpush1.msra.mxu0 0.0
    %189 = vmatprep.mubr.f32.mxu0 0.0
    %190 = vmatmul.mubr.f32.gmra.mrb[0].mxu0 %v53
    %v191 = vpop.f32.mrb[0].mxu0
    %v192 = vadd.f32 0.0, %v191
    %v193 = vpop.f32.mrb[0].mxu0
    %194 = vdwg.mxu0
    %v195 = vmax.f32 %v122, %v192
    %v196 = vld [vmem:[#allocation5 + $0x138] sm:$0xff]
    %v197 = vld [vmem:[#allocation5 + $0x140] sm:$0xff]
    %vm198 = vcmask 130048
    %v200 = vsel %vm198, %v195, 0
    %202 = vmatprep.subr.mxu0 0.0
    %203 = vmatpush1.msra.mxu0 %v196
    %204 = vmatprep.subr.mxu0 0.0
    %205 = vmatpush1.msra.mxu0 %v197
    %206 = vmatprep.subr.mxu0 0.0
    %207 = vmatpush1.msra.mxu0 0.0
    %208 = vmatprep.subr.mxu0 0.0
    %209 = vmatpush1.msra.mxu0 0.0
    %210 = vmatprep.subr.mxu0 0.0
    %211 = vmatpush1.msra.mxu0 0.0
    %212 = vmatprep.subr.mxu0 0.0
    %213 = vmatpush1.msra.mxu0 0.0
    %214 = vmatprep.subr.mxu0 0.0
    %215 = vmatpush1.msra.mxu0 0.0
    %216 = vmatprep.subr.mxu0 0.0
    %217 = vmatpush1.msra.mxu0 0.0
    %218 = vmatprep.subr.mxu0 0.0
    %219 = vmatpush1.msra.mxu0 0.0
    %220 = vmatprep.subr.mxu0 0.0
    %221 = vmatpush1.msra.mxu0 0.0
    %222 = vmatprep.subr.mxu0 0.0
    %223 = vmatpush1.msra.mxu0 0.0
    %224 = vmatprep.subr.mxu0 0.0
    %225 = vmatpush1.msra.mxu0 0.0
    %226 = vmatprep.subr.mxu0 0.0
    %227 = vmatpush1.msra.mxu0 0.0
    %228 = vmatprep.subr.mxu0 0.0
    %229 = vmatpush1.msra.mxu0 0.0
    %230 = vmatprep.subr.mxu0 0.0
    %231 = vmatpush1.msra.mxu0 0.0
    %232 = vmatprep.subr.mxu0 0.0
    %233 = vmatpush1.msra.mxu0 0.0
    %234 = vmatprep.subr.mxu0 0.0
    %235 = vmatpush1.msra.mxu0 0.0
    %236 = vmatprep.subr.mxu0 0.0
    %237 = vmatpush1.msra.mxu0 0.0
    %238 = vmatprep.subr.mxu0 0.0
    %239 = vmatpush1.msra.mxu0 0.0
    %240 = vmatprep.subr.mxu0 0.0
    %241 = vmatpush1.msra.mxu0 0.0
    %242 = vmatprep.subr.mxu0 0.0
    %243 = vmatpush1.msra.mxu0 0.0
    %244 = vmatprep.subr.mxu0 0.0
    %245 = vmatpush1.msra.mxu0 0.0
    %246 = vmatprep.subr.mxu0 0.0
    %247 = vmatpush1.msra.mxu0 0.0
    %248 = vmatprep.subr.mxu0 0.0
    %249 = vmatpush1.msra.mxu0 0.0
    %250 = vmatprep.subr.mxu0 0.0
    %251 = vmatpush1.msra.mxu0 0.0
    %252 = vmatprep.subr.mxu0 0.0
    %253 = vmatpush1.msra.mxu0 0.0
    %254 = vmatprep.subr.mxu0 0.0
    %255 = vmatpush1.msra.mxu0 0.0
    %256 = vmatprep.subr.mxu0 0.0
    %257 = vmatpush1.msra.mxu0 0.0
    %258 = vmatprep.subr.mxu0 0.0
    %259 = vmatpush1.msra.mxu0 0.0
    %260 = vmatprep.subr.mxu0 0.0
    %261 = vmatpush1.msra.mxu0 0.0
    %262 = vmatprep.subr.mxu0 0.0
    %263 = vmatpush1.msra.mxu0 0.0
    %264 = vmatprep.subr.mxu0 0.0
    %265 = vmatpush1.msra.mxu0 0.0
    %266 = vmatprep.mubr.f32.mxu0 0.0
    %267 = vmatmul.mubr.f32.gmra.mrb[0].mxu0 %v200
    %v268 = vpop.f32.mrb[0].mxu0
    %v269 = vadd.f32 0.0, %v268
    %v270 = vpop.f32.mrb[0].mxu0
    %271 = vdwg.mxu0
    %v272 = vld [vmem:[#allocation5 + $0x10] sm:$0xff]
    %274 = vrot.lane.b32.xlu0 %v269, 112
    %v275 = vpop.permute.xlu0 %274
    %vm276 = vcmask 64512
    %v277 = vsel %vm276, %v269, 0
    %v279 = vsel %vm276, %v275, 0
    %281 = vmatprep.subr.mxu0 0.0
    %282 = vmatpush1.xpose.msra.mxu0 %v279
    %283 = vmatprep.subr.mxu0 0.0
    %284 = vmatpush1.xpose.msra.mxu0 0.0
    %285 = vmatprep.subr.mxu0 0.0
    %286 = vmatpush1.xpose.msra.mxu0 0.0
    %287 = vmatprep.subr.mxu0 0.0
    %288 = vmatpush1.xpose.msra.mxu0 0.0
    %289 = vmatprep.subr.mxu0 0.0
    %290 = vmatpush1.xpose.msra.mxu0 0.0
    %291 = vmatprep.subr.mxu0 0.0
    %292 = vmatpush1.xpose.msra.mxu0 0.0
    %293 = vmatprep.subr.mxu0 0.0
    %294 = vmatpush1.xpose.msra.mxu0 0.0
    %295 = vmatprep.subr.mxu0 0.0
    %296 = vmatpush1.xpose.msra.mxu0 0.0
    %297 = vmatprep.subr.mxu0 0.0
    %298 = vmatpush1.xpose.msra.mxu0 0.0
    %299 = vmatprep.subr.mxu0 0.0
    %300 = vmatpush1.xpose.msra.mxu0 0.0
    %301 = vmatprep.subr.mxu0 0.0
    %302 = vmatpush1.xpose.msra.mxu0 0.0
    %303 = vmatprep.subr.mxu0 0.0
    %304 = vmatpush1.xpose.msra.mxu0 0.0
    %305 = vmatprep.subr.mxu0 0.0
    %306 = vmatpush1.xpose.msra.mxu0 0.0
    %307 = vmatprep.subr.mxu0 0.0
    %308 = vmatpush1.xpose.msra.mxu0 0.0
    %309 = vmatprep.subr.mxu0 0.0
    %310 = vmatpush1.xpose.msra.mxu0 0.0
    %311 = vmatprep.subr.mxu0 0.0
    %312 = vmatpush1.xpose.msra.mxu0 0.0
    %313 = vmatprep.subr.mxu0 0.0
    %314 = vmatpush1.xpose.msra.mxu0 0.0
    %315 = vmatprep.subr.mxu0 0.0
    %316 = vmatpush1.xpose.msra.mxu0 0.0
    %317 = vmatprep.subr.mxu0 0.0
    %318 = vmatpush1.xpose.msra.mxu0 0.0
    %319 = vmatprep.subr.mxu0 0.0
    %320 = vmatpush1.xpose.msra.mxu0 0.0
    %321 = vmatprep.subr.mxu0 0.0
    %322 = vmatpush1.xpose.msra.mxu0 0.0
    %323 = vmatprep.subr.mxu0 0.0
    %324 = vmatpush1.xpose.msra.mxu0 0.0
    %325 = vmatprep.subr.mxu0 0.0
    %326 = vmatpush1.xpose.msra.mxu0 0.0
    %327 = vmatprep.subr.mxu0 0.0
    %328 = vmatpush1.xpose.msra.mxu0 0.0
    %329 = vmatprep.subr.mxu0 0.0
    %330 = vmatpush1.xpose.msra.mxu0 0.0
    %331 = vmatprep.subr.mxu0 0.0
    %332 = vmatpush1.xpose.msra.mxu0 0.0
    %333 = vmatprep.subr.mxu0 0.0
    %334 = vmatpush1.xpose.msra.mxu0 0.0
    %335 = vmatprep.subr.mxu0 0.0
    %336 = vmatpush1.xpose.msra.mxu0 0.0
    %337 = vmatprep.subr.mxu0 0.0
    %338 = vmatpush1.xpose.msra.mxu0 0.0
    %339 = vmatprep.subr.mxu0 0.0
    %340 = vmatpush1.xpose.msra.mxu0 0.0
    %341 = vmatprep.subr.mxu0 0.0
    %342 = vmatpush1.xpose.msra.mxu0 0.0
    %343 = vmatprep.subr.mxu0 0.0
    %344 = vmatpush1.xpose.msra.mxu0 0.0
    %345 = vmatprep.mubr.f32.mxu0 0.0
    %346 = vmatmul.mubr.f32.gmra.mrb[0].mxu0 %v277
    %v347 = vpop.f32.mrb[0].mxu0
    %v348 = vadd.f32 %v272, %v347
    %v349 = vpop.f32.mrb[0].mxu0
    %350 = vdwg.mxu0
    %v351 = vsel %vm276, %v348, -inf
    %352 = vmax.xlane.f32.xlu0 %v351
    %v353 = vpop.xlane.xlu0 %352
    %v354 = vsub.f32 %v348, %v353
    %v355 = vmul.f32 %v354, 1.442695
    %v356 = vpow.pop %v355
    %v357 = vsel %vm276, %v356, 0.0
    %358 = vadd.xlane.f32.xlu0 %v357
    %v359 = vpop.xlane.xlu0 %358
    %v360 = vrcp.pop %v359
    %v361 = vmul.f32 %v356, %v360
    %362 = vrot.lane.b32.xlu0 %v269, 96
    %v363 = vpop.permute.xlu0 %362
    %v366 = vsel %vm276, %v361, 0
    %368 = vmatprep.subr.mxu0 0.0
    %369 = vmatpush1.msra.mxu0 %v363
    %370 = vmatprep.subr.mxu0 0.0
    %371 = vmatpush1.msra.mxu0 0.0
    %372 = vmatprep.subr.mxu0 0.0
    %373 = vmatpush1.msra.mxu0 0.0
    %374 = vmatprep.subr.mxu0 0.0
    %375 = vmatpush1.msra.mxu0 0.0
    %376 = vmatprep.subr.mxu0 0.0
    %377 = vmatpush1.msra.mxu0 0.0
    %378 = vmatprep.subr.mxu0 0.0
    %379 = vmatpush1.msra.mxu0 0.0
    %380 = vmatprep.subr.mxu0 0.0
    %381 = vmatpush1.msra.mxu0 0.0
    %382 = vmatprep.subr.mxu0 0.0
    %383 = vmatpush1.msra.mxu0 0.0
    %384 = vmatprep.subr.mxu0 0.0
    %385 = vmatpush1.msra.mxu0 0.0
    %386 = vmatprep.subr.mxu0 0.0
    %387 = vmatpush1.msra.mxu0 0.0
    %388 = vmatprep.subr.mxu0 0.0
    %389 = vmatpush1.msra.mxu0 0.0
    %390 = vmatprep.subr.mxu0 0.0
    %391 = vmatpush1.msra.mxu0 0.0
    %392 = vmatprep.subr.mxu0 0.0
    %393 = vmatpush1.msra.mxu0 0.0
    %394 = vmatprep.subr.mxu0 0.0
    %395 = vmatpush1.msra.mxu0 0.0
    %396 = vmatprep.subr.mxu0 0.0
    %397 = vmatpush1.msra.mxu0 0.0
    %398 = vmatprep.subr.mxu0 0.0
    %399 = vmatpush1.msra.mxu0 0.0
    %400 = vmatprep.subr.mxu0 0.0
    %401 = vmatpush1.msra.mxu0 0.0
    %402 = vmatprep.subr.mxu0 0.0
    %403 = vmatpush1.msra.mxu0 0.0
    %404 = vmatprep.subr.mxu0 0.0
    %405 = vmatpush1.msra.mxu0 0.0
    %406 = vmatprep.subr.mxu0 0.0
    %407 = vmatpush1.msra.mxu0 0.0
    %408 = vmatprep.subr.mxu0 0.0
    %409 = vmatpush1.msra.mxu0 0.0
    %410 = vmatprep.subr.mxu0 0.0
    %411 = vmatpush1.msra.mxu0 0.0
    %412 = vmatprep.subr.mxu0 0.0
    %413 = vmatpush1.msra.mxu0 0.0
    %414 = vmatprep.subr.mxu0 0.0
    %415 = vmatpush1.msra.mxu0 0.0
    %416 = vmatprep.subr.mxu0 0.0
    %417 = vmatpush1.msra.mxu0 0.0
    %418 = vmatprep.subr.mxu0 0.0
    %419 = vmatpush1.msra.mxu0 0.0
    %420 = vmatprep.subr.mxu0 0.0
    %421 = vmatpush1.msra.mxu0 0.0
    %422 = vmatprep.subr.mxu0 0.0
    %423 = vmatpush1.msra.mxu0 0.0
    %424 = vmatprep.subr.mxu0 0.0
    %425 = vmatpush1.msra.mxu0 0.0
    %426 = vmatprep.subr.mxu0 0.0
    %427 = vmatpush1.msra.mxu0 0.0
    %428 = vmatprep.subr.mxu0 0.0
    %429 = vmatpush1.msra.mxu0 0.0
    %430 = vmatprep.subr.mxu0 0.0
    %431 = vmatpush1.msra.mxu0 0.0
    %432 = vmatprep.mubr.f32.mxu0 0.0
    %433 = vmatmul.mubr.f32.gmra.mrb[0].mxu0 %v366
    %v434 = vpop.f32.mrb[0].mxu0
    %v435 = vadd.f32 0.0, %v434
    %v436 = vpop.f32.mrb[0].mxu0
    %437 = vdwg.mxu0
    %438 = vrot.lane.b32.xlu0 %v269, 120
    %v439 = vpop.permute.xlu0 %438
    %440 = vrot.lane.b32.xlu0 %v269, 104
    %v441 = vpop.permute.xlu0 %440
    %v442 = vsel %vm276, %v439, 0
    %v444 = vsel %vm276, %v441, 0
    %446 = vmatprep.subr.mxu0 0.0
    %447 = vmatpush1.xpose.msra.mxu0 %v444
    %448 = vmatprep.subr.mxu0 0.0
    %449 = vmatpush1.xpose.msra.mxu0 0.0
    %450 = vmatprep.subr.mxu0 0.0
    %451 = vmatpush1.xpose.msra.mxu0 0.0
    %452 = vmatprep.subr.mxu0 0.0
    %453 = vmatpush1.xpose.msra.mxu0 0.0
    %454 = vmatprep.subr.mxu0 0.0
    %455 = vmatpush1.xpose.msra.mxu0 0.0
    %456 = vmatprep.subr.mxu0 0.0
    %457 = vmatpush1.xpose.msra.mxu0 0.0
    %458 = vmatprep.subr.mxu0 0.0
    %459 = vmatpush1.xpose.msra.mxu0 0.0
    %460 = vmatprep.subr.mxu0 0.0
    %461 = vmatpush1.xpose.msra.mxu0 0.0
    %462 = vmatprep.subr.mxu0 0.0
    %463 = vmatpush1.xpose.msra.mxu0 0.0
    %464 = vmatprep.subr.mxu0 0.0
    %465 = vmatpush1.xpose.msra.mxu0 0.0
    %466 = vmatprep.subr.mxu0 0.0
    %467 = vmatpush1.xpose.msra.mxu0 0.0
    %468 = vmatprep.subr.mxu0 0.0
    %469 = vmatpush1.xpose.msra.mxu0 0.0
    %470 = vmatprep.subr.mxu0 0.0
    %471 = vmatpush1.xpose.msra.mxu0 0.0
    %472 = vmatprep.subr.mxu0 0.0
    %473 = vmatpush1.xpose.msra.mxu0 0.0
    %474 = vmatprep.subr.mxu0 0.0
    %475 = vmatpush1.xpose.msra.mxu0 0.0
    %476 = vmatprep.subr.mxu0 0.0
    %477 = vmatpush1.xpose.msra.mxu0 0.0
    %478 = vmatprep.subr.mxu0 0.0
    %479 = vmatpush1.xpose.msra.mxu0 0.0
    %480 = vmatprep.subr.mxu0 0.0
    %481 = vmatpush1.xpose.msra.mxu0 0.0
    %482 = vmatprep.subr.mxu0 0.0
    %483 = vmatpush1.xpose.msra.mxu0 0.0
    %484 = vmatprep.subr.mxu0 0.0
    %485 = vmatpush1.xpose.msra.mxu0 0.0
    %486 = vmatprep.subr.mxu0 0.0
    %487 = vmatpush1.xpose.msra.mxu0 0.0
    %488 = vmatprep.subr.mxu0 0.0
    %489 = vmatpush1.xpose.msra.mxu0 0.0
    %490 = vmatprep.subr.mxu0 0.0
    %491 = vmatpush1.xpose.msra.mxu0 0.0
    %492 = vmatprep.subr.mxu0 0.0
    %493 = vmatpush1.xpose.msra.mxu0 0.0
    %494 = vmatprep.subr.mxu0 0.0
    %495 = vmatpush1.xpose.msra.mxu0 0.0
    %496 = vmatprep.subr.mxu0 0.0
    %497 = vmatpush1.xpose.msra.mxu0 0.0
    %498 = vmatprep.subr.mxu0 0.0
    %499 = vmatpush1.xpose.msra.mxu0 0.0
    %500 = vmatprep.subr.mxu0 0.0
    %501 = vmatpush1.xpose.msra.mxu0 0.0
    %502 = vmatprep.subr.mxu0 0.0
    %503 = vmatpush1.xpose.msra.mxu0 0.0
    %504 = vmatprep.subr.mxu0 0.0
    %505 = vmatpush1.xpose.msra.mxu0 0.0
    %506 = vmatprep.subr.mxu0 0.0
    %507 = vmatpush1.xpose.msra.mxu0 0.0
    %508 = vmatprep.subr.mxu0 0.0
    %509 = vmatpush1.xpose.msra.mxu0 0.0
    %510 = vmatprep.mubr.f32.mxu0 0.0
    %511 = vmatmul.mubr.f32.gmra.mrb[0].mxu0 %v442
    %v512 = vpop.f32.mrb[0].mxu0
    %v513 = vadd.f32 %v272, %v512
    %v514 = vpop.f32.mrb[0].mxu0
    %515 = vdwg.mxu0
    %v516 = vsel %vm276, %v513, -inf
    %517 = vmax.xlane.f32.xlu0 %v516
    %v518 = vpop.xlane.xlu0 %517
    %v519 = vsub.f32 %v513, %v518
    %v520 = vmul.f32 %v519, 1.442695
    %v521 = vpow.pop %v520
    %v522 = vsel %vm276, %v521, 0.0
    %523 = vadd.xlane.f32.xlu0 %v522
    %v524 = vpop.xlane.xlu0 %523
    %v525 = vrcp.pop %v524
    %v526 = vmul.f32 %v521, %v525
    %527 = vrot.lane.b32.xlu0 %v269, 88
    %v528 = vpop.permute.xlu0 %527
    %v531 = vsel %vm276, %v526, 0
    %533 = vmatprep.subr.mxu0 0.0
    %534 = vmatpush1.msra.mxu0 %v528
    %535 = vmatprep.subr.mxu0 0.0
    %536 = vmatpush1.msra.mxu0 0.0
    %537 = vmatprep.subr.mxu0 0.0
    %538 = vmatpush1.msra.mxu0 0.0
    %539 = vmatprep.subr.mxu0 0.0
    %540 = vmatpush1.msra.mxu0 0.0
    %541 = vmatprep.subr.mxu0 0.0
    %542 = vmatpush1.msra.mxu0 0.0
    %543 = vmatprep.subr.mxu0 0.0
    %544 = vmatpush1.msra.mxu0 0.0
    %545 = vmatprep.subr.mxu0 0.0
    %546 = vmatpush1.msra.mxu0 0.0
    %547 = vmatprep.subr.mxu0 0.0
    %548 = vmatpush1.msra.mxu0 0.0
    %549 = vmatprep.subr.mxu0 0.0
    %550 = vmatpush1.msra.mxu0 0.0
    %551 = vmatprep.subr.mxu0 0.0
    %552 = vmatpush1.msra.mxu0 0.0
    %553 = vmatprep.subr.mxu0 0.0
    %554 = vmatpush1.msra.mxu0 0.0
    %555 = vmatprep.subr.mxu0 0.0
    %556 = vmatpush1.msra.mxu0 0.0
    %557 = vmatprep.subr.mxu0 0.0
    %558 = vmatpush1.msra.mxu0 0.0
    %559 = vmatprep.subr.mxu0 0.0
    %560 = vmatpush1.msra.mxu0 0.0
    %561 = vmatprep.subr.mxu0 0.0
    %562 = vmatpush1.msra.mxu0 0.0
    %563 = vmatprep.subr.mxu0 0.0
    %564 = vmatpush1.msra.mxu0 0.0
    %565 = vmatprep.subr.mxu0 0.0
    %566 = vmatpush1.msra.mxu0 0.0
    %567 = vmatprep.subr.mxu0 0.0
    %568 = vmatpush1.msra.mxu0 0.0
    %569 = vmatprep.subr.mxu0 0.0
    %570 = vmatpush1.msra.mxu0 0.0
    %571 = vmatprep.subr.mxu0 0.0
    %572 = vmatpush1.msra.mxu0 0.0
    %573 = vmatprep.subr.mxu0 0.0
    %574 = vmatpush1.msra.mxu0 0.0
    %575 = vmatprep.subr.mxu0 0.0
    %576 = vmatpush1.msra.mxu0 0.0
    %577 = vmatprep.subr.mxu0 0.0
    %578 = vmatpush1.msra.mxu0 0.0
    %579 = vmatprep.subr.mxu0 0.0
    %580 = vmatpush1.msra.mxu0 0.0
    %581 = vmatprep.subr.mxu0 0.0
    %582 = vmatpush1.msra.mxu0 0.0
    %583 = vmatprep.subr.mxu0 0.0
    %584 = vmatpush1.msra.mxu0 0.0
    %585 = vmatprep.subr.mxu0 0.0
    %586 = vmatpush1.msra.mxu0 0.0
    %587 = vmatprep.subr.mxu0 0.0
    %588 = vmatpush1.msra.mxu0 0.0
    %589 = vmatprep.subr.mxu0 0.0
    %590 = vmatpush1.msra.mxu0 0.0
    %591 = vmatprep.subr.mxu0 0.0
    %592 = vmatpush1.msra.mxu0 0.0
    %593 = vmatprep.subr.mxu0 0.0
    %594 = vmatpush1.msra.mxu0 0.0
    %595 = vmatprep.subr.mxu0 0.0
    %596 = vmatpush1.msra.mxu0 0.0
    %597 = vmatprep.mubr.f32.mxu0 0.0
    %598 = vmatmul.mubr.f32.gmra.mrb[0].mxu0 %v531
    %v599 = vpop.f32.mrb[0].mxu0
    %v600 = vadd.f32 0.0, %v599
    %v601 = vpop.f32.mrb[0].mxu0
    %602 = vdwg.mxu0
    %604 = vrot.lane.b32.xlu0 %v600, 8
    %v605 = vpop.permute.xlu0 %604
    %v607 = vsel %vm276, %v435, %v605
    %v608 = vld [vmem:[#allocation5 + $0x128] sm:$0xff]
    %v609 = vld [vmem:[#allocation5 + $0x130] sm:$0xff]
    %v610 = vld [vmem:[#allocation5 + $0x120] sm:$0x1]
    %v611 = vlaneseq
    %v612 = vshrl.u32 %v611, 7
    %v613 = vsub.s32 0, %v612
    %v614 = vrot.slane %v610, %v613
    %v616 = vsel %vm198, %v607, 0
    %618 = vmatprep.subr.mxu0 0.0
    %619 = vmatpush1.msra.mxu0 %v608
    %620 = vmatprep.subr.mxu0 0.0
    %621 = vmatpush1.msra.mxu0 %v609
    %622 = vmatprep.subr.mxu0 0.0
    %623 = vmatpush1.msra.mxu0 0.0
    %624 = vmatprep.subr.mxu0 0.0
    %625 = vmatpush1.msra.mxu0 0.0
    %626 = vmatprep.subr.mxu0 0.0
    %627 = vmatpush1.msra.mxu0 0.0
    %628 = vmatprep.subr.mxu0 0.0
    %629 = vmatpush1.msra.mxu0 0.0
    %630 = vmatprep.subr.mxu0 0.0
    %631 = vmatpush1.msra.mxu0 0.0
    %632 = vmatprep.subr.mxu0 0.0
    %633 = vmatpush1.msra.mxu0 0.0
    %634 = vmatprep.subr.mxu0 0.0
    %635 = vmatpush1.msra.mxu0 0.0
    %636 = vmatprep.subr.mxu0 0.0
    %637 = vmatpush1.msra.mxu0 0.0
    %638 = vmatprep.subr.mxu0 0.0
    %639 = vmatpush1.msra.mxu0 0.0
    %640 = vmatprep.subr.mxu0 0.0
    %641 = vmatpush1.msra.mxu0 0.0
    %642 = vmatprep.subr.mxu0 0.0
    %643 = vmatpush1.msra.mxu0 0.0
    %644 = vmatprep.subr.mxu0 0.0
    %645 = vmatpush1.msra.mxu0 0.0
    %646 = vmatprep.subr.mxu0 0.0
    %647 = vmatpush1.msra.mxu0 0.0
    %648 = vmatprep.subr.mxu0 0.0
    %649 = vmatpush1.msra.mxu0 0.0
    %650 = vmatprep.subr.mxu0 0.0
    %651 = vmatpush1.msra.mxu0 0.0
    %652 = vmatprep.subr.mxu0 0.0
    %653 = vmatpush1.msra.mxu0 0.0
    %654 = vmatprep.subr.mxu0 0.0
    %655 = vmatpush1.msra.mxu0 0.0
    %656 = vmatprep.subr.mxu0 0.0
    %657 = vmatpush1.msra.mxu0 0.0
    %658 = vmatprep.subr.mxu0 0.0
    %659 = vmatpush1.msra.mxu0 0.0
    %660 = vmatprep.subr.mxu0 0.0
    %661 = vmatpush1.msra.mxu0 0.0
    %662 = vmatprep.subr.mxu0 0.0
    %663 = vmatpush1.msra.mxu0 0.0
    %664 = vmatprep.subr.mxu0 0.0
    %665 = vmatpush1.msra.mxu0 0.0
    %666 = vmatprep.subr.mxu0 0.0
    %667 = vmatpush1.msra.mxu0 0.0
    %668 = vmatprep.subr.mxu0 0.0
    %669 = vmatpush1.msra.mxu0 0.0
    %670 = vmatprep.subr.mxu0 0.0
    %671 = vmatpush1.msra.mxu0 0.0
    %672 = vmatprep.subr.mxu0 0.0
    %673 = vmatpush1.msra.mxu0 0.0
    %674 = vmatprep.subr.mxu0 0.0
    %675 = vmatpush1.msra.mxu0 0.0
    %676 = vmatprep.subr.mxu0 0.0
    %677 = vmatpush1.msra.mxu0 0.0
    %678 = vmatprep.subr.mxu0 0.0
    %679 = vmatpush1.msra.mxu0 0.0
    %680 = vmatprep.subr.mxu0 0.0
    %681 = vmatpush1.msra.mxu0 0.0
    %682 = vmatprep.mubr.f32.mxu0 0.0
    %683 = vmatmul.mubr.f32.gmra.mrb[0].mxu0 %v616
    %v684 = vpop.f32.mrb[0].mxu0
    %v685 = vadd.f32 %v614, %v684
    %v686 = vpop.f32.mrb[0].mxu0
    %687 = vdwg.mxu0
    %v688 = vadd.f32 %v685, %v195
    %689 = vrot.lane.b32.xlu0 %v41, 1
    %v690 = vpop.permute.xlu0 %689
    %vm692 = vcmask 7168
    %v693 = vsel %vm692, 0.0, %v690
    %vm694 = vcmask 269312
    %v695 = vsel %vm694, %v693, 0.0
    %697 = vrot.lane.b32.xlu0 %v695, 127
    %v698 = vpop.permute.xlu0 %697
    %700 = vrot.lane.b32.xlu0 %v695, 126
    %v701 = vpop.permute.xlu0 %700
    %v703 = vld [vmem:[#allocation5 + $0x150] sm:$0xff]
    %v704 = vld [vmem:[#allocation5 + $0x148] sm:$0xff]
    %706 = vset.pattern.permute.xlu0 0
    %707 = vperm.xlu0 %706, %v704
    %v708 = vpop.permute.xlu0 %707
    %vm710 = vcmask 195584
    %v712 = vsel %vm710, %v703, 0
    %714 = vmatprep.subr.mxu0 0.0
    %715 = vmatpush1.msra.mxu0 %v695
    %716 = vmatprep.subr.mxu0 0.0
    %717 = vmatpush1.msra.mxu0 %v698
    %718 = vmatprep.subr.mxu0 0.0
    %719 = vmatpush1.msra.mxu0 %v701
    %720 = vmatprep.subr.mxu0 0.0
    %721 = vmatpush1.msra.mxu0 0.0
    %722 = vmatprep.subr.mxu0 0.0
    %723 = vmatpush1.msra.mxu0 0.0
    %724 = vmatprep.subr.mxu0 0.0
    %725 = vmatpush1.msra.mxu0 0.0
    %726 = vmatprep.subr.mxu0 0.0
    %727 = vmatpush1.msra.mxu0 0.0
    %728 = vmatprep.subr.mxu0 0.0
    %729 = vmatpush1.msra.mxu0 0.0
    %730 = vmatprep.subr.mxu0 0.0
    %731 = vmatpush1.msra.mxu0 0.0
    %732 = vmatprep.subr.mxu0 0.0
    %733 = vmatpush1.msra.mxu0 0.0
    %734 = vmatprep.subr.mxu0 0.0
    %735 = vmatpush1.msra.mxu0 0.0
    %736 = vmatprep.subr.mxu0 0.0
    %737 = vmatpush1.msra.mxu0 0.0
    %738 = vmatprep.subr.mxu0 0.0
    %739 = vmatpush1.msra.mxu0 0.0
    %740 = vmatprep.subr.mxu0 0.0
    %741 = vmatpush1.msra.mxu0 0.0
    %742 = vmatprep.subr.mxu0 0.0
    %743 = vmatpush1.msra.mxu0 0.0
    %744 = vmatprep.subr.mxu0 0.0
    %745 = vmatpush1.msra.mxu0 0.0
    %746 = vmatprep.subr.mxu0 0.0
    %747 = vmatpush1.msra.mxu0 0.0
    %748 = vmatprep.subr.mxu0 0.0
    %749 = vmatpush1.msra.mxu0 0.0
    %750 = vmatprep.subr.mxu0 0.0
    %751 = vmatpush1.msra.mxu0 0.0
    %752 = vmatprep.subr.mxu0 0.0
    %753 = vmatpush1.msra.mxu0 0.0
    %754 = vmatprep.subr.mxu0 0.0
    %755 = vmatpush1.msra.mxu0 0.0
    %756 = vmatprep.subr.mxu0 0.0
    %757 = vmatpush1.msra.mxu0 0.0
    %758 = vmatprep.subr.mxu0 0.0
    %759 = vmatpush1.msra.mxu0 0.0
    %760 = vmatprep.subr.mxu0 0.0
    %761 = vmatpush1.msra.mxu0 0.0
    %762 = vmatprep.subr.mxu0 0.0
    %763 = vmatpush1.msra.mxu0 0.0
    %764 = vmatprep.subr.mxu0 0.0
    %765 = vmatpush1.msra.mxu0 0.0
    %766 = vmatprep.subr.mxu0 0.0
    %767 = vmatpush1.msra.mxu0 0.0
    %768 = vmatprep.subr.mxu0 0.0
    %769 = vmatpush1.msra.mxu0 0.0
    %770 = vmatprep.subr.mxu0 0.0
    %771 = vmatpush1.msra.mxu0 0.0
    %772 = vmatprep.subr.mxu0 0.0
    %773 = vmatpush1.msra.mxu0 0.0
    %774 = vmatprep.subr.mxu0 0.0
    %775 = vmatpush1.msra.mxu0 0.0
    %776 = vmatprep.subr.mxu0 0.0
    %777 = vmatpush1.msra.mxu0 0.0
    %778 = vmatprep.mubr.f32.mxu0 0.0
    %779 = vmatmul.mubr.f32.gmra.mrb[0].mxu0 %v712
    %v780 = vpop.f32.mrb[0].mxu0
    %v781 = vadd.f32 %v708, %v780
    %v782 = vpop.f32.mrb[0].mxu0
    %783 = vdwg.mxu0
    %vm784 = vcmp.gt.f32.partialorder %v781, 0.0
    %v785 = vmin.f32 %v781, 0.0
    %v786 = vmul.f32 %v785, 1.442695
    %v787 = vpow.pop %v786
    %v788 = vsub.f32 %v787, 1.0
    %v789 = vsel %vm784, %v781, %v788
    %v791 = vsel %vm51, %v789, 0
    %793 = vmatprep.subr.mxu0 0.0
    %794 = vmatpush1.msra.mxu0 %v43
    %795 = vmatprep.subr.mxu0 0.0
    %796 = vmatpush1.msra.mxu0 %v44
    %797 = vmatprep.subr.mxu0 0.0
    %798 = vmatpush1.msra.mxu0 %v45
    %799 = vmatprep.subr.mxu0 0.0
    %800 = vmatpush1.msra.mxu0 %v46
    %801 = vmatprep.subr.mxu0 0.0
    %802 = vmatpush1.msra.mxu0 0.0
    %803 = vmatprep.subr.mxu0 0.0
    %804 = vmatpush1.msra.mxu0 0.0
    %805 = vmatprep.subr.mxu0 0.0
    %806 = vmatpush1.msra.mxu0 0.0
    %807 = vmatprep.subr.mxu0 0.0
    %808 = vmatpush1.msra.mxu0 0.0
    %809 = vmatprep.subr.mxu0 0.0
    %810 = vmatpush1.msra.mxu0 0.0
    %811 = vmatprep.subr.mxu0 0.0
    %812 = vmatpush1.msra.mxu0 0.0
    %813 = vmatprep.subr.mxu0 0.0
    %814 = vmatpush1.msra.mxu0 0.0
    %815 = vmatprep.subr.mxu0 0.0
    %816 = vmatpush1.msra.mxu0 0.0
    %817 = vmatprep.subr.mxu0 0.0
    %818 = vmatpush1.msra.mxu0 0.0
    %819 = vmatprep.subr.mxu0 0.0
    %820 = vmatpush1.msra.mxu0 0.0
    %821 = vmatprep.subr.mxu0 0.0
    %822 = vmatpush1.msra.mxu0 0.0
    %823 = vmatprep.subr.mxu0 0.0
    %824 = vmatpush1.msra.mxu0 0.0
    %825 = vmatprep.subr.mxu0 0.0
    %826 = vmatpush1.msra.mxu0 0.0
    %827 = vmatprep.subr.mxu0 0.0
    %828 = vmatpush1.msra.mxu0 0.0
    %829 = vmatprep.subr.mxu0 0.0
    %830 = vmatpush1.msra.mxu0 0.0
    %831 = vmatprep.subr.mxu0 0.0
    %832 = vmatpush1.msra.mxu0 0.0
    %833 = vmatprep.subr.mxu0 0.0
    %834 = vmatpush1.msra.mxu0 0.0
    %835 = vmatprep.subr.mxu0 0.0
    %836 = vmatpush1.msra.mxu0 0.0
    %837 = vmatprep.subr.mxu0 0.0
    %838 = vmatpush1.msra.mxu0 0.0
    %839 = vmatprep.subr.mxu0 0.0
    %840 = vmatpush1.msra.mxu0 0.0
    %841 = vmatprep.subr.mxu0 0.0
    %842 = vmatpush1.msra.mxu0 0.0
    %843 = vmatprep.subr.mxu0 0.0
    %844 = vmatpush1.msra.mxu0 0.0
    %845 = vmatprep.subr.mxu0 0.0
    %846 = vmatpush1.msra.mxu0 0.0
    %847 = vmatprep.subr.mxu0 0.0
    %848 = vmatpush1.msra.mxu0 0.0
    %849 = vmatprep.subr.mxu0 0.0
    %850 = vmatpush1.msra.mxu0 0.0
    %851 = vmatprep.subr.mxu0 0.0
    %852 = vmatpush1.msra.mxu0 0.0
    %853 = vmatprep.subr.mxu0 0.0
    %854 = vmatpush1.msra.mxu0 0.0
    %855 = vmatprep.subr.mxu0 0.0
    %856 = vmatpush1.msra.mxu0 0.0
    %857 = vmatprep.mubr.f32.mxu0 0.0
    %858 = vmatmul.mubr.f32.gmra.mrb[0].mxu0 %v791
    %v859 = vpop.f32.mrb[0].mxu0
    %v860 = vadd.f32 0.0, %v859
    %v861 = vpop.f32.mrb[0].mxu0
    %862 = vdwg.mxu0
    %863 = vmatprep.subr.mxu0 0.0
    %864 = vmatpush1.msra.mxu0 %v47
    %865 = vmatprep.subr.mxu0 0.0
    %866 = vmatpush1.msra.mxu0 %v48
    %867 = vmatprep.subr.mxu0 0.0
    %868 = vmatpush1.msra.mxu0 %v49
    %869 = vmatprep.subr.mxu0 0.0
    %870 = vmatpush1.msra.mxu0 %v50
    %871 = vmatprep.subr.mxu0 0.0
    %872 = vmatpush1.msra.mxu0 0.0
    %873 = vmatprep.subr.mxu0 0.0
    %874 = vmatpush1.msra.mxu0 0.0
    %875 = vmatprep.subr.mxu0 0.0
    %876 = vmatpush1.msra.mxu0 0.0
    %877 = vmatprep.subr.mxu0 0.0
    %878 = vmatpush1.msra.mxu0 0.0
    %879 = vmatprep.subr.mxu0 0.0
    %880 = vmatpush1.msra.mxu0 0.0
    %881 = vmatprep.subr.mxu0 0.0
    %882 = vmatpush1.msra.mxu0 0.0
    %883 = vmatprep.subr.mxu0 0.0
    %884 = vmatpush1.msra.mxu0 0.0
    %885 = vmatprep.subr.mxu0 0.0
    %886 = vmatpush1.msra.mxu0 0.0
    %887 = vmatprep.subr.mxu0 0.0
    %888 = vmatpush1.msra.mxu0 0.0
    %889 = vmatprep.subr.mxu0 0.0
    %890 = vmatpush1.msra.mxu0 0.0
    %891 = vmatprep.subr.mxu0 0.0
    %892 = vmatpush1.msra.mxu0 0.0
    %893 = vmatprep.subr.mxu0 0.0
    %894 = vmatpush1.msra.mxu0 0.0
    %895 = vmatprep.subr.mxu0 0.0
    %896 = vmatpush1.msra.mxu0 0.0
    %897 = vmatprep.subr.mxu0 0.0
    %898 = vmatpush1.msra.mxu0 0.0
    %899 = vmatprep.subr.mxu0 0.0
    %900 = vmatpush1.msra.mxu0 0.0
    %901 = vmatprep.subr.mxu0 0.0
    %902 = vmatpush1.msra.mxu0 0.0
    %903 = vmatprep.subr.mxu0 0.0
    %904 = vmatpush1.msra.mxu0 0.0
    %905 = vmatprep.subr.mxu0 0.0
    %906 = vmatpush1.msra.mxu0 0.0
    %907 = vmatprep.subr.mxu0 0.0
    %908 = vmatpush1.msra.mxu0 0.0
    %909 = vmatprep.subr.mxu0 0.0
    %910 = vmatpush1.msra.mxu0 0.0
    %911 = vmatprep.subr.mxu0 0.0
    %912 = vmatpush1.msra.mxu0 0.0
    %913 = vmatprep.subr.mxu0 0.0
    %914 = vmatpush1.msra.mxu0 0.0
    %915 = vmatprep.subr.mxu0 0.0
    %916 = vmatpush1.msra.mxu0 0.0
    %917 = vmatprep.subr.mxu0 0.0
    %918 = vmatpush1.msra.mxu0 0.0
    %919 = vmatprep.subr.mxu0 0.0
    %920 = vmatpush1.msra.mxu0 0.0
    %921 = vmatprep.subr.mxu0 0.0
    %922 = vmatpush1.msra.mxu0 0.0
    %923 = vmatprep.subr.mxu0 0.0
    %924 = vmatpush1.msra.mxu0 0.0
    %925 = vmatprep.subr.mxu0 0.0
    %926 = vmatpush1.msra.mxu0 0.0
    %927 = vmatprep.mubr.f32.mxu0 0.0
    %928 = vmatmul.mubr.f32.gmra.mrb[0].mxu0 %v791
    %v929 = vpop.f32.mrb[0].mxu0
    %v930 = vadd.f32 0.0, %v929
    %v931 = vpop.f32.mrb[0].mxu0
    %932 = vdwg.mxu0
    %v933 = vmax.f32 %v860, %v930
    %v934 = vmul.f32 %v933, %v933
    %v935 = vsel %vm198, %v934, 0.0
    %936 = vadd.xlane.f32.xlu0 %v935
    %v937 = vpop.xlane.xlu0 %936
    %v938 = vrcp.pop 16.0
    %v939 = vmul.f32 %v937, %v938
    %v940 = vlog2.pop %v939
    %v941 = vmul.f32 %v940, 0.6931472
    %v942 = vsel %vm198, %v688, 0.0
    %943 = vadd.xlane.f32.xlu0 %v942
    %v944 = vpop.xlane.xlu0 %943
    %v945 = vmul.f32 %v944, %v938
    %v946 = vsub.f32 %v688, %v945
    %v947 = vmul.f32 %v946, %v946
    %v948 = vsel %vm198, %v947, 0.0
    %949 = vadd.xlane.f32.xlu0 %v948
    %v950 = vpop.xlane.xlu0 %949
    %v951 = vmul.f32 %v950, %v938
    %v952 = vadd.f32 %v951, 1e-05
    %v953 = vrsqrt.pop %v952
    %v954 = vmul.f32 %v946, %v953
    %v955 = vld [vmem:[#allocation5 + $0x1d8] sm:$0x1]
    %v956 = vlaneseq
    %v957 = vshrl.u32 %v956, 7
    %v958 = vsub.s32 0, %v957
    %v959 = vrot.slane %v955, %v958
    %v960 = vmul.f32 %v954, %v959
    %v961 = vld [vmem:[#allocation5 + $0x1d0] sm:$0x1]
    %v962 = vlaneseq
    %v963 = vshrl.u32 %v962, 7
    %v964 = vsub.s32 0, %v963
    %v965 = vrot.slane %v961, %v964
    %v966 = vadd.f32 %v960, %v965
    %v967 = vld [vmem:[#allocation5 + $0x1e0] sm:$0xff]
    %v968 = vld [vmem:[#allocation5 + $0x1e8] sm:$0xff]
    %v969 = vld [vmem:[#allocation5 + $0x1c0] sm:$0x1]
    %v970 = vlaneseq
    %v971 = vshrl.u32 %v970, 7
    %v972 = vsub.s32 0, %v971
    %v973 = vrot.slane %v969, %v972
    %v975 = vsel %vm198, %v966, 0
    %977 = vmatprep.subr.mxu0 0.0
    %978 = vmatpush1.msra.mxu0 %v967
    %979 = vmatprep.subr.mxu0 0.0
    %980 = vmatpush1.msra.mxu0 %v968
    %981 = vmatprep.subr.mxu0 0.0
    %982 = vmatpush1.msra.mxu0 0.0
    %983 = vmatprep.subr.mxu0 0.0
    %984 = vmatpush1.msra.mxu0 0.0
    %985 = vmatprep.subr.mxu0 0.0
    %986 = vmatpush1.msra.mxu0 0.0
    %987 = vmatprep.subr.mxu0 0.0
    %988 = vmatpush1.msra.mxu0 0.0
    %989 = vmatprep.subr.mxu0 0.0
    %990 = vmatpush1.msra.mxu0 0.0
    %991 = vmatprep.subr.mxu0 0.0
    %992 = vmatpush1.msra.mxu0 0.0
    %993 = vmatprep.subr.mxu0 0.0
    %994 = vmatpush1.msra.mxu0 0.0
    %995 = vmatprep.subr.mxu0 0.0
    %996 = vmatpush1.msra.mxu0 0.0
    %997 = vmatprep.subr.mxu0 0.0
    %998 = vmatpush1.msra.mxu0 0.0
    %999 = vmatprep.subr.mxu0 0.0
    %1000 = vmatpush1.msra.mxu0 0.0
    %1001 = vmatprep.subr.mxu0 0.0
    %1002 = vmatpush1.msra.mxu0 0.0
    %1003 = vmatprep.subr.mxu0 0.0
    %1004 = vmatpush1.msra.mxu0 0.0
    %1005 = vmatprep.subr.mxu0 0.0
    %1006 = vmatpush1.msra.mxu0 0.0
    %1007 = vmatprep.subr.mxu0 0.0
    %1008 = vmatpush1.msra.mxu0 0.0
    %1009 = vmatprep.subr.mxu0 0.0
    %1010 = vmatpush1.msra.mxu0 0.0
    %1011 = vmatprep.subr.mxu0 0.0
    %1012 = vmatpush1.msra.mxu0 0.0
    %1013 = vmatprep.subr.mxu0 0.0
    %1014 = vmatpush1.msra.mxu0 0.0
    %1015 = vmatprep.subr.mxu0 0.0
    %1016 = vmatpush1.msra.mxu0 0.0
    %1017 = vmatprep.subr.mxu0 0.0
    %1018 = vmatpush1.msra.mxu0 0.0
    %1019 = vmatprep.subr.mxu0 0.0
    %1020 = vmatpush1.msra.mxu0 0.0
    %1021 = vmatprep.subr.mxu0 0.0
    %1022 = vmatpush1.msra.mxu0 0.0
    %1023 = vmatprep.subr.mxu0 0.0
    %1024 = vmatpush1.msra.mxu0 0.0
    %1025 = vmatprep.subr.mxu0 0.0
    %1026 = vmatpush1.msra.mxu0 0.0
    %1027 = vmatprep.subr.mxu0 0.0
    %1028 = vmatpush1.msra.mxu0 0.0
    %1029 = vmatprep.subr.mxu0 0.0
    %1030 = vmatpush1.msra.mxu0 0.0
    %1031 = vmatprep.subr.mxu0 0.0
    %1032 = vmatpush1.msra.mxu0 0.0
    %1033 = vmatprep.subr.mxu0 0.0
    %1034 = vmatpush1.msra.mxu0 0.0
    %1035 = vmatprep.subr.mxu0 0.0
    %1036 = vmatpush1.msra.mxu0 0.0
    %1037 = vmatprep.subr.mxu0 0.0
    %1038 = vmatpush1.msra.mxu0 0.0
    %1039 = vmatprep.subr.mxu0 0.0
    %1040 = vmatpush1.msra.mxu0 0.0
    %1041 = vmatprep.mubr.f32.mxu0 0.0
    %1042 = vmatmul.mubr.f32.gmra.mrb[0].mxu0 %v975
    %v1043 = vpop.f32.mrb[0].mxu0
    %v1044 = vadd.f32 %v973, %v1043
    %v1045 = vpop.f32.mrb[0].mxu0
    %1046 = vdwg.mxu0
    %v1047 = vmul.f32 %v1044, 0.5
    %v1048 = vmul.f32 %v1044, 0.70710677
    %vm1049 = vcmp.ge.f32.partialorder %v1048, 0.0
    %v1050 = vsel %vm1049, 1.0, -1.0
    %v1051 = vand.u32 2147483647, %v1048
    %v1052 = vmul.f32 %v1051, 0.3275911
    %v1053 = vadd.f32 %v1052, 1.0
    %v1054 = vrcp.pop %v1053
    %v1055 = vmul.f32 1.0, %v1054
    %v1056 = vmul.f32 %v1055, 1.0614054
    %v1057 = vadd.f32 %v1056, -1.4531521
    %v1058 = vmul.f32 %v1057, %v1055
    %v1059 = vadd.f32 %v1058, 1.4214138
    %v1060 = vmul.f32 %v1059, %v1055
    %v1061 = vadd.f32 %v1060, -0.28449672
    %v1062 = vmul.f32 %v1061, %v1055
    %v1063 = vadd.f32 %v1062, 0.2548296
    %v1064 = vmul.f32 %v1063, %v1055
    %v1065 = vsub.f32 0.0, %v1051
    %v1066 = vmul.f32 %v1065, %v1051
    %v1067 = vmul.f32 %v1066, 1.442695
    %v1068 = vpow.pop %v1067
    %v1069 = vmul.f32 %v1064, %v1068
    %v1070 = vsub.f32 1.0, %v1069
    %v1071 = vmul.f32 %v1050, %v1070
    %v1072 = vadd.f32 %v1071, 1.0
    %v1073 = vmul.f32 %v1047, %v1072
    %v1074 = vld [vmem:[#allocation5 + $0x1f0] sm:$0xff]
    %v1075 = vld [vmem:[#allocation5 + $0x1f8] sm:$0xff]
    %v1076 = vld [vmem:[#allocation5 + $0x1c8] sm:$0x1]
    %v1077 = vlaneseq
    %v1078 = vshrl.u32 %v1077, 7
    %v1079 = vsub.s32 0, %v1078
    %v1080 = vrot.slane %v1076, %v1079
    %v1082 = vsel %vm198, %v1073, 0
    %1084 = vmatprep.subr.mxu0 0.0
    %1085 = vmatpush1.msra.mxu0 %v1074
    %1086 = vmatprep.subr.mxu0 0.0
    %1087 = vmatpush1.msra.mxu0 %v1075
    %1088 = vmatprep.subr.mxu0 0.0
    %1089 = vmatpush1.msra.mxu0 0.0
    %1090 = vmatprep.subr.mxu0 0.0
    %1091 = vmatpush1.msra.mxu0 0.0
    %1092 = vmatprep.subr.mxu0 0.0
    %1093 = vmatpush1.msra.mxu0 0.0
    %1094 = vmatprep.subr.mxu0 0.0
    %1095 = vmatpush1.msra.mxu0 0.0
    %1096 = vmatprep.subr.mxu0 0.0
    %1097 = vmatpush1.msra.mxu0 0.0
    %1098 = vmatprep.subr.mxu0 0.0
    %1099 = vmatpush1.msra.mxu0 0.0
    %1100 = vmatprep.subr.mxu0 0.0
    %1101 = vmatpush1.msra.mxu0 0.0
    %1102 = vmatprep.subr.mxu0 0.0
    %1103 = vmatpush1.msra.mxu0 0.0
    %1104 = vmatprep.subr.mxu0 0.0
    %1105 = vmatpush1.msra.mxu0 0.0
    %1106 = vmatprep.subr.mxu0 0.0
    %1107 = vmatpush1.msra.mxu0 0.0
    %1108 = vmatprep.subr.mxu0 0.0
    %1109 = vmatpush1.msra.mxu0 0.0
    %1110 = vmatprep.subr.mxu0 0.0
    %1111 = vmatpush1.msra.mxu0 0.0
    %1112 = vmatprep.subr.mxu0 0.0
    %1113 = vmatpush1.msra.mxu0 0.0
    %1114 = vmatprep.subr.mxu0 0.0
    %1115 = vmatpush1.msra.mxu0 0.0
    %1116 = vmatprep.subr.mxu0 0.0
    %1117 = vmatpush1.msra.mxu0 0.0
    %1118 = vmatprep.subr.mxu0 0.0
    %1119 = vmatpush1.msra.mxu0 0.0
    %1120 = vmatprep.subr.mxu0 0.0
    %1121 = vmatpush1.msra.mxu0 0.0
    %1122 = vmatprep.subr.mxu0 0.0
    %1123 = vmatpush1.msra.mxu0 0.0
    %1124 = vmatprep.subr.mxu0 0.0
    %1125 = vmatpush1.msra.mxu0 0.0
    %1126 = vmatprep.subr.mxu0 0.0
    %1127 = vmatpush1.msra.mxu0 0.0
    %1128 = vmatprep.subr.mxu0 0.0
    %1129 = vmatpush1.msra.mxu0 0.0
    %1130 = vmatprep.subr.mxu0 0.0
    %1131 = vmatpush1.msra.mxu0 0.0
    %1132 = vmatprep.subr.mxu0 0.0
    %1133 = vmatpush1.msra.mxu0 0.0
    %1134 = vmatprep.subr.mxu0 0.0
    %1135 = vmatpush1.msra.mxu0 0.0
    %1136 = vmatprep.subr.mxu0 0.0
    %1137 = vmatpush1.msra.mxu0 0.0
    %1138 = vmatprep.subr.mxu0 0.0
    %1139 = vmatpush1.msra.mxu0 0.0
    %1140 = vmatprep.subr.mxu0 0.0
    %1141 = vmatpush1.msra.mxu0 0.0
    %1142 = vmatprep.subr.mxu0 0.0
    %1143 = vmatpush1.msra.mxu0 0.0
    %1144 = vmatprep.subr.mxu0 0.0
    %1145 = vmatpush1.msra.mxu0 0.0
    %1146 = vmatprep.subr.mxu0 0.0
    %1147 = vmatpush1.msra.mxu0 0.0
    %1148 = vmatprep.mubr.f32.mxu0 0.0
    %1149 = vmatmul.mubr.f32.gmra.mrb[0].mxu0 %v1082
    %v1150 = vpop.f32.mrb[0].mxu0
    %v1151 = vadd.f32 %v1080, %v1150
    %v1152 = vpop.f32.mrb[0].mxu0
    %1153 = vdwg.mxu0
    %v1154 = vadd.f32 %v1151, %v933
    %v1155 = vld [vmem:[#allocation5 + $0x200] sm:$0xff]
    %v1156 = vld [vmem:[#allocation5 + $0x208] sm:$0xff]
    %v1158 = vsel %vm198, %v1154, 0
    %1160 = vmatprep.subr.mxu0 0.0
    %1161 = vmatpush1.msra.mxu0 %v1155
    %1162 = vmatprep.subr.mxu0 0.0
    %1163 = vmatpush1.msra.mxu0 %v1156
    %1164 = vmatprep.subr.mxu0 0.0
    %1165 = vmatpush1.msra.mxu0 0.0
    %1166 = vmatprep.subr.mxu0 0.0
    %1167 = vmatpush1.msra.mxu0 0.0
    %1168 = vmatprep.subr.mxu0 0.0
    %1169 = vmatpush1.msra.mxu0 0.0
    %1170 = vmatprep.subr.mxu0 0.0
    %1171 = vmatpush1.msra.mxu0 0.0
    %1172 = vmatprep.subr.mxu0 0.0
    %1173 = vmatpush1.msra.mxu0 0.0
    %1174 = vmatprep.subr.mxu0 0.0
    %1175 = vmatpush1.msra.mxu0 0.0
    %1176 = vmatprep.subr.mxu0 0.0
    %1177 = vmatpush1.msra.mxu0 0.0
    %1178 = vmatprep.subr.mxu0 0.0
    %1179 = vmatpush1.msra.mxu0 0.0
    %1180 = vmatprep.subr.mxu0 0.0
    %1181 = vmatpush1.msra.mxu0 0.0
    %1182 = vmatprep.subr.mxu0 0.0
    %1183 = vmatpush1.msra.mxu0 0.0
    %1184 = vmatprep.subr.mxu0 0.0
    %1185 = vmatpush1.msra.mxu0 0.0
    %1186 = vmatprep.subr.mxu0 0.0
    %1187 = vmatpush1.msra.mxu0 0.0
    %1188 = vmatprep.subr.mxu0 0.0
    %1189 = vmatpush1.msra.mxu0 0.0
    %1190 = vmatprep.subr.mxu0 0.0
    %1191 = vmatpush1.msra.mxu0 0.0
    %1192 = vmatprep.subr.mxu0 0.0
    %1193 = vmatpush1.msra.mxu0 0.0
    %1194 = vmatprep.subr.mxu0 0.0
    %1195 = vmatpush1.msra.mxu0 0.0
    %1196 = vmatprep.subr.mxu0 0.0
    %1197 = vmatpush1.msra.mxu0 0.0
    %1198 = vmatprep.subr.mxu0 0.0
    %1199 = vmatpush1.msra.mxu0 0.0
    %1200 = vmatprep.subr.mxu0 0.0
    %1201 = vmatpush1.msra.mxu0 0.0
    %1202 = vmatprep.subr.mxu0 0.0
    %1203 = vmatpush1.msra.mxu0 0.0
    %1204 = vmatprep.subr.mxu0 0.0
    %1205 = vmatpush1.msra.mxu0 0.0
    %1206 = vmatprep.subr.mxu0 0.0
    %1207 = vmatpush1.msra.mxu0 0.0
    %1208 = vmatprep.subr.mxu0 0.0
    %1209 = vmatpush1.msra.mxu0 0.0
    %1210 = vmatprep.subr.mxu0 0.0
    %1211 = vmatpush1.msra.mxu0 0.0
    %1212 = vmatprep.subr.mxu0 0.0
    %1213 = vmatpush1.msra.mxu0 0.0
    %1214 = vmatprep.subr.mxu0 0.0
    %1215 = vmatpush1.msra.mxu0 0.0
    %1216 = vmatprep.subr.mxu0 0.0
    %1217 = vmatpush1.msra.mxu0 0.0
    %1218 = vmatprep.subr.mxu0 0.0
    %1219 = vmatpush1.msra.mxu0 0.0
    %1220 = vmatprep.subr.mxu0 0.0
    %1221 = vmatpush1.msra.mxu0 0.0
    %1222 = vmatprep.subr.mxu0 0.0
    %1223 = vmatpush1.msra.mxu0 0.0
    %1224 = vmatprep.mubr.f32.mxu0 0.0
    %1225 = vmatmul.mubr.f32.gmra.mrb[0].mxu0 %v1158
    %v1226 = vpop.f32.mrb[0].mxu0
    %v1227 = vadd.f32 0.0, %v1226
    %v1228 = vpop.f32.mrb[0].mxu0
    %1229 = vdwg.mxu0
    %v1231 = vsel %vm51, %v42, 0
    %1233 = vmatprep.subr.mxu0 0.0
    %1234 = vmatpush1.msra.mxu0 %v43
    %1235 = vmatprep.subr.mxu0 0.0
    %1236 = vmatpush1.msra.mxu0 %v44
    %1237 = vmatprep.subr.mxu0 0.0
    %1238 = vmatpush1.msra.mxu0 %v45
    %1239 = vmatprep.subr.mxu0 0.0
    %1240 = vmatpush1.msra.mxu0 %v46
    %1241 = vmatprep.subr.mxu0 0.0
    %1242 = vmatpush1.msra.mxu0 0.0
    %1243 = vmatprep.subr.mxu0 0.0
    %1244 = vmatpush1.msra.mxu0 0.0
    %1245 = vmatprep.subr.mxu0 0.0
    %1246 = vmatpush1.msra.mxu0 0.0
    %1247 = vmatprep.subr.mxu0 0.0
    %1248 = vmatpush1.msra.mxu0 0.0
    %1249 = vmatprep.subr.mxu0 0.0
    %1250 = vmatpush1.msra.mxu0 0.0
    %1251 = vmatprep.subr.mxu0 0.0
    %1252 = vmatpush1.msra.mxu0 0.0
    %1253 = vmatprep.subr.mxu0 0.0
    %1254 = vmatpush1.msra.mxu0 0.0
    %1255 = vmatprep.subr.mxu0 0.0
    %1256 = vmatpush1.msra.mxu0 0.0
    %1257 = vmatprep.subr.mxu0 0.0
    %1258 = vmatpush1.msra.mxu0 0.0
    %1259 = vmatprep.subr.mxu0 0.0
    %1260 = vmatpush1.msra.mxu0 0.0
    %1261 = vmatprep.subr.mxu0 0.0
    %1262 = vmatpush1.msra.mxu0 0.0
    %1263 = vmatprep.subr.mxu0 0.0
    %1264 = vmatpush1.msra.mxu0 0.0
    %1265 = vmatprep.subr.mxu0 0.0
    %1266 = vmatpush1.msra.mxu0 0.0
    %1267 = vmatprep.subr.mxu0 0.0
    %1268 = vmatpush1.msra.mxu0 0.0
    %1269 = vmatprep.subr.mxu0 0.0
    %1270 = vmatpush1.msra.mxu0 0.0
    %1271 = vmatprep.subr.mxu0 0.0
    %1272 = vmatpush1.msra.mxu0 0.0
    %1273 = vmatprep.subr.mxu0 0.0
    %1274 = vmatpush1.msra.mxu0 0.0
    %1275 = vmatprep.subr.mxu0 0.0
    %1276 = vmatpush1.msra.mxu0 0.0
    %1277 = vmatprep.subr.mxu0 0.0
    %1278 = vmatpush1.msra.mxu0 0.0
    %1279 = vmatprep.subr.mxu0 0.0
    %1280 = vmatpush1.msra.mxu0 0.0
    %1281 = vmatprep.subr.mxu0 0.0
    %1282 = vmatpush1.msra.mxu0 0.0
    %1283 = vmatprep.subr.mxu0 0.0
    %1284 = vmatpush1.msra.mxu0 0.0
    %1285 = vmatprep.subr.mxu0 0.0
    %1286 = vmatpush1.msra.mxu0 0.0
    %1287 = vmatprep.subr.mxu0 0.0
    %1288 = vmatpush1.msra.mxu0 0.0
    %1289 = vmatprep.subr.mxu0 0.0
    %1290 = vmatpush1.msra.mxu0 0.0
    %1291 = vmatprep.subr.mxu0 0.0
    %1292 = vmatpush1.msra.mxu0 0.0
    %1293 = vmatprep.subr.mxu0 0.0
    %1294 = vmatpush1.msra.mxu0 0.0
    %1295 = vmatprep.subr.mxu0 0.0
    %1296 = vmatpush1.msra.mxu0 0.0
    %1297 = vmatprep.mubr.f32.mxu0 0.0
    %1298 = vmatmul.mubr.f32.gmra.mrb[0].mxu0 %v1231
    %v1299 = vpop.f32.mrb[0].mxu0
    %v1300 = vadd.f32 0.0, %v1299
    %v1301 = vpop.f32.mrb[0].mxu0
    %1302 = vdwg.mxu0
    %1303 = vmatprep.subr.mxu0 0.0
    %1304 = vmatpush1.msra.mxu0 %v47
    %1305 = vmatprep.subr.mxu0 0.0
    %1306 = vmatpush1.msra.mxu0 %v48
    %1307 = vmatprep.subr.mxu0 0.0
    %1308 = vmatpush1.msra.mxu0 %v49
    %1309 = vmatprep.subr.mxu0 0.0
    %1310 = vmatpush1.msra.mxu0 %v50
    %1311 = vmatprep.subr.mxu0 0.0
    %1312 = vmatpush1.msra.mxu0 0.0
    %1313 = vmatprep.subr.mxu0 0.0
    %1314 = vmatpush1.msra.mxu0 0.0
    %1315 = vmatprep.subr.mxu0 0.0
    %1316 = vmatpush1.msra.mxu0 0.0
    %1317 = vmatprep.subr.mxu0 0.0
    %1318 = vmatpush1.msra.mxu0 0.0
    %1319 = vmatprep.subr.mxu0 0.0
    %1320 = vmatpush1.msra.mxu0 0.0
    %1321 = vmatprep.subr.mxu0 0.0
    %1322 = vmatpush1.msra.mxu0 0.0
    %1323 = vmatprep.subr.mxu0 0.0
    %1324 = vmatpush1.msra.mxu0 0.0
    %1325 = vmatprep.subr.mxu0 0.0
    %1326 = vmatpush1.msra.mxu0 0.0
    %1327 = vmatprep.subr.mxu0 0.0
    %1328 = vmatpush1.msra.mxu0 0.0
    %1329 = vmatprep.subr.mxu0 0.0
    %1330 = vmatpush1.msra.mxu0 0.0
    %1331 = vmatprep.subr.mxu0 0.0
    %1332 = vmatpush1.msra.mxu0 0.0
    %1333 = vmatprep.subr.mxu0 0.0
    %1334 = vmatpush1.msra.mxu0 0.0
    %1335 = vmatprep.subr.mxu0 0.0
    %1336 = vmatpush1.msra.mxu0 0.0
    %1337 = vmatprep.subr.mxu0 0.0
    %1338 = vmatpush1.msra.mxu0 0.0
    %1339 = vmatprep.subr.mxu0 0.0
    %1340 = vmatpush1.msra.mxu0 0.0
    %1341 = vmatprep.subr.mxu0 0.0
    %1342 = vmatpush1.msra.mxu0 0.0
    %1343 = vmatprep.subr.mxu0 0.0
    %1344 = vmatpush1.msra.mxu0 0.0
    %1345 = vmatprep.subr.mxu0 0.0
    %1346 = vmatpush1.msra.mxu0 0.0
    %1347 = vmatprep.subr.mxu0 0.0
    %1348 = vmatpush1.msra.mxu0 0.0
    %1349 = vmatprep.subr.mxu0 0.0
    %1350 = vmatpush1.msra.mxu0 0.0
    %1351 = vmatprep.subr.mxu0 0.0
    %1352 = vmatpush1.msra.mxu0 0.0
    %1353 = vmatprep.subr.mxu0 0.0
    %1354 = vmatpush1.msra.mxu0 0.0
    %1355 = vmatprep.subr.mxu0 0.0
    %1356 = vmatpush1.msra.mxu0 0.0
    %1357 = vmatprep.subr.mxu0 0.0
    %1358 = vmatpush1.msra.mxu0 0.0
    %1359 = vmatprep.subr.mxu0 0.0
    %1360 = vmatpush1.msra.mxu0 0.0
    %1361 = vmatprep.subr.mxu0 0.0
    %1362 = vmatpush1.msra.mxu0 0.0
    %1363 = vmatprep.subr.mxu0 0.0
    %1364 = vmatpush1.msra.mxu0 0.0
    %1365 = vmatprep.subr.mxu0 0.0
    %1366 = vmatpush1.msra.mxu0 0.0
    %1367 = vmatprep.mubr.f32.mxu0 0.0
    %1368 = vmatmul.mubr.f32.gmra.mrb[0].mxu0 %v1231
    %v1369 = vpop.f32.mrb[0].mxu0
    %v1370 = vadd.f32 0.0, %v1369
    %v1371 = vpop.f32.mrb[0].mxu0
    %1372 = vdwg.mxu0
    %v1373 = vmax.f32 %v1300, %v1370
    %v1374 = vld [vmem:[#allocation5 + $0x228] sm:$0xff]
    %v1375 = vld [vmem:[#allocation5 + $0x230] sm:$0xff]
    %v1377 = vsel %vm198, %v1373, 0
    %1379 = vmatprep.subr.mxu0 0.0
    %1380 = vmatpush1.msra.mxu0 %v1374
    %1381 = vmatprep.subr.mxu0 0.0
    %1382 = vmatpush1.msra.mxu0 %v1375
    %1383 = vmatprep.subr.mxu0 0.0
    %1384 = vmatpush1.msra.mxu0 0.0
    %1385 = vmatprep.subr.mxu0 0.0
    %1386 = vmatpush1.msra.mxu0 0.0
    %1387 = vmatprep.subr.mxu0 0.0
    %1388 = vmatpush1.msra.mxu0 0.0
    %1389 = vmatprep.subr.mxu0 0.0
    %1390 = vmatpush1.msra.mxu0 0.0
    %1391 = vmatprep.subr.mxu0 0.0
    %1392 = vmatpush1.msra.mxu0 0.0
    %1393 = vmatprep.subr.mxu0 0.0
    %1394 = vmatpush1.msra.mxu0 0.0
    %1395 = vmatprep.subr.mxu0 0.0
    %1396 = vmatpush1.msra.mxu0 0.0
    %1397 = vmatprep.subr.mxu0 0.0
    %1398 = vmatpush1.msra.mxu0 0.0
    %1399 = vmatprep.subr.mxu0 0.0
    %1400 = vmatpush1.msra.mxu0 0.0
    %1401 = vmatprep.subr.mxu0 0.0
    %1402 = vmatpush1.msra.mxu0 0.0
    %1403 = vmatprep.subr.mxu0 0.0
    %1404 = vmatpush1.msra.mxu0 0.0
    %1405 = vmatprep.subr.mxu0 0.0
    %1406 = vmatpush1.msra.mxu0 0.0
    %1407 = vmatprep.subr.mxu0 0.0
    %1408 = vmatpush1.msra.mxu0 0.0
    %1409 = vmatprep.subr.mxu0 0.0
    %1410 = vmatpush1.msra.mxu0 0.0
    %1411 = vmatprep.subr.mxu0 0.0
    %1412 = vmatpush1.msra.mxu0 0.0
    %1413 = vmatprep.subr.mxu0 0.0
    %1414 = vmatpush1.msra.mxu0 0.0
    %1415 = vmatprep.subr.mxu0 0.0
    %1416 = vmatpush1.msra.mxu0 0.0
    %1417 = vmatprep.subr.mxu0 0.0
    %1418 = vmatpush1.msra.mxu0 0.0
    %1419 = vmatprep.subr.mxu0 0.0
    %1420 = vmatpush1.msra.mxu0 0.0
    %1421 = vmatprep.subr.mxu0 0.0
    %1422 = vmatpush1.msra.mxu0 0.0
    %1423 = vmatprep.subr.mxu0 0.0
    %1424 = vmatpush1.msra.mxu0 0.0
    %1425 = vmatprep.subr.mxu0 0.0
    %1426 = vmatpush1.msra.mxu0 0.0
    %1427 = vmatprep.subr.mxu0 0.0
    %1428 = vmatpush1.msra.mxu0 0.0
    %1429 = vmatprep.subr.mxu0 0.0
    %1430 = vmatpush1.msra.mxu0 0.0
    %1431 = vmatprep.subr.mxu0 0.0
    %1432 = vmatpush1.msra.mxu0 0.0
    %1433 = vmatprep.subr.mxu0 0.0
    %1434 = vmatpush1.msra.mxu0 0.0
    %1435 = vmatprep.subr.mxu0 0.0
    %1436 = vmatpush1.msra.mxu0 0.0
    %1437 = vmatprep.subr.mxu0 0.0
    %1438 = vmatpush1.msra.mxu0 0.0
    %1439 = vmatprep.subr.mxu0 0.0
    %1440 = vmatpush1.msra.mxu0 0.0
    %1441 = vmatprep.subr.mxu0 0.0
    %1442 = vmatpush1.msra.mxu0 0.0
    %1443 = vmatprep.mubr.f32.mxu0 0.0
    %1444 = vmatmul.mubr.f32.gmra.mrb[0].mxu0 %v1377
    %v1445 = vpop.f32.mrb[0].mxu0
    %v1446 = vadd.f32 0.0, %v1445
    %v1447 = vpop.f32.mrb[0].mxu0
    %1448 = vdwg.mxu0
    %v1449 = vld [vmem:[#allocation5 + $0x18] sm:$0xff]
    %1451 = vrot.lane.b32.xlu0 %v1446, 112
    %v1452 = vpop.permute.xlu0 %1451
    %v1453 = vsel %vm276, %v1446, 0
    %v1455 = vsel %vm276, %v1452, 0
    %1457 = vmatprep.subr.mxu0 0.0
    %1458 = vmatpush1.xpose.msra.mxu0 %v1455
    %1459 = vmatprep.subr.mxu0 0.0
    %1460 = vmatpush1.xpose.msra.mxu0 0.0
    %1461 = vmatprep.subr.mxu0 0.0
    %1462 = vmatpush1.xpose.msra.mxu0 0.0
    %1463 = vmatprep.subr.mxu0 0.0
    %1464 = vmatpush1.xpose.msra.mxu0 0.0
    %1465 = vmatprep.subr.mxu0 0.0
    %1466 = vmatpush1.xpose.msra.mxu0 0.0
    %1467 = vmatprep.subr.mxu0 0.0
    %1468 = vmatpush1.xpose.msra.mxu0 0.0
    %1469 = vmatprep.subr.mxu0 0.0
    %1470 = vmatpush1.xpose.msra.mxu0 0.0
    %1471 = vmatprep.subr.mxu0 0.0
    %1472 = vmatpush1.xpose.msra.mxu0 0.0
    %1473 = vmatprep.subr.mxu0 0.0
    %1474 = vmatpush1.xpose.msra.mxu0 0.0
    %1475 = vmatprep.subr.mxu0 0.0
    %1476 = vmatpush1.xpose.msra.mxu0 0.0
    %1477 = vmatprep.subr.mxu0 0.0
    %1478 = vmatpush1.xpose.msra.mxu0 0.0
    %1479 = vmatprep.subr.mxu0 0.0
    %1480 = vmatpush1.xpose.msra.mxu0 0.0
    %1481 = vmatprep.subr.mxu0 0.0
    %1482 = vmatpush1.xpose.msra.mxu0 0.0
    %1483 = vmatprep.subr.mxu0 0.0
    %1484 = vmatpush1.xpose.msra.mxu0 0.0
    %1485 = vmatprep.subr.mxu0 0.0
    %1486 = vmatpush1.xpose.msra.mxu0 0.0
    %1487 = vmatprep.subr.mxu0 0.0
    %1488 = vmatpush1.xpose.msra.mxu0 0.0
    %1489 = vmatprep.subr.mxu0 0.0
    %1490 = vmatpush1.xpose.msra.mxu0 0.0
    %1491 = vmatprep.subr.mxu0 0.0
    %1492 = vmatpush1.xpose.msra.mxu0 0.0
    %1493 = vmatprep.subr.mxu0 0.0
    %1494 = vmatpush1.xpose.msra.mxu0 0.0
    %1495 = vmatprep.subr.mxu0 0.0
    %1496 = vmatpush1.xpose.msra.mxu0 0.0
    %1497 = vmatprep.subr.mxu0 0.0
    %1498 = vmatpush1.xpose.msra.mxu0 0.0
    %1499 = vmatprep.subr.mxu0 0.0
    %1500 = vmatpush1.xpose.msra.mxu0 0.0
    %1501 = vmatprep.subr.mxu0 0.0
    %1502 = vmatpush1.xpose.msra.mxu0 0.0
    %1503 = vmatprep.subr.mxu0 0.0
    %1504 = vmatpush1.xpose.msra.mxu0 0.0
    %1505 = vmatprep.subr.mxu0 0.0
    %1506 = vmatpush1.xpose.msra.mxu0 0.0
    %1507 = vmatprep.subr.mxu0 0.0
    %1508 = vmatpush1.xpose.msra.mxu0 0.0
    %1509 = vmatprep.subr.mxu0 0.0
    %1510 = vmatpush1.xpose.msra.mxu0 0.0
    %1511 = vmatprep.subr.mxu0 0.0
    %1512 = vmatpush1.xpose.msra.mxu0 0.0
    %1513 = vmatprep.subr.mxu0 0.0
    %1514 = vmatpush1.xpose.msra.mxu0 0.0
    %1515 = vmatprep.subr.mxu0 0.0
    %1516 = vmatpush1.xpose.msra.mxu0 0.0
    %1517 = vmatprep.subr.mxu0 0.0
    %1518 = vmatpush1.xpose.msra.mxu0 0.0
    %1519 = vmatprep.subr.mxu0 0.0
    %1520 = vmatpush1.xpose.msra.mxu0 0.0
    %1521 = vmatprep.mubr.f32.mxu0 0.0
    %1522 = vmatmul.mubr.f32.gmra.mrb[0].mxu0 %v1453
    %v1523 = vpop.f32.mrb[0].mxu0
    %v1524 = vadd.f32 %v1449, %v1523
    %v1525 = vpop.f32.mrb[0].mxu0
    %1526 = vdwg.mxu0
    %v1527 = vsel %vm276, %v1524, -inf
    %1528 = vmax.xlane.f32.xlu0 %v1527
    %v1529 = vpop.xlane.xlu0 %1528
    %v1530 = vsub.f32 %v1524, %v1529
    %v1531 = vmul.f32 %v1530, 1.442695
    %v1532 = vpow.pop %v1531
    %v1533 = vsel %vm276, %v1532, 0.0
    %1534 = vadd.xlane.f32.xlu0 %v1533
    %v1535 = vpop.xlane.xlu0 %1534
    %v1536 = vrcp.pop %v1535
    %v1537 = vmul.f32 %v1532, %v1536
    %1538 = vrot.lane.b32.xlu0 %v1446, 96
    %v1539 = vpop.permute.xlu0 %1538
    %v1542 = vsel %vm276, %v1537, 0
    %1544 = vmatprep.subr.mxu0 0.0
    %1545 = vmatpush1.msra.mxu0 %v1539
    %1546 = vmatprep.subr.mxu0 0.0
    %1547 = vmatpush1.msra.mxu0 0.0
    %1548 = vmatprep.subr.mxu0 0.0
    %1549 = vmatpush1.msra.mxu0 0.0
    %1550 = vmatprep.subr.mxu0 0.0
    %1551 = vmatpush1.msra.mxu0 0.0
    %1552 = vmatprep.subr.mxu0 0.0
    %1553 = vmatpush1.msra.mxu0 0.0
    %1554 = vmatprep.subr.mxu0 0.0
    %1555 = vmatpush1.msra.mxu0 0.0
    %1556 = vmatprep.subr.mxu0 0.0
    %1557 = vmatpush1.msra.mxu0 0.0
    %1558 = vmatprep.subr.mxu0 0.0
    %1559 = vmatpush1.msra.mxu0 0.0
    %1560 = vmatprep.subr.mxu0 0.0
    %1561 = vmatpush1.msra.mxu0 0.0
    %1562 = vmatprep.subr.mxu0 0.0
    %1563 = vmatpush1.msra.mxu0 0.0
    %1564 = vmatprep.subr.mxu0 0.0
    %1565 = vmatpush1.msra.mxu0 0.0
    %1566 = vmatprep.subr.mxu0 0.0
    %1567 = vmatpush1.msra.mxu0 0.0
    %1568 = vmatprep.subr.mxu0 0.0
    %1569 = vmatpush1.msra.mxu0 0.0
    %1570 = vmatprep.subr.mxu0 0.0
    %1571 = vmatpush1.msra.mxu0 0.0
    %1572 = vmatprep.subr.mxu0 0.0
    %1573 = vmatpush1.msra.mxu0 0.0
    %1574 = vmatprep.subr.mxu0 0.0
    %1575 = vmatpush1.msra.mxu0 0.0
    %1576 = vmatprep.subr.mxu0 0.0
    %1577 = vmatpush1.msra.mxu0 0.0
    %1578 = vmatprep.subr.mxu0 0.0
    %1579 = vmatpush1.msra.mxu0 0.0
    %1580 = vmatprep.subr.mxu0 0.0
    %1581 = vmatpush1.msra.mxu0 0.0
    %1582 = vmatprep.subr.mxu0 0.0
    %1583 = vmatpush1.msra.mxu0 0.0
    %1584 = vmatprep.subr.mxu0 0.0
    %1585 = vmatpush1.msra.mxu0 0.0
    %1586 = vmatprep.subr.mxu0 0.0
    %1587 = vmatpush1.msra.mxu0 0.0
    %1588 = vmatprep.subr.mxu0 0.0
    %1589 = vmatpush1.msra.mxu0 0.0
    %1590 = vmatprep.subr.mxu0 0.0
    %1591 = vmatpush1.msra.mxu0 0.0
    %1592 = vmatprep.subr.mxu0 0.0
    %1593 = vmatpush1.msra.mxu0 0.0
    %1594 = vmatprep.subr.mxu0 0.0
    %1595 = vmatpush1.msra.mxu0 0.0
    %1596 = vmatprep.subr.mxu0 0.0
    %1597 = vmatpush1.msra.mxu0 0.0
    %1598 = vmatprep.subr.mxu0 0.0
    %1599 = vmatpush1.msra.mxu0 0.0
    %1600 = vmatprep.subr.mxu0 0.0
    %1601 = vmatpush1.msra.mxu0 0.0
    %1602 = vmatprep.subr.mxu0 0.0
    %1603 = vmatpush1.msra.mxu0 0.0
    %1604 = vmatprep.subr.mxu0 0.0
    %1605 = vmatpush1.msra.mxu0 0.0
    %1606 = vmatprep.subr.mxu0 0.0
    %1607 = vmatpush1.msra.mxu0 0.0
    %1608 = vmatprep.mubr.f32.mxu0 0.0
    %1609 = vmatmul.mubr.f32.gmra.mrb[0].mxu0 %v1542
    %v1610 = vpop.f32.mrb[0].mxu0
    %v1611 = vadd.f32 0.0, %v1610
    %v1612 = vpop.f32.mrb[0].mxu0
    %1613 = vdwg.mxu0
    %1614 = vrot.lane.b32.xlu0 %v1446, 120
    %v1615 = vpop.permute.xlu0 %1614
    %1616 = vrot.lane.b32.xlu0 %v1446, 104
    %v1617 = vpop.permute.xlu0 %1616
    %v1618 = vsel %vm276, %v1615, 0
    %v1620 = vsel %vm276, %v1617, 0
    %1622 = vmatprep.subr.mxu0 0.0
    %1623 = vmatpush1.xpose.msra.mxu0 %v1620
    %1624 = vmatprep.subr.mxu0 0.0
    %1625 = vmatpush1.xpose.msra.mxu0 0.0
    %1626 = vmatprep.subr.mxu0 0.0
    %1627 = vmatpush1.xpose.msra.mxu0 0.0
    %1628 = vmatprep.subr.mxu0 0.0
    %1629 = vmatpush1.xpose.msra.mxu0 0.0
    %1630 = vmatprep.subr.mxu0 0.0
    %1631 = vmatpush1.xpose.msra.mxu0 0.0
    %1632 = vmatprep.subr.mxu0 0.0
    %1633 = vmatpush1.xpose.msra.mxu0 0.0
    %1634 = vmatprep.subr.mxu0 0.0
    %1635 = vmatpush1.xpose.msra.mxu0 0.0
    %1636 = vmatprep.subr.mxu0 0.0
    %1637 = vmatpush1.xpose.msra.mxu0 0.0
    %1638 = vmatprep.subr.mxu0 0.0
    %1639 = vmatpush1.xpose.msra.mxu0 0.0
    %1640 = vmatprep.subr.mxu0 0.0
    %1641 = vmatpush1.xpose.msra.mxu0 0.0
    %1642 = vmatprep.subr.mxu0 0.0
    %1643 = vmatpush1.xpose.msra.mxu0 0.0
    %1644 = vmatprep.subr.mxu0 0.0
    %1645 = vmatpush1.xpose.msra.mxu0 0.0
    %1646 = vmatprep.subr.mxu0 0.0
    %1647 = vmatpush1.xpose.msra.mxu0 0.0
    %1648 = vmatprep.subr.mxu0 0.0
    %1649 = vmatpush1.xpose.msra.mxu0 0.0
    %1650 = vmatprep.subr.mxu0 0.0
    %1651 = vmatpush1.xpose.msra.mxu0 0.0
    %1652 = vmatprep.subr.mxu0 0.0
    %1653 = vmatpush1.xpose.msra.mxu0 0.0
    %1654 = vmatprep.subr.mxu0 0.0
    %1655 = vmatpush1.xpose.msra.mxu0 0.0
    %1656 = vmatprep.subr.mxu0 0.0
    %1657 = vmatpush1.xpose.msra.mxu0 0.0
    %1658 = vmatprep.subr.mxu0 0.0
    %1659 = vmatpush1.xpose.msra.mxu0 0.0
    %1660 = vmatprep.subr.mxu0 0.0
    %1661 = vmatpush1.xpose.msra.mxu0 0.0
    %1662 = vmatprep.subr.mxu0 0.0
    %1663 = vmatpush1.xpose.msra.mxu0 0.0
    %1664 = vmatprep.subr.mxu0 0.0
    %1665 = vmatpush1.xpose.msra.mxu0 0.0
    %1666 = vmatprep.subr.mxu0 0.0
    %1667 = vmatpush1.xpose.msra.mxu0 0.0
    %1668 = vmatprep.subr.mxu0 0.0
    %1669 = vmatpush1.xpose.msra.mxu0 0.0
    %1670 = vmatprep.subr.mxu0 0.0
    %1671 = vmatpush1.xpose.msra.mxu0 0.0
    %1672 = vmatprep.subr.mxu0 0.0
    %1673 = vmatpush1.xpose.msra.mxu0 0.0
    %1674 = vmatprep.subr.mxu0 0.0
    %1675 = vmatpush1.xpose.msra.mxu0 0.0
    %1676 = vmatprep.subr.mxu0 0.0
    %1677 = vmatpush1.xpose.msra.mxu0 0.0
    %1678 = vmatprep.subr.mxu0 0.0
    %1679 = vmatpush1.xpose.msra.mxu0 0.0
    %1680 = vmatprep.subr.mxu0 0.0
    %1681 = vmatpush1.xpose.msra.mxu0 0.0
    %1682 = vmatprep.subr.mxu0 0.0
    %1683 = vmatpush1.xpose.msra.mxu0 0.0
    %1684 = vmatprep.subr.mxu0 0.0
    %1685 = vmatpush1.xpose.msra.mxu0 0.0
    %1686 = vmatprep.mubr.f32.mxu0 0.0
    %1687 = vmatmul.mubr.f32.gmra.mrb[0].mxu0 %v1618
    %v1688 = vpop.f32.mrb[0].mxu0
    %v1689 = vadd.f32 %v1449, %v1688
    %v1690 = vpop.f32.mrb[0].mxu0
    %1691 = vdwg.mxu0
    %v1692 = vsel %vm276, %v1689, -inf
    %1693 = vmax.xlane.f32.xlu0 %v1692
    %v1694 = vpop.xlane.xlu0 %1693
    %v1695 = vsub.f32 %v1689, %v1694
    %v1696 = vmul.f32 %v1695, 1.442695
    %v1697 = vpow.pop %v1696
    %v1698 = vsel %vm276, %v1697, 0.0
    %1699 = vadd.xlane.f32.xlu0 %v1698
    %v1700 = vpop.xlane.xlu0 %1699
    %v1701 = vrcp.pop %v1700
    %v1702 = vmul.f32 %v1697, %v1701
    %1703 = vrot.lane.b32.xlu0 %v1446, 88
    %v1704 = vpop.permute.xlu0 %1703
    %v1707 = vsel %vm276, %v1702, 0
    %1709 = vmatprep.subr.mxu0 0.0
    %1710 = vmatpush1.msra.mxu0 %v1704
    %1711 = vmatprep.subr.mxu0 0.0
    %1712 = vmatpush1.msra.mxu0 0.0
    %1713 = vmatprep.subr.mxu0 0.0
    %1714 = vmatpush1.msra.mxu0 0.0
    %1715 = vmatprep.subr.mxu0 0.0
    %1716 = vmatpush1.msra.mxu0 0.0
    %1717 = vmatprep.subr.mxu0 0.0
    %1718 = vmatpush1.msra.mxu0 0.0
    %1719 = vmatprep.subr.mxu0 0.0
    %1720 = vmatpush1.msra.mxu0 0.0
    %1721 = vmatprep.subr.mxu0 0.0
    %1722 = vmatpush1.msra.mxu0 0.0
    %1723 = vmatprep.subr.mxu0 0.0
    %1724 = vmatpush1.msra.mxu0 0.0
    %1725 = vmatprep.subr.mxu0 0.0
    %1726 = vmatpush1.msra.mxu0 0.0
    %1727 = vmatprep.subr.mxu0 0.0
    %1728 = vmatpush1.msra.mxu0 0.0
    %1729 = vmatprep.subr.mxu0 0.0
    %1730 = vmatpush1.msra.mxu0 0.0
    %1731 = vmatprep.subr.mxu0 0.0
    %1732 = vmatpush1.msra.mxu0 0.0
    %1733 = vmatprep.subr.mxu0 0.0
    %1734 = vmatpush1.msra.mxu0 0.0
    %1735 = vmatprep.subr.mxu0 0.0
    %1736 = vmatpush1.msra.mxu0 0.0
    %1737 = vmatprep.subr.mxu0 0.0
    %1738 = vmatpush1.msra.mxu0 0.0
    %1739 = vmatprep.subr.mxu0 0.0
    %1740 = vmatpush1.msra.mxu0 0.0
    %1741 = vmatprep.subr.mxu0 0.0
    %1742 = vmatpush1.msra.mxu0 0.0
    %1743 = vmatprep.subr.mxu0 0.0
    %1744 = vmatpush1.msra.mxu0 0.0
    %1745 = vmatprep.subr.mxu0 0.0
    %1746 = vmatpush1.msra.mxu0 0.0
    %1747 = vmatprep.subr.mxu0 0.0
    %1748 = vmatpush1.msra.mxu0 0.0
    %1749 = vmatprep.subr.mxu0 0.0
    %1750 = vmatpush1.msra.mxu0 0.0
    %1751 = vmatprep.subr.mxu0 0.0
    %1752 = vmatpush1.msra.mxu0 0.0
    %1753 = vmatprep.subr.mxu0 0.0
    %1754 = vmatpush1.msra.mxu0 0.0
    %1755 = vmatprep.subr.mxu0 0.0
    %1756 = vmatpush1.msra.mxu0 0.0
    %1757 = vmatprep.subr.mxu0 0.0
    %1758 = vmatpush1.msra.mxu0 0.0
    %1759 = vmatprep.subr.mxu0 0.0
    %1760 = vmatpush1.msra.mxu0 0.0
    %1761 = vmatprep.subr.mxu0 0.0
    %1762 = vmatpush1.msra.mxu0 0.0
    %1763 = vmatprep.subr.mxu0 0.0
    %1764 = vmatpush1.msra.mxu0 0.0
    %1765 = vmatprep.subr.mxu0 0.0
    %1766 = vmatpush1.msra.mxu0 0.0
    %1767 = vmatprep.subr.mxu0 0.0
    %1768 = vmatpush1.msra.mxu0 0.0
    %1769 = vmatprep.subr.mxu0 0.0
    %1770 = vmatpush1.msra.mxu0 0.0
    %1771 = vmatprep.subr.mxu0 0.0
    %1772 = vmatpush1.msra.mxu0 0.0
    %1773 = vmatprep.mubr.f32.mxu0 0.0
    %1774 = vmatmul.mubr.f32.gmra.mrb[0].mxu0 %v1707
    %v1775 = vpop.f32.mrb[0].mxu0
    %v1776 = vadd.f32 0.0, %v1775
    %v1777 = vpop.f32.mrb[0].mxu0
    %1778 = vdwg.mxu0
    %1780 = vrot.lane.b32.xlu0 %v1776, 8
    %v1781 = vpop.permute.xlu0 %1780
    %v1783 = vsel %vm276, %v1611, %v1781
    %v1784 = vld [vmem:[#allocation5 + $0x218] sm:$0xff]
    %v1785 = vld [vmem:[#allocation5 + $0x220] sm:$0xff]
    %v1786 = vld [vmem:[#allocation5 + $0x210] sm:$0x1]
    %v1787 = vlaneseq
    %v1788 = vshrl.u32 %v1787, 7
    %v1789 = vsub.s32 0, %v1788
    %v1790 = vrot.slane %v1786, %v1789
    %v1792 = vsel %vm198, %v1783, 0
    %1794 = vmatprep.subr.mxu0 0.0
    %1795 = vmatpush1.msra.mxu0 %v1784
    %1796 = vmatprep.subr.mxu0 0.0
    %1797 = vmatpush1.msra.mxu0 %v1785
    %1798 = vmatprep.subr.mxu0 0.0
    %1799 = vmatpush1.msra.mxu0 0.0
    %1800 = vmatprep.subr.mxu0 0.0
    %1801 = vmatpush1.msra.mxu0 0.0
    %1802 = vmatprep.subr.mxu0 0.0
    %1803 = vmatpush1.msra.mxu0 0.0
    %1804 = vmatprep.subr.mxu0 0.0
    %1805 = vmatpush1.msra.mxu0 0.0
    %1806 = vmatprep.subr.mxu0 0.0
    %1807 = vmatpush1.msra.mxu0 0.0
    %1808 = vmatprep.subr.mxu0 0.0
    %1809 = vmatpush1.msra.mxu0 0.0
    %1810 = vmatprep.subr.mxu0 0.0
    %1811 = vmatpush1.msra.mxu0 0.0
    %1812 = vmatprep.subr.mxu0 0.0
    %1813 = vmatpush1.msra.mxu0 0.0
    %1814 = vmatprep.subr.mxu0 0.0
    %1815 = vmatpush1.msra.mxu0 0.0
    %1816 = vmatprep.subr.mxu0 0.0
    %1817 = vmatpush1.msra.mxu0 0.0
    %1818 = vmatprep.subr.mxu0 0.0
    %1819 = vmatpush1.msra.mxu0 0.0
    %1820 = vmatprep.subr.mxu0 0.0
    %1821 = vmatpush1.msra.mxu0 0.0
    %1822 = vmatprep.subr.mxu0 0.0
    %1823 = vmatpush1.msra.mxu0 0.0
    %1824 = vmatprep.subr.mxu0 0.0
    %1825 = vmatpush1.msra.mxu0 0.0
    %1826 = vmatprep.subr.mxu0 0.0
    %1827 = vmatpush1.msra.mxu0 0.0
    %1828 = vmatprep.subr.mxu0 0.0
    %1829 = vmatpush1.msra.mxu0 0.0
    %1830 = vmatprep.subr.mxu0 0.0
    %1831 = vmatpush1.msra.mxu0 0.0
    %1832 = vmatprep.subr.mxu0 0.0
    %1833 = vmatpush1.msra.mxu0 0.0
    %1834 = vmatprep.subr.mxu0 0.0
    %1835 = vmatpush1.msra.mxu0 0.0
    %1836 = vmatprep.subr.mxu0 0.0
    %1837 = vmatpush1.msra.mxu0 0.0
    %1838 = vmatprep.subr.mxu0 0.0
    %1839 = vmatpush1.msra.mxu0 0.0
    %1840 = vmatprep.subr.mxu0 0.0
    %1841 = vmatpush1.msra.mxu0 0.0
    %1842 = vmatprep.subr.mxu0 0.0
    %1843 = vmatpush1.msra.mxu0 0.0
    %1844 = vmatprep.subr.mxu0 0.0
    %1845 = vmatpush1.msra.mxu0 0.0
    %1846 = vmatprep.subr.mxu0 0.0
    %1847 = vmatpush1.msra.mxu0 0.0
    %1848 = vmatprep.subr.mxu0 0.0
    %1849 = vmatpush1.msra.mxu0 0.0
    %1850 = vmatprep.subr.mxu0 0.0
    %1851 = vmatpush1.msra.mxu0 0.0
    %1852 = vmatprep.subr.mxu0 0.0
    %1853 = vmatpush1.msra.mxu0 0.0
    %1854 = vmatprep.subr.mxu0 0.0
    %1855 = vmatpush1.msra.mxu0 0.0
    %1856 = vmatprep.subr.mxu0 0.0
    %1857 = vmatpush1.msra.mxu0 0.0
    %1858 = vmatprep.mubr.f32.mxu0 0.0
    %1859 = vmatmul.mubr.f32.gmra.mrb[0].mxu0 %v1792
    %v1860 = vpop.f32.mrb[0].mxu0
    %v1861 = vadd.f32 %v1790, %v1860
    %v1862 = vpop.f32.mrb[0].mxu0
    %1863 = vdwg.mxu0
    %v1864 = vadd.f32 %v1861, %v1373
    %1865 = vrot.lane.b32.xlu0 %v42, 2
    %v1866 = vpop.permute.xlu0 %1865
    %vm1868 = vcmask 15360
    %v1869 = vsel %vm1868, 0.0, %v1866
    %vm1870 = vcmask 277504
    %v1871 = vsel %vm1870, %v1869, 0.0
    %1873 = vrot.lane.b32.xlu0 %v1871, 127
    %v1874 = vpop.permute.xlu0 %1873
    %1876 = vrot.lane.b32.xlu0 %v1871, 126
    %v1877 = vpop.permute.xlu0 %1876
    %1879 = vrot.lane.b32.xlu0 %v1871, 125
    %v1880 = vpop.permute.xlu0 %1879
    %1882 = vrot.lane.b32.xlu0 %v1871, 124
    %v1883 = vpop.permute.xlu0 %1882
    %v1885 = vld [vmem:[#allocation5 + $0x240] sm:$0xff]
    %v1886 = vld [vmem:[#allocation5 + $0x238] sm:$0xff]
    %1888 = vset.pattern.permute.xlu0 0
    %1889 = vperm.xlu0 %1888, %v1886
    %v1890 = vpop.permute.xlu0 %1889
    %vm1892 = vcmask 326656
    %v1894 = vsel %vm1892, %v1885, 0
    %1896 = vmatprep.subr.mxu0 0.0
    %1897 = vmatpush1.msra.mxu0 %v1871
    %1898 = vmatprep.subr.mxu0 0.0
    %1899 = vmatpush1.msra.mxu0 %v1874
    %1900 = vmatprep.subr.mxu0 0.0
    %1901 = vmatpush1.msra.mxu0 %v1877
    %1902 = vmatprep.subr.mxu0 0.0
    %1903 = vmatpush1.msra.mxu0 %v1880
    %1904 = vmatprep.subr.mxu0 0.0
    %1905 = vmatpush1.msra.mxu0 %v1883
    %1906 = vmatprep.subr.mxu0 0.0
    %1907 = vmatpush1.msra.mxu0 0.0
    %1908 = vmatprep.subr.mxu0 0.0
    %1909 = vmatpush1.msra.mxu0 0.0
    %1910 = vmatprep.subr.mxu0 0.0
    %1911 = vmatpush1.msra.mxu0 0.0
    %1912 = vmatprep.subr.mxu0 0.0
    %1913 = vmatpush1.msra.mxu0 0.0
    %1914 = vmatprep.subr.mxu0 0.0
    %1915 = vmatpush1.msra.mxu0 0.0
    %1916 = vmatprep.subr.mxu0 0.0
    %1917 = vmatpush1.msra.mxu0 0.0
    %1918 = vmatprep.subr.mxu0 0.0
    %1919 = vmatpush1.msra.mxu0 0.0
    %1920 = vmatprep.subr.mxu0 0.0
    %1921 = vmatpush1.msra.mxu0 0.0
    %1922 = vmatprep.subr.mxu0 0.0
    %1923 = vmatpush1.msra.mxu0 0.0
    %1924 = vmatprep.subr.mxu0 0.0
    %1925 = vmatpush1.msra.mxu0 0.0
    %1926 = vmatprep.subr.mxu0 0.0
    %1927 = vmatpush1.msra.mxu0 0.0
    %1928 = vmatprep.subr.mxu0 0.0
    %1929 = vmatpush1.msra.mxu0 0.0
    %1930 = vmatprep.subr.mxu0 0.0
    %1931 = vmatpush1.msra.mxu0 0.0
    %1932 = vmatprep.subr.mxu0 0.0
    %1933 = vmatpush1.msra.mxu0 0.0
    %1934 = vmatprep.subr.mxu0 0.0
    %1935 = vmatpush1.msra.mxu0 0.0
    %1936 = vmatprep.subr.mxu0 0.0
    %1937 = vmatpush1.msra.mxu0 0.0
    %1938 = vmatprep.subr.mxu0 0.0
    %1939 = vmatpush1.msra.mxu0 0.0
    %1940 = vmatprep.subr.mxu0 0.0
    %1941 = vmatpush1.msra.mxu0 0.0
    %1942 = vmatprep.subr.mxu0 0.0
    %1943 = vmatpush1.msra.mxu0 0.0
    %1944 = vmatprep.subr.mxu0 0.0
    %1945 = vmatpush1.msra.mxu0 0.0
    %1946 = vmatprep.subr.mxu0 0.0
    %1947 = vmatpush1.msra.mxu0 0.0
    %1948 = vmatprep.subr.mxu0 0.0
    %1949 = vmatpush1.msra.mxu0 0.0
    %1950 = vmatprep.subr.mxu0 0.0
    %1951 = vmatpush1.msra.mxu0 0.0
    %1952 = vmatprep.subr.mxu0 0.0
    %1953 = vmatpush1.msra.mxu0 0.0
    %1954 = vmatprep.subr.mxu0 0.0
    %1955 = vmatpush1.msra.mxu0 0.0
    %1956 = vmatprep.subr.mxu0 0.0
    %1957 = vmatpush1.msra.mxu0 0.0
    %1958 = vmatprep.subr.mxu0 0.0
    %1959 = vmatpush1.msra.mxu0 0.0
    %1960 = vmatprep.mubr.f32.mxu0 0.0
    %1961 = vmatmul.mubr.f32.gmra.mrb[0].mxu0 %v1894
    %v1962 = vpop.f32.mrb[0].mxu0
    %v1963 = vadd.f32 %v1890, %v1962
    %v1964 = vpop.f32.mrb[0].mxu0
    %1965 = vdwg.mxu0
    %vm1966 = vcmp.gt.f32.partialorder %v1963, 0.0
    %v1967 = vmin.f32 %v1963, 0.0
    %v1968 = vmul.f32 %v1967, 1.442695
    %v1969 = vpow.pop %v1968
    %v1970 = vsub.f32 %v1969, 1.0
    %v1971 = vsel %vm1966, %v1963, %v1970
    %v1973 = vsel %vm51, %v1971, 0
    %1975 = vmatprep.subr.mxu0 0.0
    %1976 = vmatpush1.msra.mxu0 %v43
    %1977 = vmatprep.subr.mxu0 0.0
    %1978 = vmatpush1.msra.mxu0 %v44
    %1979 = vmatprep.subr.mxu0 0.0
    %1980 = vmatpush1.msra.mxu0 %v45
    %1981 = vmatprep.subr.mxu0 0.0
    %1982 = vmatpush1.msra.mxu0 %v46
    %1983 = vmatprep.subr.mxu0 0.0
    %1984 = vmatpush1.msra.mxu0 0.0
    %1985 = vmatprep.subr.mxu0 0.0
    %1986 = vmatpush1.msra.mxu0 0.0
    %1987 = vmatprep.subr.mxu0 0.0
    %1988 = vmatpush1.msra.mxu0 0.0
    %1989 = vmatprep.subr.mxu0 0.0
    %1990 = vmatpush1.msra.mxu0 0.0
    %1991 = vmatprep.subr.mxu0 0.0
    %1992 = vmatpush1.msra.mxu0 0.0
    %1993 = vmatprep.subr.mxu0 0.0
    %1994 = vmatpush1.msra.mxu0 0.0
    %1995 = vmatprep.subr.mxu0 0.0
    %1996 = vmatpush1.msra.mxu0 0.0
    %1997 = vmatprep.subr.mxu0 0.0
    %1998 = vmatpush1.msra.mxu0 0.0
    %1999 = vmatprep.subr.mxu0 0.0
    %2000 = vmatpush1.msra.mxu0 0.0
    %2001 = vmatprep.subr.mxu0 0.0
    %2002 = vmatpush1.msra.mxu0 0.0
    %2003 = vmatprep.subr.mxu0 0.0
    %2004 = vmatpush1.msra.mxu0 0.0
    %2005 = vmatprep.subr.mxu0 0.0
    %2006 = vmatpush1.msra.mxu0 0.0
    %2007 = vmatprep.subr.mxu0 0.0
    %2008 = vmatpush1.msra.mxu0 0.0
    %2009 = vmatprep.subr.mxu0 0.0
    %2010 = vmatpush1.msra.mxu0 0.0
    %2011 = vmatprep.subr.mxu0 0.0
    %2012 = vmatpush1.msra.mxu0 0.0
    %2013 = vmatprep.subr.mxu0 0.0
    %2014 = vmatpush1.msra.mxu0 0.0
    %2015 = vmatprep.subr.mxu0 0.0
    %2016 = vmatpush1.msra.mxu0 0.0
    %2017 = vmatprep.subr.mxu0 0.0
    %2018 = vmatpush1.msra.mxu0 0.0
    %2019 = vmatprep.subr.mxu0 0.0
    %2020 = vmatpush1.msra.mxu0 0.0
    %2021 = vmatprep.subr.mxu0 0.0
    %2022 = vmatpush1.msra.mxu0 0.0
    %2023 = vmatprep.subr.mxu0 0.0
    %2024 = vmatpush1.msra.mxu0 0.0
    %2025 = vmatprep.subr.mxu0 0.0
    %2026 = vmatpush1.msra.mxu0 0.0
    %2027 = vmatprep.subr.mxu0 0.0
    %2028 = vmatpush1.msra.mxu0 0.0
    %2029 = vmatprep.subr.mxu0 0.0
    %2030 = vmatpush1.msra.mxu0 0.0
    %2031 = vmatprep.subr.mxu0 0.0
    %2032 = vmatpush1.msra.mxu0 0.0
    %2033 = vmatprep.subr.mxu0 0.0
    %2034 = vmatpush1.msra.mxu0 0.0
    %2035 = vmatprep.subr.mxu0 0.0
    %2036 = vmatpush1.msra.mxu0 0.0
    %2037 = vmatprep.subr.mxu0 0.0
    %2038 = vmatpush1.msra.mxu0 0.0
    %2039 = vmatprep.mubr.f32.mxu0 0.0
    %2040 = vmatmul.mubr.f32.gmra.mrb[0].mxu0 %v1973
    %v2041 = vpop.f32.mrb[0].mxu0
    %v2042 = vadd.f32 0.0, %v2041
    %v2043 = vpop.f32.mrb[0].mxu0
    %2044 = vdwg.mxu0
    %2045 = vmatprep.subr.mxu0 0.0
    %2046 = vmatpush1.msra.mxu0 %v47
    %2047 = vmatprep.subr.mxu0 0.0
    %2048 = vmatpush1.msra.mxu0 %v48
    %2049 = vmatprep.subr.mxu0 0.0
    %2050 = vmatpush1.msra.mxu0 %v49
    %2051 = vmatprep.subr.mxu0 0.0
    %2052 = vmatpush1.msra.mxu0 %v50
    %2053 = vmatprep.subr.mxu0 0.0
    %2054 = vmatpush1.msra.mxu0 0.0
    %2055 = vmatprep.subr.mxu0 0.0
    %2056 = vmatpush1.msra.mxu0 0.0
    %2057 = vmatprep.subr.mxu0 0.0
    %2058 = vmatpush1.msra.mxu0 0.0
    %2059 = vmatprep.subr.mxu0 0.0
    %2060 = vmatpush1.msra.mxu0 0.0
    %2061 = vmatprep.subr.mxu0 0.0
    %2062 = vmatpush1.msra.mxu0 0.0
    %2063 = vmatprep.subr.mxu0 0.0
    %2064 = vmatpush1.msra.mxu0 0.0
    %2065 = vmatprep.subr.mxu0 0.0
    %2066 = vmatpush1.msra.mxu0 0.0
    %2067 = vmatprep.subr.mxu0 0.0
    %2068 = vmatpush1.msra.mxu0 0.0
    %2069 = vmatprep.subr.mxu0 0.0
    %2070 = vmatpush1.msra.mxu0 0.0
    %2071 = vmatprep.subr.mxu0 0.0
    %2072 = vmatpush1.msra.mxu0 0.0
    %2073 = vmatprep.subr.mxu0 0.0
    %2074 = vmatpush1.msra.mxu0 0.0
    %2075 = vmatprep.subr.mxu0 0.0
    %2076 = vmatpush1.msra.mxu0 0.0
    %2077 = vmatprep.subr.mxu0 0.0
    %2078 = vmatpush1.msra.mxu0 0.0
    %2079 = vmatprep.subr.mxu0 0.0
    %2080 = vmatpush1.msra.mxu0 0.0
    %2081 = vmatprep.subr.mxu0 0.0
    %2082 = vmatpush1.msra.mxu0 0.0
    %2083 = vmatprep.subr.mxu0 0.0
    %2084 = vmatpush1.msra.mxu0 0.0
    %2085 = vmatprep.subr.mxu0 0.0
    %2086 = vmatpush1.msra.mxu0 0.0
    %2087 = vmatprep.subr.mxu0 0.0
    %2088 = vmatpush1.msra.mxu0 0.0
    %2089 = vmatprep.subr.mxu0 0.0
    %2090 = vmatpush1.msra.mxu0 0.0
    %2091 = vmatprep.subr.mxu0 0.0
    %2092 = vmatpush1.msra.mxu0 0.0
    %2093 = vmatprep.subr.mxu0 0.0
    %2094 = vmatpush1.msra.mxu0 0.0
    %2095 = vmatprep.subr.mxu0 0.0
    %2096 = vmatpush1.msra.mxu0 0.0
    %2097 = vmatprep.subr.mxu0 0.0
    %2098 = vmatpush1.msra.mxu0 0.0
    %2099 = vmatprep.subr.mxu0 0.0
    %2100 = vmatpush1.msra.mxu0 0.0
    %2101 = vmatprep.subr.mxu0 0.0
    %2102 = vmatpush1.msra.mxu0 0.0
    %2103 = vmatprep.subr.mxu0 0.0
    %2104 = vmatpush1.msra.mxu0 0.0
    %2105 = vmatprep.subr.mxu0 0.0
    %2106 = vmatpush1.msra.mxu0 0.0
    %2107 = vmatprep.subr.mxu0 0.0
    %2108 = vmatpush1.msra.mxu0 0.0
    %2109 = vmatprep.mubr.f32.mxu0 0.0
    %2110 = vmatmul.mubr.f32.gmra.mrb[0].mxu0 %v1973
    %v2111 = vpop.f32.mrb[0].mxu0
    %v2112 = vadd.f32 0.0, %v2111
    %v2113 = vpop.f32.mrb[0].mxu0
    %2114 = vdwg.mxu0
    %v2115 = vmax.f32 %v2042, %v2112
    %v2116 = vmul.f32 %v2115, %v2115
    %v2117 = vsel %vm198, %v2116, 0.0
    %2118 = vadd.xlane.f32.xlu0 %v2117
    %v2119 = vpop.xlane.xlu0 %2118
    %v2120 = vmul.f32 %v2119, %v938
    %v2121 = vlog2.pop %v2120
    %v2122 = vmul.f32 %v2121, 0.6931472
    %v2123 = vsel %vm198, %v1864, 0.0
    %2124 = vadd.xlane.f32.xlu0 %v2123
    %v2125 = vpop.xlane.xlu0 %2124
    %v2126 = vmul.f32 %v2125, %v938
    %v2127 = vsub.f32 %v1864, %v2126
    %v2128 = vmul.f32 %v2127, %v2127
    %v2129 = vsel %vm198, %v2128, 0.0
    %2130 = vadd.xlane.f32.xlu0 %v2129
    %v2131 = vpop.xlane.xlu0 %2130
    %v2132 = vmul.f32 %v2131, %v938
    %v2133 = vadd.f32 %v2132, 1e-05
    %v2134 = vrsqrt.pop %v2133
    %v2135 = vmul.f32 %v2127, %v2134
    %v2136 = vld [vmem:[#allocation5 + $0x2c8] sm:$0x1]
    %v2137 = vlaneseq
    %v2138 = vshrl.u32 %v2137, 7
    %v2139 = vsub.s32 0, %v2138
    %v2140 = vrot.slane %v2136, %v2139
    %v2141 = vmul.f32 %v2135, %v2140
    %v2142 = vld [vmem:[#allocation5 + $0x2c0] sm:$0x1]
    %v2143 = vlaneseq
    %v2144 = vshrl.u32 %v2143, 7
    %v2145 = vsub.s32 0, %v2144
    %v2146 = vrot.slane %v2142, %v2145
    %v2147 = vadd.f32 %v2141, %v2146
    %v2148 = vld [vmem:[#allocation5 + $0x2d0] sm:$0xff]
    %v2149 = vld [vmem:[#allocation5 + $0x2d8] sm:$0xff]
    %v2150 = vld [vmem:[#allocation5 + $0x2b0] sm:$0x1]
    %v2151 = vlaneseq
    %v2152 = vshrl.u32 %v2151, 7
    %v2153 = vsub.s32 0, %v2152
    %v2154 = vrot.slane %v2150, %v2153
    %v2156 = vsel %vm198, %v2147, 0
    %2158 = vmatprep.subr.mxu0 0.0
    %2159 = vmatpush1.msra.mxu0 %v2148
    %2160 = vmatprep.subr.mxu0 0.0
    %2161 = vmatpush1.msra.mxu0 %v2149
    %2162 = vmatprep.subr.mxu0 0.0
    %2163 = vmatpush1.msra.mxu0 0.0
    %2164 = vmatprep.subr.mxu0 0.0
    %2165 = vmatpush1.msra.mxu0 0.0
    %2166 = vmatprep.subr.mxu0 0.0
    %2167 = vmatpush1.msra.mxu0 0.0
    %2168 = vmatprep.subr.mxu0 0.0
    %2169 = vmatpush1.msra.mxu0 0.0
    %2170 = vmatprep.subr.mxu0 0.0
    %2171 = vmatpush1.msra.mxu0 0.0
    %2172 = vmatprep.subr.mxu0 0.0
    %2173 = vmatpush1.msra.mxu0 0.0
    %2174 = vmatprep.subr.mxu0 0.0
    %2175 = vmatpush1.msra.mxu0 0.0
    %2176 = vmatprep.subr.mxu0 0.0
    %2177 = vmatpush1.msra.mxu0 0.0
    %2178 = vmatprep.subr.mxu0 0.0
    %2179 = vmatpush1.msra.mxu0 0.0
    %2180 = vmatprep.subr.mxu0 0.0
    %2181 = vmatpush1.msra.mxu0 0.0
    %2182 = vmatprep.subr.mxu0 0.0
    %2183 = vmatpush1.msra.mxu0 0.0
    %2184 = vmatprep.subr.mxu0 0.0
    %2185 = vmatpush1.msra.mxu0 0.0
    %2186 = vmatprep.subr.mxu0 0.0
    %2187 = vmatpush1.msra.mxu0 0.0
    %2188 = vmatprep.subr.mxu0 0.0
    %2189 = vmatpush1.msra.mxu0 0.0
    %2190 = vmatprep.subr.mxu0 0.0
    %2191 = vmatpush1.msra.mxu0 0.0
    %2192 = vmatprep.subr.mxu0 0.0
    %2193 = vmatpush1.msra.mxu0 0.0
    %2194 = vmatprep.subr.mxu0 0.0
    %2195 = vmatpush1.msra.mxu0 0.0
    %2196 = vmatprep.subr.mxu0 0.0
    %2197 = vmatpush1.msra.mxu0 0.0
    %2198 = vmatprep.subr.mxu0 0.0
    %2199 = vmatpush1.msra.mxu0 0.0
    %2200 = vmatprep.subr.mxu0 0.0
    %2201 = vmatpush1.msra.mxu0 0.0
    %2202 = vmatprep.subr.mxu0 0.0
    %2203 = vmatpush1.msra.mxu0 0.0
    %2204 = vmatprep.subr.mxu0 0.0
    %2205 = vmatpush1.msra.mxu0 0.0
    %2206 = vmatprep.subr.mxu0 0.0
    %2207 = vmatpush1.msra.mxu0 0.0
    %2208 = vmatprep.subr.mxu0 0.0
    %2209 = vmatpush1.msra.mxu0 0.0
    %2210 = vmatprep.subr.mxu0 0.0
    %2211 = vmatpush1.msra.mxu0 0.0
    %2212 = vmatprep.subr.mxu0 0.0
    %2213 = vmatpush1.msra.mxu0 0.0
    %2214 = vmatprep.subr.mxu0 0.0
    %2215 = vmatpush1.msra.mxu0 0.0
    %2216 = vmatprep.subr.mxu0 0.0
    %2217 = vmatpush1.msra.mxu0 0.0
    %2218 = vmatprep.subr.mxu0 0.0
    %2219 = vmatpush1.msra.mxu0 0.0
    %2220 = vmatprep.subr.mxu0 0.0
    %2221 = vmatpush1.msra.mxu0 0.0
    %2222 = vmatprep.mubr.f32.mxu0 0.0
    %2223 = vmatmul.mubr.f32.gmra.mrb[0].mxu0 %v2156
    %v2224 = vpop.f32.mrb[0].mxu0
    %v2225 = vadd.f32 %v2154, %v2224
    %v2226 = vpop.f32.mrb[0].mxu0
    %2227 = vdwg.mxu0
    %v2228 = vmul.f32 %v2225, 0.5
    %v2229 = vmul.f32 %v2225, 0.70710677
    %vm2230 = vcmp.ge.f32.partialorder %v2229, 0.0
    %v2231 = vsel %vm2230, 1.0, -1.0
    %v2232 = vand.u32 2147483647, %v2229
    %v2233 = vmul.f32 %v2232, 0.3275911
    %v2234 = vadd.f32 %v2233, 1.0
    %v2235 = vrcp.pop %v2234
    %v2236 = vmul.f32 1.0, %v2235
    %v2237 = vmul.f32 %v2236, 1.0614054
    %v2238 = vadd.f32 %v2237, -1.4531521
    %v2239 = vmul.f32 %v2238, %v2236
    %v2240 = vadd.f32 %v2239, 1.4214138
    %v2241 = vmul.f32 %v2240, %v2236
    %v2242 = vadd.f32 %v2241, -0.28449672
    %v2243 = vmul.f32 %v2242, %v2236
    %v2244 = vadd.f32 %v2243, 0.2548296
    %v2245 = vmul.f32 %v2244, %v2236
    %v2246 = vsub.f32 0.0, %v2232
    %v2247 = vmul.f32 %v2246, %v2232
    %v2248 = vmul.f32 %v2247, 1.442695
    %v2249 = vpow.pop %v2248
    %v2250 = vmul.f32 %v2245, %v2249
    %v2251 = vsub.f32 1.0, %v2250
    %v2252 = vmul.f32 %v2231, %v2251
    %v2253 = vadd.f32 %v2252, 1.0
    %v2254 = vmul.f32 %v2228, %v2253
    %v2255 = vld [vmem:[#allocation5 + $0x2e0] sm:$0xff]
    %v2256 = vld [vmem:[#allocation5 + $0x2e8] sm:$0xff]
    %v2257 = vld [vmem:[#allocation5 + $0x2b8] sm:$0x1]
    %v2258 = vlaneseq
    %v2259 = vshrl.u32 %v2258, 7
    %v2260 = vsub.s32 0, %v2259
    %v2261 = vrot.slane %v2257, %v2260
    %v2263 = vsel %vm198, %v2254, 0
    %2265 = vmatprep.subr.mxu0 0.0
    %2266 = vmatpush1.msra.mxu0 %v2255
    %2267 = vmatprep.subr.mxu0 0.0
    %2268 = vmatpush1.msra.mxu0 %v2256
    %2269 = vmatprep.subr.mxu0 0.0
    %2270 = vmatpush1.msra.mxu0 0.0
    %2271 = vmatprep.subr.mxu0 0.0
    %2272 = vmatpush1.msra.mxu0 0.0
    %2273 = vmatprep.subr.mxu0 0.0
    %2274 = vmatpush1.msra.mxu0 0.0
    %2275 = vmatprep.subr.mxu0 0.0
    %2276 = vmatpush1.msra.mxu0 0.0
    %2277 = vmatprep.subr.mxu0 0.0
    %2278 = vmatpush1.msra.mxu0 0.0
    %2279 = vmatprep.subr.mxu0 0.0
    %2280 = vmatpush1.msra.mxu0 0.0
    %2281 = vmatprep.subr.mxu0 0.0
    %2282 = vmatpush1.msra.mxu0 0.0
    %2283 = vmatprep.subr.mxu0 0.0
    %2284 = vmatpush1.msra.mxu0 0.0
    %2285 = vmatprep.subr.mxu0 0.0
    %2286 = vmatpush1.msra.mxu0 0.0
    %2287 = vmatprep.subr.mxu0 0.0
    %2288 = vmatpush1.msra.mxu0 0.0
    %2289 = vmatprep.subr.mxu0 0.0
    %2290 = vmatpush1.msra.mxu0 0.0
    %2291 = vmatprep.subr.mxu0 0.0
    %2292 = vmatpush1.msra.mxu0 0.0
    %2293 = vmatprep.subr.mxu0 0.0
    %2294 = vmatpush1.msra.mxu0 0.0
    %2295 = vmatprep.subr.mxu0 0.0
    %2296 = vmatpush1.msra.mxu0 0.0
    %2297 = vmatprep.subr.mxu0 0.0
    %2298 = vmatpush1.msra.mxu0 0.0
    %2299 = vmatprep.subr.mxu0 0.0
    %2300 = vmatpush1.msra.mxu0 0.0
    %2301 = vmatprep.subr.mxu0 0.0
    %2302 = vmatpush1.msra.mxu0 0.0
    %2303 = vmatprep.subr.mxu0 0.0
    %2304 = vmatpush1.msra.mxu0 0.0
    %2305 = vmatprep.subr.mxu0 0.0
    %2306 = vmatpush1.msra.mxu0 0.0
    %2307 = vmatprep.subr.mxu0 0.0
    %2308 = vmatpush1.msra.mxu0 0.0
    %2309 = vmatprep.subr.mxu0 0.0
    %2310 = vmatpush1.msra.mxu0 0.0
    %2311 = vmatprep.subr.mxu0 0.0
    %2312 = vmatpush1.msra.mxu0 0.0
    %2313 = vmatprep.subr.mxu0 0.0
    %2314 = vmatpush1.msra.mxu0 0.0
    %2315 = vmatprep.subr.mxu0 0.0
    %2316 = vmatpush1.msra.mxu0 0.0
    %2317 = vmatprep.subr.mxu0 0.0
    %2318 = vmatpush1.msra.mxu0 0.0
    %2319 = vmatprep.subr.mxu0 0.0
    %2320 = vmatpush1.msra.mxu0 0.0
    %2321 = vmatprep.subr.mxu0 0.0
    %2322 = vmatpush1.msra.mxu0 0.0
    %2323 = vmatprep.subr.mxu0 0.0
    %2324 = vmatpush1.msra.mxu0 0.0
    %2325 = vmatprep.subr.mxu0 0.0
    %2326 = vmatpush1.msra.mxu0 0.0
    %2327 = vmatprep.subr.mxu0 0.0
    %2328 = vmatpush1.msra.mxu0 0.0
    %2329 = vmatprep.mubr.f32.mxu0 0.0
    %2330 = vmatmul.mubr.f32.gmra.mrb[0].mxu0 %v2263
    %v2331 = vpop.f32.mrb[0].mxu0
    %v2332 = vadd.f32 %v2261, %v2331
    %v2333 = vpop.f32.mrb[0].mxu0
    %2334 = vdwg.mxu0
    %v2335 = vadd.f32 %v2332, %v2115
    %v2336 = vld [vmem:[#allocation5 + $0x2f0] sm:$0xff]
    %v2337 = vld [vmem:[#allocation5 + $0x2f8] sm:$0xff]
    %v2339 = vsel %vm198, %v2335, 0
    %2341 = vmatprep.subr.mxu0 0.0
    %2342 = vmatpush1.msra.mxu0 %v2336
    %2343 = vmatprep.subr.mxu0 0.0
    %2344 = vmatpush1.msra.mxu0 %v2337
    %2345 = vmatprep.subr.mxu0 0.0
    %2346 = vmatpush1.msra.mxu0 0.0
    %2347 = vmatprep.subr.mxu0 0.0
    %2348 = vmatpush1.msra.mxu0 0.0
    %2349 = vmatprep.subr.mxu0 0.0
    %2350 = vmatpush1.msra.mxu0 0.0
    %2351 = vmatprep.subr.mxu0 0.0
    %2352 = vmatpush1.msra.mxu0 0.0
    %2353 = vmatprep.subr.mxu0 0.0
    %2354 = vmatpush1.msra.mxu0 0.0
    %2355 = vmatprep.subr.mxu0 0.0
    %2356 = vmatpush1.msra.mxu0 0.0
    %2357 = vmatprep.subr.mxu0 0.0
    %2358 = vmatpush1.msra.mxu0 0.0
    %2359 = vmatprep.subr.mxu0 0.0
    %2360 = vmatpush1.msra.mxu0 0.0
    %2361 = vmatprep.subr.mxu0 0.0
    %2362 = vmatpush1.msra.mxu0 0.0
    %2363 = vmatprep.subr.mxu0 0.0
    %2364 = vmatpush1.msra.mxu0 0.0
    %2365 = vmatprep.subr.mxu0 0.0
    %2366 = vmatpush1.msra.mxu0 0.0
    %2367 = vmatprep.subr.mxu0 0.0
    %2368 = vmatpush1.msra.mxu0 0.0
    %2369 = vmatprep.subr.mxu0 0.0
    %2370 = vmatpush1.msra.mxu0 0.0
    %2371 = vmatprep.subr.mxu0 0.0
    %2372 = vmatpush1.msra.mxu0 0.0
    %2373 = vmatprep.subr.mxu0 0.0
    %2374 = vmatpush1.msra.mxu0 0.0
    %2375 = vmatprep.subr.mxu0 0.0
    %2376 = vmatpush1.msra.mxu0 0.0
    %2377 = vmatprep.subr.mxu0 0.0
    %2378 = vmatpush1.msra.mxu0 0.0
    %2379 = vmatprep.subr.mxu0 0.0
    %2380 = vmatpush1.msra.mxu0 0.0
    %2381 = vmatprep.subr.mxu0 0.0
    %2382 = vmatpush1.msra.mxu0 0.0
    %2383 = vmatprep.subr.mxu0 0.0
    %2384 = vmatpush1.msra.mxu0 0.0
    %2385 = vmatprep.subr.mxu0 0.0
    %2386 = vmatpush1.msra.mxu0 0.0
    %2387 = vmatprep.subr.mxu0 0.0
    %2388 = vmatpush1.msra.mxu0 0.0
    %2389 = vmatprep.subr.mxu0 0.0
    %2390 = vmatpush1.msra.mxu0 0.0
    %2391 = vmatprep.subr.mxu0 0.0
    %2392 = vmatpush1.msra.mxu0 0.0
    %2393 = vmatprep.subr.mxu0 0.0
    %2394 = vmatpush1.msra.mxu0 0.0
    %2395 = vmatprep.subr.mxu0 0.0
    %2396 = vmatpush1.msra.mxu0 0.0
    %2397 = vmatprep.subr.mxu0 0.0
    %2398 = vmatpush1.msra.mxu0 0.0
    %2399 = vmatprep.subr.mxu0 0.0
    %2400 = vmatpush1.msra.mxu0 0.0
    %2401 = vmatprep.subr.mxu0 0.0
    %2402 = vmatpush1.msra.mxu0 0.0
    %2403 = vmatprep.subr.mxu0 0.0
    %2404 = vmatpush1.msra.mxu0 0.0
    %2405 = vmatprep.mubr.f32.mxu0 0.0
    %2406 = vmatmul.mubr.f32.gmra.mrb[0].mxu0 %v2339
    %v2407 = vpop.f32.mrb[0].mxu0
    %v2408 = vadd.f32 0.0, %v2407
    %v2409 = vpop.f32.mrb[0].mxu0
    %2410 = vdwg.mxu0
    %v2411 = vmul.f32 %v1227, 0.35355338
    %v2412 = vld [vmem:[#allocation5] sm:$0xff]
    %v2414 = vsel %vm276, %v2411, 0
    %v2417 = vsel %vm276, %v2408, 0
    %2419 = vmatprep.subr.mxu0 0.0
    %2420 = vmatpush1.xpose.msra.mxu0 %v2417
    %2421 = vmatprep.subr.mxu0 0.0
    %2422 = vmatpush1.xpose.msra.mxu0 0.0
    %2423 = vmatprep.subr.mxu0 0.0
    %2424 = vmatpush1.xpose.msra.mxu0 0.0
    %2425 = vmatprep.subr.mxu0 0.0
    %2426 = vmatpush1.xpose.msra.mxu0 0.0
    %2427 = vmatprep.subr.mxu0 0.0
    %2428 = vmatpush1.xpose.msra.mxu0 0.0
    %2429 = vmatprep.subr.mxu0 0.0
    %2430 = vmatpush1.xpose.msra.mxu0 0.0
    %2431 = vmatprep.subr.mxu0 0.0
    %2432 = vmatpush1.xpose.msra.mxu0 0.0
    %2433 = vmatprep.subr.mxu0 0.0
    %2434 = vmatpush1.xpose.msra.mxu0 0.0
    %2435 = vmatprep.subr.mxu0 0.0
    %2436 = vmatpush1.xpose.msra.mxu0 0.0
    %2437 = vmatprep.subr.mxu0 0.0
    %2438 = vmatpush1.xpose.msra.mxu0 0.0
    %2439 = vmatprep.subr.mxu0 0.0
    %2440 = vmatpush1.xpose.msra.mxu0 0.0
    %2441 = vmatprep.subr.mxu0 0.0
    %2442 = vmatpush1.xpose.msra.mxu0 0.0
    %2443 = vmatprep.subr.mxu0 0.0
    %2444 = vmatpush1.xpose.msra.mxu0 0.0
    %2445 = vmatprep.subr.mxu0 0.0
    %2446 = vmatpush1.xpose.msra.mxu0 0.0
    %2447 = vmatprep.subr.mxu0 0.0
    %2448 = vmatpush1.xpose.msra.mxu0 0.0
    %2449 = vmatprep.subr.mxu0 0.0
    %2450 = vmatpush1.xpose.msra.mxu0 0.0
    %2451 = vmatprep.subr.mxu0 0.0
    %2452 = vmatpush1.xpose.msra.mxu0 0.0
    %2453 = vmatprep.subr.mxu0 0.0
    %2454 = vmatpush1.xpose.msra.mxu0 0.0
    %2455 = vmatprep.subr.mxu0 0.0
    %2456 = vmatpush1.xpose.msra.mxu0 0.0
    %2457 = vmatprep.subr.mxu0 0.0
    %2458 = vmatpush1.xpose.msra.mxu0 0.0
    %2459 = vmatprep.subr.mxu0 0.0
    %2460 = vmatpush1.xpose.msra.mxu0 0.0
    %2461 = vmatprep.subr.mxu0 0.0
    %2462 = vmatpush1.xpose.msra.mxu0 0.0
    %2463 = vmatprep.subr.mxu0 0.0
    %2464 = vmatpush1.xpose.msra.mxu0 0.0
    %2465 = vmatprep.subr.mxu0 0.0
    %2466 = vmatpush1.xpose.msra.mxu0 0.0
    %2467 = vmatprep.subr.mxu0 0.0
    %2468 = vmatpush1.xpose.msra.mxu0 0.0
    %2469 = vmatprep.subr.mxu0 0.0
    %2470 = vmatpush1.xpose.msra.mxu0 0.0
    %2471 = vmatprep.subr.mxu0 0.0
    %2472 = vmatpush1.xpose.msra.mxu0 0.0
    %2473 = vmatprep.subr.mxu0 0.0
    %2474 = vmatpush1.xpose.msra.mxu0 0.0
    %2475 = vmatprep.subr.mxu0 0.0
    %2476 = vmatpush1.xpose.msra.mxu0 0.0
    %2477 = vmatprep.subr.mxu0 0.0
    %2478 = vmatpush1.xpose.msra.mxu0 0.0
    %2479 = vmatprep.subr.mxu0 0.0
    %2480 = vmatpush1.xpose.msra.mxu0 0.0
    %2481 = vmatprep.subr.mxu0 0.0
    %2482 = vmatpush1.xpose.msra.mxu0 0.0
    %2483 = vmatprep.mubr.f32.mxu0 0.0
    %2484 = vmatmul.mubr.f32.gmra.mrb[0].mxu0 %v2414
    %v2485 = vpop.f32.mrb[0].mxu0
    %v2486 = vadd.f32 %v2412, %v2485
    %v2487 = vpop.f32.mrb[0].mxu0
    %2488 = vdwg.mxu0
    %v2489 = vsel %vm276, %v2486, -inf
    %2490 = vmax.xlane.f32.xlu0 %v2489
    %v2491 = vpop.xlane.xlu0 %2490
    %v2492 = vsub.f32 %v2486, %v2491
    %v2493 = vmul.f32 %v2492, 1.442695
    %v2494 = vpow.pop %v2493
    %v2495 = vsel %vm276, %v2494, 0.0
    %2496 = vadd.xlane.f32.xlu0 %v2495
    %v2497 = vpop.xlane.xlu0 %2496
    %v2498 = vrcp.pop %v2497
    %v2499 = vmul.f32 %v2494, %v2498
    %v2501 = vsel %vm276, %v2499, 0
    %2503 = vmatprep.subr.mxu0 0.0
    %2504 = vmatpush1.msra.mxu0 %v2408
    %2505 = vmatprep.subr.mxu0 0.0
    %2506 = vmatpush1.msra.mxu0 0.0
    %2507 = vmatprep.subr.mxu0 0.0
    %2508 = vmatpush1.msra.mxu0 0.0
    %2509 = vmatprep.subr.mxu0 0.0
    %2510 = vmatpush1.msra.mxu0 0.0
    %2511 = vmatprep.subr.mxu0 0.0
    %2512 = vmatpush1.msra.mxu0 0.0
    %2513 = vmatprep.subr.mxu0 0.0
    %2514 = vmatpush1.msra.mxu0 0.0
    %2515 = vmatprep.subr.mxu0 0.0
    %2516 = vmatpush1.msra.mxu0 0.0
    %2517 = vmatprep.subr.mxu0 0.0
    %2518 = vmatpush1.msra.mxu0 0.0
    %2519 = vmatprep.subr.mxu0 0.0
    %2520 = vmatpush1.msra.mxu0 0.0
    %2521 = vmatprep.subr.mxu0 0.0
    %2522 = vmatpush1.msra.mxu0 0.0
    %2523 = vmatprep.subr.mxu0 0.0
    %2524 = vmatpush1.msra.mxu0 0.0
    %2525 = vmatprep.subr.mxu0 0.0
    %2526 = vmatpush1.msra.mxu0 0.0
    %2527 = vmatprep.subr.mxu0 0.0
    %2528 = vmatpush1.msra.mxu0 0.0
    %2529 = vmatprep.subr.mxu0 0.0
    %2530 = vmatpush1.msra.mxu0 0.0
    %2531 = vmatprep.subr.mxu0 0.0
    %2532 = vmatpush1.msra.mxu0 0.0
    %2533 = vmatprep.subr.mxu0 0.0
    %2534 = vmatpush1.msra.mxu0 0.0
    %2535 = vmatprep.subr.mxu0 0.0
    %2536 = vmatpush1.msra.mxu0 0.0
    %2537 = vmatprep.subr.mxu0 0.0
    %2538 = vmatpush1.msra.mxu0 0.0
    %2539 = vmatprep.subr.mxu0 0.0
    %2540 = vmatpush1.msra.mxu0 0.0
    %2541 = vmatprep.subr.mxu0 0.0
    %2542 = vmatpush1.msra.mxu0 0.0
    %2543 = vmatprep.subr.mxu0 0.0
    %2544 = vmatpush1.msra.mxu0 0.0
    %2545 = vmatprep.subr.mxu0 0.0
    %2546 = vmatpush1.msra.mxu0 0.0
    %2547 = vmatprep.subr.mxu0 0.0
    %2548 = vmatpush1.msra.mxu0 0.0
    %2549 = vmatprep.subr.mxu0 0.0
    %2550 = vmatpush1.msra.mxu0 0.0
    %2551 = vmatprep.subr.mxu0 0.0
    %2552 = vmatpush1.msra.mxu0 0.0
    %2553 = vmatprep.subr.mxu0 0.0
    %2554 = vmatpush1.msra.mxu0 0.0
    %2555 = vmatprep.subr.mxu0 0.0
    %2556 = vmatpush1.msra.mxu0 0.0
    %2557 = vmatprep.subr.mxu0 0.0
    %2558 = vmatpush1.msra.mxu0 0.0
    %2559 = vmatprep.subr.mxu0 0.0
    %2560 = vmatpush1.msra.mxu0 0.0
    %2561 = vmatprep.subr.mxu0 0.0
    %2562 = vmatpush1.msra.mxu0 0.0
    %2563 = vmatprep.subr.mxu0 0.0
    %2564 = vmatpush1.msra.mxu0 0.0
    %2565 = vmatprep.subr.mxu0 0.0
    %2566 = vmatpush1.msra.mxu0 0.0
    %2567 = vmatprep.mubr.f32.mxu0 0.0
    %2568 = vmatmul.mubr.f32.gmra.mrb[0].mxu0 %v2501
    %v2569 = vpop.f32.mrb[0].mxu0
    %v2570 = vadd.f32 0.0, %v2569
    %v2571 = vpop.f32.mrb[0].mxu0
    %2572 = vdwg.mxu0
    %2573 = vrot.lane.b32.xlu0 %v2411, 120
    %v2574 = vpop.permute.xlu0 %2573
    %2575 = vrot.lane.b32.xlu0 %v2408, 120
    %v2576 = vpop.permute.xlu0 %2575
    %v2577 = vsel %vm276, %v2574, 0
    %v2579 = vsel %vm276, %v2576, 0
    %2581 = vmatprep.subr.mxu0 0.0
    %2582 = vmatpush1.xpose.msra.mxu0 %v2579
    %2583 = vmatprep.subr.mxu0 0.0
    %2584 = vmatpush1.xpose.msra.mxu0 0.0
    %2585 = vmatprep.subr.mxu0 0.0
    %2586 = vmatpush1.xpose.msra.mxu0 0.0
    %2587 = vmatprep.subr.mxu0 0.0
    %2588 = vmatpush1.xpose.msra.mxu0 0.0
    %2589 = vmatprep.subr.mxu0 0.0
    %2590 = vmatpush1.xpose.msra.mxu0 0.0
    %2591 = vmatprep.subr.mxu0 0.0
    %2592 = vmatpush1.xpose.msra.mxu0 0.0
    %2593 = vmatprep.subr.mxu0 0.0
    %2594 = vmatpush1.xpose.msra.mxu0 0.0
    %2595 = vmatprep.subr.mxu0 0.0
    %2596 = vmatpush1.xpose.msra.mxu0 0.0
    %2597 = vmatprep.subr.mxu0 0.0
    %2598 = vmatpush1.xpose.msra.mxu0 0.0
    %2599 = vmatprep.subr.mxu0 0.0
    %2600 = vmatpush1.xpose.msra.mxu0 0.0
    %2601 = vmatprep.subr.mxu0 0.0
    %2602 = vmatpush1.xpose.msra.mxu0 0.0
    %2603 = vmatprep.subr.mxu0 0.0
    %2604 = vmatpush1.xpose.msra.mxu0 0.0
    %2605 = vmatprep.subr.mxu0 0.0
    %2606 = vmatpush1.xpose.msra.mxu0 0.0
    %2607 = vmatprep.subr.mxu0 0.0
    %2608 = vmatpush1.xpose.msra.mxu0 0.0
    %2609 = vmatprep.subr.mxu0 0.0
    %2610 = vmatpush1.xpose.msra.mxu0 0.0
    %2611 = vmatprep.subr.mxu0 0.0
    %2612 = vmatpush1.xpose.msra.mxu0 0.0
    %2613 = vmatprep.subr.mxu0 0.0
    %2614 = vmatpush1.xpose.msra.mxu0 0.0
    %2615 = vmatprep.subr.mxu0 0.0
    %2616 = vmatpush1.xpose.msra.mxu0 0.0
    %2617 = vmatprep.subr.mxu0 0.0
    %2618 = vmatpush1.xpose.msra.mxu0 0.0
    %2619 = vmatprep.subr.mxu0 0.0
    %2620 = vmatpush1.xpose.msra.mxu0 0.0
    %2621 = vmatprep.subr.mxu0 0.0
    %2622 = vmatpush1.xpose.msra.mxu0 0.0
    %2623 = vmatprep.subr.mxu0 0.0
    %2624 = vmatpush1.xpose.msra.mxu0 0.0
    %2625 = vmatprep.subr.mxu0 0.0
    %2626 = vmatpush1.xpose.msra.mxu0 0.0
    %2627 = vmatprep.subr.mxu0 0.0
    %2628 = vmatpush1.xpose.msra.mxu0 0.0
    %2629 = vmatprep.subr.mxu0 0.0
    %2630 = vmatpush1.xpose.msra.mxu0 0.0
    %2631 = vmatprep.subr.mxu0 0.0
    %2632 = vmatpush1.xpose.msra.mxu0 0.0
    %2633 = vmatprep.subr.mxu0 0.0
    %2634 = vmatpush1.xpose.msra.mxu0 0.0
    %2635 = vmatprep.subr.mxu0 0.0
    %2636 = vmatpush1.xpose.msra.mxu0 0.0
    %2637 = vmatprep.subr.mxu0 0.0
    %2638 = vmatpush1.xpose.msra.mxu0 0.0
    %2639 = vmatprep.subr.mxu0 0.0
    %2640 = vmatpush1.xpose.msra.mxu0 0.0
    %2641 = vmatprep.subr.mxu0 0.0
    %2642 = vmatpush1.xpose.msra.mxu0 0.0
    %2643 = vmatprep.subr.mxu0 0.0
    %2644 = vmatpush1.xpose.msra.mxu0 0.0
    %2645 = vmatprep.mubr.f32.mxu0 0.0
    %2646 = vmatmul.mubr.f32.gmra.mrb[0].mxu0 %v2577
    %v2647 = vpop.f32.mrb[0].mxu0
    %v2648 = vadd.f32 %v2412, %v2647
    %v2649 = vpop.f32.mrb[0].mxu0
    %2650 = vdwg.mxu0
    %v2651 = vsel %vm276, %v2648, -inf
    %2652 = vmax.xlane.f32.xlu0 %v2651
    %v2653 = vpop.xlane.xlu0 %2652
    %v2654 = vsub.f32 %v2648, %v2653
    %v2655 = vmul.f32 %v2654, 1.442695
    %v2656 = vpow.pop %v2655
    %v2657 = vsel %vm276, %v2656, 0.0
    %2658 = vadd.xlane.f32.xlu0 %v2657
    %v2659 = vpop.xlane.xlu0 %2658
    %v2660 = vrcp.pop %v2659
    %v2661 = vmul.f32 %v2656, %v2660
    %v2664 = vsel %vm276, %v2661, 0
    %2666 = vmatprep.subr.mxu0 0.0
    %2667 = vmatpush1.msra.mxu0 %v2576
    %2668 = vmatprep.subr.mxu0 0.0
    %2669 = vmatpush1.msra.mxu0 0.0
    %2670 = vmatprep.subr.mxu0 0.0
    %2671 = vmatpush1.msra.mxu0 0.0
    %2672 = vmatprep.subr.mxu0 0.0
    %2673 = vmatpush1.msra.mxu0 0.0
    %2674 = vmatprep.subr.mxu0 0.0
    %2675 = vmatpush1.msra.mxu0 0.0
    %2676 = vmatprep.subr.mxu0 0.0
    %2677 = vmatpush1.msra.mxu0 0.0
    %2678 = vmatprep.subr.mxu0 0.0
    %2679 = vmatpush1.msra.mxu0 0.0
    %2680 = vmatprep.subr.mxu0 0.0
    %2681 = vmatpush1.msra.mxu0 0.0
    %2682 = vmatprep.subr.mxu0 0.0
    %2683 = vmatpush1.msra.mxu0 0.0
    %2684 = vmatprep.subr.mxu0 0.0
    %2685 = vmatpush1.msra.mxu0 0.0
    %2686 = vmatprep.subr.mxu0 0.0
    %2687 = vmatpush1.msra.mxu0 0.0
    %2688 = vmatprep.subr.mxu0 0.0
    %2689 = vmatpush1.msra.mxu0 0.0
    %2690 = vmatprep.subr.mxu0 0.0
    %2691 = vmatpush1.msra.mxu0 0.0
    %2692 = vmatprep.subr.mxu0 0.0
    %2693 = vmatpush1.msra.mxu0 0.0
    %2694 = vmatprep.subr.mxu0 0.0
    %2695 = vmatpush1.msra.mxu0 0.0
    %2696 = vmatprep.subr.mxu0 0.0
    %2697 = vmatpush1.msra.mxu0 0.0
    %2698 = vmatprep.subr.mxu0 0.0
    %2699 = vmatpush1.msra.mxu0 0.0
    %2700 = vmatprep.subr.mxu0 0.0
    %2701 = vmatpush1.msra.mxu0 0.0
    %2702 = vmatprep.subr.mxu0 0.0
    %2703 = vmatpush1.msra.mxu0 0.0
    %2704 = vmatprep.subr.mxu0 0.0
    %2705 = vmatpush1.msra.mxu0 0.0
    %2706 = vmatprep.subr.mxu0 0.0
    %2707 = vmatpush1.msra.mxu0 0.0
    %2708 = vmatprep.subr.mxu0 0.0
    %2709 = vmatpush1.msra.mxu0 0.0
    %2710 = vmatprep.subr.mxu0 0.0
    %2711 = vmatpush1.msra.mxu0 0.0
    %2712 = vmatprep.subr.mxu0 0.0
    %2713 = vmatpush1.msra.mxu0 0.0
    %2714 = vmatprep.subr.mxu0 0.0
    %2715 = vmatpush1.msra.mxu0 0.0
    %2716 = vmatprep.subr.mxu0 0.0
    %2717 = vmatpush1.msra.mxu0 0.0
    %2718 = vmatprep.subr.mxu0 0.0
    %2719 = vmatpush1.msra.mxu0 0.0
    %2720 = vmatprep.subr.mxu0 0.0
    %2721 = vmatpush1.msra.mxu0 0.0
    %2722 = vmatprep.subr.mxu0 0.0
    %2723 = vmatpush1.msra.mxu0 0.0
    %2724 = vmatprep.subr.mxu0 0.0
    %2725 = vmatpush1.msra.mxu0 0.0
    %2726 = vmatprep.subr.mxu0 0.0
    %2727 = vmatpush1.msra.mxu0 0.0
    %2728 = vmatprep.subr.mxu0 0.0
    %2729 = vmatpush1.msra.mxu0 0.0
    %2730 = vmatprep.mubr.f32.mxu0 0.0
    %2731 = vmatmul.mubr.f32.gmra.mrb[0].mxu0 %v2664
    %v2732 = vpop.f32.mrb[0].mxu0
    %v2733 = vadd.f32 0.0, %v2732
    %v2734 = vpop.f32.mrb[0].mxu0
    %2735 = vdwg.mxu0
    %2737 = vrot.lane.b32.xlu0 %v2733, 8
    %v2738 = vpop.permute.xlu0 %2737
    %v2740 = vsel %vm276, %v2570, %v2738
    %v2741 = vld [vmem:[#allocation5 + $0x1b0] sm:$0xff]
    %v2742 = vld [vmem:[#allocation5 + $0x1b8] sm:$0xff]
    %v2743 = vld [vmem:[#allocation5 + $0x1a8] sm:$0x1]
    %v2744 = vlaneseq
    %v2745 = vshrl.u32 %v2744, 7
    %v2746 = vsub.s32 0, %v2745
    %v2747 = vrot.slane %v2743, %v2746
    %v2749 = vsel %vm198, %v2740, 0
    %2751 = vmatprep.subr.mxu0 0.0
    %2752 = vmatpush1.msra.mxu0 %v2741
    %2753 = vmatprep.subr.mxu0 0.0
    %2754 = vmatpush1.msra.mxu0 %v2742
    %2755 = vmatprep.subr.mxu0 0.0
    %2756 = vmatpush1.msra.mxu0 0.0
    %2757 = vmatprep.subr.mxu0 0.0
    %2758 = vmatpush1.msra.mxu0 0.0
    %2759 = vmatprep.subr.mxu0 0.0
    %2760 = vmatpush1.msra.mxu0 0.0
    %2761 = vmatprep.subr.mxu0 0.0
    %2762 = vmatpush1.msra.mxu0 0.0
    %2763 = vmatprep.subr.mxu0 0.0
    %2764 = vmatpush1.msra.mxu0 0.0
    %2765 = vmatprep.subr.mxu0 0.0
    %2766 = vmatpush1.msra.mxu0 0.0
    %2767 = vmatprep.subr.mxu0 0.0
    %2768 = vmatpush1.msra.mxu0 0.0
    %2769 = vmatprep.subr.mxu0 0.0
    %2770 = vmatpush1.msra.mxu0 0.0
    %2771 = vmatprep.subr.mxu0 0.0
    %2772 = vmatpush1.msra.mxu0 0.0
    %2773 = vmatprep.subr.mxu0 0.0
    %2774 = vmatpush1.msra.mxu0 0.0
    %2775 = vmatprep.subr.mxu0 0.0
    %2776 = vmatpush1.msra.mxu0 0.0
    %2777 = vmatprep.subr.mxu0 0.0
    %2778 = vmatpush1.msra.mxu0 0.0
    %2779 = vmatprep.subr.mxu0 0.0
    %2780 = vmatpush1.msra.mxu0 0.0
    %2781 = vmatprep.subr.mxu0 0.0
    %2782 = vmatpush1.msra.mxu0 0.0
    %2783 = vmatprep.subr.mxu0 0.0
    %2784 = vmatpush1.msra.mxu0 0.0
    %2785 = vmatprep.subr.mxu0 0.0
    %2786 = vmatpush1.msra.mxu0 0.0
    %2787 = vmatprep.subr.mxu0 0.0
    %2788 = vmatpush1.msra.mxu0 0.0
    %2789 = vmatprep.subr.mxu0 0.0
    %2790 = vmatpush1.msra.mxu0 0.0
    %2791 = vmatprep.subr.mxu0 0.0
    %2792 = vmatpush1.msra.mxu0 0.0
    %2793 = vmatprep.subr.mxu0 0.0
    %2794 = vmatpush1.msra.mxu0 0.0
    %2795 = vmatprep.subr.mxu0 0.0
    %2796 = vmatpush1.msra.mxu0 0.0
    %2797 = vmatprep.subr.mxu0 0.0
    %2798 = vmatpush1.msra.mxu0 0.0
    %2799 = vmatprep.subr.mxu0 0.0
    %2800 = vmatpush1.msra.mxu0 0.0
    %2801 = vmatprep.subr.mxu0 0.0
    %2802 = vmatpush1.msra.mxu0 0.0
    %2803 = vmatprep.subr.mxu0 0.0
    %2804 = vmatpush1.msra.mxu0 0.0
    %2805 = vmatprep.subr.mxu0 0.0
    %2806 = vmatpush1.msra.mxu0 0.0
    %2807 = vmatprep.subr.mxu0 0.0
    %2808 = vmatpush1.msra.mxu0 0.0
    %2809 = vmatprep.subr.mxu0 0.0
    %2810 = vmatpush1.msra.mxu0 0.0
    %2811 = vmatprep.subr.mxu0 0.0
    %2812 = vmatpush1.msra.mxu0 0.0
    %2813 = vmatprep.subr.mxu0 0.0
    %2814 = vmatpush1.msra.mxu0 0.0
    %2815 = vmatprep.mubr.f32.mxu0 0.0
    %2816 = vmatmul.mubr.f32.gmra.mrb[0].mxu0 %v2749
    %v2817 = vpop.f32.mrb[0].mxu0
    %v2818 = vadd.f32 %v2747, %v2817
    %v2819 = vpop.f32.mrb[0].mxu0
    %2820 = vdwg.mxu0
    %v2821 = vadd.f32 %v1227, %v2818
    %v2822 = vsel %vm198, %v2821, 0.0
    %2823 = vadd.xlane.f32.xlu0 %v2822
    %v2824 = vpop.xlane.xlu0 %2823
    %v2825 = vmul.f32 %v2824, %v938
    %v2826 = vsub.f32 %v2821, %v2825
    %v2827 = vmul.f32 %v2826, %v2826
    %v2828 = vsel %vm198, %v2827, 0.0
    %2829 = vadd.xlane.f32.xlu0 %v2828
    %v2830 = vpop.xlane.xlu0 %2829
    %v2831 = vmul.f32 %v2830, %v938
    %v2832 = vadd.f32 %v2831, 1e-05
    %v2833 = vrsqrt.pop %v2832
    %v2834 = vmul.f32 %v2826, %v2833
    %v2835 = vld [vmem:[#allocation5 + $0x170] sm:$0x1]
    %v2836 = vlaneseq
    %v2837 = vshrl.u32 %v2836, 7
    %v2838 = vsub.s32 0, %v2837
    %v2839 = vrot.slane %v2835, %v2838
    %v2840 = vmul.f32 %v2834, %v2839
    %v2841 = vld [vmem:[#allocation5 + $0x168] sm:$0x1]
    %v2842 = vlaneseq
    %v2843 = vshrl.u32 %v2842, 7
    %v2844 = vsub.s32 0, %v2843
    %v2845 = vrot.slane %v2841, %v2844
    %v2846 = vadd.f32 %v2840, %v2845
    %v2847 = vld [vmem:[#allocation5 + $0x178] sm:$0xff]
    %v2848 = vld [vmem:[#allocation5 + $0x180] sm:$0xff]
    %v2849 = vld [vmem:[#allocation5 + $0x158] sm:$0x1]
    %v2850 = vlaneseq
    %v2851 = vshrl.u32 %v2850, 7
    %v2852 = vsub.s32 0, %v2851
    %v2853 = vrot.slane %v2849, %v2852
    %v2855 = vsel %vm198, %v2846, 0
    %2857 = vmatprep.subr.mxu0 0.0
    %2858 = vmatpush1.msra.mxu0 %v2847
    %2859 = vmatprep.subr.mxu0 0.0
    %2860 = vmatpush1.msra.mxu0 %v2848
    %2861 = vmatprep.subr.mxu0 0.0
    %2862 = vmatpush1.msra.mxu0 0.0
    %2863 = vmatprep.subr.mxu0 0.0
    %2864 = vmatpush1.msra.mxu0 0.0
    %2865 = vmatprep.subr.mxu0 0.0
    %2866 = vmatpush1.msra.mxu0 0.0
    %2867 = vmatprep.subr.mxu0 0.0
    %2868 = vmatpush1.msra.mxu0 0.0
    %2869 = vmatprep.subr.mxu0 0.0
    %2870 = vmatpush1.msra.mxu0 0.0
    %2871 = vmatprep.subr.mxu0 0.0
    %2872 = vmatpush1.msra.mxu0 0.0
    %2873 = vmatprep.subr.mxu0 0.0
    %2874 = vmatpush1.msra.mxu0 0.0
    %2875 = vmatprep.subr.mxu0 0.0
    %2876 = vmatpush1.msra.mxu0 0.0
    %2877 = vmatprep.subr.mxu0 0.0
    %2878 = vmatpush1.msra.mxu0 0.0
    %2879 = vmatprep.subr.mxu0 0.0
    %2880 = vmatpush1.msra.mxu0 0.0
    %2881 = vmatprep.subr.mxu0 0.0
    %2882 = vmatpush1.msra.mxu0 0.0
    %2883 = vmatprep.subr.mxu0 0.0
    %2884 = vmatpush1.msra.mxu0 0.0
    %2885 = vmatprep.subr.mxu0 0.0
    %2886 = vmatpush1.msra.mxu0 0.0
    %2887 = vmatprep.subr.mxu0 0.0
    %2888 = vmatpush1.msra.mxu0 0.0
    %2889 = vmatprep.subr.mxu0 0.0
    %2890 = vmatpush1.msra.mxu0 0.0
    %2891 = vmatprep.subr.mxu0 0.0
    %2892 = vmatpush1.msra.mxu0 0.0
    %2893 = vmatprep.subr.mxu0 0.0
    %2894 = vmatpush1.msra.mxu0 0.0
    %2895 = vmatprep.subr.mxu0 0.0
    %2896 = vmatpush1.msra.mxu0 0.0
    %2897 = vmatprep.subr.mxu0 0.0
    %2898 = vmatpush1.msra.mxu0 0.0
    %2899 = vmatprep.subr.mxu0 0.0
    %2900 = vmatpush1.msra.mxu0 0.0
    %2901 = vmatprep.subr.mxu0 0.0
    %2902 = vmatpush1.msra.mxu0 0.0
    %2903 = vmatprep.subr.mxu0 0.0
    %2904 = vmatpush1.msra.mxu0 0.0
    %2905 = vmatprep.subr.mxu0 0.0
    %2906 = vmatpush1.msra.mxu0 0.0
    %2907 = vmatprep.subr.mxu0 0.0
    %2908 = vmatpush1.msra.mxu0 0.0
    %2909 = vmatprep.subr.mxu0 0.0
    %2910 = vmatpush1.msra.mxu0 0.0
    %2911 = vmatprep.subr.mxu0 0.0
    %2912 = vmatpush1.msra.mxu0 0.0
    %2913 = vmatprep.subr.mxu0 0.0
    %2914 = vmatpush1.msra.mxu0 0.0
    %2915 = vmatprep.subr.mxu0 0.0
    %2916 = vmatpush1.msra.mxu0 0.0
    %2917 = vmatprep.subr.mxu0 0.0
    %2918 = vmatpush1.msra.mxu0 0.0
    %2919 = vmatprep.subr.mxu0 0.0
    %2920 = vmatpush1.msra.mxu0 0.0
    %2921 = vmatprep.mubr.f32.mxu0 0.0
    %2922 = vmatmul.mubr.f32.gmra.mrb[0].mxu0 %v2855
    %v2923 = vpop.f32.mrb[0].mxu0
    %v2924 = vadd.f32 %v2853, %v2923
    %v2925 = vpop.f32.mrb[0].mxu0
    %2926 = vdwg.mxu0
    %v2927 = vmul.f32 %v2924, 0.5
    %v2928 = vmul.f32 %v2924, 0.70710677
    %vm2929 = vcmp.ge.f32.partialorder %v2928, 0.0
    %v2930 = vsel %vm2929, 1.0, -1.0
    %v2931 = vand.u32 2147483647, %v2928
    %v2932 = vmul.f32 %v2931, 0.3275911
    %v2933 = vadd.f32 %v2932, 1.0
    %v2934 = vrcp.pop %v2933
    %v2935 = vmul.f32 1.0, %v2934
    %v2936 = vmul.f32 %v2935, 1.0614054
    %v2937 = vadd.f32 %v2936, -1.4531521
    %v2938 = vmul.f32 %v2937, %v2935
    %v2939 = vadd.f32 %v2938, 1.4214138
    %v2940 = vmul.f32 %v2939, %v2935
    %v2941 = vadd.f32 %v2940, -0.28449672
    %v2942 = vmul.f32 %v2941, %v2935
    %v2943 = vadd.f32 %v2942, 0.2548296
    %v2944 = vmul.f32 %v2943, %v2935
    %v2945 = vsub.f32 0.0, %v2931
    %v2946 = vmul.f32 %v2945, %v2931
    %v2947 = vmul.f32 %v2946, 1.442695
    %v2948 = vpow.pop %v2947
    %v2949 = vmul.f32 %v2944, %v2948
    %v2950 = vsub.f32 1.0, %v2949
    %v2951 = vmul.f32 %v2930, %v2950
    %v2952 = vadd.f32 %v2951, 1.0
    %v2953 = vmul.f32 %v2927, %v2952
    %v2954 = vld [vmem:[#allocation5 + $0x188] sm:$0xff]
    %v2955 = vld [vmem:[#allocation5 + $0x190] sm:$0xff]
    %v2956 = vld [vmem:[#allocation5 + $0x198] sm:$0xff]
    %v2957 = vld [vmem:[#allocation5 + $0x1a0] sm:$0xff]
    %v2958 = vld [vmem:[#allocation5 + $0x160] sm:$0x1]
    %v2959 = vlaneseq
    %v2960 = vshrl.u32 %v2959, 7
    %v2961 = vsub.s32 0, %v2960
    %v2962 = vrot.slane %v2958, %v2961
    %v2964 = vsel %vm51, %v2953, 0
    %2966 = vmatprep.subr.mxu0 0.0
    %2967 = vmatpush1.msra.mxu0 %v2954
    %2968 = vmatprep.subr.mxu0 0.0
    %2969 = vmatpush1.msra.mxu0 %v2955
    %2970 = vmatprep.subr.mxu0 0.0
    %2971 = vmatpush1.msra.mxu0 %v2956
    %2972 = vmatprep.subr.mxu0 0.0
    %2973 = vmatpush1.msra.mxu0 %v2957
    %2974 = vmatprep.subr.mxu0 0.0
    %2975 = vmatpush1.msra.mxu0 0.0
    %2976 = vmatprep.subr.mxu0 0.0
    %2977 = vmatpush1.msra.mxu0 0.0
    %2978 = vmatprep.subr.mxu0 0.0
    %2979 = vmatpush1.msra.mxu0 0.0
    %2980 = vmatprep.subr.mxu0 0.0
    %2981 = vmatpush1.msra.mxu0 0.0
    %2982 = vmatprep.subr.mxu0 0.0
    %2983 = vmatpush1.msra.mxu0 0.0
    %2984 = vmatprep.subr.mxu0 0.0
    %2985 = vmatpush1.msra.mxu0 0.0
    %2986 = vmatprep.subr.mxu0 0.0
    %2987 = vmatpush1.msra.mxu0 0.0
    %2988 = vmatprep.subr.mxu0 0.0
    %2989 = vmatpush1.msra.mxu0 0.0
    %2990 = vmatprep.subr.mxu0 0.0
    %2991 = vmatpush1.msra.mxu0 0.0
    %2992 = vmatprep.subr.mxu0 0.0
    %2993 = vmatpush1.msra.mxu0 0.0
    %2994 = vmatprep.subr.mxu0 0.0
    %2995 = vmatpush1.msra.mxu0 0.0
    %2996 = vmatprep.subr.mxu0 0.0
    %2997 = vmatpush1.msra.mxu0 0.0
    %2998 = vmatprep.subr.mxu0 0.0
    %2999 = vmatpush1.msra.mxu0 0.0
    %3000 = vmatprep.subr.mxu0 0.0
    %3001 = vmatpush1.msra.mxu0 0.0
    %3002 = vmatprep.subr.mxu0 0.0
    %3003 = vmatpush1.msra.mxu0 0.0
    %3004 = vmatprep.subr.mxu0 0.0
    %3005 = vmatpush1.msra.mxu0 0.0
    %3006 = vmatprep.subr.mxu0 0.0
    %3007 = vmatpush1.msra.mxu0 0.0
    %3008 = vmatprep.subr.mxu0 0.0
    %3009 = vmatpush1.msra.mxu0 0.0
    %3010 = vmatprep.subr.mxu0 0.0
    %3011 = vmatpush1.msra.mxu0 0.0
    %3012 = vmatprep.subr.mxu0 0.0
    %3013 = vmatpush1.msra.mxu0 0.0
    %3014 = vmatprep.subr.mxu0 0.0
    %3015 = vmatpush1.msra.mxu0 0.0
    %3016 = vmatprep.subr.mxu0 0.0
    %3017 = vmatpush1.msra.mxu0 0.0
    %3018 = vmatprep.subr.mxu0 0.0
    %3019 = vmatpush1.msra.mxu0 0.0
    %3020 = vmatprep.subr.mxu0 0.0
    %3021 = vmatpush1.msra.mxu0 0.0
    %3022 = vmatprep.subr.mxu0 0.0
    %3023 = vmatpush1.msra.mxu0 0.0
    %3024 = vmatprep.subr.mxu0 0.0
    %3025 = vmatpush1.msra.mxu0 0.0
    %3026 = vmatprep.subr.mxu0 0.0
    %3027 = vmatpush1.msra.mxu0 0.0
    %3028 = vmatprep.subr.mxu0 0.0
    %3029 = vmatpush1.msra.mxu0 0.0
    %3030 = vmatprep.mubr.f32.mxu0 0.0
    %3031 = vmatmul.mubr.f32.gmra.mrb[0].mxu0 %v2964
    %v3032 = vpop.f32.mrb[0].mxu0
    %v3033 = vadd.f32 %v2962, %v3032
    %v3034 = vpop.f32.mrb[0].mxu0
    %3035 = vdwg.mxu0
    %v3036 = vmul.f32 %v2408, 0.35355338
    %v3037 = vld [vmem:[#allocation5 + $0x8] sm:$0xff]
    %v3039 = vsel %vm276, %v3036, 0
    %v3042 = vsel %vm276, %v1227, 0
    %3044 = vmatprep.subr.mxu0 0.0
    %3045 = vmatpush1.xpose.msra.mxu0 %v3042
    %3046 = vmatprep.subr.mxu0 0.0
    %3047 = vmatpush1.xpose.msra.mxu0 0.0
    %3048 = vmatprep.subr.mxu0 0.0
    %3049 = vmatpush1.xpose.msra.mxu0 0.0
    %3050 = vmatprep.subr.mxu0 0.0
    %3051 = vmatpush1.xpose.msra.mxu0 0.0
    %3052 = vmatprep.subr.mxu0 0.0
    %3053 = vmatpush1.xpose.msra.mxu0 0.0
    %3054 = vmatprep.subr.mxu0 0.0
    %3055 = vmatpush1.xpose.msra.mxu0 0.0
    %3056 = vmatprep.subr.mxu0 0.0
    %3057 = vmatpush1.xpose.msra.mxu0 0.0
    %3058 = vmatprep.subr.mxu0 0.0
    %3059 = vmatpush1.xpose.msra.mxu0 0.0
    %3060 = vmatprep.subr.mxu0 0.0
    %3061 = vmatpush1.xpose.msra.mxu0 0.0
    %3062 = vmatprep.subr.mxu0 0.0
    %3063 = vmatpush1.xpose.msra.mxu0 0.0
    %3064 = vmatprep.subr.mxu0 0.0
    %3065 = vmatpush1.xpose.msra.mxu0 0.0
    %3066 = vmatprep.subr.mxu0 0.0
    %3067 = vmatpush1.xpose.msra.mxu0 0.0
    %3068 = vmatprep.subr.mxu0 0.0
    %3069 = vmatpush1.xpose.msra.mxu0 0.0
    %3070 = vmatprep.subr.mxu0 0.0
    %3071 = vmatpush1.xpose.msra.mxu0 0.0
    %3072 = vmatprep.subr.mxu0 0.0
    %3073 = vmatpush1.xpose.msra.mxu0 0.0
    %3074 = vmatprep.subr.mxu0 0.0
    %3075 = vmatpush1.xpose.msra.mxu0 0.0
    %3076 = vmatprep.subr.mxu0 0.0
    %3077 = vmatpush1.xpose.msra.mxu0 0.0
    %3078 = vmatprep.subr.mxu0 0.0
    %3079 = vmatpush1.xpose.msra.mxu0 0.0
    %3080 = vmatprep.subr.mxu0 0.0
    %3081 = vmatpush1.xpose.msra.mxu0 0.0
    %3082 = vmatprep.subr.mxu0 0.0
    %3083 = vmatpush1.xpose.msra.mxu0 0.0
    %3084 = vmatprep.subr.mxu0 0.0
    %3085 = vmatpush1.xpose.msra.mxu0 0.0
    %3086 = vmatprep.subr.mxu0 0.0
    %3087 = vmatpush1.xpose.msra.mxu0 0.0
    %3088 = vmatprep.subr.mxu0 0.0
    %3089 = vmatpush1.xpose.msra.mxu0 0.0
    %3090 = vmatprep.subr.mxu0 0.0
    %3091 = vmatpush1.xpose.msra.mxu0 0.0
    %3092 = vmatprep.subr.mxu0 0.0
    %3093 = vmatpush1.xpose.msra.mxu0 0.0
    %3094 = vmatprep.subr.mxu0 0.0
    %3095 = vmatpush1.xpose.msra.mxu0 0.0
    %3096 = vmatprep.subr.mxu0 0.0
    %3097 = vmatpush1.xpose.msra.mxu0 0.0
    %3098 = vmatprep.subr.mxu0 0.0
    %3099 = vmatpush1.xpose.msra.mxu0 0.0
    %3100 = vmatprep.subr.mxu0 0.0
    %3101 = vmatpush1.xpose.msra.mxu0 0.0
    %3102 = vmatprep.subr.mxu0 0.0
    %3103 = vmatpush1.xpose.msra.mxu0 0.0
    %3104 = vmatprep.subr.mxu0 0.0
    %3105 = vmatpush1.xpose.msra.mxu0 0.0
    %3106 = vmatprep.subr.mxu0 0.0
    %3107 = vmatpush1.xpose.msra.mxu0 0.0
    %3108 = vmatprep.mubr.f32.mxu0 0.0
    %3109 = vmatmul.mubr.f32.gmra.mrb[0].mxu0 %v3039
    %v3110 = vpop.f32.mrb[0].mxu0
    %v3111 = vadd.f32 %v3037, %v3110
    %v3112 = vpop.f32.mrb[0].mxu0
    %3113 = vdwg.mxu0
    %v3114 = vsel %vm276, %v3111, -inf
    %3115 = vmax.xlane.f32.xlu0 %v3114
    %v3116 = vpop.xlane.xlu0 %3115
    %v3117 = vsub.f32 %v3111, %v3116
    %v3118 = vmul.f32 %v3117, 1.442695
    %v3119 = vpow.pop %v3118
    %v3120 = vsel %vm276, %v3119, 0.0
    %3121 = vadd.xlane.f32.xlu0 %v3120
    %v3122 = vpop.xlane.xlu0 %3121
    %v3123 = vrcp.pop %v3122
    %v3124 = vmul.f32 %v3119, %v3123
    %v3126 = vsel %vm276, %v3124, 0
    %3128 = vmatprep.subr.mxu0 0.0
    %3129 = vmatpush1.msra.mxu0 %v1227
    %3130 = vmatprep.subr.mxu0 0.0
    %3131 = vmatpush1.msra.mxu0 0.0
    %3132 = vmatprep.subr.mxu0 0.0
    %3133 = vmatpush1.msra.mxu0 0.0
    %3134 = vmatprep.subr.mxu0 0.0
    %3135 = vmatpush1.msra.mxu0 0.0
    %3136 = vmatprep.subr.mxu0 0.0
    %3137 = vmatpush1.msra.mxu0 0.0
    %3138 = vmatprep.subr.mxu0 0.0
    %3139 = vmatpush1.msra.mxu0 0.0
    %3140 = vmatprep.subr.mxu0 0.0
    %3141 = vmatpush1.msra.mxu0 0.0
    %3142 = vmatprep.subr.mxu0 0.0
    %3143 = vmatpush1.msra.mxu0 0.0
    %3144 = vmatprep.subr.mxu0 0.0
    %3145 = vmatpush1.msra.mxu0 0.0
    %3146 = vmatprep.subr.mxu0 0.0
    %3147 = vmatpush1.msra.mxu0 0.0
    %3148 = vmatprep.subr.mxu0 0.0
    %3149 = vmatpush1.msra.mxu0 0.0
    %3150 = vmatprep.subr.mxu0 0.0
    %3151 = vmatpush1.msra.mxu0 0.0
    %3152 = vmatprep.subr.mxu0 0.0
    %3153 = vmatpush1.msra.mxu0 0.0
    %3154 = vmatprep.subr.mxu0 0.0
    %3155 = vmatpush1.msra.mxu0 0.0
    %3156 = vmatprep.subr.mxu0 0.0
    %3157 = vmatpush1.msra.mxu0 0.0
    %3158 = vmatprep.subr.mxu0 0.0
    %3159 = vmatpush1.msra.mxu0 0.0
    %3160 = vmatprep.subr.mxu0 0.0
    %3161 = vmatpush1.msra.mxu0 0.0
    %3162 = vmatprep.subr.mxu0 0.0
    %3163 = vmatpush1.msra.mxu0 0.0
    %3164 = vmatprep.subr.mxu0 0.0
    %3165 = vmatpush1.msra.mxu0 0.0
    %3166 = vmatprep.subr.mxu0 0.0
    %3167 = vmatpush1.msra.mxu0 0.0
    %3168 = vmatprep.subr.mxu0 0.0
    %3169 = vmatpush1.msra.mxu0 0.0
    %3170 = vmatprep.subr.mxu0 0.0
    %3171 = vmatpush1.msra.mxu0 0.0
    %3172 = vmatprep.subr.mxu0 0.0
    %3173 = vmatpush1.msra.mxu0 0.0
    %3174 = vmatprep.subr.mxu0 0.0
    %3175 = vmatpush1.msra.mxu0 0.0
    %3176 = vmatprep.subr.mxu0 0.0
    %3177 = vmatpush1.msra.mxu0 0.0
    %3178 = vmatprep.subr.mxu0 0.0
    %3179 = vmatpush1.msra.mxu0 0.0
    %3180 = vmatprep.subr.mxu0 0.0
    %3181 = vmatpush1.msra.mxu0 0.0
    %3182 = vmatprep.subr.mxu0 0.0
    %3183 = vmatpush1.msra.mxu0 0.0
    %3184 = vmatprep.subr.mxu0 0.0
    %3185 = vmatpush1.msra.mxu0 0.0
    %3186 = vmatprep.subr.mxu0 0.0
    %3187 = vmatpush1.msra.mxu0 0.0
    %3188 = vmatprep.subr.mxu0 0.0
    %3189 = vmatpush1.msra.mxu0 0.0
    %3190 = vmatprep.subr.mxu0 0.0
    %3191 = vmatpush1.msra.mxu0 0.0
    %3192 = vmatprep.mubr.f32.mxu0 0.0
    %3193 = vmatmul.mubr.f32.gmra.mrb[0].mxu0 %v3126
    %v3194 = vpop.f32.mrb[0].mxu0
    %v3195 = vadd.f32 0.0, %v3194
    %v3196 = vpop.f32.mrb[0].mxu0
    %3197 = vdwg.mxu0
    %3198 = vrot.lane.b32.xlu0 %v3036, 120
    %v3199 = vpop.permute.xlu0 %3198
    %3200 = vrot.lane.b32.xlu0 %v1227, 120
    %v3201 = vpop.permute.xlu0 %3200
    %v3202 = vsel %vm276, %v3199, 0
    %v3204 = vsel %vm276, %v3201, 0
    %3206 = vmatprep.subr.mxu0 0.0
    %3207 = vmatpush1.xpose.msra.mxu0 %v3204
    %3208 = vmatprep.subr.mxu0 0.0
    %3209 = vmatpush1.xpose.msra.mxu0 0.0
    %3210 = vmatprep.subr.mxu0 0.0
    %3211 = vmatpush1.xpose.msra.mxu0 0.0
    %3212 = vmatprep.subr.mxu0 0.0
    %3213 = vmatpush1.xpose.msra.mxu0 0.0
    %3214 = vmatprep.subr.mxu0 0.0
    %3215 = vmatpush1.xpose.msra.mxu0 0.0
    %3216 = vmatprep.subr.mxu0 0.0
    %3217 = vmatpush1.xpose.msra.mxu0 0.0
    %3218 = vmatprep.subr.mxu0 0.0
    %3219 = vmatpush1.xpose.msra.mxu0 0.0
    %3220 = vmatprep.subr.mxu0 0.0
    %3221 = vmatpush1.xpose.msra.mxu0 0.0
    %3222 = vmatprep.subr.mxu0 0.0
    %3223 = vmatpush1.xpose.msra.mxu0 0.0
    %3224 = vmatprep.subr.mxu0 0.0
    %3225 = vmatpush1.xpose.msra.mxu0 0.0
    %3226 = vmatprep.subr.mxu0 0.0
    %3227 = vmatpush1.xpose.msra.mxu0 0.0
    %3228 = vmatprep.subr.mxu0 0.0
    %3229 = vmatpush1.xpose.msra.mxu0 0.0
    %3230 = vmatprep.subr.mxu0 0.0
    %3231 = vmatpush1.xpose.msra.mxu0 0.0
    %3232 = vmatprep.subr.mxu0 0.0
    %3233 = vmatpush1.xpose.msra.mxu0 0.0
    %3234 = vmatprep.subr.mxu0 0.0
    %3235 = vmatpush1.xpose.msra.mxu0 0.0
    %3236 = vmatprep.subr.mxu0 0.0
    %3237 = vmatpush1.xpose.msra.mxu0 0.0
    %3238 = vmatprep.subr.mxu0 0.0
    %3239 = vmatpush1.xpose.msra.mxu0 0.0
    %3240 = vmatprep.subr.mxu0 0.0
    %3241 = vmatpush1.xpose.msra.mxu0 0.0
    %3242 = vmatprep.subr.mxu0 0.0
    %3243 = vmatpush1.xpose.msra.mxu0 0.0
    %3244 = vmatprep.subr.mxu0 0.0
    %3245 = vmatpush1.xpose.msra.mxu0 0.0
    %3246 = vmatprep.subr.mxu0 0.0
    %3247 = vmatpush1.xpose.msra.mxu0 0.0
    %3248 = vmatprep.subr.mxu0 0.0
    %3249 = vmatpush1.xpose.msra.mxu0 0.0
    %3250 = vmatprep.subr.mxu0 0.0
    %3251 = vmatpush1.xpose.msra.mxu0 0.0
    %3252 = vmatprep.subr.mxu0 0.0
    %3253 = vmatpush1.xpose.msra.mxu0 0.0
    %3254 = vmatprep.subr.mxu0 0.0
    %3255 = vmatpush1.xpose.msra.mxu0 0.0
    %3256 = vmatprep.subr.mxu0 0.0
    %3257 = vmatpush1.xpose.msra.mxu0 0.0
    %3258 = vmatprep.subr.mxu0 0.0
    %3259 = vmatpush1.xpose.msra.mxu0 0.0
    %3260 = vmatprep.subr.mxu0 0.0
    %3261 = vmatpush1.xpose.msra.mxu0 0.0
    %3262 = vmatprep.subr.mxu0 0.0
    %3263 = vmatpush1.xpose.msra.mxu0 0.0
    %3264 = vmatprep.subr.mxu0 0.0
    %3265 = vmatpush1.xpose.msra.mxu0 0.0
    %3266 = vmatprep.subr.mxu0 0.0
    %3267 = vmatpush1.xpose.msra.mxu0 0.0
    %3268 = vmatprep.subr.mxu0 0.0
    %3269 = vmatpush1.xpose.msra.mxu0 0.0
    %3270 = vmatprep.mubr.f32.mxu0 0.0
    %3271 = vmatmul.mubr.f32.gmra.mrb[0].mxu0 %v3202
    %v3272 = vpop.f32.mrb[0].mxu0
    %v3273 = vadd.f32 %v3037, %v3272
    %v3274 = vpop.f32.mrb[0].mxu0
    %3275 = vdwg.mxu0
    %v3276 = vsel %vm276, %v3273, -inf
    %3277 = vmax.xlane.f32.xlu0 %v3276
    %v3278 = vpop.xlane.xlu0 %3277
    %v3279 = vsub.f32 %v3273, %v3278
    %v3280 = vmul.f32 %v3279, 1.442695
    %v3281 = vpow.pop %v3280
    %v3282 = vsel %vm276, %v3281, 0.0
    %3283 = vadd.xlane.f32.xlu0 %v3282
    %v3284 = vpop.xlane.xlu0 %3283
    %v3285 = vrcp.pop %v3284
    %v3286 = vmul.f32 %v3281, %v3285
    %v3289 = vsel %vm276, %v3286, 0
    %3291 = vmatprep.subr.mxu0 0.0
    %3292 = vmatpush1.msra.mxu0 %v3201
    %3293 = vmatprep.subr.mxu0 0.0
    %3294 = vmatpush1.msra.mxu0 0.0
    %3295 = vmatprep.subr.mxu0 0.0
    %3296 = vmatpush1.msra.mxu0 0.0
    %3297 = vmatprep.subr.mxu0 0.0
    %3298 = vmatpush1.msra.mxu0 0.0
    %3299 = vmatprep.subr.mxu0 0.0
    %3300 = vmatpush1.msra.mxu0 0.0
    %3301 = vmatprep.subr.mxu0 0.0
    %3302 = vmatpush1.msra.mxu0 0.0
    %3303 = vmatprep.subr.mxu0 0.0
    %3304 = vmatpush1.msra.mxu0 0.0
    %3305 = vmatprep.subr.mxu0 0.0
    %3306 = vmatpush1.msra.mxu0 0.0
    %3307 = vmatprep.subr.mxu0 0.0
    %3308 = vmatpush1.msra.mxu0 0.0
    %3309 = vmatprep.subr.mxu0 0.0
    %3310 = vmatpush1.msra.mxu0 0.0
    %3311 = vmatprep.subr.mxu0 0.0
    %3312 = vmatpush1.msra.mxu0 0.0
    %3313 = vmatprep.subr.mxu0 0.0
    %3314 = vmatpush1.msra.mxu0 0.0
    %3315 = vmatprep.subr.mxu0 0.0
    %3316 = vmatpush1.msra.mxu0 0.0
    %3317 = vmatprep.subr.mxu0 0.0
    %3318 = vmatpush1.msra.mxu0 0.0
    %3319 = vmatprep.subr.mxu0 0.0
    %3320 = vmatpush1.msra.mxu0 0.0
    %3321 = vmatprep.subr.mxu0 0.0
    %3322 = vmatpush1.msra.mxu0 0.0
    %3323 = vmatprep.subr.mxu0 0.0
    %3324 = vmatpush1.msra.mxu0 0.0
    %3325 = vmatprep.subr.mxu0 0.0
    %3326 = vmatpush1.msra.mxu0 0.0
    %3327 = vmatprep.subr.mxu0 0.0
    %3328 = vmatpush1.msra.mxu0 0.0
    %3329 = vmatprep.subr.mxu0 0.0
    %3330 = vmatpush1.msra.mxu0 0.0
    %3331 = vmatprep.subr.mxu0 0.0
    %3332 = vmatpush1.msra.mxu0 0.0
    %3333 = vmatprep.subr.mxu0 0.0
    %3334 = vmatpush1.msra.mxu0 0.0
    %3335 = vmatprep.subr.mxu0 0.0
    %3336 = vmatpush1.msra.mxu0 0.0
    %3337 = vmatprep.subr.mxu0 0.0
    %3338 = vmatpush1.msra.mxu0 0.0
    %3339 = vmatprep.subr.mxu0 0.0
    %3340 = vmatpush1.msra.mxu0 0.0
    %3341 = vmatprep.subr.mxu0 0.0
    %3342 = vmatpush1.msra.mxu0 0.0
    %3343 = vmatprep.subr.mxu0 0.0
    %3344 = vmatpush1.msra.mxu0 0.0
    %3345 = vmatprep.subr.mxu0 0.0
    %3346 = vmatpush1.msra.mxu0 0.0
    %3347 = vmatprep.subr.mxu0 0.0
    %3348 = vmatpush1.msra.mxu0 0.0
    %3349 = vmatprep.subr.mxu0 0.0
    %3350 = vmatpush1.msra.mxu0 0.0
    %3351 = vmatprep.subr.mxu0 0.0
    %3352 = vmatpush1.msra.mxu0 0.0
    %3353 = vmatprep.subr.mxu0 0.0
    %3354 = vmatpush1.msra.mxu0 0.0
    %3355 = vmatprep.mubr.f32.mxu0 0.0
    %3356 = vmatmul.mubr.f32.gmra.mrb[0].mxu0 %v3289
    %v3357 = vpop.f32.mrb[0].mxu0
    %v3358 = vadd.f32 0.0, %v3357
    %v3359 = vpop.f32.mrb[0].mxu0
    %3360 = vdwg.mxu0
    %3362 = vrot.lane.b32.xlu0 %v3358, 8
    %v3363 = vpop.permute.xlu0 %3362
    %v3365 = vsel %vm276, %v3195, %v3363
    %v3366 = vld [vmem:[#allocation5 + $0x2a0] sm:$0xff]
    %v3367 = vld [vmem:[#allocation5 + $0x2a8] sm:$0xff]
    %v3368 = vld [vmem:[#allocation5 + $0x298] sm:$0x1]
    %v3369 = vlaneseq
    %v3370 = vshrl.u32 %v3369, 7
    %v3371 = vsub.s32 0, %v3370
    %v3372 = vrot.slane %v3368, %v3371
    %v3374 = vsel %vm198, %v3365, 0
    %3376 = vmatprep.subr.mxu0 0.0
    %3377 = vmatpush1.msra.mxu0 %v3366
    %3378 = vmatprep.subr.mxu0 0.0
    %3379 = vmatpush1.msra.mxu0 %v3367
    %3380 = vmatprep.subr.mxu0 0.0
    %3381 = vmatpush1.msra.mxu0 0.0
    %3382 = vmatprep.subr.mxu0 0.0
    %3383 = vmatpush1.msra.mxu0 0.0
    %3384 = vmatprep.subr.mxu0 0.0
    %3385 = vmatpush1.msra.mxu0 0.0
    %3386 = vmatprep.subr.mxu0 0.0
    %3387 = vmatpush1.msra.mxu0 0.0
    %3388 = vmatprep.subr.mxu0 0.0
    %3389 = vmatpush1.msra.mxu0 0.0
    %3390 = vmatprep.subr.mxu0 0.0
    %3391 = vmatpush1.msra.mxu0 0.0
    %3392 = vmatprep.subr.mxu0 0.0
    %3393 = vmatpush1.msra.mxu0 0.0
    %3394 = vmatprep.subr.mxu0 0.0
    %3395 = vmatpush1.msra.mxu0 0.0
    %3396 = vmatprep.subr.mxu0 0.0
    %3397 = vmatpush1.msra.mxu0 0.0
    %3398 = vmatprep.subr.mxu0 0.0
    %3399 = vmatpush1.msra.mxu0 0.0
    %3400 = vmatprep.subr.mxu0 0.0
    %3401 = vmatpush1.msra.mxu0 0.0
    %3402 = vmatprep.subr.mxu0 0.0
    %3403 = vmatpush1.msra.mxu0 0.0
    %3404 = vmatprep.subr.mxu0 0.0
    %3405 = vmatpush1.msra.mxu0 0.0
    %3406 = vmatprep.subr.mxu0 0.0
    %3407 = vmatpush1.msra.mxu0 0.0
    %3408 = vmatprep.subr.mxu0 0.0
    %3409 = vmatpush1.msra.mxu0 0.0
    %3410 = vmatprep.subr.mxu0 0.0
    %3411 = vmatpush1.msra.mxu0 0.0
    %3412 = vmatprep.subr.mxu0 0.0
    %3413 = vmatpush1.msra.mxu0 0.0
    %3414 = vmatprep.subr.mxu0 0.0
    %3415 = vmatpush1.msra.mxu0 0.0
    %3416 = vmatprep.subr.mxu0 0.0
    %3417 = vmatpush1.msra.mxu0 0.0
    %3418 = vmatprep.subr.mxu0 0.0
    %3419 = vmatpush1.msra.mxu0 0.0
    %3420 = vmatprep.subr.mxu0 0.0
    %3421 = vmatpush1.msra.mxu0 0.0
    %3422 = vmatprep.subr.mxu0 0.0
    %3423 = vmatpush1.msra.mxu0 0.0
    %3424 = vmatprep.subr.mxu0 0.0
    %3425 = vmatpush1.msra.mxu0 0.0
    %3426 = vmatprep.subr.mxu0 0.0
    %3427 = vmatpush1.msra.mxu0 0.0
    %3428 = vmatprep.subr.mxu0 0.0
    %3429 = vmatpush1.msra.mxu0 0.0
    %3430 = vmatprep.subr.mxu0 0.0
    %3431 = vmatpush1.msra.mxu0 0.0
    %3432 = vmatprep.subr.mxu0 0.0
    %3433 = vmatpush1.msra.mxu0 0.0
    %3434 = vmatprep.subr.mxu0 0.0
    %3435 = vmatpush1.msra.mxu0 0.0
    %3436 = vmatprep.subr.mxu0 0.0
    %3437 = vmatpush1.msra.mxu0 0.0
    %3438 = vmatprep.subr.mxu0 0.0
    %3439 = vmatpush1.msra.mxu0 0.0
    %3440 = vmatprep.mubr.f32.mxu0 0.0
    %3441 = vmatmul.mubr.f32.gmra.mrb[0].mxu0 %v3374
    %v3442 = vpop.f32.mrb[0].mxu0
    %v3443 = vadd.f32 %v3372, %v3442
    %v3444 = vpop.f32.mrb[0].mxu0
    %3445 = vdwg.mxu0
    %v3446 = vadd.f32 %v2408, %v3443
    %v3447 = vsel %vm198, %v3446, 0.0
    %3448 = vadd.xlane.f32.xlu0 %v3447
    %v3449 = vpop.xlane.xlu0 %3448
    %v3450 = vmul.f32 %v3449, %v938
    %v3451 = vsub.f32 %v3446, %v3450
    %v3452 = vmul.f32 %v3451, %v3451
    %v3453 = vsel %vm198, %v3452, 0.0
    %3454 = vadd.xlane.f32.xlu0 %v3453
    %v3455 = vpop.xlane.xlu0 %3454
    %v3456 = vmul.f32 %v3455, %v938
    %v3457 = vadd.f32 %v3456, 1e-05
    %v3458 = vrsqrt.pop %v3457
    %v3459 = vmul.f32 %v3451, %v3458
    %v3460 = vld [vmem:[#allocation5 + $0x260] sm:$0x1]
    %v3461 = vlaneseq
    %v3462 = vshrl.u32 %v3461, 7
    %v3463 = vsub.s32 0, %v3462
    %v3464 = vrot.slane %v3460, %v3463
    %v3465 = vmul.f32 %v3459, %v3464
    %v3466 = vld [vmem:[#allocation5 + $0x258] sm:$0x1]
    %v3467 = vlaneseq
    %v3468 = vshrl.u32 %v3467, 7
    %v3469 = vsub.s32 0, %v3468
    %v3470 = vrot.slane %v3466, %v3469
    %v3471 = vadd.f32 %v3465, %v3470
    %v3472 = vld [vmem:[#allocation5 + $0x268] sm:$0xff]
    %v3473 = vld [vmem:[#allocation5 + $0x270] sm:$0xff]
    %v3474 = vld [vmem:[#allocation5 + $0x248] sm:$0x1]
    %v3475 = vlaneseq
    %v3476 = vshrl.u32 %v3475, 7
    %v3477 = vsub.s32 0, %v3476
    %v3478 = vrot.slane %v3474, %v3477
    %v3480 = vsel %vm198, %v3471, 0
    %3482 = vmatprep.subr.mxu0 0.0
    %3483 = vmatpush1.msra.mxu0 %v3472
    %3484 = vmatprep.subr.mxu0 0.0
    %3485 = vmatpush1.msra.mxu0 %v3473
    %3486 = vmatprep.subr.mxu0 0.0
    %3487 = vmatpush1.msra.mxu0 0.0
    %3488 = vmatprep.subr.mxu0 0.0
    %3489 = vmatpush1.msra.mxu0 0.0
    %3490 = vmatprep.subr.mxu0 0.0
    %3491 = vmatpush1.msra.mxu0 0.0
    %3492 = vmatprep.subr.mxu0 0.0
    %3493 = vmatpush1.msra.mxu0 0.0
    %3494 = vmatprep.subr.mxu0 0.0
    %3495 = vmatpush1.msra.mxu0 0.0
    %3496 = vmatprep.subr.mxu0 0.0
    %3497 = vmatpush1.msra.mxu0 0.0
    %3498 = vmatprep.subr.mxu0 0.0
    %3499 = vmatpush1.msra.mxu0 0.0
    %3500 = vmatprep.subr.mxu0 0.0
    %3501 = vmatpush1.msra.mxu0 0.0
    %3502 = vmatprep.subr.mxu0 0.0
    %3503 = vmatpush1.msra.mxu0 0.0
    %3504 = vmatprep.subr.mxu0 0.0
    %3505 = vmatpush1.msra.mxu0 0.0
    %3506 = vmatprep.subr.mxu0 0.0
    %3507 = vmatpush1.msra.mxu0 0.0
    %3508 = vmatprep.subr.mxu0 0.0
    %3509 = vmatpush1.msra.mxu0 0.0
    %3510 = vmatprep.subr.mxu0 0.0
    %3511 = vmatpush1.msra.mxu0 0.0
    %3512 = vmatprep.subr.mxu0 0.0
    %3513 = vmatpush1.msra.mxu0 0.0
    %3514 = vmatprep.subr.mxu0 0.0
    %3515 = vmatpush1.msra.mxu0 0.0
    %3516 = vmatprep.subr.mxu0 0.0
    %3517 = vmatpush1.msra.mxu0 0.0
    %3518 = vmatprep.subr.mxu0 0.0
    %3519 = vmatpush1.msra.mxu0 0.0
    %3520 = vmatprep.subr.mxu0 0.0
    %3521 = vmatpush1.msra.mxu0 0.0
    %3522 = vmatprep.subr.mxu0 0.0
    %3523 = vmatpush1.msra.mxu0 0.0
    %3524 = vmatprep.subr.mxu0 0.0
    %3525 = vmatpush1.msra.mxu0 0.0
    %3526 = vmatprep.subr.mxu0 0.0
    %3527 = vmatpush1.msra.mxu0 0.0
    %3528 = vmatprep.subr.mxu0 0.0
    %3529 = vmatpush1.msra.mxu0 0.0
    %3530 = vmatprep.subr.mxu0 0.0
    %3531 = vmatpush1.msra.mxu0 0.0
    %3532 = vmatprep.subr.mxu0 0.0
    %3533 = vmatpush1.msra.mxu0 0.0
    %3534 = vmatprep.subr.mxu0 0.0
    %3535 = vmatpush1.msra.mxu0 0.0
    %3536 = vmatprep.subr.mxu0 0.0
    %3537 = vmatpush1.msra.mxu0 0.0
    %3538 = vmatprep.subr.mxu0 0.0
    %3539 = vmatpush1.msra.mxu0 0.0
    %3540 = vmatprep.subr.mxu0 0.0
    %3541 = vmatpush1.msra.mxu0 0.0
    %3542 = vmatprep.subr.mxu0 0.0
    %3543 = vmatpush1.msra.mxu0 0.0
    %3544 = vmatprep.subr.mxu0 0.0
    %3545 = vmatpush1.msra.mxu0 0.0
    %3546 = vmatprep.mubr.f32.mxu0 0.0
    %3547 = vmatmul.mubr.f32.gmra.mrb[0].mxu0 %v3480
    %v3548 = vpop.f32.mrb[0].mxu0
    %v3549 = vadd.f32 %v3478, %v3548
    %v3550 = vpop.f32.mrb[0].mxu0
    %3551 = vdwg.mxu0
    %v3552 = vmul.f32 %v3549, 0.5
    %v3553 = vmul.f32 %v3549, 0.70710677
    %vm3554 = vcmp.ge.f32.partialorder %v3553, 0.0
    %v3555 = vsel %vm3554, 1.0, -1.0
    %v3556 = vand.u32 2147483647, %v3553
    %v3557 = vmul.f32 %v3556, 0.3275911
    %v3558 = vadd.f32 %v3557, 1.0
    %v3559 = vrcp.pop %v3558
    %v3560 = vmul.f32 1.0, %v3559
    %v3561 = vmul.f32 %v3560, 1.0614054
    %v3562 = vadd.f32 %v3561, -1.4531521
    %v3563 = vmul.f32 %v3562, %v3560
    %v3564 = vadd.f32 %v3563, 1.4214138
    %v3565 = vmul.f32 %v3564, %v3560
    %v3566 = vadd.f32 %v3565, -0.28449672
    %v3567 = vmul.f32 %v3566, %v3560
    %v3568 = vadd.f32 %v3567, 0.2548296
    %v3569 = vmul.f32 %v3568, %v3560
    %v3570 = vsub.f32 0.0, %v3556
    %v3571 = vmul.f32 %v3570, %v3556
    %v3572 = vmul.f32 %v3571, 1.442695
    %v3573 = vpow.pop %v3572
    %v3574 = vmul.f32 %v3569, %v3573
    %v3575 = vsub.f32 1.0, %v3574
    %v3576 = vmul.f32 %v3555, %v3575
    %v3577 = vadd.f32 %v3576, 1.0
    %v3578 = vmul.f32 %v3552, %v3577
    %v3579 = vld [vmem:[#allocation5 + $0x278] sm:$0xff]
    %v3580 = vld [vmem:[#allocation5 + $0x280] sm:$0xff]
    %v3581 = vld [vmem:[#allocation5 + $0x288] sm:$0xff]
    %v3582 = vld [vmem:[#allocation5 + $0x290] sm:$0xff]
    %v3583 = vld [vmem:[#allocation5 + $0x250] sm:$0x1]
    %v3584 = vlaneseq
    %v3585 = vshrl.u32 %v3584, 7
    %v3586 = vsub.s32 0, %v3585
    %v3587 = vrot.slane %v3583, %v3586
    %v3589 = vsel %vm51, %v3578, 0
    %3591 = vmatprep.subr.mxu0 0.0
    %3592 = vmatpush1.msra.mxu0 %v3579
    %3593 = vmatprep.subr.mxu0 0.0
    %3594 = vmatpush1.msra.mxu0 %v3580
    %3595 = vmatprep.subr.mxu0 0.0
    %3596 = vmatpush1.msra.mxu0 %v3581
    %3597 = vmatprep.subr.mxu0 0.0
    %3598 = vmatpush1.msra.mxu0 %v3582
    %3599 = vmatprep.subr.mxu0 0.0
    %3600 = vmatpush1.msra.mxu0 0.0
    %3601 = vmatprep.subr.mxu0 0.0
    %3602 = vmatpush1.msra.mxu0 0.0
    %3603 = vmatprep.subr.mxu0 0.0
    %3604 = vmatpush1.msra.mxu0 0.0
    %3605 = vmatprep.subr.mxu0 0.0
    %3606 = vmatpush1.msra.mxu0 0.0
    %3607 = vmatprep.subr.mxu0 0.0
    %3608 = vmatpush1.msra.mxu0 0.0
    %3609 = vmatprep.subr.mxu0 0.0
    %3610 = vmatpush1.msra.mxu0 0.0
    %3611 = vmatprep.subr.mxu0 0.0
    %3612 = vmatpush1.msra.mxu0 0.0
    %3613 = vmatprep.subr.mxu0 0.0
    %3614 = vmatpush1.msra.mxu0 0.0
    %3615 = vmatprep.subr.mxu0 0.0
    %3616 = vmatpush1.msra.mxu0 0.0
    %3617 = vmatprep.subr.mxu0 0.0
    %3618 = vmatpush1.msra.mxu0 0.0
    %3619 = vmatprep.subr.mxu0 0.0
    %3620 = vmatpush1.msra.mxu0 0.0
    %3621 = vmatprep.subr.mxu0 0.0
    %3622 = vmatpush1.msra.mxu0 0.0
    %3623 = vmatprep.subr.mxu0 0.0
    %3624 = vmatpush1.msra.mxu0 0.0
    %3625 = vmatprep.subr.mxu0 0.0
    %3626 = vmatpush1.msra.mxu0 0.0
    %3627 = vmatprep.subr.mxu0 0.0
    %3628 = vmatpush1.msra.mxu0 0.0
    %3629 = vmatprep.subr.mxu0 0.0
    %3630 = vmatpush1.msra.mxu0 0.0
    %3631 = vmatprep.subr.mxu0 0.0
    %3632 = vmatpush1.msra.mxu0 0.0
    %3633 = vmatprep.subr.mxu0 0.0
    %3634 = vmatpush1.msra.mxu0 0.0
    %3635 = vmatprep.subr.mxu0 0.0
    %3636 = vmatpush1.msra.mxu0 0.0
    %3637 = vmatprep.subr.mxu0 0.0
    %3638 = vmatpush1.msra.mxu0 0.0
    %3639 = vmatprep.subr.mxu0 0.0
    %3640 = vmatpush1.msra.mxu0 0.0
    %3641 = vmatprep.subr.mxu0 0.0
    %3642 = vmatpush1.msra.mxu0 0.0
    %3643 = vmatprep.subr.mxu0 0.0
    %3644 = vmatpush1.msra.mxu0 0.0
    %3645 = vmatprep.subr.mxu0 0.0
    %3646 = vmatpush1.msra.mxu0 0.0
    %3647 = vmatprep.subr.mxu0 0.0
    %3648 = vmatpush1.msra.mxu0 0.0
    %3649 = vmatprep.subr.mxu0 0.0
    %3650 = vmatpush1.msra.mxu0 0.0
    %3651 = vmatprep.subr.mxu0 0.0
    %3652 = vmatpush1.msra.mxu0 0.0
    %3653 = vmatprep.subr.mxu0 0.0
    %3654 = vmatpush1.msra.mxu0 0.0
    %3655 = vmatprep.mubr.f32.mxu0 0.0
    %3656 = vmatmul.mubr.f32.gmra.mrb[0].mxu0 %v3589
    %v3657 = vpop.f32.mrb[0].mxu0
    %v3658 = vadd.f32 %v3587, %v3657
    %v3659 = vpop.f32.mrb[0].mxu0
    %3660 = vdwg.mxu0
    %v3661 = vld [vmem:[#allocation5 + $0x20] sm:$0xff]
    %v3662 = vld [vmem:[#allocation5 + $0x28] sm:$0xff]
    %v3663 = vld [vmem:[#allocation5 + $0x30] sm:$0xff]
    %v3664 = vld [vmem:[#allocation5 + $0x38] sm:$0xff]
    %v3666 = vsel %vm198, %v3033, 0
    %3668 = vmatprep.subr.mxu0 0.0
    %3669 = vmatpush1.msra.mxu0 %v3661
    %3670 = vmatprep.subr.mxu0 0.0
    %3671 = vmatpush1.msra.mxu0 %v3662
    %3672 = vmatprep.subr.mxu0 0.0
    %3673 = vmatpush1.msra.mxu0 0.0
    %3674 = vmatprep.subr.mxu0 0.0
    %3675 = vmatpush1.msra.mxu0 0.0
    %3676 = vmatprep.subr.mxu0 0.0
    %3677 = vmatpush1.msra.mxu0 0.0
    %3678 = vmatprep.subr.mxu0 0.0
    %3679 = vmatpush1.msra.mxu0 0.0
    %3680 = vmatprep.subr.mxu0 0.0
    %3681 = vmatpush1.msra.mxu0 0.0
    %3682 = vmatprep.subr.mxu0 0.0
    %3683 = vmatpush1.msra.mxu0 0.0
    %3684 = vmatprep.subr.mxu0 0.0
    %3685 = vmatpush1.msra.mxu0 0.0
    %3686 = vmatprep.subr.mxu0 0.0
    %3687 = vmatpush1.msra.mxu0 0.0
    %3688 = vmatprep.subr.mxu0 0.0
    %3689 = vmatpush1.msra.mxu0 0.0
    %3690 = vmatprep.subr.mxu0 0.0
    %3691 = vmatpush1.msra.mxu0 0.0
    %3692 = vmatprep.subr.mxu0 0.0
    %3693 = vmatpush1.msra.mxu0 0.0
    %3694 = vmatprep.subr.mxu0 0.0
    %3695 = vmatpush1.msra.mxu0 0.0
    %3696 = vmatprep.subr.mxu0 0.0
    %3697 = vmatpush1.msra.mxu0 0.0
    %3698 = vmatprep.subr.mxu0 0.0
    %3699 = vmatpush1.msra.mxu0 0.0
    %3700 = vmatprep.subr.mxu0 0.0
    %3701 = vmatpush1.msra.mxu0 0.0
    %3702 = vmatprep.subr.mxu0 0.0
    %3703 = vmatpush1.msra.mxu0 0.0
    %3704 = vmatprep.subr.mxu0 0.0
    %3705 = vmatpush1.msra.mxu0 0.0
    %3706 = vmatprep.subr.mxu0 0.0
    %3707 = vmatpush1.msra.mxu0 0.0
    %3708 = vmatprep.subr.mxu0 0.0
    %3709 = vmatpush1.msra.mxu0 0.0
    %3710 = vmatprep.subr.mxu0 0.0
    %3711 = vmatpush1.msra.mxu0 0.0
    %3712 = vmatprep.subr.mxu0 0.0
    %3713 = vmatpush1.msra.mxu0 0.0
    %3714 = vmatprep.subr.mxu0 0.0
    %3715 = vmatpush1.msra.mxu0 0.0
    %3716 = vmatprep.subr.mxu0 0.0
    %3717 = vmatpush1.msra.mxu0 0.0
    %3718 = vmatprep.subr.mxu0 0.0
    %3719 = vmatpush1.msra.mxu0 0.0
    %3720 = vmatprep.subr.mxu0 0.0
    %3721 = vmatpush1.msra.mxu0 0.0
    %3722 = vmatprep.subr.mxu0 0.0
    %3723 = vmatpush1.msra.mxu0 0.0
    %3724 = vmatprep.subr.mxu0 0.0
    %3725 = vmatpush1.msra.mxu0 0.0
    %3726 = vmatprep.subr.mxu0 0.0
    %3727 = vmatpush1.msra.mxu0 0.0
    %3728 = vmatprep.subr.mxu0 0.0
    %3729 = vmatpush1.msra.mxu0 0.0
    %3730 = vmatprep.subr.mxu0 0.0
    %3731 = vmatpush1.msra.mxu0 0.0
    %3732 = vmatprep.mubr.f32.mxu0 0.0
    %3733 = vmatmul.mubr.f32.gmra.mrb[0].mxu0 %v3666
    %v3734 = vpop.f32.mrb[0].mxu0
    %v3735 = vadd.f32 0.0, %v3734
    %v3736 = vpop.f32.mrb[0].mxu0
    %3737 = vdwg.mxu0
    %3738 = vmatprep.subr.mxu0 0.0
    %3739 = vmatpush1.msra.mxu0 %v3663
    %3740 = vmatprep.subr.mxu0 0.0
    %3741 = vmatpush1.msra.mxu0 %v3664
    %3742 = vmatprep.subr.mxu0 0.0
    %3743 = vmatpush1.msra.mxu0 0.0
    %3744 = vmatprep.subr.mxu0 0.0
    %3745 = vmatpush1.msra.mxu0 0.0
    %3746 = vmatprep.subr.mxu0 0.0
    %3747 = vmatpush1.msra.mxu0 0.0
    %3748 = vmatprep.subr.mxu0 0.0
    %3749 = vmatpush1.msra.mxu0 0.0
    %3750 = vmatprep.subr.mxu0 0.0
    %3751 = vmatpush1.msra.mxu0 0.0
    %3752 = vmatprep.subr.mxu0 0.0
    %3753 = vmatpush1.msra.mxu0 0.0
    %3754 = vmatprep.subr.mxu0 0.0
    %3755 = vmatpush1.msra.mxu0 0.0
    %3756 = vmatprep.subr.mxu0 0.0
    %3757 = vmatpush1.msra.mxu0 0.0
    %3758 = vmatprep.subr.mxu0 0.0
    %3759 = vmatpush1.msra.mxu0 0.0
    %3760 = vmatprep.subr.mxu0 0.0
    %3761 = vmatpush1.msra.mxu0 0.0
    %3762 = vmatprep.subr.mxu0 0.0
    %3763 = vmatpush1.msra.mxu0 0.0
    %3764 = vmatprep.subr.mxu0 0.0
    %3765 = vmatpush1.msra.mxu0 0.0
    %3766 = vmatprep.subr.mxu0 0.0
    %3767 = vmatpush1.msra.mxu0 0.0
    %3768 = vmatprep.subr.mxu0 0.0
    %3769 = vmatpush1.msra.mxu0 0.0
    %3770 = vmatprep.subr.mxu0 0.0
    %3771 = vmatpush1.msra.mxu0 0.0
    %3772 = vmatprep.subr.mxu0 0.0
    %3773 = vmatpush1.msra.mxu0 0.0
    %3774 = vmatprep.subr.mxu0 0.0
    %3775 = vmatpush1.msra.mxu0 0.0
    %3776 = vmatprep.subr.mxu0 0.0
    %3777 = vmatpush1.msra.mxu0 0.0
    %3778 = vmatprep.subr.mxu0 0.0
    %3779 = vmatpush1.msra.mxu0 0.0
    %3780 = vmatprep.subr.mxu0 0.0
    %3781 = vmatpush1.msra.mxu0 0.0
    %3782 = vmatprep.subr.mxu0 0.0
    %3783 = vmatpush1.msra.mxu0 0.0
    %3784 = vmatprep.subr.mxu0 0.0
    %3785 = vmatpush1.msra.mxu0 0.0
    %3786 = vmatprep.subr.mxu0 0.0
    %3787 = vmatpush1.msra.mxu0 0.0
    %3788 = vmatprep.subr.mxu0 0.0
    %3789 = vmatpush1.msra.mxu0 0.0
    %3790 = vmatprep.subr.mxu0 0.0
    %3791 = vmatpush1.msra.mxu0 0.0
    %3792 = vmatprep.subr.mxu0 0.0
    %3793 = vmatpush1.msra.mxu0 0.0
    %3794 = vmatprep.subr.mxu0 0.0
    %3795 = vmatpush1.msra.mxu0 0.0
    %3796 = vmatprep.subr.mxu0 0.0
    %3797 = vmatpush1.msra.mxu0 0.0
    %3798 = vmatprep.subr.mxu0 0.0
    %3799 = vmatpush1.msra.mxu0 0.0
    %3800 = vmatprep.subr.mxu0 0.0
    %3801 = vmatpush1.msra.mxu0 0.0
    %3802 = vmatprep.mubr.f32.mxu0 0.0
    %3803 = vmatmul.mubr.f32.gmra.mrb[0].mxu0 %v3666
    %v3804 = vpop.f32.mrb[0].mxu0
    %v3805 = vadd.f32 0.0, %v3804
    %v3806 = vpop.f32.mrb[0].mxu0
    %3807 = vdwg.mxu0
    %v3808 = vmax.f32 %v3735, %v3805
    %v3809 = vld [vmem:[#allocation5 + $0x318] sm:$0xff]
    %v3811 = vsel %vm276, %v3808, 0
    %3813 = vmatprep.subr.mxu0 0.0
    %3814 = vmatpush1.msra.mxu0 %v3809
    %3815 = vmatprep.subr.mxu0 0.0
    %3816 = vmatpush1.msra.mxu0 0.0
    %3817 = vmatprep.subr.mxu0 0.0
    %3818 = vmatpush1.msra.mxu0 0.0
    %3819 = vmatprep.subr.mxu0 0.0
    %3820 = vmatpush1.msra.mxu0 0.0
    %3821 = vmatprep.subr.mxu0 0.0
    %3822 = vmatpush1.msra.mxu0 0.0
    %3823 = vmatprep.subr.mxu0 0.0
    %3824 = vmatpush1.msra.mxu0 0.0
    %3825 = vmatprep.subr.mxu0 0.0
    %3826 = vmatpush1.msra.mxu0 0.0
    %3827 = vmatprep.subr.mxu0 0.0
    %3828 = vmatpush1.msra.mxu0 0.0
    %3829 = vmatprep.subr.mxu0 0.0
    %3830 = vmatpush1.msra.mxu0 0.0
    %3831 = vmatprep.subr.mxu0 0.0
    %3832 = vmatpush1.msra.mxu0 0.0
    %3833 = vmatprep.subr.mxu0 0.0
    %3834 = vmatpush1.msra.mxu0 0.0
    %3835 = vmatprep.subr.mxu0 0.0
    %3836 = vmatpush1.msra.mxu0 0.0
    %3837 = vmatprep.subr.mxu0 0.0
    %3838 = vmatpush1.msra.mxu0 0.0
    %3839 = vmatprep.subr.mxu0 0.0
    %3840 = vmatpush1.msra.mxu0 0.0
    %3841 = vmatprep.subr.mxu0 0.0
    %3842 = vmatpush1.msra.mxu0 0.0
    %3843 = vmatprep.subr.mxu0 0.0
    %3844 = vmatpush1.msra.mxu0 0.0
    %3845 = vmatprep.subr.mxu0 0.0
    %3846 = vmatpush1.msra.mxu0 0.0
    %3847 = vmatprep.subr.mxu0 0.0
    %3848 = vmatpush1.msra.mxu0 0.0
    %3849 = vmatprep.subr.mxu0 0.0
    %3850 = vmatpush1.msra.mxu0 0.0
    %3851 = vmatprep.subr.mxu0 0.0
    %3852 = vmatpush1.msra.mxu0 0.0
    %3853 = vmatprep.subr.mxu0 0.0
    %3854 = vmatpush1.msra.mxu0 0.0
    %3855 = vmatprep.subr.mxu0 0.0
    %3856 = vmatpush1.msra.mxu0 0.0
    %3857 = vmatprep.subr.mxu0 0.0
    %3858 = vmatpush1.msra.mxu0 0.0
    %3859 = vmatprep.subr.mxu0 0.0
    %3860 = vmatpush1.msra.mxu0 0.0
    %3861 = vmatprep.subr.mxu0 0.0
    %3862 = vmatpush1.msra.mxu0 0.0
    %3863 = vmatprep.subr.mxu0 0.0
    %3864 = vmatpush1.msra.mxu0 0.0
    %3865 = vmatprep.subr.mxu0 0.0
    %3866 = vmatpush1.msra.mxu0 0.0
    %3867 = vmatprep.subr.mxu0 0.0
    %3868 = vmatpush1.msra.mxu0 0.0
    %3869 = vmatprep.subr.mxu0 0.0
    %3870 = vmatpush1.msra.mxu0 0.0
    %3871 = vmatprep.subr.mxu0 0.0
    %3872 = vmatpush1.msra.mxu0 0.0
    %3873 = vmatprep.subr.mxu0 0.0
    %3874 = vmatpush1.msra.mxu0 0.0
    %3875 = vmatprep.subr.mxu0 0.0
    %3876 = vmatpush1.msra.mxu0 0.0
    %3877 = vmatprep.mubr.f32.mxu0 0.0
    %3878 = vmatmul.mubr.f32.gmra.mrb[0].mxu0 %v3811
    %v3879 = vpop.f32.mrb[0].mxu0
    %v3880 = vadd.f32 0.0, %v3879
    %v3881 = vpop.f32.mrb[0].mxu0
    %3882 = vdwg.mxu0
    %3884 = vrot.lane.b32.xlu0 %v3880, 112
    %v3885 = vpop.permute.xlu0 %3884
    %v3886 = vsel %vm276, %v3880, 0
    %v3888 = vsel %vm276, %v3885, 0
    %3890 = vmatprep.subr.mxu0 0.0
    %3891 = vmatpush1.xpose.msra.mxu0 %v3888
    %3892 = vmatprep.subr.mxu0 0.0
    %3893 = vmatpush1.xpose.msra.mxu0 0.0
    %3894 = vmatprep.subr.mxu0 0.0
    %3895 = vmatpush1.xpose.msra.mxu0 0.0
    %3896 = vmatprep.subr.mxu0 0.0
    %3897 = vmatpush1.xpose.msra.mxu0 0.0
    %3898 = vmatprep.subr.mxu0 0.0
    %3899 = vmatpush1.xpose.msra.mxu0 0.0
    %3900 = vmatprep.subr.mxu0 0.0
    %3901 = vmatpush1.xpose.msra.mxu0 0.0
    %3902 = vmatprep.subr.mxu0 0.0
    %3903 = vmatpush1.xpose.msra.mxu0 0.0
    %3904 = vmatprep.subr.mxu0 0.0
    %3905 = vmatpush1.xpose.msra.mxu0 0.0
    %3906 = vmatprep.subr.mxu0 0.0
    %3907 = vmatpush1.xpose.msra.mxu0 0.0
    %3908 = vmatprep.subr.mxu0 0.0
    %3909 = vmatpush1.xpose.msra.mxu0 0.0
    %3910 = vmatprep.subr.mxu0 0.0
    %3911 = vmatpush1.xpose.msra.mxu0 0.0
    %3912 = vmatprep.subr.mxu0 0.0
    %3913 = vmatpush1.xpose.msra.mxu0 0.0
    %3914 = vmatprep.subr.mxu0 0.0
    %3915 = vmatpush1.xpose.msra.mxu0 0.0
    %3916 = vmatprep.subr.mxu0 0.0
    %3917 = vmatpush1.xpose.msra.mxu0 0.0
    %3918 = vmatprep.subr.mxu0 0.0
    %3919 = vmatpush1.xpose.msra.mxu0 0.0
    %3920 = vmatprep.subr.mxu0 0.0
    %3921 = vmatpush1.xpose.msra.mxu0 0.0
    %3922 = vmatprep.subr.mxu0 0.0
    %3923 = vmatpush1.xpose.msra.mxu0 0.0
    %3924 = vmatprep.subr.mxu0 0.0
    %3925 = vmatpush1.xpose.msra.mxu0 0.0
    %3926 = vmatprep.subr.mxu0 0.0
    %3927 = vmatpush1.xpose.msra.mxu0 0.0
    %3928 = vmatprep.subr.mxu0 0.0
    %3929 = vmatpush1.xpose.msra.mxu0 0.0
    %3930 = vmatprep.subr.mxu0 0.0
    %3931 = vmatpush1.xpose.msra.mxu0 0.0
    %3932 = vmatprep.subr.mxu0 0.0
    %3933 = vmatpush1.xpose.msra.mxu0 0.0
    %3934 = vmatprep.subr.mxu0 0.0
    %3935 = vmatpush1.xpose.msra.mxu0 0.0
    %3936 = vmatprep.subr.mxu0 0.0
    %3937 = vmatpush1.xpose.msra.mxu0 0.0
    %3938 = vmatprep.subr.mxu0 0.0
    %3939 = vmatpush1.xpose.msra.mxu0 0.0
    %3940 = vmatprep.subr.mxu0 0.0
    %3941 = vmatpush1.xpose.msra.mxu0 0.0
    %3942 = vmatprep.subr.mxu0 0.0
    %3943 = vmatpush1.xpose.msra.mxu0 0.0
    %3944 = vmatprep.subr.mxu0 0.0
    %3945 = vmatpush1.xpose.msra.mxu0 0.0
    %3946 = vmatprep.subr.mxu0 0.0
    %3947 = vmatpush1.xpose.msra.mxu0 0.0
    %3948 = vmatprep.subr.mxu0 0.0
    %3949 = vmatpush1.xpose.msra.mxu0 0.0
    %3950 = vmatprep.subr.mxu0 0.0
    %3951 = vmatpush1.xpose.msra.mxu0 0.0
    %3952 = vmatprep.subr.mxu0 0.0
    %3953 = vmatpush1.xpose.msra.mxu0 0.0
    %3954 = vmatprep.mubr.f32.mxu0 0.0
    %3955 = vmatmul.mubr.f32.gmra.mrb[0].mxu0 %v3886
    %v3956 = vpop.f32.mrb[0].mxu0
    %v3957 = vadd.f32 %v272, %v3956
    %v3958 = vpop.f32.mrb[0].mxu0
    %3959 = vdwg.mxu0
    %v3960 = vsel %vm276, %v3957, -inf
    %3961 = vmax.xlane.f32.xlu0 %v3960
    %v3962 = vpop.xlane.xlu0 %3961
    %v3963 = vsub.f32 %v3957, %v3962
    %v3964 = vmul.f32 %v3963, 1.442695
    %v3965 = vpow.pop %v3964
    %v3966 = vsel %vm276, %v3965, 0.0
    %3967 = vadd.xlane.f32.xlu0 %v3966
    %v3968 = vpop.xlane.xlu0 %3967
    %v3969 = vrcp.pop %v3968
    %v3970 = vmul.f32 %v3965, %v3969
    %3971 = vrot.lane.b32.xlu0 %v3880, 96
    %v3972 = vpop.permute.xlu0 %3971
    %v3975 = vsel %vm276, %v3970, 0
    %3977 = vmatprep.subr.mxu0 0.0
    %3978 = vmatpush1.msra.mxu0 %v3972
    %3979 = vmatprep.subr.mxu0 0.0
    %3980 = vmatpush1.msra.mxu0 0.0
    %3981 = vmatprep.subr.mxu0 0.0
    %3982 = vmatpush1.msra.mxu0 0.0
    %3983 = vmatprep.subr.mxu0 0.0
    %3984 = vmatpush1.msra.mxu0 0.0
    %3985 = vmatprep.subr.mxu0 0.0
    %3986 = vmatpush1.msra.mxu0 0.0
    %3987 = vmatprep.subr.mxu0 0.0
    %3988 = vmatpush1.msra.mxu0 0.0
    %3989 = vmatprep.subr.mxu0 0.0
    %3990 = vmatpush1.msra.mxu0 0.0
    %3991 = vmatprep.subr.mxu0 0.0
    %3992 = vmatpush1.msra.mxu0 0.0
    %3993 = vmatprep.subr.mxu0 0.0
    %3994 = vmatpush1.msra.mxu0 0.0
    %3995 = vmatprep.subr.mxu0 0.0
    %3996 = vmatpush1.msra.mxu0 0.0
    %3997 = vmatprep.subr.mxu0 0.0
    %3998 = vmatpush1.msra.mxu0 0.0
    %3999 = vmatprep.subr.mxu0 0.0
    %4000 = vmatpush1.msra.mxu0 0.0
    %4001 = vmatprep.subr.mxu0 0.0
    %4002 = vmatpush1.msra.mxu0 0.0
    %4003 = vmatprep.subr.mxu0 0.0
    %4004 = vmatpush1.msra.mxu0 0.0
    %4005 = vmatprep.subr.mxu0 0.0
    %4006 = vmatpush1.msra.mxu0 0.0
    %4007 = vmatprep.subr.mxu0 0.0
    %4008 = vmatpush1.msra.mxu0 0.0
    %4009 = vmatprep.subr.mxu0 0.0
    %4010 = vmatpush1.msra.mxu0 0.0
    %4011 = vmatprep.subr.mxu0 0.0
    %4012 = vmatpush1.msra.mxu0 0.0
    %4013 = vmatprep.subr.mxu0 0.0
    %4014 = vmatpush1.msra.mxu0 0.0
    %4015 = vmatprep.subr.mxu0 0.0
    %4016 = vmatpush1.msra.mxu0 0.0
    %4017 = vmatprep.subr.mxu0 0.0
    %4018 = vmatpush1.msra.mxu0 0.0
    %4019 = vmatprep.subr.mxu0 0.0
    %4020 = vmatpush1.msra.mxu0 0.0
    %4021 = vmatprep.subr.mxu0 0.0
    %4022 = vmatpush1.msra.mxu0 0.0
    %4023 = vmatprep.subr.mxu0 0.0
    %4024 = vmatpush1.msra.mxu0 0.0
    %4025 = vmatprep.subr.mxu0 0.0
    %4026 = vmatpush1.msra.mxu0 0.0
    %4027 = vmatprep.subr.mxu0 0.0
    %4028 = vmatpush1.msra.mxu0 0.0
    %4029 = vmatprep.subr.mxu0 0.0
    %4030 = vmatpush1.msra.mxu0 0.0
    %4031 = vmatprep.subr.mxu0 0.0
    %4032 = vmatpush1.msra.mxu0 0.0
    %4033 = vmatprep.subr.mxu0 0.0
    %4034 = vmatpush1.msra.mxu0 0.0
    %4035 = vmatprep.subr.mxu0 0.0
    %4036 = vmatpush1.msra.mxu0 0.0
    %4037 = vmatprep.subr.mxu0 0.0
    %4038 = vmatpush1.msra.mxu0 0.0
    %4039 = vmatprep.subr.mxu0 0.0
    %4040 = vmatpush1.msra.mxu0 0.0
    %4041 = vmatprep.mubr.f32.mxu0 0.0
    %4042 = vmatmul.mubr.f32.gmra.mrb[0].mxu0 %v3975
    %v4043 = vpop.f32.mrb[0].mxu0
    %v4044 = vadd.f32 0.0, %v4043
    %v4045 = vpop.f32.mrb[0].mxu0
    %4046 = vdwg.mxu0
    %4047 = vrot.lane.b32.xlu0 %v3880, 120
    %v4048 = vpop.permute.xlu0 %4047
    %4049 = vrot.lane.b32.xlu0 %v3880, 104
    %v4050 = vpop.permute.xlu0 %4049
    %v4051 = vsel %vm276, %v4048, 0
    %v4053 = vsel %vm276, %v4050, 0
    %4055 = vmatprep.subr.mxu0 0.0
    %4056 = vmatpush1.xpose.msra.mxu0 %v4053
    %4057 = vmatprep.subr.mxu0 0.0
    %4058 = vmatpush1.xpose.msra.mxu0 0.0
    %4059 = vmatprep.subr.mxu0 0.0
    %4060 = vmatpush1.xpose.msra.mxu0 0.0
    %4061 = vmatprep.subr.mxu0 0.0
    %4062 = vmatpush1.xpose.msra.mxu0 0.0
    %4063 = vmatprep.subr.mxu0 0.0
    %4064 = vmatpush1.xpose.msra.mxu0 0.0
    %4065 = vmatprep.subr.mxu0 0.0
    %4066 = vmatpush1.xpose.msra.mxu0 0.0
    %4067 = vmatprep.subr.mxu0 0.0
    %4068 = vmatpush1.xpose.msra.mxu0 0.0
    %4069 = vmatprep.subr.mxu0 0.0
    %4070 = vmatpush1.xpose.msra.mxu0 0.0
    %4071 = vmatprep.subr.mxu0 0.0
    %4072 = vmatpush1.xpose.msra.mxu0 0.0
    %4073 = vmatprep.subr.mxu0 0.0
    %4074 = vmatpush1.xpose.msra.mxu0 0.0
    %4075 = vmatprep.subr.mxu0 0.0
    %4076 = vmatpush1.xpose.msra.mxu0 0.0
    %4077 = vmatprep.subr.mxu0 0.0
    %4078 = vmatpush1.xpose.msra.mxu0 0.0
    %4079 = vmatprep.subr.mxu0 0.0
    %4080 = vmatpush1.xpose.msra.mxu0 0.0
    %4081 = vmatprep.subr.mxu0 0.0
    %4082 = vmatpush1.xpose.msra.mxu0 0.0
    %4083 = vmatprep.subr.mxu0 0.0
    %4084 = vmatpush1.xpose.msra.mxu0 0.0
    %4085 = vmatprep.subr.mxu0 0.0
    %4086 = vmatpush1.xpose.msra.mxu0 0.0
    %4087 = vmatprep.subr.mxu0 0.0
    %4088 = vmatpush1.xpose.msra.mxu0 0.0
    %4089 = vmatprep.subr.mxu0 0.0
    %4090 = vmatpush1.xpose.msra.mxu0 0.0
    %4091 = vmatprep.subr.mxu0 0.0
    %4092 = vmatpush1.xpose.msra.mxu0 0.0
    %4093 = vmatprep.subr.mxu0 0.0
    %4094 = vmatpush1.xpose.msra.mxu0 0.0
    %4095 = vmatprep.subr.mxu0 0.0
    %4096 = vmatpush1.xpose.msra.mxu0 0.0
    %4097 = vmatprep.subr.mxu0 0.0
    %4098 = vmatpush1.xpose.msra.mxu0 0.0
    %4099 = vmatprep.subr.mxu0 0.0
    %4100 = vmatpush1.xpose.msra.mxu0 0.0
    %4101 = vmatprep.subr.mxu0 0.0
    %4102 = vmatpush1.xpose.msra.mxu0 0.0
    %4103 = vmatprep.subr.mxu0 0.0
    %4104 = vmatpush1.xpose.msra.mxu0 0.0
    %4105 = vmatprep.subr.mxu0 0.0
    %4106 = vmatpush1.xpose.msra.mxu0 0.0
    %4107 = vmatprep.subr.mxu0 0.0
    %4108 = vmatpush1.xpose.msra.mxu0 0.0
    %4109 = vmatprep.subr.mxu0 0.0
    %4110 = vmatpush1.xpose.msra.mxu0 0.0
    %4111 = vmatprep.subr.mxu0 0.0
    %4112 = vmatpush1.xpose.msra.mxu0 0.0
    %4113 = vmatprep.subr.mxu0 0.0
    %4114 = vmatpush1.xpose.msra.mxu0 0.0
    %4115 = vmatprep.subr.mxu0 0.0
    %4116 = vmatpush1.xpose.msra.mxu0 0.0
    %4117 = vmatprep.subr.mxu0 0.0
    %4118 = vmatpush1.xpose.msra.mxu0 0.0
    %4119 = vmatprep.mubr.f32.mxu0 0.0
    %4120 = vmatmul.mubr.f32.gmra.mrb[0].mxu0 %v4051
    %v4121 = vpop.f32.mrb[0].mxu0
    %v4122 = vadd.f32 %v272, %v4121
    %v4123 = vpop.f32.mrb[0].mxu0
    %4124 = vdwg.mxu0
    %v4125 = vsel %vm276, %v4122, -inf
    %4126 = vmax.xlane.f32.xlu0 %v4125
    %v4127 = vpop.xlane.xlu0 %4126
    %v4128 = vsub.f32 %v4122, %v4127
    %v4129 = vmul.f32 %v4128, 1.442695
    %v4130 = vpow.pop %v4129
    %v4131 = vsel %vm276, %v4130, 0.0
    %4132 = vadd.xlane.f32.xlu0 %v4131
    %v4133 = vpop.xlane.xlu0 %4132
    %v4134 = vrcp.pop %v4133
    %v4135 = vmul.f32 %v4130, %v4134
    %4136 = vrot.lane.b32.xlu0 %v3880, 88
    %v4137 = vpop.permute.xlu0 %4136
    %v4140 = vsel %vm276, %v4135, 0
    %4142 = vmatprep.subr.mxu0 0.0
    %4143 = vmatpush1.msra.mxu0 %v4137
    %4144 = vmatprep.subr.mxu0 0.0
    %4145 = vmatpush1.msra.mxu0 0.0
    %4146 = vmatprep.subr.mxu0 0.0
    %4147 = vmatpush1.msra.mxu0 0.0
    %4148 = vmatprep.subr.mxu0 0.0
    %4149 = vmatpush1.msra.mxu0 0.0
    %4150 = vmatprep.subr.mxu0 0.0
    %4151 = vmatpush1.msra.mxu0 0.0
    %4152 = vmatprep.subr.mxu0 0.0
    %4153 = vmatpush1.msra.mxu0 0.0
    %4154 = vmatprep.subr.mxu0 0.0
    %4155 = vmatpush1.msra.mxu0 0.0
    %4156 = vmatprep.subr.mxu0 0.0
    %4157 = vmatpush1.msra.mxu0 0.0
    %4158 = vmatprep.subr.mxu0 0.0
    %4159 = vmatpush1.msra.mxu0 0.0
    %4160 = vmatprep.subr.mxu0 0.0
    %4161 = vmatpush1.msra.mxu0 0.0
    %4162 = vmatprep.subr.mxu0 0.0
    %4163 = vmatpush1.msra.mxu0 0.0
    %4164 = vmatprep.subr.mxu0 0.0
    %4165 = vmatpush1.msra.mxu0 0.0
    %4166 = vmatprep.subr.mxu0 0.0
    %4167 = vmatpush1.msra.mxu0 0.0
    %4168 = vmatprep.subr.mxu0 0.0
    %4169 = vmatpush1.msra.mxu0 0.0
    %4170 = vmatprep.subr.mxu0 0.0
    %4171 = vmatpush1.msra.mxu0 0.0
    %4172 = vmatprep.subr.mxu0 0.0
    %4173 = vmatpush1.msra.mxu0 0.0
    %4174 = vmatprep.subr.mxu0 0.0
    %4175 = vmatpush1.msra.mxu0 0.0
    %4176 = vmatprep.subr.mxu0 0.0
    %4177 = vmatpush1.msra.mxu0 0.0
    %4178 = vmatprep.subr.mxu0 0.0
    %4179 = vmatpush1.msra.mxu0 0.0
    %4180 = vmatprep.subr.mxu0 0.0
    %4181 = vmatpush1.msra.mxu0 0.0
    %4182 = vmatprep.subr.mxu0 0.0
    %4183 = vmatpush1.msra.mxu0 0.0
    %4184 = vmatprep.subr.mxu0 0.0
    %4185 = vmatpush1.msra.mxu0 0.0
    %4186 = vmatprep.subr.mxu0 0.0
    %4187 = vmatpush1.msra.mxu0 0.0
    %4188 = vmatprep.subr.mxu0 0.0
    %4189 = vmatpush1.msra.mxu0 0.0
    %4190 = vmatprep.subr.mxu0 0.0
    %4191 = vmatpush1.msra.mxu0 0.0
    %4192 = vmatprep.subr.mxu0 0.0
    %4193 = vmatpush1.msra.mxu0 0.0
    %4194 = vmatprep.subr.mxu0 0.0
    %4195 = vmatpush1.msra.mxu0 0.0
    %4196 = vmatprep.subr.mxu0 0.0
    %4197 = vmatpush1.msra.mxu0 0.0
    %4198 = vmatprep.subr.mxu0 0.0
    %4199 = vmatpush1.msra.mxu0 0.0
    %4200 = vmatprep.subr.mxu0 0.0
    %4201 = vmatpush1.msra.mxu0 0.0
    %4202 = vmatprep.subr.mxu0 0.0
    %4203 = vmatpush1.msra.mxu0 0.0
    %4204 = vmatprep.subr.mxu0 0.0
    %4205 = vmatpush1.msra.mxu0 0.0
    %4206 = vmatprep.mubr.f32.mxu0 0.0
    %4207 = vmatmul.mubr.f32.gmra.mrb[0].mxu0 %v4140
    %v4208 = vpop.f32.mrb[0].mxu0
    %v4209 = vadd.f32 0.0, %v4208
    %v4210 = vpop.f32.mrb[0].mxu0
    %4211 = vdwg.mxu0
    %4213 = vrot.lane.b32.xlu0 %v4209, 8
    %v4214 = vpop.permute.xlu0 %4213
    %v4216 = vsel %vm276, %v4044, %v4214
    %v4217 = vld [vmem:[#allocation5 + $0x308] sm:$0xff]
    %v4218 = vld [vmem:[#allocation5 + $0x310] sm:$0xff]
    %v4219 = vld [vmem:[#allocation5 + $0x300] sm:$0x1]
    %v4220 = vlaneseq
    %v4221 = vshrl.u32 %v4220, 7
    %v4222 = vsub.s32 0, %v4221
    %v4223 = vrot.slane %v4219, %v4222
    %v4225 = vsel %vm198, %v4216, 0
    %4227 = vmatprep.subr.mxu0 0.0
    %4228 = vmatpush1.msra.mxu0 %v4217
    %4229 = vmatprep.subr.mxu0 0.0
    %4230 = vmatpush1.msra.mxu0 %v4218
    %4231 = vmatprep.subr.mxu0 0.0
    %4232 = vmatpush1.msra.mxu0 0.0
    %4233 = vmatprep.subr.mxu0 0.0
    %4234 = vmatpush1.msra.mxu0 0.0
    %4235 = vmatprep.subr.mxu0 0.0
    %4236 = vmatpush1.msra.mxu0 0.0
    %4237 = vmatprep.subr.mxu0 0.0
    %4238 = vmatpush1.msra.mxu0 0.0
    %4239 = vmatprep.subr.mxu0 0.0
    %4240 = vmatpush1.msra.mxu0 0.0
    %4241 = vmatprep.subr.mxu0 0.0
    %4242 = vmatpush1.msra.mxu0 0.0
    %4243 = vmatprep.subr.mxu0 0.0
    %4244 = vmatpush1.msra.mxu0 0.0
    %4245 = vmatprep.subr.mxu0 0.0
    %4246 = vmatpush1.msra.mxu0 0.0
    %4247 = vmatprep.subr.mxu0 0.0
    %4248 = vmatpush1.msra.mxu0 0.0
    %4249 = vmatprep.subr.mxu0 0.0
    %4250 = vmatpush1.msra.mxu0 0.0
    %4251 = vmatprep.subr.mxu0 0.0
    %4252 = vmatpush1.msra.mxu0 0.0
    %4253 = vmatprep.subr.mxu0 0.0
    %4254 = vmatpush1.msra.mxu0 0.0
    %4255 = vmatprep.subr.mxu0 0.0
    %4256 = vmatpush1.msra.mxu0 0.0
    %4257 = vmatprep.subr.mxu0 0.0
    %4258 = vmatpush1.msra.mxu0 0.0
    %4259 = vmatprep.subr.mxu0 0.0
    %4260 = vmatpush1.msra.mxu0 0.0
    %4261 = vmatprep.subr.mxu0 0.0
    %4262 = vmatpush1.msra.mxu0 0.0
    %4263 = vmatprep.subr.mxu0 0.0
    %4264 = vmatpush1.msra.mxu0 0.0
    %4265 = vmatprep.subr.mxu0 0.0
    %4266 = vmatpush1.msra.mxu0 0.0
    %4267 = vmatprep.subr.mxu0 0.0
    %4268 = vmatpush1.msra.mxu0 0.0
    %4269 = vmatprep.subr.mxu0 0.0
    %4270 = vmatpush1.msra.mxu0 0.0
    %4271 = vmatprep.subr.mxu0 0.0
    %4272 = vmatpush1.msra.mxu0 0.0
    %4273 = vmatprep.subr.mxu0 0.0
    %4274 = vmatpush1.msra.mxu0 0.0
    %4275 = vmatprep.subr.mxu0 0.0
    %4276 = vmatpush1.msra.mxu0 0.0
    %4277 = vmatprep.subr.mxu0 0.0
    %4278 = vmatpush1.msra.mxu0 0.0
    %4279 = vmatprep.subr.mxu0 0.0
    %4280 = vmatpush1.msra.mxu0 0.0
    %4281 = vmatprep.subr.mxu0 0.0
    %4282 = vmatpush1.msra.mxu0 0.0
    %4283 = vmatprep.subr.mxu0 0.0
    %4284 = vmatpush1.msra.mxu0 0.0
    %4285 = vmatprep.subr.mxu0 0.0
    %4286 = vmatpush1.msra.mxu0 0.0
    %4287 = vmatprep.subr.mxu0 0.0
    %4288 = vmatpush1.msra.mxu0 0.0
    %4289 = vmatprep.subr.mxu0 0.0
    %4290 = vmatpush1.msra.mxu0 0.0
    %4291 = vmatprep.mubr.f32.mxu0 0.0
    %4292 = vmatmul.mubr.f32.gmra.mrb[0].mxu0 %v4225
    %v4293 = vpop.f32.mrb[0].mxu0
    %v4294 = vadd.f32 %v4223, %v4293
    %v4295 = vpop.f32.mrb[0].mxu0
    %4296 = vdwg.mxu0
    %v4297 = vadd.f32 %v4294, %v3808
    %4298 = vrot.lane.b32.xlu0 %v3033, 1
    %v4299 = vpop.permute.xlu0 %4298
    %v4301 = vsel %vm692, 0.0, %v4299
    %vm4302 = vcmask 138240
    %v4303 = vsel %vm4302, %v4301, 0.0
    %4305 = vrot.lane.b32.xlu0 %v4303, 127
    %v4306 = vpop.permute.xlu0 %4305
    %4308 = vrot.lane.b32.xlu0 %v4303, 126
    %v4309 = vpop.permute.xlu0 %4308
    %v4311 = vld [vmem:[#allocation5 + $0x328] sm:$0xff]
    %v4312 = vld [vmem:[#allocation5 + $0x320] sm:$0xff]
    %4314 = vset.pattern.permute.xlu0 0
    %4315 = vperm.xlu0 %4314, %v4312
    %v4316 = vpop.permute.xlu0 %4315
    %v4319 = vsel %vm710, %v4311, 0
    %4321 = vmatprep.subr.mxu0 0.0
    %4322 = vmatpush1.msra.mxu0 %v4303
    %4323 = vmatprep.subr.mxu0 0.0
    %4324 = vmatpush1.msra.mxu0 %v4306
    %4325 = vmatprep.subr.mxu0 0.0
    %4326 = vmatpush1.msra.mxu0 %v4309
    %4327 = vmatprep.subr.mxu0 0.0
    %4328 = vmatpush1.msra.mxu0 0.0
    %4329 = vmatprep.subr.mxu0 0.0
    %4330 = vmatpush1.msra.mxu0 0.0
    %4331 = vmatprep.subr.mxu0 0.0
    %4332 = vmatpush1.msra.mxu0 0.0
    %4333 = vmatprep.subr.mxu0 0.0
    %4334 = vmatpush1.msra.mxu0 0.0
    %4335 = vmatprep.subr.mxu0 0.0
    %4336 = vmatpush1.msra.mxu0 0.0
    %4337 = vmatprep.subr.mxu0 0.0
    %4338 = vmatpush1.msra.mxu0 0.0
    %4339 = vmatprep.subr.mxu0 0.0
    %4340 = vmatpush1.msra.mxu0 0.0
    %4341 = vmatprep.subr.mxu0 0.0
    %4342 = vmatpush1.msra.mxu0 0.0
    %4343 = vmatprep.subr.mxu0 0.0
    %4344 = vmatpush1.msra.mxu0 0.0
    %4345 = vmatprep.subr.mxu0 0.0
    %4346 = vmatpush1.msra.mxu0 0.0
    %4347 = vmatprep.subr.mxu0 0.0
    %4348 = vmatpush1.msra.mxu0 0.0
    %4349 = vmatprep.subr.mxu0 0.0
    %4350 = vmatpush1.msra.mxu0 0.0
    %4351 = vmatprep.subr.mxu0 0.0
    %4352 = vmatpush1.msra.mxu0 0.0
    %4353 = vmatprep.subr.mxu0 0.0
    %4354 = vmatpush1.msra.mxu0 0.0
    %4355 = vmatprep.subr.mxu0 0.0
    %4356 = vmatpush1.msra.mxu0 0.0
    %4357 = vmatprep.subr.mxu0 0.0
    %4358 = vmatpush1.msra.mxu0 0.0
    %4359 = vmatprep.subr.mxu0 0.0
    %4360 = vmatpush1.msra.mxu0 0.0
    %4361 = vmatprep.subr.mxu0 0.0
    %4362 = vmatpush1.msra.mxu0 0.0
    %4363 = vmatprep.subr.mxu0 0.0
    %4364 = vmatpush1.msra.mxu0 0.0
    %4365 = vmatprep.subr.mxu0 0.0
    %4366 = vmatpush1.msra.mxu0 0.0
    %4367 = vmatprep.subr.mxu0 0.0
    %4368 = vmatpush1.msra.mxu0 0.0
    %4369 = vmatprep.subr.mxu0 0.0
    %4370 = vmatpush1.msra.mxu0 0.0
    %4371 = vmatprep.subr.mxu0 0.0
    %4372 = vmatpush1.msra.mxu0 0.0
    %4373 = vmatprep.subr.mxu0 0.0
    %4374 = vmatpush1.msra.mxu0 0.0
    %4375 = vmatprep.subr.mxu0 0.0
    %4376 = vmatpush1.msra.mxu0 0.0
    %4377 = vmatprep.subr.mxu0 0.0
    %4378 = vmatpush1.msra.mxu0 0.0
    %4379 = vmatprep.subr.mxu0 0.0
    %4380 = vmatpush1.msra.mxu0 0.0
    %4381 = vmatprep.subr.mxu0 0.0
    %4382 = vmatpush1.msra.mxu0 0.0
    %4383 = vmatprep.subr.mxu0 0.0
    %4384 = vmatpush1.msra.mxu0 0.0
    %4385 = vmatprep.mubr.f32.mxu0 0.0
    %4386 = vmatmul.mubr.f32.gmra.mrb[0].mxu0 %v4319
    %v4387 = vpop.f32.mrb[0].mxu0
    %v4388 = vadd.f32 %v4316, %v4387
    %v4389 = vpop.f32.mrb[0].mxu0
    %4390 = vdwg.mxu0
    %vm4391 = vcmp.gt.f32.partialorder %v4388, 0.0
    %v4392 = vmin.f32 %v4388, 0.0
    %v4393 = vmul.f32 %v4392, 1.442695
    %v4394 = vpow.pop %v4393
    %v4395 = vsub.f32 %v4394, 1.0
    %v4396 = vsel %vm4391, %v4388, %v4395
    %v4398 = vsel %vm198, %v4396, 0
    %4400 = vmatprep.subr.mxu0 0.0
    %4401 = vmatpush1.msra.mxu0 %v3661
    %4402 = vmatprep.subr.mxu0 0.0
    %4403 = vmatpush1.msra.mxu0 %v3662
    %4404 = vmatprep.subr.mxu0 0.0
    %4405 = vmatpush1.msra.mxu0 0.0
    %4406 = vmatprep.subr.mxu0 0.0
    %4407 = vmatpush1.msra.mxu0 0.0
    %4408 = vmatprep.subr.mxu0 0.0
    %4409 = vmatpush1.msra.mxu0 0.0
    %4410 = vmatprep.subr.mxu0 0.0
    %4411 = vmatpush1.msra.mxu0 0.0
    %4412 = vmatprep.subr.mxu0 0.0
    %4413 = vmatpush1.msra.mxu0 0.0
    %4414 = vmatprep.subr.mxu0 0.0
    %4415 = vmatpush1.msra.mxu0 0.0
    %4416 = vmatprep.subr.mxu0 0.0
    %4417 = vmatpush1.msra.mxu0 0.0
    %4418 = vmatprep.subr.mxu0 0.0
    %4419 = vmatpush1.msra.mxu0 0.0
    %4420 = vmatprep.subr.mxu0 0.0
    %4421 = vmatpush1.msra.mxu0 0.0
    %4422 = vmatprep.subr.mxu0 0.0
    %4423 = vmatpush1.msra.mxu0 0.0
    %4424 = vmatprep.subr.mxu0 0.0
    %4425 = vmatpush1.msra.mxu0 0.0
    %4426 = vmatprep.subr.mxu0 0.0
    %4427 = vmatpush1.msra.mxu0 0.0
    %4428 = vmatprep.subr.mxu0 0.0
    %4429 = vmatpush1.msra.mxu0 0.0
    %4430 = vmatprep.subr.mxu0 0.0
    %4431 = vmatpush1.msra.mxu0 0.0
    %4432 = vmatprep.subr.mxu0 0.0
    %4433 = vmatpush1.msra.mxu0 0.0
    %4434 = vmatprep.subr.mxu0 0.0
    %4435 = vmatpush1.msra.mxu0 0.0
    %4436 = vmatprep.subr.mxu0 0.0
    %4437 = vmatpush1.msra.mxu0 0.0
    %4438 = vmatprep.subr.mxu0 0.0
    %4439 = vmatpush1.msra.mxu0 0.0
    %4440 = vmatprep.subr.mxu0 0.0
    %4441 = vmatpush1.msra.mxu0 0.0
    %4442 = vmatprep.subr.mxu0 0.0
    %4443 = vmatpush1.msra.mxu0 0.0
    %4444 = vmatprep.subr.mxu0 0.0
    %4445 = vmatpush1.msra.mxu0 0.0
    %4446 = vmatprep.subr.mxu0 0.0
    %4447 = vmatpush1.msra.mxu0 0.0
    %4448 = vmatprep.subr.mxu0 0.0
    %4449 = vmatpush1.msra.mxu0 0.0
    %4450 = vmatprep.subr.mxu0 0.0
    %4451 = vmatpush1.msra.mxu0 0.0
    %4452 = vmatprep.subr.mxu0 0.0
    %4453 = vmatpush1.msra.mxu0 0.0
    %4454 = vmatprep.subr.mxu0 0.0
    %4455 = vmatpush1.msra.mxu0 0.0
    %4456 = vmatprep.subr.mxu0 0.0
    %4457 = vmatpush1.msra.mxu0 0.0
    %4458 = vmatprep.subr.mxu0 0.0
    %4459 = vmatpush1.msra.mxu0 0.0
    %4460 = vmatprep.subr.mxu0 0.0
    %4461 = vmatpush1.msra.mxu0 0.0
    %4462 = vmatprep.subr.mxu0 0.0
    %4463 = vmatpush1.msra.mxu0 0.0
    %4464 = vmatprep.mubr.f32.mxu0 0.0
    %4465 = vmatmul.mubr.f32.gmra.mrb[0].mxu0 %v4398
    %v4466 = vpop.f32.mrb[0].mxu0
    %v4467 = vadd.f32 0.0, %v4466
    %v4468 = vpop.f32.mrb[0].mxu0
    %4469 = vdwg.mxu0
    %4470 = vmatprep.subr.mxu0 0.0
    %4471 = vmatpush1.msra.mxu0 %v3663
    %4472 = vmatprep.subr.mxu0 0.0
    %4473 = vmatpush1.msra.mxu0 %v3664
    %4474 = vmatprep.subr.mxu0 0.0
    %4475 = vmatpush1.msra.mxu0 0.0
    %4476 = vmatprep.subr.mxu0 0.0
    %4477 = vmatpush1.msra.mxu0 0.0
    %4478 = vmatprep.subr.mxu0 0.0
    %4479 = vmatpush1.msra.mxu0 0.0
    %4480 = vmatprep.subr.mxu0 0.0
    %4481 = vmatpush1.msra.mxu0 0.0
    %4482 = vmatprep.subr.mxu0 0.0
    %4483 = vmatpush1.msra.mxu0 0.0
    %4484 = vmatprep.subr.mxu0 0.0
    %4485 = vmatpush1.msra.mxu0 0.0
    %4486 = vmatprep.subr.mxu0 0.0
    %4487 = vmatpush1.msra.mxu0 0.0
    %4488 = vmatprep.subr.mxu0 0.0
    %4489 = vmatpush1.msra.mxu0 0.0
    %4490 = vmatprep.subr.mxu0 0.0
    %4491 = vmatpush1.msra.mxu0 0.0
    %4492 = vmatprep.subr.mxu0 0.0
    %4493 = vmatpush1.msra.mxu0 0.0
    %4494 = vmatprep.subr.mxu0 0.0
    %4495 = vmatpush1.msra.mxu0 0.0
    %4496 = vmatprep.subr.mxu0 0.0
    %4497 = vmatpush1.msra.mxu0 0.0
    %4498 = vmatprep.subr.mxu0 0.0
    %4499 = vmatpush1.msra.mxu0 0.0
    %4500 = vmatprep.subr.mxu0 0.0
    %4501 = vmatpush1.msra.mxu0 0.0
    %4502 = vmatprep.subr.mxu0 0.0
    %4503 = vmatpush1.msra.mxu0 0.0
    %4504 = vmatprep.subr.mxu0 0.0
    %4505 = vmatpush1.msra.mxu0 0.0
    %4506 = vmatprep.subr.mxu0 0.0
    %4507 = vmatpush1.msra.mxu0 0.0
    %4508 = vmatprep.subr.mxu0 0.0
    %4509 = vmatpush1.msra.mxu0 0.0
    %4510 = vmatprep.subr.mxu0 0.0
    %4511 = vmatpush1.msra.mxu0 0.0
    %4512 = vmatprep.subr.mxu0 0.0
    %4513 = vmatpush1.msra.mxu0 0.0
    %4514 = vmatprep.subr.mxu0 0.0
    %4515 = vmatpush1.msra.mxu0 0.0
    %4516 = vmatprep.subr.mxu0 0.0
    %4517 = vmatpush1.msra.mxu0 0.0
    %4518 = vmatprep.subr.mxu0 0.0
    %4519 = vmatpush1.msra.mxu0 0.0
    %4520 = vmatprep.subr.mxu0 0.0
    %4521 = vmatpush1.msra.mxu0 0.0
    %4522 = vmatprep.subr.mxu0 0.0
    %4523 = vmatpush1.msra.mxu0 0.0
    %4524 = vmatprep.subr.mxu0 0.0
    %4525 = vmatpush1.msra.mxu0 0.0
    %4526 = vmatprep.subr.mxu0 0.0
    %4527 = vmatpush1.msra.mxu0 0.0
    %4528 = vmatprep.subr.mxu0 0.0
    %4529 = vmatpush1.msra.mxu0 0.0
    %4530 = vmatprep.subr.mxu0 0.0
    %4531 = vmatpush1.msra.mxu0 0.0
    %4532 = vmatprep.subr.mxu0 0.0
    %4533 = vmatpush1.msra.mxu0 0.0
    %4534 = vmatprep.mubr.f32.mxu0 0.0
    %4535 = vmatmul.mubr.f32.gmra.mrb[0].mxu0 %v4398
    %v4536 = vpop.f32.mrb[0].mxu0
    %v4537 = vadd.f32 0.0, %v4536
    %v4538 = vpop.f32.mrb[0].mxu0
    %4539 = vdwg.mxu0
    %v4540 = vmax.f32 %v4467, %v4537
    %v4541 = vmul.f32 %v4540, %v4540
    %v4542 = vsel %vm276, %v4541, 0.0
    %4543 = vadd.xlane.f32.xlu0 %v4542
    %v4544 = vpop.xlane.xlu0 %4543
    %v4545 = vrcp.pop 8.0
    %v4546 = vmul.f32 %v4544, %v4545
    %v4547 = vlog2.pop %v4546
    %v4548 = vmul.f32 %v4547, 0.6931472
    %v4549 = vsel %vm276, %v4297, 0.0
    %4550 = vadd.xlane.f32.xlu0 %v4549
    %v4551 = vpop.xlane.xlu0 %4550
    %v4552 = vmul.f32 %v4551, %v4545
    %v4553 = vsub.f32 %v4297, %v4552
    %v4554 = vmul.f32 %v4553, %v4553
    %v4555 = vsel %vm276, %v4554, 0.0
    %4556 = vadd.xlane.f32.xlu0 %v4555
    %v4557 = vpop.xlane.xlu0 %4556
    %v4558 = vmul.f32 %v4557, %v4545
    %v4559 = vadd.f32 %v4558, 1e-05
    %v4560 = vrsqrt.pop %v4559
    %v4561 = vmul.f32 %v4553, %v4560
    %v4562 = vld [vmem:[#allocation5 + $0x3b0] sm:$0x1]
    %v4563 = vlaneseq
    %v4564 = vshrl.u32 %v4563, 7
    %v4565 = vsub.s32 0, %v4564
    %v4566 = vrot.slane %v4562, %v4565
    %v4567 = vmul.f32 %v4561, %v4566
    %v4568 = vld [vmem:[#allocation5 + $0x3a8] sm:$0x1]
    %v4569 = vlaneseq
    %v4570 = vshrl.u32 %v4569, 7
    %v4571 = vsub.s32 0, %v4570
    %v4572 = vrot.slane %v4568, %v4571
    %v4573 = vadd.f32 %v4567, %v4572
    %v4574 = vld [vmem:[#allocation5 + $0x3b8] sm:$0xff]
    %v4575 = vld [vmem:[#allocation5 + $0x398] sm:$0x1]
    %v4576 = vlaneseq
    %v4577 = vshrl.u32 %v4576, 7
    %v4578 = vsub.s32 0, %v4577
    %v4579 = vrot.slane %v4575, %v4578
    %v4581 = vsel %vm276, %v4573, 0
    %4583 = vmatprep.subr.mxu0 0.0
    %4584 = vmatpush1.msra.mxu0 %v4574
    %4585 = vmatprep.subr.mxu0 0.0
    %4586 = vmatpush1.msra.mxu0 0.0
    %4587 = vmatprep.subr.mxu0 0.0
    %4588 = vmatpush1.msra.mxu0 0.0
    %4589 = vmatprep.subr.mxu0 0.0
    %4590 = vmatpush1.msra.mxu0 0.0
    %4591 = vmatprep.subr.mxu0 0.0
    %4592 = vmatpush1.msra.mxu0 0.0
    %4593 = vmatprep.subr.mxu0 0.0
    %4594 = vmatpush1.msra.mxu0 0.0
    %4595 = vmatprep.subr.mxu0 0.0
    %4596 = vmatpush1.msra.mxu0 0.0
    %4597 = vmatprep.subr.mxu0 0.0
    %4598 = vmatpush1.msra.mxu0 0.0
    %4599 = vmatprep.subr.mxu0 0.0
    %4600 = vmatpush1.msra.mxu0 0.0
    %4601 = vmatprep.subr.mxu0 0.0
    %4602 = vmatpush1.msra.mxu0 0.0
    %4603 = vmatprep.subr.mxu0 0.0
    %4604 = vmatpush1.msra.mxu0 0.0
    %4605 = vmatprep.subr.mxu0 0.0
    %4606 = vmatpush1.msra.mxu0 0.0
    %4607 = vmatprep.subr.mxu0 0.0
    %4608 = vmatpush1.msra.mxu0 0.0
    %4609 = vmatprep.subr.mxu0 0.0
    %4610 = vmatpush1.msra.mxu0 0.0
    %4611 = vmatprep.subr.mxu0 0.0
    %4612 = vmatpush1.msra.mxu0 0.0
    %4613 = vmatprep.subr.mxu0 0.0
    %4614 = vmatpush1.msra.mxu0 0.0
    %4615 = vmatprep.subr.mxu0 0.0
    %4616 = vmatpush1.msra.mxu0 0.0
    %4617 = vmatprep.subr.mxu0 0.0
    %4618 = vmatpush1.msra.mxu0 0.0
    %4619 = vmatprep.subr.mxu0 0.0
    %4620 = vmatpush1.msra.mxu0 0.0
    %4621 = vmatprep.subr.mxu0 0.0
    %4622 = vmatpush1.msra.mxu0 0.0
    %4623 = vmatprep.subr.mxu0 0.0
    %4624 = vmatpush1.msra.mxu0 0.0
    %4625 = vmatprep.subr.mxu0 0.0
    %4626 = vmatpush1.msra.mxu0 0.0
    %4627 = vmatprep.subr.mxu0 0.0
    %4628 = vmatpush1.msra.mxu0 0.0
    %4629 = vmatprep.subr.mxu0 0.0
    %4630 = vmatpush1.msra.mxu0 0.0
    %4631 = vmatprep.subr.mxu0 0.0
    %4632 = vmatpush1.msra.mxu0 0.0
    %4633 = vmatprep.subr.mxu0 0.0
    %4634 = vmatpush1.msra.mxu0 0.0
    %4635 = vmatprep.subr.mxu0 0.0
    %4636 = vmatpush1.msra.mxu0 0.0
    %4637 = vmatprep.subr.mxu0 0.0
    %4638 = vmatpush1.msra.mxu0 0.0
    %4639 = vmatprep.subr.mxu0 0.0
    %4640 = vmatpush1.msra.mxu0 0.0
    %4641 = vmatprep.subr.mxu0 0.0
    %4642 = vmatpush1.msra.mxu0 0.0
    %4643 = vmatprep.subr.mxu0 0.0
    %4644 = vmatpush1.msra.mxu0 0.0
    %4645 = vmatprep.subr.mxu0 0.0
    %4646 = vmatpush1.msra.mxu0 0.0
    %4647 = vmatprep.mubr.f32.mxu0 0.0
    %4648 = vmatmul.mubr.f32.gmra.mrb[0].mxu0 %v4581
    %v4649 = vpop.f32.mrb[0].mxu0
    %v4650 = vadd.f32 %v4579, %v4649
    %v4651 = vpop.f32.mrb[0].mxu0
    %4652 = vdwg.mxu0
    %v4653 = vmul.f32 %v4650, 0.5
    %v4654 = vmul.f32 %v4650, 0.70710677
    %vm4655 = vcmp.ge.f32.partialorder %v4654, 0.0
    %v4656 = vsel %vm4655, 1.0, -1.0
    %v4657 = vand.u32 2147483647, %v4654
    %v4658 = vmul.f32 %v4657, 0.3275911
    %v4659 = vadd.f32 %v4658, 1.0
    %v4660 = vrcp.pop %v4659
    %v4661 = vmul.f32 1.0, %v4660
    %v4662 = vmul.f32 %v4661, 1.0614054
    %v4663 = vadd.f32 %v4662, -1.4531521
    %v4664 = vmul.f32 %v4663, %v4661
    %v4665 = vadd.f32 %v4664, 1.4214138
    %v4666 = vmul.f32 %v4665, %v4661
    %v4667 = vadd.f32 %v4666, -0.28449672
    %v4668 = vmul.f32 %v4667, %v4661
    %v4669 = vadd.f32 %v4668, 0.2548296
    %v4670 = vmul.f32 %v4669, %v4661
    %v4671 = vsub.f32 0.0, %v4657
    %v4672 = vmul.f32 %v4671, %v4657
    %v4673 = vmul.f32 %v4672, 1.442695
    %v4674 = vpow.pop %v4673
    %v4675 = vmul.f32 %v4670, %v4674
    %v4676 = vsub.f32 1.0, %v4675
    %v4677 = vmul.f32 %v4656, %v4676
    %v4678 = vadd.f32 %v4677, 1.0
    %v4679 = vmul.f32 %v4653, %v4678
    %v4680 = vld [vmem:[#allocation5 + $0x3c0] sm:$0xff]
    %v4681 = vld [vmem:[#allocation5 + $0x3c8] sm:$0xff]
    %v4682 = vld [vmem:[#allocation5 + $0x3a0] sm:$0x1]
    %v4683 = vlaneseq
    %v4684 = vshrl.u32 %v4683, 7
    %v4685 = vsub.s32 0, %v4684
    %v4686 = vrot.slane %v4682, %v4685
    %v4688 = vsel %vm198, %v4679, 0
    %4690 = vmatprep.subr.mxu0 0.0
    %4691 = vmatpush1.msra.mxu0 %v4680
    %4692 = vmatprep.subr.mxu0 0.0
    %4693 = vmatpush1.msra.mxu0 %v4681
    %4694 = vmatprep.subr.mxu0 0.0
    %4695 = vmatpush1.msra.mxu0 0.0
    %4696 = vmatprep.subr.mxu0 0.0
    %4697 = vmatpush1.msra.mxu0 0.0
    %4698 = vmatprep.subr.mxu0 0.0
    %4699 = vmatpush1.msra.mxu0 0.0
    %4700 = vmatprep.subr.mxu0 0.0
    %4701 = vmatpush1.msra.mxu0 0.0
    %4702 = vmatprep.subr.mxu0 0.0
    %4703 = vmatpush1.msra.mxu0 0.0
    %4704 = vmatprep.subr.mxu0 0.0
    %4705 = vmatpush1.msra.mxu0 0.0
    %4706 = vmatprep.subr.mxu0 0.0
    %4707 = vmatpush1.msra.mxu0 0.0
    %4708 = vmatprep.subr.mxu0 0.0
    %4709 = vmatpush1.msra.mxu0 0.0
    %4710 = vmatprep.subr.mxu0 0.0
    %4711 = vmatpush1.msra.mxu0 0.0
    %4712 = vmatprep.subr.mxu0 0.0
    %4713 = vmatpush1.msra.mxu0 0.0
    %4714 = vmatprep.subr.mxu0 0.0
    %4715 = vmatpush1.msra.mxu0 0.0
    %4716 = vmatprep.subr.mxu0 0.0
    %4717 = vmatpush1.msra.mxu0 0.0
    %4718 = vmatprep.subr.mxu0 0.0
    %4719 = vmatpush1.msra.mxu0 0.0
    %4720 = vmatprep.subr.mxu0 0.0
    %4721 = vmatpush1.msra.mxu0 0.0
    %4722 = vmatprep.subr.mxu0 0.0
    %4723 = vmatpush1.msra.mxu0 0.0
    %4724 = vmatprep.subr.mxu0 0.0
    %4725 = vmatpush1.msra.mxu0 0.0
    %4726 = vmatprep.subr.mxu0 0.0
    %4727 = vmatpush1.msra.mxu0 0.0
    %4728 = vmatprep.subr.mxu0 0.0
    %4729 = vmatpush1.msra.mxu0 0.0
    %4730 = vmatprep.subr.mxu0 0.0
    %4731 = vmatpush1.msra.mxu0 0.0
    %4732 = vmatprep.subr.mxu0 0.0
    %4733 = vmatpush1.msra.mxu0 0.0
    %4734 = vmatprep.subr.mxu0 0.0
    %4735 = vmatpush1.msra.mxu0 0.0
    %4736 = vmatprep.subr.mxu0 0.0
    %4737 = vmatpush1.msra.mxu0 0.0
    %4738 = vmatprep.subr.mxu0 0.0
    %4739 = vmatpush1.msra.mxu0 0.0
    %4740 = vmatprep.subr.mxu0 0.0
    %4741 = vmatpush1.msra.mxu0 0.0
    %4742 = vmatprep.subr.mxu0 0.0
    %4743 = vmatpush1.msra.mxu0 0.0
    %4744 = vmatprep.subr.mxu0 0.0
    %4745 = vmatpush1.msra.mxu0 0.0
    %4746 = vmatprep.subr.mxu0 0.0
    %4747 = vmatpush1.msra.mxu0 0.0
    %4748 = vmatprep.subr.mxu0 0.0
    %4749 = vmatpush1.msra.mxu0 0.0
    %4750 = vmatprep.subr.mxu0 0.0
    %4751 = vmatpush1.msra.mxu0 0.0
    %4752 = vmatprep.subr.mxu0 0.0
    %4753 = vmatpush1.msra.mxu0 0.0
    %4754 = vmatprep.mubr.f32.mxu0 0.0
    %4755 = vmatmul.mubr.f32.gmra.mrb[0].mxu0 %v4688
    %v4756 = vpop.f32.mrb[0].mxu0
    %v4757 = vadd.f32 %v4686, %v4756
    %v4758 = vpop.f32.mrb[0].mxu0
    %4759 = vdwg.mxu0
    %v4760 = vadd.f32 %v4757, %v4540
    %v4761 = vld [vmem:[#allocation5 + $0x3d0] sm:$0xff]
    %v4763 = vsel %vm276, %v4760, 0
    %4765 = vmatprep.subr.mxu0 0.0
    %4766 = vmatpush1.msra.mxu0 %v4761
    %4767 = vmatprep.subr.mxu0 0.0
    %4768 = vmatpush1.msra.mxu0 0.0
    %4769 = vmatprep.subr.mxu0 0.0
    %4770 = vmatpush1.msra.mxu0 0.0
    %4771 = vmatprep.subr.mxu0 0.0
    %4772 = vmatpush1.msra.mxu0 0.0
    %4773 = vmatprep.subr.mxu0 0.0
    %4774 = vmatpush1.msra.mxu0 0.0
    %4775 = vmatprep.subr.mxu0 0.0
    %4776 = vmatpush1.msra.mxu0 0.0
    %4777 = vmatprep.subr.mxu0 0.0
    %4778 = vmatpush1.msra.mxu0 0.0
    %4779 = vmatprep.subr.mxu0 0.0
    %4780 = vmatpush1.msra.mxu0 0.0
    %4781 = vmatprep.subr.mxu0 0.0
    %4782 = vmatpush1.msra.mxu0 0.0
    %4783 = vmatprep.subr.mxu0 0.0
    %4784 = vmatpush1.msra.mxu0 0.0
    %4785 = vmatprep.subr.mxu0 0.0
    %4786 = vmatpush1.msra.mxu0 0.0
    %4787 = vmatprep.subr.mxu0 0.0
    %4788 = vmatpush1.msra.mxu0 0.0
    %4789 = vmatprep.subr.mxu0 0.0
    %4790 = vmatpush1.msra.mxu0 0.0
    %4791 = vmatprep.subr.mxu0 0.0
    %4792 = vmatpush1.msra.mxu0 0.0
    %4793 = vmatprep.subr.mxu0 0.0
    %4794 = vmatpush1.msra.mxu0 0.0
    %4795 = vmatprep.subr.mxu0 0.0
    %4796 = vmatpush1.msra.mxu0 0.0
    %4797 = vmatprep.subr.mxu0 0.0
    %4798 = vmatpush1.msra.mxu0 0.0
    %4799 = vmatprep.subr.mxu0 0.0
    %4800 = vmatpush1.msra.mxu0 0.0
    %4801 = vmatprep.subr.mxu0 0.0
    %4802 = vmatpush1.msra.mxu0 0.0
    %4803 = vmatprep.subr.mxu0 0.0
    %4804 = vmatpush1.msra.mxu0 0.0
    %4805 = vmatprep.subr.mxu0 0.0
    %4806 = vmatpush1.msra.mxu0 0.0
    %4807 = vmatprep.subr.mxu0 0.0
    %4808 = vmatpush1.msra.mxu0 0.0
    %4809 = vmatprep.subr.mxu0 0.0
    %4810 = vmatpush1.msra.mxu0 0.0
    %4811 = vmatprep.subr.mxu0 0.0
    %4812 = vmatpush1.msra.mxu0 0.0
    %4813 = vmatprep.subr.mxu0 0.0
    %4814 = vmatpush1.msra.mxu0 0.0
    %4815 = vmatprep.subr.mxu0 0.0
    %4816 = vmatpush1.msra.mxu0 0.0
    %4817 = vmatprep.subr.mxu0 0.0
    %4818 = vmatpush1.msra.mxu0 0.0
    %4819 = vmatprep.subr.mxu0 0.0
    %4820 = vmatpush1.msra.mxu0 0.0
    %4821 = vmatprep.subr.mxu0 0.0
    %4822 = vmatpush1.msra.mxu0 0.0
    %4823 = vmatprep.subr.mxu0 0.0
    %4824 = vmatpush1.msra.mxu0 0.0
    %4825 = vmatprep.subr.mxu0 0.0
    %4826 = vmatpush1.msra.mxu0 0.0
    %4827 = vmatprep.subr.mxu0 0.0
    %4828 = vmatpush1.msra.mxu0 0.0
    %4829 = vmatprep.mubr.f32.mxu0 0.0
    %4830 = vmatmul.mubr.f32.gmra.mrb[0].mxu0 %v4763
    %v4831 = vpop.f32.mrb[0].mxu0
    %v4832 = vadd.f32 0.0, %v4831
    %v4833 = vpop.f32.mrb[0].mxu0
    %4834 = vdwg.mxu0
    %v4836 = vsel %vm198, %v3658, 0
    %4838 = vmatprep.subr.mxu0 0.0
    %4839 = vmatpush1.msra.mxu0 %v3661
    %4840 = vmatprep.subr.mxu0 0.0
    %4841 = vmatpush1.msra.mxu0 %v3662
    %4842 = vmatprep.subr.mxu0 0.0
    %4843 = vmatpush1.msra.mxu0 0.0
    %4844 = vmatprep.subr.mxu0 0.0
    %4845 = vmatpush1.msra.mxu0 0.0
    %4846 = vmatprep.subr.mxu0 0.0
    %4847 = vmatpush1.msra.mxu0 0.0
    %4848 = vmatprep.subr.mxu0 0.0
    %4849 = vmatpush1.msra.mxu0 0.0
    %4850 = vmatprep.subr.mxu0 0.0
    %4851 = vmatpush1.msra.mxu0 0.0
    %4852 = vmatprep.subr.mxu0 0.0
    %4853 = vmatpush1.msra.mxu0 0.0
    %4854 = vmatprep.subr.mxu0 0.0
    %4855 = vmatpush1.msra.mxu0 0.0
    %4856 = vmatprep.subr.mxu0 0.0
    %4857 = vmatpush1.msra.mxu0 0.0
    %4858 = vmatprep.subr.mxu0 0.0
    %4859 = vmatpush1.msra.mxu0 0.0
    %4860 = vmatprep.subr.mxu0 0.0
    %4861 = vmatpush1.msra.mxu0 0.0
    %4862 = vmatprep.subr.mxu0 0.0
    %4863 = vmatpush1.msra.mxu0 0.0
    %4864 = vmatprep.subr.mxu0 0.0
    %4865 = vmatpush1.msra.mxu0 0.0
    %4866 = vmatprep.subr.mxu0 0.0
    %4867 = vmatpush1.msra.mxu0 0.0
    %4868 = vmatprep.subr.mxu0 0.0
    %4869 = vmatpush1.msra.mxu0 0.0
    %4870 = vmatprep.subr.mxu0 0.0
    %4871 = vmatpush1.msra.mxu0 0.0
    %4872 = vmatprep.subr.mxu0 0.0
    %4873 = vmatpush1.msra.mxu0 0.0
    %4874 = vmatprep.subr.mxu0 0.0
    %4875 = vmatpush1.msra.mxu0 0.0
    %4876 = vmatprep.subr.mxu0 0.0
    %4877 = vmatpush1.msra.mxu0 0.0
    %4878 = vmatprep.subr.mxu0 0.0
    %4879 = vmatpush1.msra.mxu0 0.0
    %4880 = vmatprep.subr.mxu0 0.0
    %4881 = vmatpush1.msra.mxu0 0.0
    %4882 = vmatprep.subr.mxu0 0.0
    %4883 = vmatpush1.msra.mxu0 0.0
    %4884 = vmatprep.subr.mxu0 0.0
    %4885 = vmatpush1.msra.mxu0 0.0
    %4886 = vmatprep.subr.mxu0 0.0
    %4887 = vmatpush1.msra.mxu0 0.0
    %4888 = vmatprep.subr.mxu0 0.0
    %4889 = vmatpush1.msra.mxu0 0.0
    %4890 = vmatprep.subr.mxu0 0.0
    %4891 = vmatpush1.msra.mxu0 0.0
    %4892 = vmatprep.subr.mxu0 0.0
    %4893 = vmatpush1.msra.mxu0 0.0
    %4894 = vmatprep.subr.mxu0 0.0
    %4895 = vmatpush1.msra.mxu0 0.0
    %4896 = vmatprep.subr.mxu0 0.0
    %4897 = vmatpush1.msra.mxu0 0.0
    %4898 = vmatprep.subr.mxu0 0.0
    %4899 = vmatpush1.msra.mxu0 0.0
    %4900 = vmatprep.subr.mxu0 0.0
    %4901 = vmatpush1.msra.mxu0 0.0
    %4902 = vmatprep.mubr.f32.mxu0 0.0
    %4903 = vmatmul.mubr.f32.gmra.mrb[0].mxu0 %v4836
    %v4904 = vpop.f32.mrb[0].mxu0
    %v4905 = vadd.f32 0.0, %v4904
    %v4906 = vpop.f32.mrb[0].mxu0
    %4907 = vdwg.mxu0
    %4908 = vmatprep.subr.mxu0 0.0
    %4909 = vmatpush1.msra.mxu0 %v3663
    %4910 = vmatprep.subr.mxu0 0.0
    %4911 = vmatpush1.msra.mxu0 %v3664
    %4912 = vmatprep.subr.mxu0 0.0
    %4913 = vmatpush1.msra.mxu0 0.0
    %4914 = vmatprep.subr.mxu0 0.0
    %4915 = vmatpush1.msra.mxu0 0.0
    %4916 = vmatprep.subr.mxu0 0.0
    %4917 = vmatpush1.msra.mxu0 0.0
    %4918 = vmatprep.subr.mxu0 0.0
    %4919 = vmatpush1.msra.mxu0 0.0
    %4920 = vmatprep.subr.mxu0 0.0
    %4921 = vmatpush1.msra.mxu0 0.0
    %4922 = vmatprep.subr.mxu0 0.0
    %4923 = vmatpush1.msra.mxu0 0.0
    %4924 = vmatprep.subr.mxu0 0.0
    %4925 = vmatpush1.msra.mxu0 0.0
    %4926 = vmatprep.subr.mxu0 0.0
    %4927 = vmatpush1.msra.mxu0 0.0
    %4928 = vmatprep.subr.mxu0 0.0
    %4929 = vmatpush1.msra.mxu0 0.0
    %4930 = vmatprep.subr.mxu0 0.0
    %4931 = vmatpush1.msra.mxu0 0.0
    %4932 = vmatprep.subr.mxu0 0.0
    %4933 = vmatpush1.msra.mxu0 0.0
    %4934 = vmatprep.subr.mxu0 0.0
    %4935 = vmatpush1.msra.mxu0 0.0
    %4936 = vmatprep.subr.mxu0 0.0
    %4937 = vmatpush1.msra.mxu0 0.0
    %4938 = vmatprep.subr.mxu0 0.0
    %4939 = vmatpush1.msra.mxu0 0.0
    %4940 = vmatprep.subr.mxu0 0.0
    %4941 = vmatpush1.msra.mxu0 0.0
    %4942 = vmatprep.subr.mxu0 0.0
    %4943 = vmatpush1.msra.mxu0 0.0
    %4944 = vmatprep.subr.mxu0 0.0
    %4945 = vmatpush1.msra.mxu0 0.0
    %4946 = vmatprep.subr.mxu0 0.0
    %4947 = vmatpush1.msra.mxu0 0.0
    %4948 = vmatprep.subr.mxu0 0.0
    %4949 = vmatpush1.msra.mxu0 0.0
    %4950 = vmatprep.subr.mxu0 0.0
    %4951 = vmatpush1.msra.mxu0 0.0
    %4952 = vmatprep.subr.mxu0 0.0
    %4953 = vmatpush1.msra.mxu0 0.0
    %4954 = vmatprep.subr.mxu0 0.0
    %4955 = vmatpush1.msra.mxu0 0.0
    %4956 = vmatprep.subr.mxu0 0.0
    %4957 = vmatpush1.msra.mxu0 0.0
    %4958 = vmatprep.subr.mxu0 0.0
    %4959 = vmatpush1.msra.mxu0 0.0
    %4960 = vmatprep.subr.mxu0 0.0
    %4961 = vmatpush1.msra.mxu0 0.0
    %4962 = vmatprep.subr.mxu0 0.0
    %4963 = vmatpush1.msra.mxu0 0.0
    %4964 = vmatprep.subr.mxu0 0.0
    %4965 = vmatpush1.msra.mxu0 0.0
    %4966 = vmatprep.subr.mxu0 0.0
    %4967 = vmatpush1.msra.mxu0 0.0
    %4968 = vmatprep.subr.mxu0 0.0
    %4969 = vmatpush1.msra.mxu0 0.0
    %4970 = vmatprep.subr.mxu0 0.0
    %4971 = vmatpush1.msra.mxu0 0.0
    %4972 = vmatprep.mubr.f32.mxu0 0.0
    %4973 = vmatmul.mubr.f32.gmra.mrb[0].mxu0 %v4836
    %v4974 = vpop.f32.mrb[0].mxu0
    %v4975 = vadd.f32 0.0, %v4974
    %v4976 = vpop.f32.mrb[0].mxu0
    %4977 = vdwg.mxu0
    %v4978 = vmax.f32 %v4905, %v4975
    %v4979 = vld [vmem:[#allocation5 + $0x3f0] sm:$0xff]
    %v4981 = vsel %vm276, %v4978, 0
    %4983 = vmatprep.subr.mxu0 0.0
    %4984 = vmatpush1.msra.mxu0 %v4979
    %4985 = vmatprep.subr.mxu0 0.0
    %4986 = vmatpush1.msra.mxu0 0.0
    %4987 = vmatprep.subr.mxu0 0.0
    %4988 = vmatpush1.msra.mxu0 0.0
    %4989 = vmatprep.subr.mxu0 0.0
    %4990 = vmatpush1.msra.mxu0 0.0
    %4991 = vmatprep.subr.mxu0 0.0
    %4992 = vmatpush1.msra.mxu0 0.0
    %4993 = vmatprep.subr.mxu0 0.0
    %4994 = vmatpush1.msra.mxu0 0.0
    %4995 = vmatprep.subr.mxu0 0.0
    %4996 = vmatpush1.msra.mxu0 0.0
    %4997 = vmatprep.subr.mxu0 0.0
    %4998 = vmatpush1.msra.mxu0 0.0
    %4999 = vmatprep.subr.mxu0 0.0
    %5000 = vmatpush1.msra.mxu0 0.0
    %5001 = vmatprep.subr.mxu0 0.0
    %5002 = vmatpush1.msra.mxu0 0.0
    %5003 = vmatprep.subr.mxu0 0.0
    %5004 = vmatpush1.msra.mxu0 0.0
    %5005 = vmatprep.subr.mxu0 0.0
    %5006 = vmatpush1.msra.mxu0 0.0
    %5007 = vmatprep.subr.mxu0 0.0
    %5008 = vmatpush1.msra.mxu0 0.0
    %5009 = vmatprep.subr.mxu0 0.0
    %5010 = vmatpush1.msra.mxu0 0.0
    %5011 = vmatprep.subr.mxu0 0.0
    %5012 = vmatpush1.msra.mxu0 0.0
    %5013 = vmatprep.subr.mxu0 0.0
    %5014 = vmatpush1.msra.mxu0 0.0
    %5015 = vmatprep.subr.mxu0 0.0
    %5016 = vmatpush1.msra.mxu0 0.0
    %5017 = vmatprep.subr.mxu0 0.0
    %5018 = vmatpush1.msra.mxu0 0.0
    %5019 = vmatprep.subr.mxu0 0.0
    %5020 = vmatpush1.msra.mxu0 0.0
    %5021 = vmatprep.subr.mxu0 0.0
    %5022 = vmatpush1.msra.mxu0 0.0
    %5023 = vmatprep.subr.mxu0 0.0
    %5024 = vmatpush1.msra.mxu0 0.0
    %5025 = vmatprep.subr.mxu0 0.0
    %5026 = vmatpush1.msra.mxu0 0.0
    %5027 = vmatprep.subr.mxu0 0.0
    %5028 = vmatpush1.msra.mxu0 0.0
    %5029 = vmatprep.subr.mxu0 0.0
    %5030 = vmatpush1.msra.mxu0 0.0
    %5031 = vmatprep.subr.mxu0 0.0
    %5032 = vmatpush1.msra.mxu0 0.0
    %5033 = vmatprep.subr.mxu0 0.0
    %5034 = vmatpush1.msra.mxu0 0.0
    %5035 = vmatprep.subr.mxu0 0.0
    %5036 = vmatpush1.msra.mxu0 0.0
    %5037 = vmatprep.subr.mxu0 0.0
    %5038 = vmatpush1.msra.mxu0 0.0
    %5039 = vmatprep.subr.mxu0 0.0
    %5040 = vmatpush1.msra.mxu0 0.0
    %5041 = vmatprep.subr.mxu0 0.0
    %5042 = vmatpush1.msra.mxu0 0.0
    %5043 = vmatprep.subr.mxu0 0.0
    %5044 = vmatpush1.msra.mxu0 0.0
    %5045 = vmatprep.subr.mxu0 0.0
    %5046 = vmatpush1.msra.mxu0 0.0
    %5047 = vmatprep.mubr.f32.mxu0 0.0
    %5048 = vmatmul.mubr.f32.gmra.mrb[0].mxu0 %v4981
    %v5049 = vpop.f32.mrb[0].mxu0
    %v5050 = vadd.f32 0.0, %v5049
    %v5051 = vpop.f32.mrb[0].mxu0
    %5052 = vdwg.mxu0
    %5054 = vrot.lane.b32.xlu0 %v5050, 112
    %v5055 = vpop.permute.xlu0 %5054
    %v5056 = vsel %vm276, %v5050, 0
    %v5058 = vsel %vm276, %v5055, 0
    %5060 = vmatprep.subr.mxu0 0.0
    %5061 = vmatpush1.xpose.msra.mxu0 %v5058
    %5062 = vmatprep.subr.mxu0 0.0
    %5063 = vmatpush1.xpose.msra.mxu0 0.0
    %5064 = vmatprep.subr.mxu0 0.0
    %5065 = vmatpush1.xpose.msra.mxu0 0.0
    %5066 = vmatprep.subr.mxu0 0.0
    %5067 = vmatpush1.xpose.msra.mxu0 0.0
    %5068 = vmatprep.subr.mxu0 0.0
    %5069 = vmatpush1.xpose.msra.mxu0 0.0
    %5070 = vmatprep.subr.mxu0 0.0
    %5071 = vmatpush1.xpose.msra.mxu0 0.0
    %5072 = vmatprep.subr.mxu0 0.0
    %5073 = vmatpush1.xpose.msra.mxu0 0.0
    %5074 = vmatprep.subr.mxu0 0.0
    %5075 = vmatpush1.xpose.msra.mxu0 0.0
    %5076 = vmatprep.subr.mxu0 0.0
    %5077 = vmatpush1.xpose.msra.mxu0 0.0
    %5078 = vmatprep.subr.mxu0 0.0
    %5079 = vmatpush1.xpose.msra.mxu0 0.0
    %5080 = vmatprep.subr.mxu0 0.0
    %5081 = vmatpush1.xpose.msra.mxu0 0.0
    %5082 = vmatprep.subr.mxu0 0.0
    %5083 = vmatpush1.xpose.msra.mxu0 0.0
    %5084 = vmatprep.subr.mxu0 0.0
    %5085 = vmatpush1.xpose.msra.mxu0 0.0
    %5086 = vmatprep.subr.mxu0 0.0
    %5087 = vmatpush1.xpose.msra.mxu0 0.0
    %5088 = vmatprep.subr.mxu0 0.0
    %5089 = vmatpush1.xpose.msra.mxu0 0.0
    %5090 = vmatprep.subr.mxu0 0.0
    %5091 = vmatpush1.xpose.msra.mxu0 0.0
    %5092 = vmatprep.subr.mxu0 0.0
    %5093 = vmatpush1.xpose.msra.mxu0 0.0
    %5094 = vmatprep.subr.mxu0 0.0
    %5095 = vmatpush1.xpose.msra.mxu0 0.0
    %5096 = vmatprep.subr.mxu0 0.0
    %5097 = vmatpush1.xpose.msra.mxu0 0.0
    %5098 = vmatprep.subr.mxu0 0.0
    %5099 = vmatpush1.xpose.msra.mxu0 0.0
    %5100 = vmatprep.subr.mxu0 0.0
    %5101 = vmatpush1.xpose.msra.mxu0 0.0
    %5102 = vmatprep.subr.mxu0 0.0
    %5103 = vmatpush1.xpose.msra.mxu0 0.0
    %5104 = vmatprep.subr.mxu0 0.0
    %5105 = vmatpush1.xpose.msra.mxu0 0.0
    %5106 = vmatprep.subr.mxu0 0.0
    %5107 = vmatpush1.xpose.msra.mxu0 0.0
    %5108 = vmatprep.subr.mxu0 0.0
    %5109 = vmatpush1.xpose.msra.mxu0 0.0
    %5110 = vmatprep.subr.mxu0 0.0
    %5111 = vmatpush1.xpose.msra.mxu0 0.0
    %5112 = vmatprep.subr.mxu0 0.0
    %5113 = vmatpush1.xpose.msra.mxu0 0.0
    %5114 = vmatprep.subr.mxu0 0.0
    %5115 = vmatpush1.xpose.msra.mxu0 0.0
    %5116 = vmatprep.subr.mxu0 0.0
    %5117 = vmatpush1.xpose.msra.mxu0 0.0
    %5118 = vmatprep.subr.mxu0 0.0
    %5119 = vmatpush1.xpose.msra.mxu0 0.0
    %5120 = vmatprep.subr.mxu0 0.0
    %5121 = vmatpush1.xpose.msra.mxu0 0.0
    %5122 = vmatprep.subr.mxu0 0.0
    %5123 = vmatpush1.xpose.msra.mxu0 0.0
    %5124 = vmatprep.mubr.f32.mxu0 0.0
    %5125 = vmatmul.mubr.f32.gmra.mrb[0].mxu0 %v5056
    %v5126 = vpop.f32.mrb[0].mxu0
    %v5127 = vadd.f32 %v1449, %v5126
    %v5128 = vpop.f32.mrb[0].mxu0
    %5129 = vdwg.mxu0
    %v5130 = vsel %vm276, %v5127, -inf
    %5131 = vmax.xlane.f32.xlu0 %v5130
    %v5132 = vpop.xlane.xlu0 %5131
    %v5133 = vsub.f32 %v5127, %v5132
    %v5134 = vmul.f32 %v5133, 1.442695
    %v5135 = vpow.pop %v5134
    %v5136 = vsel %vm276, %v5135, 0.0
    %5137 = vadd.xlane.f32.xlu0 %v5136
    %v5138 = vpop.xlane.xlu0 %5137
    %v5139 = vrcp.pop %v5138
    %v5140 = vmul.f32 %v5135, %v5139
    %5141 = vrot.lane.b32.xlu0 %v5050, 96
    %v5142 = vpop.permute.xlu0 %5141
    %v5145 = vsel %vm276, %v5140, 0
    %5147 = vmatprep.subr.mxu0 0.0
    %5148 = vmatpush1.msra.mxu0 %v5142
    %5149 = vmatprep.subr.mxu0 0.0
    %5150 = vmatpush1.msra.mxu0 0.0
    %5151 = vmatprep.subr.mxu0 0.0
    %5152 = vmatpush1.msra.mxu0 0.0
    %5153 = vmatprep.subr.mxu0 0.0
    %5154 = vmatpush1.msra.mxu0 0.0
    %5155 = vmatprep.subr.mxu0 0.0
    %5156 = vmatpush1.msra.mxu0 0.0
    %5157 = vmatprep.subr.mxu0 0.0
    %5158 = vmatpush1.msra.mxu0 0.0
    %5159 = vmatprep.subr.mxu0 0.0
    %5160 = vmatpush1.msra.mxu0 0.0
    %5161 = vmatprep.subr.mxu0 0.0
    %5162 = vmatpush1.msra.mxu0 0.0
    %5163 = vmatprep.subr.mxu0 0.0
    %5164 = vmatpush1.msra.mxu0 0.0
    %5165 = vmatprep.subr.mxu0 0.0
    %5166 = vmatpush1.msra.mxu0 0.0
    %5167 = vmatprep.subr.mxu0 0.0
    %5168 = vmatpush1.msra.mxu0 0.0
    %5169 = vmatprep.subr.mxu0 0.0
    %5170 = vmatpush1.msra.mxu0 0.0
    %5171 = vmatprep.subr.mxu0 0.0
    %5172 = vmatpush1.msra.mxu0 0.0
    %5173 = vmatprep.subr.mxu0 0.0
    %5174 = vmatpush1.msra.mxu0 0.0
    %5175 = vmatprep.subr.mxu0 0.0
    %5176 = vmatpush1.msra.mxu0 0.0
    %5177 = vmatprep.subr.mxu0 0.0
    %5178 = vmatpush1.msra.mxu0 0.0
    %5179 = vmatprep.subr.mxu0 0.0
    %5180 = vmatpush1.msra.mxu0 0.0
    %5181 = vmatprep.subr.mxu0 0.0
    %5182 = vmatpush1.msra.mxu0 0.0
    %5183 = vmatprep.subr.mxu0 0.0
    %5184 = vmatpush1.msra.mxu0 0.0
    %5185 = vmatprep.subr.mxu0 0.0
    %5186 = vmatpush1.msra.mxu0 0.0
    %5187 = vmatprep.subr.mxu0 0.0
    %5188 = vmatpush1.msra.mxu0 0.0
    %5189 = vmatprep.subr.mxu0 0.0
    %5190 = vmatpush1.msra.mxu0 0.0
    %5191 = vmatprep.subr.mxu0 0.0
    %5192 = vmatpush1.msra.mxu0 0.0
    %5193 = vmatprep.subr.mxu0 0.0
    %5194 = vmatpush1.msra.mxu0 0.0
    %5195 = vmatprep.subr.mxu0 0.0
    %5196 = vmatpush1.msra.mxu0 0.0
    %5197 = vmatprep.subr.mxu0 0.0
    %5198 = vmatpush1.msra.mxu0 0.0
    %5199 = vmatprep.subr.mxu0 0.0
    %5200 = vmatpush1.msra.mxu0 0.0
    %5201 = vmatprep.subr.mxu0 0.0
    %5202 = vmatpush1.msra.mxu0 0.0
    %5203 = vmatprep.subr.mxu0 0.0
    %5204 = vmatpush1.msra.mxu0 0.0
    %5205 = vmatprep.subr.mxu0 0.0
    %5206 = vmatpush1.msra.mxu0 0.0
    %5207 = vmatprep.subr.mxu0 0.0
    %5208 = vmatpush1.msra.mxu0 0.0
    %5209 = vmatprep.subr.mxu0 0.0
    %5210 = vmatpush1.msra.mxu0 0.0
    %5211 = vmatprep.mubr.f32.mxu0 0.0
    %5212 = vmatmul.mubr.f32.gmra.mrb[0].mxu0 %v5145
    %v5213 = vpop.f32.mrb[0].mxu0
    %v5214 = vadd.f32 0.0, %v5213
    %v5215 = vpop.f32.mrb[0].mxu0
    %5216 = vdwg.mxu0
    %5217 = vrot.lane.b32.xlu0 %v5050, 120
    %v5218 = vpop.permute.xlu0 %5217
    %5219 = vrot.lane.b32.xlu0 %v5050, 104
    %v5220 = vpop.permute.xlu0 %5219
    %v5221 = vsel %vm276, %v5218, 0
    %v5223 = vsel %vm276, %v5220, 0
    %5225 = vmatprep.subr.mxu0 0.0
    %5226 = vmatpush1.xpose.msra.mxu0 %v5223
    %5227 = vmatprep.subr.mxu0 0.0
    %5228 = vmatpush1.xpose.msra.mxu0 0.0
    %5229 = vmatprep.subr.mxu0 0.0
    %5230 = vmatpush1.xpose.msra.mxu0 0.0
    %5231 = vmatprep.subr.mxu0 0.0
    %5232 = vmatpush1.xpose.msra.mxu0 0.0
    %5233 = vmatprep.subr.mxu0 0.0
    %5234 = vmatpush1.xpose.msra.mxu0 0.0
    %5235 = vmatprep.subr.mxu0 0.0
    %5236 = vmatpush1.xpose.msra.mxu0 0.0
    %5237 = vmatprep.subr.mxu0 0.0
    %5238 = vmatpush1.xpose.msra.mxu0 0.0
    %5239 = vmatprep.subr.mxu0 0.0
    %5240 = vmatpush1.xpose.msra.mxu0 0.0
    %5241 = vmatprep.subr.mxu0 0.0
    %5242 = vmatpush1.xpose.msra.mxu0 0.0
    %5243 = vmatprep.subr.mxu0 0.0
    %5244 = vmatpush1.xpose.msra.mxu0 0.0
    %5245 = vmatprep.subr.mxu0 0.0
    %5246 = vmatpush1.xpose.msra.mxu0 0.0
    %5247 = vmatprep.subr.mxu0 0.0
    %5248 = vmatpush1.xpose.msra.mxu0 0.0
    %5249 = vmatprep.subr.mxu0 0.0
    %5250 = vmatpush1.xpose.msra.mxu0 0.0
    %5251 = vmatprep.subr.mxu0 0.0
    %5252 = vmatpush1.xpose.msra.mxu0 0.0
    %5253 = vmatprep.subr.mxu0 0.0
    %5254 = vmatpush1.xpose.msra.mxu0 0.0
    %5255 = vmatprep.subr.mxu0 0.0
    %5256 = vmatpush1.xpose.msra.mxu0 0.0
    %5257 = vmatprep.subr.mxu0 0.0
    %5258 = vmatpush1.xpose.msra.mxu0 0.0
    %5259 = vmatprep.subr.mxu0 0.0
    %5260 = vmatpush1.xpose.msra.mxu0 0.0
    %5261 = vmatprep.subr.mxu0 0.0
    %5262 = vmatpush1.xpose.msra.mxu0 0.0
    %5263 = vmatprep.subr.mxu0 0.0
    %5264 = vmatpush1.xpose.msra.mxu0 0.0
    %5265 = vmatprep.subr.mxu0 0.0
    %5266 = vmatpush1.xpose.msra.mxu0 0.0
    %5267 = vmatprep.subr.mxu0 0.0
    %5268 = vmatpush1.xpose.msra.mxu0 0.0
    %5269 = vmatprep.subr.mxu0 0.0
    %5270 = vmatpush1.xpose.msra.mxu0 0.0
    %5271 = vmatprep.subr.mxu0 0.0
    %5272 = vmatpush1.xpose.msra.mxu0 0.0
    %5273 = vmatprep.subr.mxu0 0.0
    %5274 = vmatpush1.xpose.msra.mxu0 0.0
    %5275 = vmatprep.subr.mxu0 0.0
    %5276 = vmatpush1.xpose.msra.mxu0 0.0
    %5277 = vmatprep.subr.mxu0 0.0
    %5278 = vmatpush1.xpose.msra.mxu0 0.0
    %5279 = vmatprep.subr.mxu0 0.0
    %5280 = vmatpush1.xpose.msra.mxu0 0.0
    %5281 = vmatprep.subr.mxu0 0.0
    %5282 = vmatpush1.xpose.msra.mxu0 0.0
    %5283 = vmatprep.subr.mxu0 0.0
    %5284 = vmatpush1.xpose.msra.mxu0 0.0
    %5285 = vmatprep.subr.mxu0 0.0
    %5286 = vmatpush1.xpose.msra.mxu0 0.0
    %5287 = vmatprep.subr.mxu0 0.0
    %5288 = vmatpush1.xpose.msra.mxu0 0.0
    %5289 = vmatprep.mubr.f32.mxu0 0.0
    %5290 = vmatmul.mubr.f32.gmra.mrb[0].mxu0 %v5221
    %v5291 = vpop.f32.mrb[0].mxu0
    %v5292 = vadd.f32 %v1449, %v5291
    %v5293 = vpop.f32.mrb[0].mxu0
    %5294 = vdwg.mxu0
    %v5295 = vsel %vm276, %v5292, -inf
    %5296 = vmax.xlane.f32.xlu0 %v5295
    %v5297 = vpop.xlane.xlu0 %5296
    %v5298 = vsub.f32 %v5292, %v5297
    %v5299 = vmul.f32 %v5298, 1.442695
    %v5300 = vpow.pop %v5299
    %v5301 = vsel %vm276, %v5300, 0.0
    %5302 = vadd.xlane.f32.xlu0 %v5301
    %v5303 = vpop.xlane.xlu0 %5302
    %v5304 = vrcp.pop %v5303
    %v5305 = vmul.f32 %v5300, %v5304
    %5306 = vrot.lane.b32.xlu0 %v5050, 88
    %v5307 = vpop.permute.xlu0 %5306
    %v5310 = vsel %vm276, %v5305, 0
    %5312 = vmatprep.subr.mxu0 0.0
    %5313 = vmatpush1.msra.mxu0 %v5307
    %5314 = vmatprep.subr.mxu0 0.0
    %5315 = vmatpush1.msra.mxu0 0.0
    %5316 = vmatprep.subr.mxu0 0.0
    %5317 = vmatpush1.msra.mxu0 0.0
    %5318 = vmatprep.subr.mxu0 0.0
    %5319 = vmatpush1.msra.mxu0 0.0
    %5320 = vmatprep.subr.mxu0 0.0
    %5321 = vmatpush1.msra.mxu0 0.0
    %5322 = vmatprep.subr.mxu0 0.0
    %5323 = vmatpush1.msra.mxu0 0.0
    %5324 = vmatprep.subr.mxu0 0.0
    %5325 = vmatpush1.msra.mxu0 0.0
    %5326 = vmatprep.subr.mxu0 0.0
    %5327 = vmatpush1.msra.mxu0 0.0
    %5328 = vmatprep.subr.mxu0 0.0
    %5329 = vmatpush1.msra.mxu0 0.0
    %5330 = vmatprep.subr.mxu0 0.0
    %5331 = vmatpush1.msra.mxu0 0.0
    %5332 = vmatprep.subr.mxu0 0.0
    %5333 = vmatpush1.msra.mxu0 0.0
    %5334 = vmatprep.subr.mxu0 0.0
    %5335 = vmatpush1.msra.mxu0 0.0
    %5336 = vmatprep.subr.mxu0 0.0
    %5337 = vmatpush1.msra.mxu0 0.0
    %5338 = vmatprep.subr.mxu0 0.0
    %5339 = vmatpush1.msra.mxu0 0.0
    %5340 = vmatprep.subr.mxu0 0.0
    %5341 = vmatpush1.msra.mxu0 0.0
    %5342 = vmatprep.subr.mxu0 0.0
    %5343 = vmatpush1.msra.mxu0 0.0
    %5344 = vmatprep.subr.mxu0 0.0
    %5345 = vmatpush1.msra.mxu0 0.0
    %5346 = vmatprep.subr.mxu0 0.0
    %5347 = vmatpush1.msra.mxu0 0.0
    %5348 = vmatprep.subr.mxu0 0.0
    %5349 = vmatpush1.msra.mxu0 0.0
    %5350 = vmatprep.subr.mxu0 0.0
    %5351 = vmatpush1.msra.mxu0 0.0
    %5352 = vmatprep.subr.mxu0 0.0
    %5353 = vmatpush1.msra.mxu0 0.0
    %5354 = vmatprep.subr.mxu0 0.0
    %5355 = vmatpush1.msra.mxu0 0.0
    %5356 = vmatprep.subr.mxu0 0.0
    %5357 = vmatpush1.msra.mxu0 0.0
    %5358 = vmatprep.subr.mxu0 0.0
    %5359 = vmatpush1.msra.mxu0 0.0
    %5360 = vmatprep.subr.mxu0 0.0
    %5361 = vmatpush1.msra.mxu0 0.0
    %5362 = vmatprep.subr.mxu0 0.0
    %5363 = vmatpush1.msra.mxu0 0.0
    %5364 = vmatprep.subr.mxu0 0.0
    %5365 = vmatpush1.msra.mxu0 0.0
    %5366 = vmatprep.subr.mxu0 0.0
    %5367 = vmatpush1.msra.mxu0 0.0
    %5368 = vmatprep.subr.mxu0 0.0
    %5369 = vmatpush1.msra.mxu0 0.0
    %5370 = vmatprep.subr.mxu0 0.0
    %5371 = vmatpush1.msra.mxu0 0.0
    %5372 = vmatprep.subr.mxu0 0.0
    %5373 = vmatpush1.msra.mxu0 0.0
    %5374 = vmatprep.subr.mxu0 0.0
    %5375 = vmatpush1.msra.mxu0 0.0
    %5376 = vmatprep.mubr.f32.mxu0 0.0
    %5377 = vmatmul.mubr.f32.gmra.mrb[0].mxu0 %v5310
    %v5378 = vpop.f32.mrb[0].mxu0
    %v5379 = vadd.f32 0.0, %v5378
    %v5380 = vpop.f32.mrb[0].mxu0
    %5381 = vdwg.mxu0
    %5383 = vrot.lane.b32.xlu0 %v5379, 8
    %v5384 = vpop.permute.xlu0 %5383
    %v5386 = vsel %vm276, %v5214, %v5384
    %v5387 = vld [vmem:[#allocation5 + $0x3e0] sm:$0xff]
    %v5388 = vld [vmem:[#allocation5 + $0x3e8] sm:$0xff]
    %v5389 = vld [vmem:[#allocation5 + $0x3d8] sm:$0x1]
    %v5390 = vlaneseq
    %v5391 = vshrl.u32 %v5390, 7
    %v5392 = vsub.s32 0, %v5391
    %v5393 = vrot.slane %v5389, %v5392
    %v5395 = vsel %vm198, %v5386, 0
    %5397 = vmatprep.subr.mxu0 0.0
    %5398 = vmatpush1.msra.mxu0 %v5387
    %5399 = vmatprep.subr.mxu0 0.0
    %5400 = vmatpush1.msra.mxu0 %v5388
    %5401 = vmatprep.subr.mxu0 0.0
    %5402 = vmatpush1.msra.mxu0 0.0
    %5403 = vmatprep.subr.mxu0 0.0
    %5404 = vmatpush1.msra.mxu0 0.0
    %5405 = vmatprep.subr.mxu0 0.0
    %5406 = vmatpush1.msra.mxu0 0.0
    %5407 = vmatprep.subr.mxu0 0.0
    %5408 = vmatpush1.msra.mxu0 0.0
    %5409 = vmatprep.subr.mxu0 0.0
    %5410 = vmatpush1.msra.mxu0 0.0
    %5411 = vmatprep.subr.mxu0 0.0
    %5412 = vmatpush1.msra.mxu0 0.0
    %5413 = vmatprep.subr.mxu0 0.0
    %5414 = vmatpush1.msra.mxu0 0.0
    %5415 = vmatprep.subr.mxu0 0.0
    %5416 = vmatpush1.msra.mxu0 0.0
    %5417 = vmatprep.subr.mxu0 0.0
    %5418 = vmatpush1.msra.mxu0 0.0
    %5419 = vmatprep.subr.mxu0 0.0
    %5420 = vmatpush1.msra.mxu0 0.0
    %5421 = vmatprep.subr.mxu0 0.0
    %5422 = vmatpush1.msra.mxu0 0.0
    %5423 = vmatprep.subr.mxu0 0.0
    %5424 = vmatpush1.msra.mxu0 0.0
    %5425 = vmatprep.subr.mxu0 0.0
    %5426 = vmatpush1.msra.mxu0 0.0
    %5427 = vmatprep.subr.mxu0 0.0
    %5428 = vmatpush1.msra.mxu0 0.0
    %5429 = vmatprep.subr.mxu0 0.0
    %5430 = vmatpush1.msra.mxu0 0.0
    %5431 = vmatprep.subr.mxu0 0.0
    %5432 = vmatpush1.msra.mxu0 0.0
    %5433 = vmatprep.subr.mxu0 0.0
    %5434 = vmatpush1.msra.mxu0 0.0
    %5435 = vmatprep.subr.mxu0 0.0
    %5436 = vmatpush1.msra.mxu0 0.0
    %5437 = vmatprep.subr.mxu0 0.0
    %5438 = vmatpush1.msra.mxu0 0.0
    %5439 = vmatprep.subr.mxu0 0.0
    %5440 = vmatpush1.msra.mxu0 0.0
    %5441 = vmatprep.subr.mxu0 0.0
    %5442 = vmatpush1.msra.mxu0 0.0
    %5443 = vmatprep.subr.mxu0 0.0
    %5444 = vmatpush1.msra.mxu0 0.0
    %5445 = vmatprep.subr.mxu0 0.0
    %5446 = vmatpush1.msra.mxu0 0.0
    %5447 = vmatprep.subr.mxu0 0.0
    %5448 = vmatpush1.msra.mxu0 0.0
    %5449 = vmatprep.subr.mxu0 0.0
    %5450 = vmatpush1.msra.mxu0 0.0
    %5451 = vmatprep.subr.mxu0 0.0
    %5452 = vmatpush1.msra.mxu0 0.0
    %5453 = vmatprep.subr.mxu0 0.0
    %5454 = vmatpush1.msra.mxu0 0.0
    %5455 = vmatprep.subr.mxu0 0.0
    %5456 = vmatpush1.msra.mxu0 0.0
    %5457 = vmatprep.subr.mxu0 0.0
    %5458 = vmatpush1.msra.mxu0 0.0
    %5459 = vmatprep.subr.mxu0 0.0
    %5460 = vmatpush1.msra.mxu0 0.0
    %5461 = vmatprep.mubr.f32.mxu0 0.0
    %5462 = vmatmul.mubr.f32.gmra.mrb[0].mxu0 %v5395
    %v5463 = vpop.f32.mrb[0].mxu0
    %v5464 = vadd.f32 %v5393, %v5463
    %v5465 = vpop.f32.mrb[0].mxu0
    %5466 = vdwg.mxu0
    %v5467 = vadd.f32 %v5464, %v4978
    %5468 = vrot.lane.b32.xlu0 %v3658, 2
    %v5469 = vpop.permute.xlu0 %5468
    %v5471 = vsel %vm1868, 0.0, %v5469
    %vm5472 = vcmask 146432
    %v5473 = vsel %vm5472, %v5471, 0.0
    %5475 = vrot.lane.b32.xlu0 %v5473, 127
    %v5476 = vpop.permute.xlu0 %5475
    %5478 = vrot.lane.b32.xlu0 %v5473, 126
    %v5479 = vpop.permute.xlu0 %5478
    %5481 = vrot.lane.b32.xlu0 %v5473, 125
    %v5482 = vpop.permute.xlu0 %5481
    %5484 = vrot.lane.b32.xlu0 %v5473, 124
    %v5485 = vpop.permute.xlu0 %5484
    %v5487 = vld [vmem:[#allocation5 + $0x400] sm:$0xff]
    %v5488 = vld [vmem:[#allocation5 + $0x3f8] sm:$0xff]
    %5490 = vset.pattern.permute.xlu0 0
    %5491 = vperm.xlu0 %5490, %v5488
    %v5492 = vpop.permute.xlu0 %5491
    %v5495 = vsel %vm1892, %v5487, 0
    %5497 = vmatprep.subr.mxu0 0.0
    %5498 = vmatpush1.msra.mxu0 %v5473
    %5499 = vmatprep.subr.mxu0 0.0
    %5500 = vmatpush1.msra.mxu0 %v5476
    %5501 = vmatprep.subr.mxu0 0.0
    %5502 = vmatpush1.msra.mxu0 %v5479
    %5503 = vmatprep.subr.mxu0 0.0
    %5504 = vmatpush1.msra.mxu0 %v5482
    %5505 = vmatprep.subr.mxu0 0.0
    %5506 = vmatpush1.msra.mxu0 %v5485
    %5507 = vmatprep.subr.mxu0 0.0
    %5508 = vmatpush1.msra.mxu0 0.0
    %5509 = vmatprep.subr.mxu0 0.0
    %5510 = vmatpush1.msra.mxu0 0.0
    %5511 = vmatprep.subr.mxu0 0.0
    %5512 = vmatpush1.msra.mxu0 0.0
    %5513 = vmatprep.subr.mxu0 0.0
    %5514 = vmatpush1.msra.mxu0 0.0
    %5515 = vmatprep.subr.mxu0 0.0
    %5516 = vmatpush1.msra.mxu0 0.0
    %5517 = vmatprep.subr.mxu0 0.0
    %5518 = vmatpush1.msra.mxu0 0.0
    %5519 = vmatprep.subr.mxu0 0.0
    %5520 = vmatpush1.msra.mxu0 0.0
    %5521 = vmatprep.subr.mxu0 0.0
    %5522 = vmatpush1.msra.mxu0 0.0
    %5523 = vmatprep.subr.mxu0 0.0
    %5524 = vmatpush1.msra.mxu0 0.0
    %5525 = vmatprep.subr.mxu0 0.0
    %5526 = vmatpush1.msra.mxu0 0.0
    %5527 = vmatprep.subr.mxu0 0.0
    %5528 = vmatpush1.msra.mxu0 0.0
    %5529 = vmatprep.subr.mxu0 0.0
    %5530 = vmatpush1.msra.mxu0 0.0
    %5531 = vmatprep.subr.mxu0 0.0
    %5532 = vmatpush1.msra.mxu0 0.0
    %5533 = vmatprep.subr.mxu0 0.0
    %5534 = vmatpush1.msra.mxu0 0.0
    %5535 = vmatprep.subr.mxu0 0.0
    %5536 = vmatpush1.msra.mxu0 0.0
    %5537 = vmatprep.subr.mxu0 0.0
    %5538 = vmatpush1.msra.mxu0 0.0
    %5539 = vmatprep.subr.mxu0 0.0
    %5540 = vmatpush1.msra.mxu0 0.0
    %5541 = vmatprep.subr.mxu0 0.0
    %5542 = vmatpush1.msra.mxu0 0.0
    %5543 = vmatprep.subr.mxu0 0.0
    %5544 = vmatpush1.msra.mxu0 0.0
    %5545 = vmatprep.subr.mxu0 0.0
    %5546 = vmatpush1.msra.mxu0 0.0
    %5547 = vmatprep.subr.mxu0 0.0
    %5548 = vmatpush1.msra.mxu0 0.0
    %5549 = vmatprep.subr.mxu0 0.0
    %5550 = vmatpush1.msra.mxu0 0.0
    %5551 = vmatprep.subr.mxu0 0.0
    %5552 = vmatpush1.msra.mxu0 0.0
    %5553 = vmatprep.subr.mxu0 0.0
    %5554 = vmatpush1.msra.mxu0 0.0
    %5555 = vmatprep.subr.mxu0 0.0
    %5556 = vmatpush1.msra.mxu0 0.0
    %5557 = vmatprep.subr.mxu0 0.0
    %5558 = vmatpush1.msra.mxu0 0.0
    %5559 = vmatprep.subr.mxu0 0.0
    %5560 = vmatpush1.msra.mxu0 0.0
    %5561 = vmatprep.mubr.f32.mxu0 0.0
    %5562 = vmatmul.mubr.f32.gmra.mrb[0].mxu0 %v5495
    %v5563 = vpop.f32.mrb[0].mxu0
    %v5564 = vadd.f32 %v5492, %v5563
    %v5565 = vpop.f32.mrb[0].mxu0
    %5566 = vdwg.mxu0
    %vm5567 = vcmp.gt.f32.partialorder %v5564, 0.0
    %v5568 = vmin.f32 %v5564, 0.0
    %v5569 = vmul.f32 %v5568, 1.442695
    %v5570 = vpow.pop %v5569
    %v5571 = vsub.f32 %v5570, 1.0
    %v5572 = vsel %vm5567, %v5564, %v5571
    %v5574 = vsel %vm198, %v5572, 0
    %5576 = vmatprep.subr.mxu0 0.0
    %5577 = vmatpush1.msra.mxu0 %v3661
    %5578 = vmatprep.subr.mxu0 0.0
    %5579 = vmatpush1.msra.mxu0 %v3662
    %5580 = vmatprep.subr.mxu0 0.0
    %5581 = vmatpush1.msra.mxu0 0.0
    %5582 = vmatprep.subr.mxu0 0.0
    %5583 = vmatpush1.msra.mxu0 0.0
    %5584 = vmatprep.subr.mxu0 0.0
    %5585 = vmatpush1.msra.mxu0 0.0
    %5586 = vmatprep.subr.mxu0 0.0
    %5587 = vmatpush1.msra.mxu0 0.0
    %5588 = vmatprep.subr.mxu0 0.0
    %5589 = vmatpush1.msra.mxu0 0.0
    %5590 = vmatprep.subr.mxu0 0.0
    %5591 = vmatpush1.msra.mxu0 0.0
    %5592 = vmatprep.subr.mxu0 0.0
    %5593 = vmatpush1.msra.mxu0 0.0
    %5594 = vmatprep.subr.mxu0 0.0
    %5595 = vmatpush1.msra.mxu0 0.0
    %5596 = vmatprep.subr.mxu0 0.0
    %5597 = vmatpush1.msra.mxu0 0.0
    %5598 = vmatprep.subr.mxu0 0.0
    %5599 = vmatpush1.msra.mxu0 0.0
    %5600 = vmatprep.subr.mxu0 0.0
    %5601 = vmatpush1.msra.mxu0 0.0
    %5602 = vmatprep.subr.mxu0 0.0
    %5603 = vmatpush1.msra.mxu0 0.0
    %5604 = vmatprep.subr.mxu0 0.0
    %5605 = vmatpush1.msra.mxu0 0.0
    %5606 = vmatprep.subr.mxu0 0.0
    %5607 = vmatpush1.msra.mxu0 0.0
    %5608 = vmatprep.subr.mxu0 0.0
    %5609 = vmatpush1.msra.mxu0 0.0
    %5610 = vmatprep.subr.mxu0 0.0
    %5611 = vmatpush1.msra.mxu0 0.0
    %5612 = vmatprep.subr.mxu0 0.0
    %5613 = vmatpush1.msra.mxu0 0.0
    %5614 = vmatprep.subr.mxu0 0.0
    %5615 = vmatpush1.msra.mxu0 0.0
    %5616 = vmatprep.subr.mxu0 0.0
    %5617 = vmatpush1.msra.mxu0 0.0
    %5618 = vmatprep.subr.mxu0 0.0
    %5619 = vmatpush1.msra.mxu0 0.0
    %5620 = vmatprep.subr.mxu0 0.0
    %5621 = vmatpush1.msra.mxu0 0.0
    %5622 = vmatprep.subr.mxu0 0.0
    %5623 = vmatpush1.msra.mxu0 0.0
    %5624 = vmatprep.subr.mxu0 0.0
    %5625 = vmatpush1.msra.mxu0 0.0
    %5626 = vmatprep.subr.mxu0 0.0
    %5627 = vmatpush1.msra.mxu0 0.0
    %5628 = vmatprep.subr.mxu0 0.0
    %5629 = vmatpush1.msra.mxu0 0.0
    %5630 = vmatprep.subr.mxu0 0.0
    %5631 = vmatpush1.msra.mxu0 0.0
    %5632 = vmatprep.subr.mxu0 0.0
    %5633 = vmatpush1.msra.mxu0 0.0
    %5634 = vmatprep.subr.mxu0 0.0
    %5635 = vmatpush1.msra.mxu0 0.0
    %5636 = vmatprep.subr.mxu0 0.0
    %5637 = vmatpush1.msra.mxu0 0.0
    %5638 = vmatprep.subr.mxu0 0.0
    %5639 = vmatpush1.msra.mxu0 0.0
    %5640 = vmatprep.mubr.f32.mxu0 0.0
    %5641 = vmatmul.mubr.f32.gmra.mrb[0].mxu0 %v5574
    %v5642 = vpop.f32.mrb[0].mxu0
    %v5643 = vadd.f32 0.0, %v5642
    %v5644 = vpop.f32.mrb[0].mxu0
    %5645 = vdwg.mxu0
    %5646 = vmatprep.subr.mxu0 0.0
    %5647 = vmatpush1.msra.mxu0 %v3663
    %5648 = vmatprep.subr.mxu0 0.0
    %5649 = vmatpush1.msra.mxu0 %v3664
    %5650 = vmatprep.subr.mxu0 0.0
    %5651 = vmatpush1.msra.mxu0 0.0
    %5652 = vmatprep.subr.mxu0 0.0
    %5653 = vmatpush1.msra.mxu0 0.0
    %5654 = vmatprep.subr.mxu0 0.0
    %5655 = vmatpush1.msra.mxu0 0.0
    %5656 = vmatprep.subr.mxu0 0.0
    %5657 = vmatpush1.msra.mxu0 0.0
    %5658 = vmatprep.subr.mxu0 0.0
    %5659 = vmatpush1.msra.mxu0 0.0
    %5660 = vmatprep.subr.mxu0 0.0
    %5661 = vmatpush1.msra.mxu0 0.0
    %5662 = vmatprep.subr.mxu0 0.0
    %5663 = vmatpush1.msra.mxu0 0.0
    %5664 = vmatprep.subr.mxu0 0.0
    %5665 = vmatpush1.msra.mxu0 0.0
    %5666 = vmatprep.subr.mxu0 0.0
    %5667 = vmatpush1.msra.mxu0 0.0
    %5668 = vmatprep.subr.mxu0 0.0
    %5669 = vmatpush1.msra.mxu0 0.0
    %5670 = vmatprep.subr.mxu0 0.0
    %5671 = vmatpush1.msra.mxu0 0.0
    %5672 = vmatprep.subr.mxu0 0.0
    %5673 = vmatpush1.msra.mxu0 0.0
    %5674 = vmatprep.subr.mxu0 0.0
    %5675 = vmatpush1.msra.mxu0 0.0
    %5676 = vmatprep.subr.mxu0 0.0
    %5677 = vmatpush1.msra.mxu0 0.0
    %5678 = vmatprep.subr.mxu0 0.0
    %5679 = vmatpush1.msra.mxu0 0.0
    %5680 = vmatprep.subr.mxu0 0.0
    %5681 = vmatpush1.msra.mxu0 0.0
    %5682 = vmatprep.subr.mxu0 0.0
    %5683 = vmatpush1.msra.mxu0 0.0
    %5684 = vmatprep.subr.mxu0 0.0
    %5685 = vmatpush1.msra.mxu0 0.0
    %5686 = vmatprep.subr.mxu0 0.0
    %5687 = vmatpush1.msra.mxu0 0.0
    %5688 = vmatprep.subr.mxu0 0.0
    %5689 = vmatpush1.msra.mxu0 0.0
    %5690 = vmatprep.subr.mxu0 0.0
    %5691 = vmatpush1.msra.mxu0 0.0
    %5692 = vmatprep.subr.mxu0 0.0
    %5693 = vmatpush1.msra.mxu0 0.0
    %5694 = vmatprep.subr.mxu0 0.0
    %5695 = vmatpush1.msra.mxu0 0.0
    %5696 = vmatprep.subr.mxu0 0.0
    %5697 = vmatpush1.msra.mxu0 0.0
    %5698 = vmatprep.subr.mxu0 0.0
    %5699 = vmatpush1.msra.mxu0 0.0
    %5700 = vmatprep.subr.mxu0 0.0
    %5701 = vmatpush1.msra.mxu0 0.0
    %5702 = vmatprep.subr.mxu0 0.0
    %5703 = vmatpush1.msra.mxu0 0.0
    %5704 = vmatprep.subr.mxu0 0.0
    %5705 = vmatpush1.msra.mxu0 0.0
    %5706 = vmatprep.subr.mxu0 0.0
    %5707 = vmatpush1.msra.mxu0 0.0
    %5708 = vmatprep.subr.mxu0 0.0
    %5709 = vmatpush1.msra.mxu0 0.0
    %5710 = vmatprep.mubr.f32.mxu0 0.0
    %5711 = vmatmul.mubr.f32.gmra.mrb[0].mxu0 %v5574
    %v5712 = vpop.f32.mrb[0].mxu0
    %v5713 = vadd.f32 0.0, %v5712
    %v5714 = vpop.f32.mrb[0].mxu0
    %5715 = vdwg.mxu0
    %v5716 = vmax.f32 %v5643, %v5713
    %v5717 = vmul.f32 %v5716, %v5716
    %v5718 = vsel %vm276, %v5717, 0.0
    %5719 = vadd.xlane.f32.xlu0 %v5718
    %v5720 = vpop.xlane.xlu0 %5719
    %v5721 = vmul.f32 %v5720, %v4545
    %v5722 = vlog2.pop %v5721
    %v5723 = vmul.f32 %v5722, 0.6931472
    %v5724 = vsel %vm276, %v5467, 0.0
    %5725 = vadd.xlane.f32.xlu0 %v5724
    %v5726 = vpop.xlane.xlu0 %5725
    %v5727 = vmul.f32 %v5726, %v4545
    %v5728 = vsub.f32 %v5467, %v5727
    %v5729 = vmul.f32 %v5728, %v5728
    %v5730 = vsel %vm276, %v5729, 0.0
    %5731 = vadd.xlane.f32.xlu0 %v5730
    %v5732 = vpop.xlane.xlu0 %5731
    %v5733 = vmul.f32 %v5732, %v4545
    %v5734 = vadd.f32 %v5733, 1e-05
    %v5735 = vrsqrt.pop %v5734
    %v5736 = vmul.f32 %v5728, %v5735
    %v5737 = vld [vmem:[#allocation5 + $0x488] sm:$0x1]
    %v5738 = vlaneseq
    %v5739 = vshrl.u32 %v5738, 7
    %v5740 = vsub.s32 0, %v5739
    %v5741 = vrot.slane %v5737, %v5740
    %v5742 = vmul.f32 %v5736, %v5741
    %v5743 = vld [vmem:[#allocation5 + $0x480] sm:$0x1]
    %v5744 = vlaneseq
    %v5745 = vshrl.u32 %v5744, 7
    %v5746 = vsub.s32 0, %v5745
    %v5747 = vrot.slane %v5743, %v5746
    %v5748 = vadd.f32 %v5742, %v5747
    %v5749 = vld [vmem:[#allocation5 + $0x490] sm:$0xff]
    %v5750 = vld [vmem:[#allocation5 + $0x470] sm:$0x1]
    %v5751 = vlaneseq
    %v5752 = vshrl.u32 %v5751, 7
    %v5753 = vsub.s32 0, %v5752
    %v5754 = vrot.slane %v5750, %v5753
    %v5756 = vsel %vm276, %v5748, 0
    %5758 = vmatprep.subr.mxu0 0.0
    %5759 = vmatpush1.msra.mxu0 %v5749
    %5760 = vmatprep.subr.mxu0 0.0
    %5761 = vmatpush1.msra.mxu0 0.0
    %5762 = vmatprep.subr.mxu0 0.0
    %5763 = vmatpush1.msra.mxu0 0.0
    %5764 = vmatprep.subr.mxu0 0.0
    %5765 = vmatpush1.msra.mxu0 0.0
    %5766 = vmatprep.subr.mxu0 0.0
    %5767 = vmatpush1.msra.mxu0 0.0
    %5768 = vmatprep.subr.mxu0 0.0
    %5769 = vmatpush1.msra.mxu0 0.0
    %5770 = vmatprep.subr.mxu0 0.0
    %5771 = vmatpush1.msra.mxu0 0.0
    %5772 = vmatprep.subr.mxu0 0.0
    %5773 = vmatpush1.msra.mxu0 0.0
    %5774 = vmatprep.subr.mxu0 0.0
    %5775 = vmatpush1.msra.mxu0 0.0
    %5776 = vmatprep.subr.mxu0 0.0
    %5777 = vmatpush1.msra.mxu0 0.0
    %5778 = vmatprep.subr.mxu0 0.0
    %5779 = vmatpush1.msra.mxu0 0.0
    %5780 = vmatprep.subr.mxu0 0.0
    %5781 = vmatpush1.msra.mxu0 0.0
    %5782 = vmatprep.subr.mxu0 0.0
    %5783 = vmatpush1.msra.mxu0 0.0
    %5784 = vmatprep.subr.mxu0 0.0
    %5785 = vmatpush1.msra.mxu0 0.0
    %5786 = vmatprep.subr.mxu0 0.0
    %5787 = vmatpush1.msra.mxu0 0.0
    %5788 = vmatprep.subr.mxu0 0.0
    %5789 = vmatpush1.msra.mxu0 0.0
    %5790 = vmatprep.subr.mxu0 0.0
    %5791 = vmatpush1.msra.mxu0 0.0
    %5792 = vmatprep.subr.mxu0 0.0
    %5793 = vmatpush1.msra.mxu0 0.0
    %5794 = vmatprep.subr.mxu0 0.0
    %5795 = vmatpush1.msra.mxu0 0.0
    %5796 = vmatprep.subr.mxu0 0.0
    %5797 = vmatpush1.msra.mxu0 0.0
    %5798 = vmatprep.subr.mxu0 0.0
    %5799 = vmatpush1.msra.mxu0 0.0
    %5800 = vmatprep.subr.mxu0 0.0
    %5801 = vmatpush1.msra.mxu0 0.0
    %5802 = vmatprep.subr.mxu0 0.0
    %5803 = vmatpush1.msra.mxu0 0.0
    %5804 = vmatprep.subr.mxu0 0.0
    %5805 = vmatpush1.msra.mxu0 0.0
    %5806 = vmatprep.subr.mxu0 0.0
    %5807 = vmatpush1.msra.mxu0 0.0
    %5808 = vmatprep.subr.mxu0 0.0
    %5809 = vmatpush1.msra.mxu0 0.0
    %5810 = vmatprep.subr.mxu0 0.0
    %5811 = vmatpush1.msra.mxu0 0.0
    %5812 = vmatprep.subr.mxu0 0.0
    %5813 = vmatpush1.msra.mxu0 0.0
    %5814 = vmatprep.subr.mxu0 0.0
    %5815 = vmatpush1.msra.mxu0 0.0
    %5816 = vmatprep.subr.mxu0 0.0
    %5817 = vmatpush1.msra.mxu0 0.0
    %5818 = vmatprep.subr.mxu0 0.0
    %5819 = vmatpush1.msra.mxu0 0.0
    %5820 = vmatprep.subr.mxu0 0.0
    %5821 = vmatpush1.msra.mxu0 0.0
    %5822 = vmatprep.mubr.f32.mxu0 0.0
    %5823 = vmatmul.mubr.f32.gmra.mrb[0].mxu0 %v5756
    %v5824 = vpop.f32.mrb[0].mxu0
    %v5825 = vadd.f32 %v5754, %v5824
    %v5826 = vpop.f32.mrb[0].mxu0
    %5827 = vdwg.mxu0
    %v5828 = vmul.f32 %v5825, 0.5
    %v5829 = vmul.f32 %v5825, 0.70710677
    %vm5830 = vcmp.ge.f32.partialorder %v5829, 0.0
    %v5831 = vsel %vm5830, 1.0, -1.0
    %v5832 = vand.u32 2147483647, %v5829
    %v5833 = vmul.f32 %v5832, 0.3275911
    %v5834 = vadd.f32 %v5833, 1.0
    %v5835 = vrcp.pop %v5834
    %v5836 = vmul.f32 1.0, %v5835
    %v5837 = vmul.f32 %v5836, 1.0614054
    %v5838 = vadd.f32 %v5837, -1.4531521
    %v5839 = vmul.f32 %v5838, %v5836
    %v5840 = vadd.f32 %v5839, 1.4214138
    %v5841 = vmul.f32 %v5840, %v5836
    %v5842 = vadd.f32 %v5841, -0.28449672
    %v5843 = vmul.f32 %v5842, %v5836
    %v5844 = vadd.f32 %v5843, 0.2548296
    %v5845 = vmul.f32 %v5844, %v5836
    %v5846 = vsub.f32 0.0, %v5832
    %v5847 = vmul.f32 %v5846, %v5832
    %v5848 = vmul.f32 %v5847, 1.442695
    %v5849 = vpow.pop %v5848
    %v5850 = vmul.f32 %v5845, %v5849
    %v5851 = vsub.f32 1.0, %v5850
    %v5852 = vmul.f32 %v5831, %v5851
    %v5853 = vadd.f32 %v5852, 1.0
    %v5854 = vmul.f32 %v5828, %v5853
    %v5855 = vld [vmem:[#allocation5 + $0x498] sm:$0xff]
    %v5856 = vld [vmem:[#allocation5 + $0x4a0] sm:$0xff]
    %v5857 = vld [vmem:[#allocation5 + $0x478] sm:$0x1]
    %v5858 = vlaneseq
    %v5859 = vshrl.u32 %v5858, 7
    %v5860 = vsub.s32 0, %v5859
    %v5861 = vrot.slane %v5857, %v5860
    %v5863 = vsel %vm198, %v5854, 0
    %5865 = vmatprep.subr.mxu0 0.0
    %5866 = vmatpush1.msra.mxu0 %v5855
    %5867 = vmatprep.subr.mxu0 0.0
    %5868 = vmatpush1.msra.mxu0 %v5856
    %5869 = vmatprep.subr.mxu0 0.0
    %5870 = vmatpush1.msra.mxu0 0.0
    %5871 = vmatprep.subr.mxu0 0.0
    %5872 = vmatpush1.msra.mxu0 0.0
    %5873 = vmatprep.subr.mxu0 0.0
    %5874 = vmatpush1.msra.mxu0 0.0
    %5875 = vmatprep.subr.mxu0 0.0
    %5876 = vmatpush1.msra.mxu0 0.0
    %5877 = vmatprep.subr.mxu0 0.0
    %5878 = vmatpush1.msra.mxu0 0.0
    %5879 = vmatprep.subr.mxu0 0.0
    %5880 = vmatpush1.msra.mxu0 0.0
    %5881 = vmatprep.subr.mxu0 0.0
    %5882 = vmatpush1.msra.mxu0 0.0
    %5883 = vmatprep.subr.mxu0 0.0
    %5884 = vmatpush1.msra.mxu0 0.0
    %5885 = vmatprep.subr.mxu0 0.0
    %5886 = vmatpush1.msra.mxu0 0.0
    %5887 = vmatprep.subr.mxu0 0.0
    %5888 = vmatpush1.msra.mxu0 0.0
    %5889 = vmatprep.subr.mxu0 0.0
    %5890 = vmatpush1.msra.mxu0 0.0
    %5891 = vmatprep.subr.mxu0 0.0
    %5892 = vmatpush1.msra.mxu0 0.0
    %5893 = vmatprep.subr.mxu0 0.0
    %5894 = vmatpush1.msra.mxu0 0.0
    %5895 = vmatprep.subr.mxu0 0.0
    %5896 = vmatpush1.msra.mxu0 0.0
    %5897 = vmatprep.subr.mxu0 0.0
    %5898 = vmatpush1.msra.mxu0 0.0
    %5899 = vmatprep.subr.mxu0 0.0
    %5900 = vmatpush1.msra.mxu0 0.0
    %5901 = vmatprep.subr.mxu0 0.0
    %5902 = vmatpush1.msra.mxu0 0.0
    %5903 = vmatprep.subr.mxu0 0.0
    %5904 = vmatpush1.msra.mxu0 0.0
    %5905 = vmatprep.subr.mxu0 0.0
    %5906 = vmatpush1.msra.mxu0 0.0
    %5907 = vmatprep.subr.mxu0 0.0
    %5908 = vmatpush1.msra.mxu0 0.0
    %5909 = vmatprep.subr.mxu0 0.0
    %5910 = vmatpush1.msra.mxu0 0.0
    %5911 = vmatprep.subr.mxu0 0.0
    %5912 = vmatpush1.msra.mxu0 0.0
    %5913 = vmatprep.subr.mxu0 0.0
    %5914 = vmatpush1.msra.mxu0 0.0
    %5915 = vmatprep.subr.mxu0 0.0
    %5916 = vmatpush1.msra.mxu0 0.0
    %5917 = vmatprep.subr.mxu0 0.0
    %5918 = vmatpush1.msra.mxu0 0.0
    %5919 = vmatprep.subr.mxu0 0.0
    %5920 = vmatpush1.msra.mxu0 0.0
    %5921 = vmatprep.subr.mxu0 0.0
    %5922 = vmatpush1.msra.mxu0 0.0
    %5923 = vmatprep.subr.mxu0 0.0
    %5924 = vmatpush1.msra.mxu0 0.0
    %5925 = vmatprep.subr.mxu0 0.0
    %5926 = vmatpush1.msra.mxu0 0.0
    %5927 = vmatprep.subr.mxu0 0.0
    %5928 = vmatpush1.msra.mxu0 0.0
    %5929 = vmatprep.mubr.f32.mxu0 0.0
    %5930 = vmatmul.mubr.f32.gmra.mrb[0].mxu0 %v5863
    %v5931 = vpop.f32.mrb[0].mxu0
    %v5932 = vadd.f32 %v5861, %v5931
    %v5933 = vpop.f32.mrb[0].mxu0
    %5934 = vdwg.mxu0
    %v5935 = vadd.f32 %v5932, %v5716
    %v5936 = vld [vmem:[#allocation5 + $0x4a8] sm:$0xff]
    %v5938 = vsel %vm276, %v5935, 0
    %5940 = vmatprep.subr.mxu0 0.0
    %5941 = vmatpush1.msra.mxu0 %v5936
    %5942 = vmatprep.subr.mxu0 0.0
    %5943 = vmatpush1.msra.mxu0 0.0
    %5944 = vmatprep.subr.mxu0 0.0
    %5945 = vmatpush1.msra.mxu0 0.0
    %5946 = vmatprep.subr.mxu0 0.0
    %5947 = vmatpush1.msra.mxu0 0.0
    %5948 = vmatprep.subr.mxu0 0.0
    %5949 = vmatpush1.msra.mxu0 0.0
    %5950 = vmatprep.subr.mxu0 0.0
    %5951 = vmatpush1.msra.mxu0 0.0
    %5952 = vmatprep.subr.mxu0 0.0
    %5953 = vmatpush1.msra.mxu0 0.0
    %5954 = vmatprep.subr.mxu0 0.0
    %5955 = vmatpush1.msra.mxu0 0.0
    %5956 = vmatprep.subr.mxu0 0.0
    %5957 = vmatpush1.msra.mxu0 0.0
    %5958 = vmatprep.subr.mxu0 0.0
    %5959 = vmatpush1.msra.mxu0 0.0
    %5960 = vmatprep.subr.mxu0 0.0
    %5961 = vmatpush1.msra.mxu0 0.0
    %5962 = vmatprep.subr.mxu0 0.0
    %5963 = vmatpush1.msra.mxu0 0.0
    %5964 = vmatprep.subr.mxu0 0.0
    %5965 = vmatpush1.msra.mxu0 0.0
    %5966 = vmatprep.subr.mxu0 0.0
    %5967 = vmatpush1.msra.mxu0 0.0
    %5968 = vmatprep.subr.mxu0 0.0
    %5969 = vmatpush1.msra.mxu0 0.0
    %5970 = vmatprep.subr.mxu0 0.0
    %5971 = vmatpush1.msra.mxu0 0.0
    %5972 = vmatprep.subr.mxu0 0.0
    %5973 = vmatpush1.msra.mxu0 0.0
    %5974 = vmatprep.subr.mxu0 0.0
    %5975 = vmatpush1.msra.mxu0 0.0
    %5976 = vmatprep.subr.mxu0 0.0
    %5977 = vmatpush1.msra.mxu0 0.0
    %5978 = vmatprep.subr.mxu0 0.0
    %5979 = vmatpush1.msra.mxu0 0.0
    %5980 = vmatprep.subr.mxu0 0.0
    %5981 = vmatpush1.msra.mxu0 0.0
    %5982 = vmatprep.subr.mxu0 0.0
    %5983 = vmatpush1.msra.mxu0 0.0
    %5984 = vmatprep.subr.mxu0 0.0
    %5985 = vmatpush1.msra.mxu0 0.0
    %5986 = vmatprep.subr.mxu0 0.0
    %5987 = vmatpush1.msra.mxu0 0.0
    %5988 = vmatprep.subr.mxu0 0.0
    %5989 = vmatpush1.msra.mxu0 0.0
    %5990 = vmatprep.subr.mxu0 0.0
    %5991 = vmatpush1.msra.mxu0 0.0
    %5992 = vmatprep.subr.mxu0 0.0
    %5993 = vmatpush1.msra.mxu0 0.0
    %5994 = vmatprep.subr.mxu0 0.0
    %5995 = vmatpush1.msra.mxu0 0.0
    %5996 = vmatprep.subr.mxu0 0.0
    %5997 = vmatpush1.msra.mxu0 0.0
    %5998 = vmatprep.subr.mxu0 0.0
    %5999 = vmatpush1.msra.mxu0 0.0
    %6000 = vmatprep.subr.mxu0 0.0
    %6001 = vmatpush1.msra.mxu0 0.0
    %6002 = vmatprep.subr.mxu0 0.0
    %6003 = vmatpush1.msra.mxu0 0.0
    %6004 = vmatprep.mubr.f32.mxu0 0.0
    %6005 = vmatmul.mubr.f32.gmra.mrb[0].mxu0 %v5938
    %v6006 = vpop.f32.mrb[0].mxu0
    %v6007 = vadd.f32 0.0, %v6006
    %v6008 = vpop.f32.mrb[0].mxu0
    %6009 = vdwg.mxu0
    %v6010 = vmul.f32 %v4832, 0.35355338
    %v6012 = vsel %vm276, %v6010, 0
    %v6015 = vsel %vm276, %v6007, 0
    %6017 = vmatprep.subr.mxu0 0.0
    %6018 = vmatpush1.xpose.msra.mxu0 %v6015
    %6019 = vmatprep.subr.mxu0 0.0
    %6020 = vmatpush1.xpose.msra.mxu0 0.0
    %6021 = vmatprep.subr.mxu0 0.0
    %6022 = vmatpush1.xpose.msra.mxu0 0.0
    %6023 = vmatprep.subr.mxu0 0.0
    %6024 = vmatpush1.xpose.msra.mxu0 0.0
    %6025 = vmatprep.subr.mxu0 0.0
    %6026 = vmatpush1.xpose.msra.mxu0 0.0
    %6027 = vmatprep.subr.mxu0 0.0
    %6028 = vmatpush1.xpose.msra.mxu0 0.0
    %6029 = vmatprep.subr.mxu0 0.0
    %6030 = vmatpush1.xpose.msra.mxu0 0.0
    %6031 = vmatprep.subr.mxu0 0.0
    %6032 = vmatpush1.xpose.msra.mxu0 0.0
    %6033 = vmatprep.subr.mxu0 0.0
    %6034 = vmatpush1.xpose.msra.mxu0 0.0
    %6035 = vmatprep.subr.mxu0 0.0
    %6036 = vmatpush1.xpose.msra.mxu0 0.0
    %6037 = vmatprep.subr.mxu0 0.0
    %6038 = vmatpush1.xpose.msra.mxu0 0.0
    %6039 = vmatprep.subr.mxu0 0.0
    %6040 = vmatpush1.xpose.msra.mxu0 0.0
    %6041 = vmatprep.subr.mxu0 0.0
    %6042 = vmatpush1.xpose.msra.mxu0 0.0
    %6043 = vmatprep.subr.mxu0 0.0
    %6044 = vmatpush1.xpose.msra.mxu0 0.0
    %6045 = vmatprep.subr.mxu0 0.0
    %6046 = vmatpush1.xpose.msra.mxu0 0.0
    %6047 = vmatprep.subr.mxu0 0.0
    %6048 = vmatpush1.xpose.msra.mxu0 0.0
    %6049 = vmatprep.subr.mxu0 0.0
    %6050 = vmatpush1.xpose.msra.mxu0 0.0
    %6051 = vmatprep.subr.mxu0 0.0
    %6052 = vmatpush1.xpose.msra.mxu0 0.0
    %6053 = vmatprep.subr.mxu0 0.0
    %6054 = vmatpush1.xpose.msra.mxu0 0.0
    %6055 = vmatprep.subr.mxu0 0.0
    %6056 = vmatpush1.xpose.msra.mxu0 0.0
    %6057 = vmatprep.subr.mxu0 0.0
    %6058 = vmatpush1.xpose.msra.mxu0 0.0
    %6059 = vmatprep.subr.mxu0 0.0
    %6060 = vmatpush1.xpose.msra.mxu0 0.0
    %6061 = vmatprep.subr.mxu0 0.0
    %6062 = vmatpush1.xpose.msra.mxu0 0.0
    %6063 = vmatprep.subr.mxu0 0.0
    %6064 = vmatpush1.xpose.msra.mxu0 0.0
    %6065 = vmatprep.subr.mxu0 0.0
    %6066 = vmatpush1.xpose.msra.mxu0 0.0
    %6067 = vmatprep.subr.mxu0 0.0
    %6068 = vmatpush1.xpose.msra.mxu0 0.0
    %6069 = vmatprep.subr.mxu0 0.0
    %6070 = vmatpush1.xpose.msra.mxu0 0.0
    %6071 = vmatprep.subr.mxu0 0.0
    %6072 = vmatpush1.xpose.msra.mxu0 0.0
    %6073 = vmatprep.subr.mxu0 0.0
    %6074 = vmatpush1.xpose.msra.mxu0 0.0
    %6075 = vmatprep.subr.mxu0 0.0
    %6076 = vmatpush1.xpose.msra.mxu0 0.0
    %6077 = vmatprep.subr.mxu0 0.0
    %6078 = vmatpush1.xpose.msra.mxu0 0.0
    %6079 = vmatprep.subr.mxu0 0.0
    %6080 = vmatpush1.xpose.msra.mxu0 0.0
    %6081 = vmatprep.mubr.f32.mxu0 0.0
    %6082 = vmatmul.mubr.f32.gmra.mrb[0].mxu0 %v6012
    %v6083 = vpop.f32.mrb[0].mxu0
    %v6084 = vadd.f32 %v2412, %v6083
    %v6085 = vpop.f32.mrb[0].mxu0
    %6086 = vdwg.mxu0
    %v6087 = vsel %vm276, %v6084, -inf
    %6088 = vmax.xlane.f32.xlu0 %v6087
    %v6089 = vpop.xlane.xlu0 %6088
    %v6090 = vsub.f32 %v6084, %v6089
    %v6091 = vmul.f32 %v6090, 1.442695
    %v6092 = vpow.pop %v6091
    %v6093 = vsel %vm276, %v6092, 0.0
    %6094 = vadd.xlane.f32.xlu0 %v6093
    %v6095 = vpop.xlane.xlu0 %6094
    %v6096 = vrcp.pop %v6095
    %v6097 = vmul.f32 %v6092, %v6096
    %v6099 = vsel %vm276, %v6097, 0
    %6101 = vmatprep.subr.mxu0 0.0
    %6102 = vmatpush1.msra.mxu0 %v6007
    %6103 = vmatprep.subr.mxu0 0.0
    %6104 = vmatpush1.msra.mxu0 0.0
    %6105 = vmatprep.subr.mxu0 0.0
    %6106 = vmatpush1.msra.mxu0 0.0
    %6107 = vmatprep.subr.mxu0 0.0
    %6108 = vmatpush1.msra.mxu0 0.0
    %6109 = vmatprep.subr.mxu0 0.0
    %6110 = vmatpush1.msra.mxu0 0.0
    %6111 = vmatprep.subr.mxu0 0.0
    %6112 = vmatpush1.msra.mxu0 0.0
    %6113 = vmatprep.subr.mxu0 0.0
    %6114 = vmatpush1.msra.mxu0 0.0
    %6115 = vmatprep.subr.mxu0 0.0
    %6116 = vmatpush1.msra.mxu0 0.0
    %6117 = vmatprep.subr.mxu0 0.0
    %6118 = vmatpush1.msra.mxu0 0.0
    %6119 = vmatprep.subr.mxu0 0.0
    %6120 = vmatpush1.msra.mxu0 0.0
    %6121 = vmatprep.subr.mxu0 0.0
    %6122 = vmatpush1.msra.mxu0 0.0
    %6123 = vmatprep.subr.mxu0 0.0
    %6124 = vmatpush1.msra.mxu0 0.0
    %6125 = vmatprep.subr.mxu0 0.0
    %6126 = vmatpush1.msra.mxu0 0.0
    %6127 = vmatprep.subr.mxu0 0.0
    %6128 = vmatpush1.msra.mxu0 0.0
    %6129 = vmatprep.subr.mxu0 0.0
    %6130 = vmatpush1.msra.mxu0 0.0
    %6131 = vmatprep.subr.mxu0 0.0
    %6132 = vmatpush1.msra.mxu0 0.0
    %6133 = vmatprep.subr.mxu0 0.0
    %6134 = vmatpush1.msra.mxu0 0.0
    %6135 = vmatprep.subr.mxu0 0.0
    %6136 = vmatpush1.msra.mxu0 0.0
    %6137 = vmatprep.subr.mxu0 0.0
    %6138 = vmatpush1.msra.mxu0 0.0
    %6139 = vmatprep.subr.mxu0 0.0
    %6140 = vmatpush1.msra.mxu0 0.0
    %6141 = vmatprep.subr.mxu0 0.0
    %6142 = vmatpush1.msra.mxu0 0.0
    %6143 = vmatprep.subr.mxu0 0.0
    %6144 = vmatpush1.msra.mxu0 0.0
    %6145 = vmatprep.subr.mxu0 0.0
    %6146 = vmatpush1.msra.mxu0 0.0
    %6147 = vmatprep.subr.mxu0 0.0
    %6148 = vmatpush1.msra.mxu0 0.0
    %6149 = vmatprep.subr.mxu0 0.0
    %6150 = vmatpush1.msra.mxu0 0.0
    %6151 = vmatprep.subr.mxu0 0.0
    %6152 = vmatpush1.msra.mxu0 0.0
    %6153 = vmatprep.subr.mxu0 0.0
    %6154 = vmatpush1.msra.mxu0 0.0
    %6155 = vmatprep.subr.mxu0 0.0
    %6156 = vmatpush1.msra.mxu0 0.0
    %6157 = vmatprep.subr.mxu0 0.0
    %6158 = vmatpush1.msra.mxu0 0.0
    %6159 = vmatprep.subr.mxu0 0.0
    %6160 = vmatpush1.msra.mxu0 0.0
    %6161 = vmatprep.subr.mxu0 0.0
    %6162 = vmatpush1.msra.mxu0 0.0
    %6163 = vmatprep.subr.mxu0 0.0
    %6164 = vmatpush1.msra.mxu0 0.0
    %6165 = vmatprep.mubr.f32.mxu0 0.0
    %6166 = vmatmul.mubr.f32.gmra.mrb[0].mxu0 %v6099
    %v6167 = vpop.f32.mrb[0].mxu0
    %v6168 = vadd.f32 0.0, %v6167
    %v6169 = vpop.f32.mrb[0].mxu0
    %6170 = vdwg.mxu0
    %6171 = vrot.lane.b32.xlu0 %v6010, 120
    %v6172 = vpop.permute.xlu0 %6171
    %6173 = vrot.lane.b32.xlu0 %v6007, 120
    %v6174 = vpop.permute.xlu0 %6173
    %v6175 = vsel %vm276, %v6172, 0
    %v6177 = vsel %vm276, %v6174, 0
    %6179 = vmatprep.subr.mxu0 0.0
    %6180 = vmatpush1.xpose.msra.mxu0 %v6177
    %6181 = vmatprep.subr.mxu0 0.0
    %6182 = vmatpush1.xpose.msra.mxu0 0.0
    %6183 = vmatprep.subr.mxu0 0.0
    %6184 = vmatpush1.xpose.msra.mxu0 0.0
    %6185 = vmatprep.subr.mxu0 0.0
    %6186 = vmatpush1.xpose.msra.mxu0 0.0
    %6187 = vmatprep.subr.mxu0 0.0
    %6188 = vmatpush1.xpose.msra.mxu0 0.0
    %6189 = vmatprep.subr.mxu0 0.0
    %6190 = vmatpush1.xpose.msra.mxu0 0.0
    %6191 = vmatprep.subr.mxu0 0.0
    %6192 = vmatpush1.xpose.msra.mxu0 0.0
    %6193 = vmatprep.subr.mxu0 0.0
    %6194 = vmatpush1.xpose.msra.mxu0 0.0
    %6195 = vmatprep.subr.mxu0 0.0
    %6196 = vmatpush1.xpose.msra.mxu0 0.0
    %6197 = vmatprep.subr.mxu0 0.0
    %6198 = vmatpush1.xpose.msra.mxu0 0.0
    %6199 = vmatprep.subr.mxu0 0.0
    %6200 = vmatpush1.xpose.msra.mxu0 0.0
    %6201 = vmatprep.subr.mxu0 0.0
    %6202 = vmatpush1.xpose.msra.mxu0 0.0
    %6203 = vmatprep.subr.mxu0 0.0
    %6204 = vmatpush1.xpose.msra.mxu0 0.0
    %6205 = vmatprep.subr.mxu0 0.0
    %6206 = vmatpush1.xpose.msra.mxu0 0.0
    %6207 = vmatprep.subr.mxu0 0.0
    %6208 = vmatpush1.xpose.msra.mxu0 0.0
    %6209 = vmatprep.subr.mxu0 0.0
    %6210 = vmatpush1.xpose.msra.mxu0 0.0
    %6211 = vmatprep.subr.mxu0 0.0
    %6212 = vmatpush1.xpose.msra.mxu0 0.0
    %6213 = vmatprep.subr.mxu0 0.0
    %6214 = vmatpush1.xpose.msra.mxu0 0.0
    %6215 = vmatprep.subr.mxu0 0.0
    %6216 = vmatpush1.xpose.msra.mxu0 0.0
    %6217 = vmatprep.subr.mxu0 0.0
    %6218 = vmatpush1.xpose.msra.mxu0 0.0
    %6219 = vmatprep.subr.mxu0 0.0
    %6220 = vmatpush1.xpose.msra.mxu0 0.0
    %6221 = vmatprep.subr.mxu0 0.0
    %6222 = vmatpush1.xpose.msra.mxu0 0.0
    %6223 = vmatprep.subr.mxu0 0.0
    %6224 = vmatpush1.xpose.msra.mxu0 0.0
    %6225 = vmatprep.subr.mxu0 0.0
    %6226 = vmatpush1.xpose.msra.mxu0 0.0
    %6227 = vmatprep.subr.mxu0 0.0
    %6228 = vmatpush1.xpose.msra.mxu0 0.0
    %6229 = vmatprep.subr.mxu0 0.0
    %6230 = vmatpush1.xpose.msra.mxu0 0.0
    %6231 = vmatprep.subr.mxu0 0.0
    %6232 = vmatpush1.xpose.msra.mxu0 0.0
    %6233 = vmatprep.subr.mxu0 0.0
    %6234 = vmatpush1.xpose.msra.mxu0 0.0
    %6235 = vmatprep.subr.mxu0 0.0
    %6236 = vmatpush1.xpose.msra.mxu0 0.0
    %6237 = vmatprep.subr.mxu0 0.0
    %6238 = vmatpush1.xpose.msra.mxu0 0.0
    %6239 = vmatprep.subr.mxu0 0.0
    %6240 = vmatpush1.xpose.msra.mxu0 0.0
    %6241 = vmatprep.subr.mxu0 0.0
    %6242 = vmatpush1.xpose.msra.mxu0 0.0
    %6243 = vmatprep.mubr.f32.mxu0 0.0
    %6244 = vmatmul.mubr.f32.gmra.mrb[0].mxu0 %v6175
    %v6245 = vpop.f32.mrb[0].mxu0
    %v6246 = vadd.f32 %v2412, %v6245
    %v6247 = vpop.f32.mrb[0].mxu0
    %6248 = vdwg.mxu0
    %v6249 = vsel %vm276, %v6246, -inf
    %6250 = vmax.xlane.f32.xlu0 %v6249
    %v6251 = vpop.xlane.xlu0 %6250
    %v6252 = vsub.f32 %v6246, %v6251
    %v6253 = vmul.f32 %v6252, 1.442695
    %v6254 = vpow.pop %v6253
    %v6255 = vsel %vm276, %v6254, 0.0
    %6256 = vadd.xlane.f32.xlu0 %v6255
    %v6257 = vpop.xlane.xlu0 %6256
    %v6258 = vrcp.pop %v6257
    %v6259 = vmul.f32 %v6254, %v6258
    %v6262 = vsel %vm276, %v6259, 0
    %6264 = vmatprep.subr.mxu0 0.0
    %6265 = vmatpush1.msra.mxu0 %v6174
    %6266 = vmatprep.subr.mxu0 0.0
    %6267 = vmatpush1.msra.mxu0 0.0
    %6268 = vmatprep.subr.mxu0 0.0
    %6269 = vmatpush1.msra.mxu0 0.0
    %6270 = vmatprep.subr.mxu0 0.0
    %6271 = vmatpush1.msra.mxu0 0.0
    %6272 = vmatprep.subr.mxu0 0.0
    %6273 = vmatpush1.msra.mxu0 0.0
    %6274 = vmatprep.subr.mxu0 0.0
    %6275 = vmatpush1.msra.mxu0 0.0
    %6276 = vmatprep.subr.mxu0 0.0
    %6277 = vmatpush1.msra.mxu0 0.0
    %6278 = vmatprep.subr.mxu0 0.0
    %6279 = vmatpush1.msra.mxu0 0.0
    %6280 = vmatprep.subr.mxu0 0.0
    %6281 = vmatpush1.msra.mxu0 0.0
    %6282 = vmatprep.subr.mxu0 0.0
    %6283 = vmatpush1.msra.mxu0 0.0
    %6284 = vmatprep.subr.mxu0 0.0
    %6285 = vmatpush1.msra.mxu0 0.0
    %6286 = vmatprep.subr.mxu0 0.0
    %6287 = vmatpush1.msra.mxu0 0.0
    %6288 = vmatprep.subr.mxu0 0.0
    %6289 = vmatpush1.msra.mxu0 0.0
    %6290 = vmatprep.subr.mxu0 0.0
    %6291 = vmatpush1.msra.mxu0 0.0
    %6292 = vmatprep.subr.mxu0 0.0
    %6293 = vmatpush1.msra.mxu0 0.0
    %6294 = vmatprep.subr.mxu0 0.0
    %6295 = vmatpush1.msra.mxu0 0.0
    %6296 = vmatprep.subr.mxu0 0.0
    %6297 = vmatpush1.msra.mxu0 0.0
    %6298 = vmatprep.subr.mxu0 0.0
    %6299 = vmatpush1.msra.mxu0 0.0
    %6300 = vmatprep.subr.mxu0 0.0
    %6301 = vmatpush1.msra.mxu0 0.0
    %6302 = vmatprep.subr.mxu0 0.0
    %6303 = vmatpush1.msra.mxu0 0.0
    %6304 = vmatprep.subr.mxu0 0.0
    %6305 = vmatpush1.msra.mxu0 0.0
    %6306 = vmatprep.subr.mxu0 0.0
    %6307 = vmatpush1.msra.mxu0 0.0
    %6308 = vmatprep.subr.mxu0 0.0
    %6309 = vmatpush1.msra.mxu0 0.0
    %6310 = vmatprep.subr.mxu0 0.0
    %6311 = vmatpush1.msra.mxu0 0.0
    %6312 = vmatprep.subr.mxu0 0.0
    %6313 = vmatpush1.msra.mxu0 0.0
    %6314 = vmatprep.subr.mxu0 0.0
    %6315 = vmatpush1.msra.mxu0 0.0
    %6316 = vmatprep.subr.mxu0 0.0
    %6317 = vmatpush1.msra.mxu0 0.0
    %6318 = vmatprep.subr.mxu0 0.0
    %6319 = vmatpush1.msra.mxu0 0.0
    %6320 = vmatprep.subr.mxu0 0.0
    %6321 = vmatpush1.msra.mxu0 0.0
    %6322 = vmatprep.subr.mxu0 0.0
    %6323 = vmatpush1.msra.mxu0 0.0
    %6324 = vmatprep.subr.mxu0 0.0
    %6325 = vmatpush1.msra.mxu0 0.0
    %6326 = vmatprep.subr.mxu0 0.0
    %6327 = vmatpush1.msra.mxu0 0.0
    %6328 = vmatprep.mubr.f32.mxu0 0.0
    %6329 = vmatmul.mubr.f32.gmra.mrb[0].mxu0 %v6262
    %v6330 = vpop.f32.mrb[0].mxu0
    %v6331 = vadd.f32 0.0, %v6330
    %v6332 = vpop.f32.mrb[0].mxu0
    %6333 = vdwg.mxu0
    %6335 = vrot.lane.b32.xlu0 %v6331, 8
    %v6336 = vpop.permute.xlu0 %6335
    %v6338 = vsel %vm276, %v6168, %v6336
    %v6339 = vld [vmem:[#allocation5 + $0x388] sm:$0xff]
    %v6340 = vld [vmem:[#allocation5 + $0x390] sm:$0xff]
    %v6341 = vld [vmem:[#allocation5 + $0x380] sm:$0x1]
    %v6342 = vlaneseq
    %v6343 = vshrl.u32 %v6342, 7
    %v6344 = vsub.s32 0, %v6343
    %v6345 = vrot.slane %v6341, %v6344
    %v6347 = vsel %vm198, %v6338, 0
    %6349 = vmatprep.subr.mxu0 0.0
    %6350 = vmatpush1.msra.mxu0 %v6339
    %6351 = vmatprep.subr.mxu0 0.0
    %6352 = vmatpush1.msra.mxu0 %v6340
    %6353 = vmatprep.subr.mxu0 0.0
    %6354 = vmatpush1.msra.mxu0 0.0
    %6355 = vmatprep.subr.mxu0 0.0
    %6356 = vmatpush1.msra.mxu0 0.0
    %6357 = vmatprep.subr.mxu0 0.0
    %6358 = vmatpush1.msra.mxu0 0.0
    %6359 = vmatprep.subr.mxu0 0.0
    %6360 = vmatpush1.msra.mxu0 0.0
    %6361 = vmatprep.subr.mxu0 0.0
    %6362 = vmatpush1.msra.mxu0 0.0
    %6363 = vmatprep.subr.mxu0 0.0
    %6364 = vmatpush1.msra.mxu0 0.0
    %6365 = vmatprep.subr.mxu0 0.0
    %6366 = vmatpush1.msra.mxu0 0.0
    %6367 = vmatprep.subr.mxu0 0.0
    %6368 = vmatpush1.msra.mxu0 0.0
    %6369 = vmatprep.subr.mxu0 0.0
    %6370 = vmatpush1.msra.mxu0 0.0
    %6371 = vmatprep.subr.mxu0 0.0
    %6372 = vmatpush1.msra.mxu0 0.0
    %6373 = vmatprep.subr.mxu0 0.0
    %6374 = vmatpush1.msra.mxu0 0.0
    %6375 = vmatprep.subr.mxu0 0.0
    %6376 = vmatpush1.msra.mxu0 0.0
    %6377 = vmatprep.subr.mxu0 0.0
    %6378 = vmatpush1.msra.mxu0 0.0
    %6379 = vmatprep.subr.mxu0 0.0
    %6380 = vmatpush1.msra.mxu0 0.0
    %6381 = vmatprep.subr.mxu0 0.0
    %6382 = vmatpush1.msra.mxu0 0.0
    %6383 = vmatprep.subr.mxu0 0.0
    %6384 = vmatpush1.msra.mxu0 0.0
    %6385 = vmatprep.subr.mxu0 0.0
    %6386 = vmatpush1.msra.mxu0 0.0
    %6387 = vmatprep.subr.mxu0 0.0
    %6388 = vmatpush1.msra.mxu0 0.0
    %6389 = vmatprep.subr.mxu0 0.0
    %6390 = vmatpush1.msra.mxu0 0.0
    %6391 = vmatprep.subr.mxu0 0.0
    %6392 = vmatpush1.msra.mxu0 0.0
    %6393 = vmatprep.subr.mxu0 0.0
    %6394 = vmatpush1.msra.mxu0 0.0
    %6395 = vmatprep.subr.mxu0 0.0
    %6396 = vmatpush1.msra.mxu0 0.0
    %6397 = vmatprep.subr.mxu0 0.0
    %6398 = vmatpush1.msra.mxu0 0.0
    %6399 = vmatprep.subr.mxu0 0.0
    %6400 = vmatpush1.msra.mxu0 0.0
    %6401 = vmatprep.subr.mxu0 0.0
    %6402 = vmatpush1.msra.mxu0 0.0
    %6403 = vmatprep.subr.mxu0 0.0
    %6404 = vmatpush1.msra.mxu0 0.0
    %6405 = vmatprep.subr.mxu0 0.0
    %6406 = vmatpush1.msra.mxu0 0.0
    %6407 = vmatprep.subr.mxu0 0.0
    %6408 = vmatpush1.msra.mxu0 0.0
    %6409 = vmatprep.subr.mxu0 0.0
    %6410 = vmatpush1.msra.mxu0 0.0
    %6411 = vmatprep.subr.mxu0 0.0
    %6412 = vmatpush1.msra.mxu0 0.0
    %6413 = vmatprep.mubr.f32.mxu0 0.0
    %6414 = vmatmul.mubr.f32.gmra.mrb[0].mxu0 %v6347
    %v6415 = vpop.f32.mrb[0].mxu0
    %v6416 = vadd.f32 %v6345, %v6415
    %v6417 = vpop.f32.mrb[0].mxu0
    %6418 = vdwg.mxu0
    %v6419 = vadd.f32 %v4832, %v6416
    %v6420 = vsel %vm198, %v6419, 0.0
    %6421 = vadd.xlane.f32.xlu0 %v6420
    %v6422 = vpop.xlane.xlu0 %6421
    %v6423 = vmul.f32 %v6422, %v938
    %v6424 = vsub.f32 %v6419, %v6423
    %v6425 = vmul.f32 %v6424, %v6424
    %v6426 = vsel %vm198, %v6425, 0.0
    %6427 = vadd.xlane.f32.xlu0 %v6426
    %v6428 = vpop.xlane.xlu0 %6427
    %v6429 = vmul.f32 %v6428, %v938
    %v6430 = vadd.f32 %v6429, 1e-05
    %v6431 = vrsqrt.pop %v6430
    %v6432 = vmul.f32 %v6424, %v6431
    %v6433 = vld [vmem:[#allocation5 + $0x348] sm:$0x1]
    %v6434 = vlaneseq
    %v6435 = vshrl.u32 %v6434, 7
    %v6436 = vsub.s32 0, %v6435
    %v6437 = vrot.slane %v6433, %v6436
    %v6438 = vmul.f32 %v6432, %v6437
    %v6439 = vld [vmem:[#allocation5 + $0x340] sm:$0x1]
    %v6440 = vlaneseq
    %v6441 = vshrl.u32 %v6440, 7
    %v6442 = vsub.s32 0, %v6441
    %v6443 = vrot.slane %v6439, %v6442
    %v6444 = vadd.f32 %v6438, %v6443
    %v6445 = vld [vmem:[#allocation5 + $0x350] sm:$0xff]
    %v6446 = vld [vmem:[#allocation5 + $0x358] sm:$0xff]
    %v6447 = vld [vmem:[#allocation5 + $0x330] sm:$0x1]
    %v6448 = vlaneseq
    %v6449 = vshrl.u32 %v6448, 7
    %v6450 = vsub.s32 0, %v6449
    %v6451 = vrot.slane %v6447, %v6450
    %v6453 = vsel %vm198, %v6444, 0
    %6455 = vmatprep.subr.mxu0 0.0
    %6456 = vmatpush1.msra.mxu0 %v6445
    %6457 = vmatprep.subr.mxu0 0.0
    %6458 = vmatpush1.msra.mxu0 %v6446
    %6459 = vmatprep.subr.mxu0 0.0
    %6460 = vmatpush1.msra.mxu0 0.0
    %6461 = vmatprep.subr.mxu0 0.0
    %6462 = vmatpush1.msra.mxu0 0.0
    %6463 = vmatprep.subr.mxu0 0.0
    %6464 = vmatpush1.msra.mxu0 0.0
    %6465 = vmatprep.subr.mxu0 0.0
    %6466 = vmatpush1.msra.mxu0 0.0
    %6467 = vmatprep.subr.mxu0 0.0
    %6468 = vmatpush1.msra.mxu0 0.0
    %6469 = vmatprep.subr.mxu0 0.0
    %6470 = vmatpush1.msra.mxu0 0.0
    %6471 = vmatprep.subr.mxu0 0.0
    %6472 = vmatpush1.msra.mxu0 0.0
    %6473 = vmatprep.subr.mxu0 0.0
    %6474 = vmatpush1.msra.mxu0 0.0
    %6475 = vmatprep.subr.mxu0 0.0
    %6476 = vmatpush1.msra.mxu0 0.0
    %6477 = vmatprep.subr.mxu0 0.0
    %6478 = vmatpush1.msra.mxu0 0.0
    %6479 = vmatprep.subr.mxu0 0.0
    %6480 = vmatpush1.msra.mxu0 0.0
    %6481 = vmatprep.subr.mxu0 0.0
    %6482 = vmatpush1.msra.mxu0 0.0
    %6483 = vmatprep.subr.mxu0 0.0
    %6484 = vmatpush1.msra.mxu0 0.0
    %6485 = vmatprep.subr.mxu0 0.0
    %6486 = vmatpush1.msra.mxu0 0.0
    %6487 = vmatprep.subr.mxu0 0.0
    %6488 = vmatpush1.msra.mxu0 0.0
    %6489 = vmatprep.subr.mxu0 0.0
    %6490 = vmatpush1.msra.mxu0 0.0
    %6491 = vmatprep.subr.mxu0 0.0
    %6492 = vmatpush1.msra.mxu0 0.0
    %6493 = vmatprep.subr.mxu0 0.0
    %6494 = vmatpush1.msra.mxu0 0.0
    %6495 = vmatprep.subr.mxu0 0.0
    %6496 = vmatpush1.msra.mxu0 0.0
    %6497 = vmatprep.subr.mxu0 0.0
    %6498 = vmatpush1.msra.mxu0 0.0
    %6499 = vmatprep.subr.mxu0 0.0
    %6500 = vmatpush1.msra.mxu0 0.0
    %6501 = vmatprep.subr.mxu0 0.0
    %6502 = vmatpush1.msra.mxu0 0.0
    %6503 = vmatprep.subr.mxu0 0.0
    %6504 = vmatpush1.msra.mxu0 0.0
    %6505 = vmatprep.subr.mxu0 0.0
    %6506 = vmatpush1.msra.mxu0 0.0
    %6507 = vmatprep.subr.mxu0 0.0
    %6508 = vmatpush1.msra.mxu0 0.0
    %6509 = vmatprep.subr.mxu0 0.0
    %6510 = vmatpush1.msra.mxu0 0.0
    %6511 = vmatprep.subr.mxu0 0.0
    %6512 = vmatpush1.msra.mxu0 0.0
    %6513 = vmatprep.subr.mxu0 0.0
    %6514 = vmatpush1.msra.mxu0 0.0
    %6515 = vmatprep.subr.mxu0 0.0
    %6516 = vmatpush1.msra.mxu0 0.0
    %6517 = vmatprep.subr.mxu0 0.0
    %6518 = vmatpush1.msra.mxu0 0.0
    %6519 = vmatprep.mubr.f32.mxu0 0.0
    %6520 = vmatmul.mubr.f32.gmra.mrb[0].mxu0 %v6453
    %v6521 = vpop.f32.mrb[0].mxu0
    %v6522 = vadd.f32 %v6451, %v6521
    %v6523 = vpop.f32.mrb[0].mxu0
    %6524 = vdwg.mxu0
    %v6525 = vmul.f32 %v6522, 0.5
    %v6526 = vmul.f32 %v6522, 0.70710677
    %vm6527 = vcmp.ge.f32.partialorder %v6526, 0.0
    %v6528 = vsel %vm6527, 1.0, -1.0
    %v6529 = vand.u32 2147483647, %v6526
    %v6530 = vmul.f32 %v6529, 0.3275911
    %v6531 = vadd.f32 %v6530, 1.0
    %v6532 = vrcp.pop %v6531
    %v6533 = vmul.f32 1.0, %v6532
    %v6534 = vmul.f32 %v6533, 1.0614054
    %v6535 = vadd.f32 %v6534, -1.4531521
    %v6536 = vmul.f32 %v6535, %v6533
    %v6537 = vadd.f32 %v6536, 1.4214138
    %v6538 = vmul.f32 %v6537, %v6533
    %v6539 = vadd.f32 %v6538, -0.28449672
    %v6540 = vmul.f32 %v6539, %v6533
    %v6541 = vadd.f32 %v6540, 0.2548296
    %v6542 = vmul.f32 %v6541, %v6533
    %v6543 = vsub.f32 0.0, %v6529
    %v6544 = vmul.f32 %v6543, %v6529
    %v6545 = vmul.f32 %v6544, 1.442695
    %v6546 = vpow.pop %v6545
    %v6547 = vmul.f32 %v6542, %v6546
    %v6548 = vsub.f32 1.0, %v6547
    %v6549 = vmul.f32 %v6528, %v6548
    %v6550 = vadd.f32 %v6549, 1.0
    %v6551 = vmul.f32 %v6525, %v6550
    %v6552 = vld [vmem:[#allocation5 + $0x360] sm:$0xff]
    %v6553 = vld [vmem:[#allocation5 + $0x368] sm:$0xff]
    %v6554 = vld [vmem:[#allocation5 + $0x370] sm:$0xff]
    %v6555 = vld [vmem:[#allocation5 + $0x378] sm:$0xff]
    %v6556 = vld [vmem:[#allocation5 + $0x338] sm:$0x1]
    %v6557 = vlaneseq
    %v6558 = vshrl.u32 %v6557, 7
    %v6559 = vsub.s32 0, %v6558
    %v6560 = vrot.slane %v6556, %v6559
    %v6562 = vsel %vm51, %v6551, 0
    %6564 = vmatprep.subr.mxu0 0.0
    %6565 = vmatpush1.msra.mxu0 %v6552
    %6566 = vmatprep.subr.mxu0 0.0
    %6567 = vmatpush1.msra.mxu0 %v6553
    %6568 = vmatprep.subr.mxu0 0.0
    %6569 = vmatpush1.msra.mxu0 %v6554
    %6570 = vmatprep.subr.mxu0 0.0
    %6571 = vmatpush1.msra.mxu0 %v6555
    %6572 = vmatprep.subr.mxu0 0.0
    %6573 = vmatpush1.msra.mxu0 0.0
    %6574 = vmatprep.subr.mxu0 0.0
    %6575 = vmatpush1.msra.mxu0 0.0
    %6576 = vmatprep.subr.mxu0 0.0
    %6577 = vmatpush1.msra.mxu0 0.0
    %6578 = vmatprep.subr.mxu0 0.0
    %6579 = vmatpush1.msra.mxu0 0.0
    %6580 = vmatprep.subr.mxu0 0.0
    %6581 = vmatpush1.msra.mxu0 0.0
    %6582 = vmatprep.subr.mxu0 0.0
    %6583 = vmatpush1.msra.mxu0 0.0
    %6584 = vmatprep.subr.mxu0 0.0
    %6585 = vmatpush1.msra.mxu0 0.0
    %6586 = vmatprep.subr.mxu0 0.0
    %6587 = vmatpush1.msra.mxu0 0.0
    %6588 = vmatprep.subr.mxu0 0.0
    %6589 = vmatpush1.msra.mxu0 0.0
    %6590 = vmatprep.subr.mxu0 0.0
    %6591 = vmatpush1.msra.mxu0 0.0
    %6592 = vmatprep.subr.mxu0 0.0
    %6593 = vmatpush1.msra.mxu0 0.0
    %6594 = vmatprep.subr.mxu0 0.0
    %6595 = vmatpush1.msra.mxu0 0.0
    %6596 = vmatprep.subr.mxu0 0.0
    %6597 = vmatpush1.msra.mxu0 0.0
    %6598 = vmatprep.subr.mxu0 0.0
    %6599 = vmatpush1.msra.mxu0 0.0
    %6600 = vmatprep.subr.mxu0 0.0
    %6601 = vmatpush1.msra.mxu0 0.0
    %6602 = vmatprep.subr.mxu0 0.0
    %6603 = vmatpush1.msra.mxu0 0.0
    %6604 = vmatprep.subr.mxu0 0.0
    %6605 = vmatpush1.msra.mxu0 0.0
    %6606 = vmatprep.subr.mxu0 0.0
    %6607 = vmatpush1.msra.mxu0 0.0
    %6608 = vmatprep.subr.mxu0 0.0
    %6609 = vmatpush1.msra.mxu0 0.0
    %6610 = vmatprep.subr.mxu0 0.0
    %6611 = vmatpush1.msra.mxu0 0.0
    %6612 = vmatprep.subr.mxu0 0.0
    %6613 = vmatpush1.msra.mxu0 0.0
    %6614 = vmatprep.subr.mxu0 0.0
    %6615 = vmatpush1.msra.mxu0 0.0
    %6616 = vmatprep.subr.mxu0 0.0
    %6617 = vmatpush1.msra.mxu0 0.0
    %6618 = vmatprep.subr.mxu0 0.0
    %6619 = vmatpush1.msra.mxu0 0.0
    %6620 = vmatprep.subr.mxu0 0.0
    %6621 = vmatpush1.msra.mxu0 0.0
    %6622 = vmatprep.subr.mxu0 0.0
    %6623 = vmatpush1.msra.mxu0 0.0
    %6624 = vmatprep.subr.mxu0 0.0
    %6625 = vmatpush1.msra.mxu0 0.0
    %6626 = vmatprep.subr.mxu0 0.0
    %6627 = vmatpush1.msra.mxu0 0.0
    %6628 = vmatprep.mubr.f32.mxu0 0.0
    %6629 = vmatmul.mubr.f32.gmra.mrb[0].mxu0 %v6562
    %v6630 = vpop.f32.mrb[0].mxu0
    %v6631 = vadd.f32 %v6560, %v6630
    %v6632 = vpop.f32.mrb[0].mxu0
    %6633 = vdwg.mxu0
    %v6634 = vmul.f32 %v6007, 0.35355338
    %v6636 = vsel %vm276, %v6634, 0
    %v6639 = vsel %vm276, %v4832, 0
    %6641 = vmatprep.subr.mxu0 0.0
    %6642 = vmatpush1.xpose.msra.mxu0 %v6639
    %6643 = vmatprep.subr.mxu0 0.0
    %6644 = vmatpush1.xpose.msra.mxu0 0.0
    %6645 = vmatprep.subr.mxu0 0.0
    %6646 = vmatpush1.xpose.msra.mxu0 0.0
    %6647 = vmatprep.subr.mxu0 0.0
    %6648 = vmatpush1.xpose.msra.mxu0 0.0
    %6649 = vmatprep.subr.mxu0 0.0
    %6650 = vmatpush1.xpose.msra.mxu0 0.0
    %6651 = vmatprep.subr.mxu0 0.0
    %6652 = vmatpush1.xpose.msra.mxu0 0.0
    %6653 = vmatprep.subr.mxu0 0.0
    %6654 = vmatpush1.xpose.msra.mxu0 0.0
    %6655 = vmatprep.subr.mxu0 0.0
    %6656 = vmatpush1.xpose.msra.mxu0 0.0
    %6657 = vmatprep.subr.mxu0 0.0
    %6658 = vmatpush1.xpose.msra.mxu0 0.0
    %6659 = vmatprep.subr.mxu0 0.0
    %6660 = vmatpush1.xpose.msra.mxu0 0.0
    %6661 = vmatprep.subr.mxu0 0.0
    %6662 = vmatpush1.xpose.msra.mxu0 0.0
    %6663 = vmatprep.subr.mxu0 0.0
    %6664 = vmatpush1.xpose.msra.mxu0 0.0
    %6665 = vmatprep.subr.mxu0 0.0
    %6666 = vmatpush1.xpose.msra.mxu0 0.0
    %6667 = vmatprep.subr.mxu0 0.0
    %6668 = vmatpush1.xpose.msra.mxu0 0.0
    %6669 = vmatprep.subr.mxu0 0.0
    %6670 = vmatpush1.xpose.msra.mxu0 0.0
    %6671 = vmatprep.subr.mxu0 0.0
    %6672 = vmatpush1.xpose.msra.mxu0 0.0
    %6673 = vmatprep.subr.mxu0 0.0
    %6674 = vmatpush1.xpose.msra.mxu0 0.0
    %6675 = vmatprep.subr.mxu0 0.0
    %6676 = vmatpush1.xpose.msra.mxu0 0.0
    %6677 = vmatprep.subr.mxu0 0.0
    %6678 = vmatpush1.xpose.msra.mxu0 0.0
    %6679 = vmatprep.subr.mxu0 0.0
    %6680 = vmatpush1.xpose.msra.mxu0 0.0
    %6681 = vmatprep.subr.mxu0 0.0
    %6682 = vmatpush1.xpose.msra.mxu0 0.0
    %6683 = vmatprep.subr.mxu0 0.0
    %6684 = vmatpush1.xpose.msra.mxu0 0.0
    %6685 = vmatprep.subr.mxu0 0.0
    %6686 = vmatpush1.xpose.msra.mxu0 0.0
    %6687 = vmatprep.subr.mxu0 0.0
    %6688 = vmatpush1.xpose.msra.mxu0 0.0
    %6689 = vmatprep.subr.mxu0 0.0
    %6690 = vmatpush1.xpose.msra.mxu0 0.0
    %6691 = vmatprep.subr.mxu0 0.0
    %6692 = vmatpush1.xpose.msra.mxu0 0.0
    %6693 = vmatprep.subr.mxu0 0.0
    %6694 = vmatpush1.xpose.msra.mxu0 0.0
    %6695 = vmatprep.subr.mxu0 0.0
    %6696 = vmatpush1.xpose.msra.mxu0 0.0
    %6697 = vmatprep.subr.mxu0 0.0
    %6698 = vmatpush1.xpose.msra.mxu0 0.0
    %6699 = vmatprep.subr.mxu0 0.0
    %6700 = vmatpush1.xpose.msra.mxu0 0.0
    %6701 = vmatprep.subr.mxu0 0.0
    %6702 = vmatpush1.xpose.msra.mxu0 0.0
    %6703 = vmatprep.subr.mxu0 0.0
    %6704 = vmatpush1.xpose.msra.mxu0 0.0
    %6705 = vmatprep.mubr.f32.mxu0 0.0
    %6706 = vmatmul.mubr.f32.gmra.mrb[0].mxu0 %v6636
    %v6707 = vpop.f32.mrb[0].mxu0
    %v6708 = vadd.f32 %v3037, %v6707
    %v6709 = vpop.f32.mrb[0].mxu0
    %6710 = vdwg.mxu0
    %v6711 = vsel %vm276, %v6708, -inf
    %6712 = vmax.xlane.f32.xlu0 %v6711
    %v6713 = vpop.xlane.xlu0 %6712
    %v6714 = vsub.f32 %v6708, %v6713
    %v6715 = vmul.f32 %v6714, 1.442695
    %v6716 = vpow.pop %v6715
    %v6717 = vsel %vm276, %v6716, 0.0
    %6718 = vadd.xlane.f32.xlu0 %v6717
    %v6719 = vpop.xlane.xlu0 %6718
    %v6720 = vrcp.pop %v6719
    %v6721 = vmul.f32 %v6716, %v6720
    %v6723 = vsel %vm276, %v6721, 0
    %6725 = vmatprep.subr.mxu0 0.0
    %6726 = vmatpush1.msra.mxu0 %v4832
    %6727 = vmatprep.subr.mxu0 0.0
    %6728 = vmatpush1.msra.mxu0 0.0
    %6729 = vmatprep.subr.mxu0 0.0
    %6730 = vmatpush1.msra.mxu0 0.0
    %6731 = vmatprep.subr.mxu0 0.0
    %6732 = vmatpush1.msra.mxu0 0.0
    %6733 = vmatprep.subr.mxu0 0.0
    %6734 = vmatpush1.msra.mxu0 0.0
    %6735 = vmatprep.subr.mxu0 0.0
    %6736 = vmatpush1.msra.mxu0 0.0
    %6737 = vmatprep.subr.mxu0 0.0
    %6738 = vmatpush1.msra.mxu0 0.0
    %6739 = vmatprep.subr.mxu0 0.0
    %6740 = vmatpush1.msra.mxu0 0.0
    %6741 = vmatprep.subr.mxu0 0.0
    %6742 = vmatpush1.msra.mxu0 0.0
    %6743 = vmatprep.subr.mxu0 0.0
    %6744 = vmatpush1.msra.mxu0 0.0
    %6745 = vmatprep.subr.mxu0 0.0
    %6746 = vmatpush1.msra.mxu0 0.0
    %6747 = vmatprep.subr.mxu0 0.0
    %6748 = vmatpush1.msra.mxu0 0.0
    %6749 = vmatprep.subr.mxu0 0.0
    %6750 = vmatpush1.msra.mxu0 0.0
    %6751 = vmatprep.subr.mxu0 0.0
    %6752 = vmatpush1.msra.mxu0 0.0
    %6753 = vmatprep.subr.mxu0 0.0
    %6754 = vmatpush1.msra.mxu0 0.0
    %6755 = vmatprep.subr.mxu0 0.0
    %6756 = vmatpush1.msra.mxu0 0.0
    %6757 = vmatprep.subr.mxu0 0.0
    %6758 = vmatpush1.msra.mxu0 0.0
    %6759 = vmatprep.subr.mxu0 0.0
    %6760 = vmatpush1.msra.mxu0 0.0
    %6761 = vmatprep.subr.mxu0 0.0
    %6762 = vmatpush1.msra.mxu0 0.0
    %6763 = vmatprep.subr.mxu0 0.0
    %6764 = vmatpush1.msra.mxu0 0.0
    %6765 = vmatprep.subr.mxu0 0.0
    %6766 = vmatpush1.msra.mxu0 0.0
    %6767 = vmatprep.subr.mxu0 0.0
    %6768 = vmatpush1.msra.mxu0 0.0
    %6769 = vmatprep.subr.mxu0 0.0
    %6770 = vmatpush1.msra.mxu0 0.0
    %6771 = vmatprep.subr.mxu0 0.0
    %6772 = vmatpush1.msra.mxu0 0.0
    %6773 = vmatprep.subr.mxu0 0.0
    %6774 = vmatpush1.msra.mxu0 0.0
    %6775 = vmatprep.subr.mxu0 0.0
    %6776 = vmatpush1.msra.mxu0 0.0
    %6777 = vmatprep.subr.mxu0 0.0
    %6778 = vmatpush1.msra.mxu0 0.0
    %6779 = vmatprep.subr.mxu0 0.0
    %6780 = vmatpush1.msra.mxu0 0.0
    %6781 = vmatprep.subr.mxu0 0.0
    %6782 = vmatpush1.msra.mxu0 0.0
    %6783 = vmatprep.subr.mxu0 0.0
    %6784 = vmatpush1.msra.mxu0 0.0
    %6785 = vmatprep.subr.mxu0 0.0
    %6786 = vmatpush1.msra.mxu0 0.0
    %6787 = vmatprep.subr.mxu0 0.0
    %6788 = vmatpush1.msra.mxu0 0.0
    %6789 = vmatprep.mubr.f32.mxu0 0.0
    %6790 = vmatmul.mubr.f32.gmra.mrb[0].mxu0 %v6723
    %v6791 = vpop.f32.mrb[0].mxu0
    %v6792 = vadd.f32 0.0, %v6791
    %v6793 = vpop.f32.mrb[0].mxu0
    %6794 = vdwg.mxu0
    %6795 = vrot.lane.b32.xlu0 %v6634, 120
    %v6796 = vpop.permute.xlu0 %6795
    %6797 = vrot.lane.b32.xlu0 %v4832, 120
    %v6798 = vpop.permute.xlu0 %6797
    %v6799 = vsel %vm276, %v6796, 0
    %v6801 = vsel %vm276, %v6798, 0
    %6803 = vmatprep.subr.mxu0 0.0
    %6804 = vmatpush1.xpose.msra.mxu0 %v6801
    %6805 = vmatprep.subr.mxu0 0.0
    %6806 = vmatpush1.xpose.msra.mxu0 0.0
    %6807 = vmatprep.subr.mxu0 0.0
    %6808 = vmatpush1.xpose.msra.mxu0 0.0
    %6809 = vmatprep.subr.mxu0 0.0
    %6810 = vmatpush1.xpose.msra.mxu0 0.0
    %6811 = vmatprep.subr.mxu0 0.0
    %6812 = vmatpush1.xpose.msra.mxu0 0.0
    %6813 = vmatprep.subr.mxu0 0.0
    %6814 = vmatpush1.xpose.msra.mxu0 0.0
    %6815 = vmatprep.subr.mxu0 0.0
    %6816 = vmatpush1.xpose.msra.mxu0 0.0
    %6817 = vmatprep.subr.mxu0 0.0
    %6818 = vmatpush1.xpose.msra.mxu0 0.0
    %6819 = vmatprep.subr.mxu0 0.0
    %6820 = vmatpush1.xpose.msra.mxu0 0.0
    %6821 = vmatprep.subr.mxu0 0.0
    %6822 = vmatpush1.xpose.msra.mxu0 0.0
    %6823 = vmatprep.subr.mxu0 0.0
    %6824 = vmatpush1.xpose.msra.mxu0 0.0
    %6825 = vmatprep.subr.mxu0 0.0
    %6826 = vmatpush1.xpose.msra.mxu0 0.0
    %6827 = vmatprep.subr.mxu0 0.0
    %6828 = vmatpush1.xpose.msra.mxu0 0.0
    %6829 = vmatprep.subr.mxu0 0.0
    %6830 = vmatpush1.xpose.msra.mxu0 0.0
    %6831 = vmatprep.subr.mxu0 0.0
    %6832 = vmatpush1.xpose.msra.mxu0 0.0
    %6833 = vmatprep.subr.mxu0 0.0
    %6834 = vmatpush1.xpose.msra.mxu0 0.0
    %6835 = vmatprep.subr.mxu0 0.0
    %6836 = vmatpush1.xpose.msra.mxu0 0.0
    %6837 = vmatprep.subr.mxu0 0.0
    %6838 = vmatpush1.xpose.msra.mxu0 0.0
    %6839 = vmatprep.subr.mxu0 0.0
    %6840 = vmatpush1.xpose.msra.mxu0 0.0
    %6841 = vmatprep.subr.mxu0 0.0
    %6842 = vmatpush1.xpose.msra.mxu0 0.0
    %6843 = vmatprep.subr.mxu0 0.0
    %6844 = vmatpush1.xpose.msra.mxu0 0.0
    %6845 = vmatprep.subr.mxu0 0.0
    %6846 = vmatpush1.xpose.msra.mxu0 0.0
    %6847 = vmatprep.subr.mxu0 0.0
    %6848 = vmatpush1.xpose.msra.mxu0 0.0
    %6849 = vmatprep.subr.mxu0 0.0
    %6850 = vmatpush1.xpose.msra.mxu0 0.0
    %6851 = vmatprep.subr.mxu0 0.0
    %6852 = vmatpush1.xpose.msra.mxu0 0.0
    %6853 = vmatprep.subr.mxu0 0.0
    %6854 = vmatpush1.xpose.msra.mxu0 0.0
    %6855 = vmatprep.subr.mxu0 0.0
    %6856 = vmatpush1.xpose.msra.mxu0 0.0
    %6857 = vmatprep.subr.mxu0 0.0
    %6858 = vmatpush1.xpose.msra.mxu0 0.0
    %6859 = vmatprep.subr.mxu0 0.0
    %6860 = vmatpush1.xpose.msra.mxu0 0.0
    %6861 = vmatprep.subr.mxu0 0.0
    %6862 = vmatpush1.xpose.msra.mxu0 0.0
    %6863 = vmatprep.subr.mxu0 0.0
    %6864 = vmatpush1.xpose.msra.mxu0 0.0
    %6865 = vmatprep.subr.mxu0 0.0
    %6866 = vmatpush1.xpose.msra.mxu0 0.0
    %6867 = vmatprep.mubr.f32.mxu0 0.0
    %6868 = vmatmul.mubr.f32.gmra.mrb[0].mxu0 %v6799
    %v6869 = vpop.f32.mrb[0].mxu0
    %v6870 = vadd.f32 %v3037, %v6869
    %v6871 = vpop.f32.mrb[0].mxu0
    %6872 = vdwg.mxu0
    %v6873 = vsel %vm276, %v6870, -inf
    %6874 = vmax.xlane.f32.xlu0 %v6873
    %v6875 = vpop.xlane.xlu0 %6874
    %v6876 = vsub.f32 %v6870, %v6875
    %v6877 = vmul.f32 %v6876, 1.442695
    %v6878 = vpow.pop %v6877
    %v6879 = vsel %vm276, %v6878, 0.0
    %6880 = vadd.xlane.f32.xlu0 %v6879
    %v6881 = vpop.xlane.xlu0 %6880
    %v6882 = vrcp.pop %v6881
    %v6883 = vmul.f32 %v6878, %v6882
    %v6886 = vsel %vm276, %v6883, 0
    %6888 = vmatprep.subr.mxu0 0.0
    %6889 = vmatpush1.msra.mxu0 %v6798
    %6890 = vmatprep.subr.mxu0 0.0
    %6891 = vmatpush1.msra.mxu0 0.0
    %6892 = vmatprep.subr.mxu0 0.0
    %6893 = vmatpush1.msra.mxu0 0.0
    %6894 = vmatprep.subr.mxu0 0.0
    %6895 = vmatpush1.msra.mxu0 0.0
    %6896 = vmatprep.subr.mxu0 0.0
    %6897 = vmatpush1.msra.mxu0 0.0
    %6898 = vmatprep.subr.mxu0 0.0
    %6899 = vmatpush1.msra.mxu0 0.0
    %6900 = vmatprep.subr.mxu0 0.0
    %6901 = vmatpush1.msra.mxu0 0.0
    %6902 = vmatprep.subr.mxu0 0.0
    %6903 = vmatpush1.msra.mxu0 0.0
    %6904 = vmatprep.subr.mxu0 0.0
    %6905 = vmatpush1.msra.mxu0 0.0
    %6906 = vmatprep.subr.mxu0 0.0
    %6907 = vmatpush1.msra.mxu0 0.0
    %6908 = vmatprep.subr.mxu0 0.0
    %6909 = vmatpush1.msra.mxu0 0.0
    %6910 = vmatprep.subr.mxu0 0.0
    %6911 = vmatpush1.msra.mxu0 0.0
    %6912 = vmatprep.subr.mxu0 0.0
    %6913 = vmatpush1.msra.mxu0 0.0
    %6914 = vmatprep.subr.mxu0 0.0
    %6915 = vmatpush1.msra.mxu0 0.0
    %6916 = vmatprep.subr.mxu0 0.0
    %6917 = vmatpush1.msra.mxu0 0.0
    %6918 = vmatprep.subr.mxu0 0.0
    %6919 = vmatpush1.msra.mxu0 0.0
    %6920 = vmatprep.subr.mxu0 0.0
    %6921 = vmatpush1.msra.mxu0 0.0
    %6922 = vmatprep.subr.mxu0 0.0
    %6923 = vmatpush1.msra.mxu0 0.0
    %6924 = vmatprep.subr.mxu0 0.0
    %6925 = vmatpush1.msra.mxu0 0.0
    %6926 = vmatprep.subr.mxu0 0.0
    %6927 = vmatpush1.msra.mxu0 0.0
    %6928 = vmatprep.subr.mxu0 0.0
    %6929 = vmatpush1.msra.mxu0 0.0
    %6930 = vmatprep.subr.mxu0 0.0
    %6931 = vmatpush1.msra.mxu0 0.0
    %6932 = vmatprep.subr.mxu0 0.0
    %6933 = vmatpush1.msra.mxu0 0.0
    %6934 = vmatprep.subr.mxu0 0.0
    %6935 = vmatpush1.msra.mxu0 0.0
    %6936 = vmatprep.subr.mxu0 0.0
    %6937 = vmatpush1.msra.mxu0 0.0
    %6938 = vmatprep.subr.mxu0 0.0
    %6939 = vmatpush1.msra.mxu0 0.0
    %6940 = vmatprep.subr.mxu0 0.0
    %6941 = vmatpush1.msra.mxu0 0.0
    %6942 = vmatprep.subr.mxu0 0.0
    %6943 = vmatpush1.msra.mxu0 0.0
    %6944 = vmatprep.subr.mxu0 0.0
    %6945 = vmatpush1.msra.mxu0 0.0
    %6946 = vmatprep.subr.mxu0 0.0
    %6947 = vmatpush1.msra.mxu0 0.0
    %6948 = vmatprep.subr.mxu0 0.0
    %6949 = vmatpush1.msra.mxu0 0.0
    %6950 = vmatprep.subr.mxu0 0.0
    %6951 = vmatpush1.msra.mxu0 0.0
    %6952 = vmatprep.mubr.f32.mxu0 0.0
    %6953 = vmatmul.mubr.f32.gmra.mrb[0].mxu0 %v6886
    %v6954 = vpop.f32.mrb[0].mxu0
    %v6955 = vadd.f32 0.0, %v6954
    %v6956 = vpop.f32.mrb[0].mxu0
    %6957 = vdwg.mxu0
    %6959 = vrot.lane.b32.xlu0 %v6955, 8
    %v6960 = vpop.permute.xlu0 %6959
    %v6962 = vsel %vm276, %v6792, %v6960
    %v6963 = vld [vmem:[#allocation5 + $0x460] sm:$0xff]
    %v6964 = vld [vmem:[#allocation5 + $0x468] sm:$0xff]
    %v6965 = vld [vmem:[#allocation5 + $0x458] sm:$0x1]
    %v6966 = vlaneseq
    %v6967 = vshrl.u32 %v6966, 7
    %v6968 = vsub.s32 0, %v6967
    %v6969 = vrot.slane %v6965, %v6968
    %v6971 = vsel %vm198, %v6962, 0
    %6973 = vmatprep.subr.mxu0 0.0
    %6974 = vmatpush1.msra.mxu0 %v6963
    %6975 = vmatprep.subr.mxu0 0.0
    %6976 = vmatpush1.msra.mxu0 %v6964
    %6977 = vmatprep.subr.mxu0 0.0
    %6978 = vmatpush1.msra.mxu0 0.0
    %6979 = vmatprep.subr.mxu0 0.0
    %6980 = vmatpush1.msra.mxu0 0.0
    %6981 = vmatprep.subr.mxu0 0.0
    %6982 = vmatpush1.msra.mxu0 0.0
    %6983 = vmatprep.subr.mxu0 0.0
    %6984 = vmatpush1.msra.mxu0 0.0
    %6985 = vmatprep.subr.mxu0 0.0
    %6986 = vmatpush1.msra.mxu0 0.0
    %6987 = vmatprep.subr.mxu0 0.0
    %6988 = vmatpush1.msra.mxu0 0.0
    %6989 = vmatprep.subr.mxu0 0.0
    %6990 = vmatpush1.msra.mxu0 0.0
    %6991 = vmatprep.subr.mxu0 0.0
    %6992 = vmatpush1.msra.mxu0 0.0
    %6993 = vmatprep.subr.mxu0 0.0
    %6994 = vmatpush1.msra.mxu0 0.0
    %6995 = vmatprep.subr.mxu0 0.0
    %6996 = vmatpush1.msra.mxu0 0.0
    %6997 = vmatprep.subr.mxu0 0.0
    %6998 = vmatpush1.msra.mxu0 0.0
    %6999 = vmatprep.subr.mxu0 0.0
    %7000 = vmatpush1.msra.mxu0 0.0
    %7001 = vmatprep.subr.mxu0 0.0
    %7002 = vmatpush1.msra.mxu0 0.0
    %7003 = vmatprep.subr.mxu0 0.0
    %7004 = vmatpush1.msra.mxu0 0.0
    %7005 = vmatprep.subr.mxu0 0.0
    %7006 = vmatpush1.msra.mxu0 0.0
    %7007 = vmatprep.subr.mxu0 0.0
    %7008 = vmatpush1.msra.mxu0 0.0
    %7009 = vmatprep.subr.mxu0 0.0
    %7010 = vmatpush1.msra.mxu0 0.0
    %7011 = vmatprep.subr.mxu0 0.0
    %7012 = vmatpush1.msra.mxu0 0.0
    %7013 = vmatprep.subr.mxu0 0.0
    %7014 = vmatpush1.msra.mxu0 0.0
    %7015 = vmatprep.subr.mxu0 0.0
    %7016 = vmatpush1.msra.mxu0 0.0
    %7017 = vmatprep.subr.mxu0 0.0
    %7018 = vmatpush1.msra.mxu0 0.0
    %7019 = vmatprep.subr.mxu0 0.0
    %7020 = vmatpush1.msra.mxu0 0.0
    %7021 = vmatprep.subr.mxu0 0.0
    %7022 = vmatpush1.msra.mxu0 0.0
    %7023 = vmatprep.subr.mxu0 0.0
    %7024 = vmatpush1.msra.mxu0 0.0
    %7025 = vmatprep.subr.mxu0 0.0
    %7026 = vmatpush1.msra.mxu0 0.0
    %7027 = vmatprep.subr.mxu0 0.0
    %7028 = vmatpush1.msra.mxu0 0.0
    %7029 = vmatprep.subr.mxu0 0.0
    %7030 = vmatpush1.msra.mxu0 0.0
    %7031 = vmatprep.subr.mxu0 0.0
    %7032 = vmatpush1.msra.mxu0 0.0
    %7033 = vmatprep.subr.mxu0 0.0
    %7034 = vmatpush1.msra.mxu0 0.0
    %7035 = vmatprep.subr.mxu0 0.0
    %7036 = vmatpush1.msra.mxu0 0.0
    %7037 = vmatprep.mubr.f32.mxu0 0.0
    %7038 = vmatmul.mubr.f32.gmra.mrb[0].mxu0 %v6971
    %v7039 = vpop.f32.mrb[0].mxu0
    %v7040 = vadd.f32 %v6969, %v7039
    %v7041 = vpop.f32.mrb[0].mxu0
    %7042 = vdwg.mxu0
    %v7043 = vadd.f32 %v6007, %v7040
    %v7044 = vsel %vm198, %v7043, 0.0
    %7045 = vadd.xlane.f32.xlu0 %v7044
    %v7046 = vpop.xlane.xlu0 %7045
    %v7047 = vmul.f32 %v7046, %v938
    %v7048 = vsub.f32 %v7043, %v7047
    %v7049 = vmul.f32 %v7048, %v7048
    %v7050 = vsel %vm198, %v7049, 0.0
    %7051 = vadd.xlane.f32.xlu0 %v7050
    %v7052 = vpop.xlane.xlu0 %7051
    %v7053 = vmul.f32 %v7052, %v938
    %v7054 = vadd.f32 %v7053, 1e-05
    %v7055 = vrsqrt.pop %v7054
    %v7056 = vmul.f32 %v7048, %v7055
    %v7057 = vld [vmem:[#allocation5 + $0x420] sm:$0x1]
    %v7058 = vlaneseq
    %v7059 = vshrl.u32 %v7058, 7
    %v7060 = vsub.s32 0, %v7059
    %v7061 = vrot.slane %v7057, %v7060
    %v7062 = vmul.f32 %v7056, %v7061
    %v7063 = vld [vmem:[#allocation5 + $0x418] sm:$0x1]
    %v7064 = vlaneseq
    %v7065 = vshrl.u32 %v7064, 7
    %v7066 = vsub.s32 0, %v7065
    %v7067 = vrot.slane %v7063, %v7066
    %v7068 = vadd.f32 %v7062, %v7067
    %v7069 = vld [vmem:[#allocation5 + $0x428] sm:$0xff]
    %v7070 = vld [vmem:[#allocation5 + $0x430] sm:$0xff]
    %v7071 = vld [vmem:[#allocation5 + $0x408] sm:$0x1]
    %v7072 = vlaneseq
    %v7073 = vshrl.u32 %v7072, 7
    %v7074 = vsub.s32 0, %v7073
    %v7075 = vrot.slane %v7071, %v7074
    %v7077 = vsel %vm198, %v7068, 0
    %7079 = vmatprep.subr.mxu0 0.0
    %7080 = vmatpush1.msra.mxu0 %v7069
    %7081 = vmatprep.subr.mxu0 0.0
    %7082 = vmatpush1.msra.mxu0 %v7070
    %7083 = vmatprep.subr.mxu0 0.0
    %7084 = vmatpush1.msra.mxu0 0.0
    %7085 = vmatprep.subr.mxu0 0.0
    %7086 = vmatpush1.msra.mxu0 0.0
    %7087 = vmatprep.subr.mxu0 0.0
    %7088 = vmatpush1.msra.mxu0 0.0
    %7089 = vmatprep.subr.mxu0 0.0
    %7090 = vmatpush1.msra.mxu0 0.0
    %7091 = vmatprep.subr.mxu0 0.0
    %7092 = vmatpush1.msra.mxu0 0.0
    %7093 = vmatprep.subr.mxu0 0.0
    %7094 = vmatpush1.msra.mxu0 0.0
    %7095 = vmatprep.subr.mxu0 0.0
    %7096 = vmatpush1.msra.mxu0 0.0
    %7097 = vmatprep.subr.mxu0 0.0
    %7098 = vmatpush1.msra.mxu0 0.0
    %7099 = vmatprep.subr.mxu0 0.0
    %7100 = vmatpush1.msra.mxu0 0.0
    %7101 = vmatprep.subr.mxu0 0.0
    %7102 = vmatpush1.msra.mxu0 0.0
    %7103 = vmatprep.subr.mxu0 0.0
    %7104 = vmatpush1.msra.mxu0 0.0
    %7105 = vmatprep.subr.mxu0 0.0
    %7106 = vmatpush1.msra.mxu0 0.0
    %7107 = vmatprep.subr.mxu0 0.0
    %7108 = vmatpush1.msra.mxu0 0.0
    %7109 = vmatprep.subr.mxu0 0.0
    %7110 = vmatpush1.msra.mxu0 0.0
    %7111 = vmatprep.subr.mxu0 0.0
    %7112 = vmatpush1.msra.mxu0 0.0
    %7113 = vmatprep.subr.mxu0 0.0
    %7114 = vmatpush1.msra.mxu0 0.0
    %7115 = vmatprep.subr.mxu0 0.0
    %7116 = vmatpush1.msra.mxu0 0.0
    %7117 = vmatprep.subr.mxu0 0.0
    %7118 = vmatpush1.msra.mxu0 0.0
    %7119 = vmatprep.subr.mxu0 0.0
    %7120 = vmatpush1.msra.mxu0 0.0
    %7121 = vmatprep.subr.mxu0 0.0
    %7122 = vmatpush1.msra.mxu0 0.0
    %7123 = vmatprep.subr.mxu0 0.0
    %7124 = vmatpush1.msra.mxu0 0.0
    %7125 = vmatprep.subr.mxu0 0.0
    %7126 = vmatpush1.msra.mxu0 0.0
    %7127 = vmatprep.subr.mxu0 0.0
    %7128 = vmatpush1.msra.mxu0 0.0
    %7129 = vmatprep.subr.mxu0 0.0
    %7130 = vmatpush1.msra.mxu0 0.0
    %7131 = vmatprep.subr.mxu0 0.0
    %7132 = vmatpush1.msra.mxu0 0.0
    %7133 = vmatprep.subr.mxu0 0.0
    %7134 = vmatpush1.msra.mxu0 0.0
    %7135 = vmatprep.subr.mxu0 0.0
    %7136 = vmatpush1.msra.mxu0 0.0
    %7137 = vmatprep.subr.mxu0 0.0
    %7138 = vmatpush1.msra.mxu0 0.0
    %7139 = vmatprep.subr.mxu0 0.0
    %7140 = vmatpush1.msra.mxu0 0.0
    %7141 = vmatprep.subr.mxu0 0.0
    %7142 = vmatpush1.msra.mxu0 0.0
    %7143 = vmatprep.mubr.f32.mxu0 0.0
    %7144 = vmatmul.mubr.f32.gmra.mrb[0].mxu0 %v7077
    %v7145 = vpop.f32.mrb[0].mxu0
    %v7146 = vadd.f32 %v7075, %v7145
    %v7147 = vpop.f32.mrb[0].mxu0
    %7148 = vdwg.mxu0
    %v7149 = vmul.f32 %v7146, 0.5
    %v7150 = vmul.f32 %v7146, 0.70710677
    %vm7151 = vcmp.ge.f32.partialorder %v7150, 0.0
    %v7152 = vsel %vm7151, 1.0, -1.0
    %v7153 = vand.u32 2147483647, %v7150
    %v7154 = vmul.f32 %v7153, 0.3275911
    %v7155 = vadd.f32 %v7154, 1.0
    %v7156 = vrcp.pop %v7155
    %v7157 = vmul.f32 1.0, %v7156
    %v7158 = vmul.f32 %v7157, 1.0614054
    %v7159 = vadd.f32 %v7158, -1.4531521
    %v7160 = vmul.f32 %v7159, %v7157
    %v7161 = vadd.f32 %v7160, 1.4214138
    %v7162 = vmul.f32 %v7161, %v7157
    %v7163 = vadd.f32 %v7162, -0.28449672
    %v7164 = vmul.f32 %v7163, %v7157
    %v7165 = vadd.f32 %v7164, 0.2548296
    %v7166 = vmul.f32 %v7165, %v7157
    %v7167 = vsub.f32 0.0, %v7153
    %v7168 = vmul.f32 %v7167, %v7153
    %v7169 = vmul.f32 %v7168, 1.442695
    %v7170 = vpow.pop %v7169
    %v7171 = vmul.f32 %v7166, %v7170
    %v7172 = vsub.f32 1.0, %v7171
    %v7173 = vmul.f32 %v7152, %v7172
    %v7174 = vadd.f32 %v7173, 1.0
    %v7175 = vmul.f32 %v7149, %v7174
    %v7176 = vld [vmem:[#allocation5 + $0x438] sm:$0xff]
    %v7177 = vld [vmem:[#allocation5 + $0x440] sm:$0xff]
    %v7178 = vld [vmem:[#allocation5 + $0x448] sm:$0xff]
    %v7179 = vld [vmem:[#allocation5 + $0x450] sm:$0xff]
    %v7180 = vld [vmem:[#allocation5 + $0x410] sm:$0x1]
    %v7181 = vlaneseq
    %v7182 = vshrl.u32 %v7181, 7
    %v7183 = vsub.s32 0, %v7182
    %v7184 = vrot.slane %v7180, %v7183
    %v7186 = vsel %vm51, %v7175, 0
    %7188 = vmatprep.subr.mxu0 0.0
    %7189 = vmatpush1.msra.mxu0 %v7176
    %7190 = vmatprep.subr.mxu0 0.0
    %7191 = vmatpush1.msra.mxu0 %v7177
    %7192 = vmatprep.subr.mxu0 0.0
    %7193 = vmatpush1.msra.mxu0 %v7178
    %7194 = vmatprep.subr.mxu0 0.0
    %7195 = vmatpush1.msra.mxu0 %v7179
    %7196 = vmatprep.subr.mxu0 0.0
    %7197 = vmatpush1.msra.mxu0 0.0
    %7198 = vmatprep.subr.mxu0 0.0
    %7199 = vmatpush1.msra.mxu0 0.0
    %7200 = vmatprep.subr.mxu0 0.0
    %7201 = vmatpush1.msra.mxu0 0.0
    %7202 = vmatprep.subr.mxu0 0.0
    %7203 = vmatpush1.msra.mxu0 0.0
    %7204 = vmatprep.subr.mxu0 0.0
    %7205 = vmatpush1.msra.mxu0 0.0
    %7206 = vmatprep.subr.mxu0 0.0
    %7207 = vmatpush1.msra.mxu0 0.0
    %7208 = vmatprep.subr.mxu0 0.0
    %7209 = vmatpush1.msra.mxu0 0.0
    %7210 = vmatprep.subr.mxu0 0.0
    %7211 = vmatpush1.msra.mxu0 0.0
    %7212 = vmatprep.subr.mxu0 0.0
    %7213 = vmatpush1.msra.mxu0 0.0
    %7214 = vmatprep.subr.mxu0 0.0
    %7215 = vmatpush1.msra.mxu0 0.0
    %7216 = vmatprep.subr.mxu0 0.0
    %7217 = vmatpush1.msra.mxu0 0.0
    %7218 = vmatprep.subr.mxu0 0.0
    %7219 = vmatpush1.msra.mxu0 0.0
    %7220 = vmatprep.subr.mxu0 0.0
    %7221 = vmatpush1.msra.mxu0 0.0
    %7222 = vmatprep.subr.mxu0 0.0
    %7223 = vmatpush1.msra.mxu0 0.0
    %7224 = vmatprep.subr.mxu0 0.0
    %7225 = vmatpush1.msra.mxu0 0.0
    %7226 = vmatprep.subr.mxu0 0.0
    %7227 = vmatpush1.msra.mxu0 0.0
    %7228 = vmatprep.subr.mxu0 0.0
    %7229 = vmatpush1.msra.mxu0 0.0
    %7230 = vmatprep.subr.mxu0 0.0
    %7231 = vmatpush1.msra.mxu0 0.0
    %7232 = vmatprep.subr.mxu0 0.0
    %7233 = vmatpush1.msra.mxu0 0.0
    %7234 = vmatprep.subr.mxu0 0.0
    %7235 = vmatpush1.msra.mxu0 0.0
    %7236 = vmatprep.subr.mxu0 0.0
    %7237 = vmatpush1.msra.mxu0 0.0
    %7238 = vmatprep.subr.mxu0 0.0
    %7239 = vmatpush1.msra.mxu0 0.0
    %7240 = vmatprep.subr.mxu0 0.0
    %7241 = vmatpush1.msra.mxu0 0.0
    %7242 = vmatprep.subr.mxu0 0.0
    %7243 = vmatpush1.msra.mxu0 0.0
    %7244 = vmatprep.subr.mxu0 0.0
    %7245 = vmatpush1.msra.mxu0 0.0
    %7246 = vmatprep.subr.mxu0 0.0
    %7247 = vmatpush1.msra.mxu0 0.0
    %7248 = vmatprep.subr.mxu0 0.0
    %7249 = vmatpush1.msra.mxu0 0.0
    %7250 = vmatprep.subr.mxu0 0.0
    %7251 = vmatpush1.msra.mxu0 0.0
    %7252 = vmatprep.mubr.f32.mxu0 0.0
    %7253 = vmatmul.mubr.f32.gmra.mrb[0].mxu0 %v7186
    %v7254 = vpop.f32.mrb[0].mxu0
    %v7255 = vadd.f32 %v7184, %v7254
    %v7256 = vpop.f32.mrb[0].mxu0
    %7257 = vdwg.mxu0
    %v7259 = vrot.slane %v6631, 1
    %7260 = vrot.lane.b32.xlu0 %v7259, 8
    %v7261 = vpop.permute.xlu0 %7260
    %v7263 = vrot.slane %v6631, 2
    %7264 = vrot.lane.b32.xlu0 %v7263, 16
    %v7265 = vpop.permute.xlu0 %7264
    %v7267 = vrot.slane %v6631, 3
    %7268 = vrot.lane.b32.xlu0 %v7267, 24
    %v7269 = vpop.permute.xlu0 %7268
    %v7272 = vrot.slane %v941, 1
    %v7274 = vrot.slane %v941, 2
    %v7276 = vrot.slane %v941, 3
    %v7279 = vrot.slane %v4548, 1
    %v7281 = vrot.slane %v4548, 2
    %v7283 = vrot.slane %v4548, 3
    %v7285 = vsel %vm276, %v6631, %v7261
    %v7286 = vsel %vm198, %v7285, %v7265
    %v7287 = vsel %vm710, %v7286, %v7269
    %v7288 = vsel %vm51, %v7287, %v941
    %v7289 = vsel %vm694, %v7288, %v7272
    %v7290 = vsel %vm1870, %v7289, %v7274
    %vm7291 = vcmask 285696
    %v7292 = vsel %vm7291, %v7290, %v7276
    %vm7293 = vcmask 293888
    %v7294 = vsel %vm7293, %v7292, %v4548
    %vm7295 = vcmask 302080
    %v7296 = vsel %vm7295, %v7294, %v7279
    %vm7297 = vcmask 310272
    %v7298 = vsel %vm7297, %v7296, %v7281
    %vm7299 = vcmask 318464
    %v7300 = vsel %vm7299, %v7298, %v7283
    %v7302 = vrot.slane %v7300, 3
    %vm7304 = vcmask 1040384
    %v7305 = vsel %vm7304, %v7300, %v7302
    %vm7306 = vcmask 320512
    %v7307 = vsel %vm7306, %v7305, 0.0
    %7308 = vadd.xlane.f32.xlu0 %v7307
    %v7309 = vpop.xlane.xlu0 %7308
    %v7310 = vrcp.pop 40.0
    %v7311 = vmul.f32 %v7309, %v7310
    %v7312 = vsub.f32 %v7305, %v7311
    %v7313 = vmul.f32 %v7312, %v7312
    %v7314 = vsel %vm7306, %v7313, 0.0
    %7315 = vadd.xlane.f32.xlu0 %v7314
    %v7316 = vpop.xlane.xlu0 %7315
    %v7317 = vmul.f32 %v7316, %v7310
    %v7318 = vadd.f32 %v7317, 1e-05
    %v7319 = vrsqrt.pop %v7318
    %v7320 = vmul.f32 %v7312, %v7319
    %v7321 = vld [vmem:[#allocation5 + $0x98] sm:$0x1]
    %v7322 = vlaneseq
    %v7323 = vshrl.u32 %v7322, 7
    %v7324 = vsub.s32 0, %v7323
    %v7325 = vrot.slane %v7321, %v7324
    %v7326 = vmul.f32 %v7320, %v7325
    %v7327 = vld [vmem:[#allocation5 + $0x90] sm:$0x1]
    %v7328 = vlaneseq
    %v7329 = vshrl.u32 %v7328, 7
    %v7330 = vsub.s32 0, %v7329
    %v7331 = vrot.slane %v7327, %v7330
    %v7332 = vadd.f32 %v7326, %v7331
    %v7333 = vld [vmem:[#allocation5 + $0xa0] sm:$0xff]
    %v7334 = vld [vmem:[#allocation5 + $0xa8] sm:$0xff]
    %v7335 = vld [vmem:[#allocation5 + $0xb0] sm:$0xff]
    %v7336 = vld [vmem:[#allocation5 + $0xb8] sm:$0xff]
    %v7337 = vld [vmem:[#allocation5 + $0xc0] sm:$0xff]
    %v7338 = vld [vmem:[#allocation5 + $0x80] sm:$0x1]
    %v7339 = vlaneseq
    %v7340 = vshrl.u32 %v7339, 7
    %v7341 = vsub.s32 0, %v7340
    %v7342 = vrot.slane %v7338, %v7341
    %v7344 = vsel %vm1892, %v7332, 0
    %7346 = vmatprep.subr.mxu0 0.0
    %7347 = vmatpush1.msra.mxu0 %v7333
    %7348 = vmatprep.subr.mxu0 0.0
    %7349 = vmatpush1.msra.mxu0 %v7334
    %7350 = vmatprep.subr.mxu0 0.0
    %7351 = vmatpush1.msra.mxu0 %v7335
    %7352 = vmatprep.subr.mxu0 0.0
    %7353 = vmatpush1.msra.mxu0 %v7336
    %7354 = vmatprep.subr.mxu0 0.0
    %7355 = vmatpush1.msra.mxu0 %v7337
    %7356 = vmatprep.subr.mxu0 0.0
    %7357 = vmatpush1.msra.mxu0 0.0
    %7358 = vmatprep.subr.mxu0 0.0
    %7359 = vmatpush1.msra.mxu0 0.0
    %7360 = vmatprep.subr.mxu0 0.0
    %7361 = vmatpush1.msra.mxu0 0.0
    %7362 = vmatprep.subr.mxu0 0.0
    %7363 = vmatpush1.msra.mxu0 0.0
    %7364 = vmatprep.subr.mxu0 0.0
    %7365 = vmatpush1.msra.mxu0 0.0
    %7366 = vmatprep.subr.mxu0 0.0
    %7367 = vmatpush1.msra.mxu0 0.0
    %7368 = vmatprep.subr.mxu0 0.0
    %7369 = vmatpush1.msra.mxu0 0.0
    %7370 = vmatprep.subr.mxu0 0.0
    %7371 = vmatpush1.msra.mxu0 0.0
    %7372 = vmatprep.subr.mxu0 0.0
    %7373 = vmatpush1.msra.mxu0 0.0
    %7374 = vmatprep.subr.mxu0 0.0
    %7375 = vmatpush1.msra.mxu0 0.0
    %7376 = vmatprep.subr.mxu0 0.0
    %7377 = vmatpush1.msra.mxu0 0.0
    %7378 = vmatprep.subr.mxu0 0.0
    %7379 = vmatpush1.msra.mxu0 0.0
    %7380 = vmatprep.subr.mxu0 0.0
    %7381 = vmatpush1.msra.mxu0 0.0
    %7382 = vmatprep.subr.mxu0 0.0
    %7383 = vmatpush1.msra.mxu0 0.0
    %7384 = vmatprep.subr.mxu0 0.0
    %7385 = vmatpush1.msra.mxu0 0.0
    %7386 = vmatprep.subr.mxu0 0.0
    %7387 = vmatpush1.msra.mxu0 0.0
    %7388 = vmatprep.subr.mxu0 0.0
    %7389 = vmatpush1.msra.mxu0 0.0
    %7390 = vmatprep.subr.mxu0 0.0
    %7391 = vmatpush1.msra.mxu0 0.0
    %7392 = vmatprep.subr.mxu0 0.0
    %7393 = vmatpush1.msra.mxu0 0.0
    %7394 = vmatprep.subr.mxu0 0.0
    %7395 = vmatpush1.msra.mxu0 0.0
    %7396 = vmatprep.subr.mxu0 0.0
    %7397 = vmatpush1.msra.mxu0 0.0
    %7398 = vmatprep.subr.mxu0 0.0
    %7399 = vmatpush1.msra.mxu0 0.0
    %7400 = vmatprep.subr.mxu0 0.0
    %7401 = vmatpush1.msra.mxu0 0.0
    %7402 = vmatprep.subr.mxu0 0.0
    %7403 = vmatpush1.msra.mxu0 0.0
    %7404 = vmatprep.subr.mxu0 0.0
    %7405 = vmatpush1.msra.mxu0 0.0
    %7406 = vmatprep.subr.mxu0 0.0
    %7407 = vmatpush1.msra.mxu0 0.0
    %7408 = vmatprep.subr.mxu0 0.0
    %7409 = vmatpush1.msra.mxu0 0.0
    %7410 = vmatprep.mubr.f32.mxu0 0.0
    %7411 = vmatmul.mubr.f32.gmra.mrb[0].mxu0 %v7344
    %v7412 = vpop.f32.mrb[0].mxu0
    %v7413 = vadd.f32 %v7342, %v7412
    %v7414 = vpop.f32.mrb[0].mxu0
    %7415 = vdwg.mxu0
    %v7416 = vmul.f32 %v7413, 0.5
    %v7417 = vmul.f32 %v7413, 0.70710677
    %vm7418 = vcmp.ge.f32.partialorder %v7417, 0.0
    %v7419 = vsel %vm7418, 1.0, -1.0
    %v7420 = vand.u32 2147483647, %v7417
    %v7421 = vmul.f32 %v7420, 0.3275911
    %v7422 = vadd.f32 %v7421, 1.0
    %v7423 = vrcp.pop %v7422
    %v7424 = vmul.f32 1.0, %v7423
    %v7425 = vmul.f32 %v7424, 1.0614054
    %v7426 = vadd.f32 %v7425, -1.4531521
    %v7427 = vmul.f32 %v7426, %v7424
    %v7428 = vadd.f32 %v7427, 1.4214138
    %v7429 = vmul.f32 %v7428, %v7424
    %v7430 = vadd.f32 %v7429, -0.28449672
    %v7431 = vmul.f32 %v7430, %v7424
    %v7432 = vadd.f32 %v7431, 0.2548296
    %v7433 = vmul.f32 %v7432, %v7424
    %v7434 = vsub.f32 0.0, %v7420
    %v7435 = vmul.f32 %v7434, %v7420
    %v7436 = vmul.f32 %v7435, 1.442695
    %v7437 = vpow.pop %v7436
    %v7438 = vmul.f32 %v7433, %v7437
    %v7439 = vsub.f32 1.0, %v7438
    %v7440 = vmul.f32 %v7419, %v7439
    %v7441 = vadd.f32 %v7440, 1.0
    %v7442 = vmul.f32 %v7416, %v7441
    %v7443 = vld [vmem:[#allocation5 + $0xc8] sm:$0xff]
    %v7444 = vld [vmem:[#allocation5 + $0x88] sm:$0x1]
    %v7445 = vlaneseq
    %v7446 = vshrl.u32 %v7445, 7
    %v7447 = vsub.s32 0, %v7446
    %v7448 = vrot.slane %v7444, %v7447
    %v7450 = vsel %vm276, %v7442, 0
    %7452 = vmatprep.subr.mxu0 0.0
    %7453 = vmatpush1.msra.mxu0 %v7443
    %7454 = vmatprep.subr.mxu0 0.0
    %7455 = vmatpush1.msra.mxu0 0.0
    %7456 = vmatprep.subr.mxu0 0.0
    %7457 = vmatpush1.msra.mxu0 0.0
    %7458 = vmatprep.subr.mxu0 0.0
    %7459 = vmatpush1.msra.mxu0 0.0
    %7460 = vmatprep.subr.mxu0 0.0
    %7461 = vmatpush1.msra.mxu0 0.0
    %7462 = vmatprep.subr.mxu0 0.0
    %7463 = vmatpush1.msra.mxu0 0.0
    %7464 = vmatprep.subr.mxu0 0.0
    %7465 = vmatpush1.msra.mxu0 0.0
    %7466 = vmatprep.subr.mxu0 0.0
    %7467 = vmatpush1.msra.mxu0 0.0
    %7468 = vmatprep.subr.mxu0 0.0
    %7469 = vmatpush1.msra.mxu0 0.0
    %7470 = vmatprep.subr.mxu0 0.0
    %7471 = vmatpush1.msra.mxu0 0.0
    %7472 = vmatprep.subr.mxu0 0.0
    %7473 = vmatpush1.msra.mxu0 0.0
    %7474 = vmatprep.subr.mxu0 0.0
    %7475 = vmatpush1.msra.mxu0 0.0
    %7476 = vmatprep.subr.mxu0 0.0
    %7477 = vmatpush1.msra.mxu0 0.0
    %7478 = vmatprep.subr.mxu0 0.0
    %7479 = vmatpush1.msra.mxu0 0.0
    %7480 = vmatprep.subr.mxu0 0.0
    %7481 = vmatpush1.msra.mxu0 0.0
    %7482 = vmatprep.subr.mxu0 0.0
    %7483 = vmatpush1.msra.mxu0 0.0
    %7484 = vmatprep.subr.mxu0 0.0
    %7485 = vmatpush1.msra.mxu0 0.0
    %7486 = vmatprep.subr.mxu0 0.0
    %7487 = vmatpush1.msra.mxu0 0.0
    %7488 = vmatprep.subr.mxu0 0.0
    %7489 = vmatpush1.msra.mxu0 0.0
    %7490 = vmatprep.subr.mxu0 0.0
    %7491 = vmatpush1.msra.mxu0 0.0
    %7492 = vmatprep.subr.mxu0 0.0
    %7493 = vmatpush1.msra.mxu0 0.0
    %7494 = vmatprep.subr.mxu0 0.0
    %7495 = vmatpush1.msra.mxu0 0.0
    %7496 = vmatprep.subr.mxu0 0.0
    %7497 = vmatpush1.msra.mxu0 0.0
    %7498 = vmatprep.subr.mxu0 0.0
    %7499 = vmatpush1.msra.mxu0 0.0
    %7500 = vmatprep.subr.mxu0 0.0
    %7501 = vmatpush1.msra.mxu0 0.0
    %7502 = vmatprep.subr.mxu0 0.0
    %7503 = vmatpush1.msra.mxu0 0.0
    %7504 = vmatprep.subr.mxu0 0.0
    %7505 = vmatpush1.msra.mxu0 0.0
    %7506 = vmatprep.subr.mxu0 0.0
    %7507 = vmatpush1.msra.mxu0 0.0
    %7508 = vmatprep.subr.mxu0 0.0
    %7509 = vmatpush1.msra.mxu0 0.0
    %7510 = vmatprep.subr.mxu0 0.0
    %7511 = vmatpush1.msra.mxu0 0.0
    %7512 = vmatprep.subr.mxu0 0.0
    %7513 = vmatpush1.msra.mxu0 0.0
    %7514 = vmatprep.subr.mxu0 0.0
    %7515 = vmatpush1.msra.mxu0 0.0
    %7516 = vmatprep.mubr.f32.mxu0 0.0
    %7517 = vmatmul.mubr.f32.gmra.mrb[0].mxu0 %v7450
    %v7518 = vpop.f32.mrb[0].mxu0
    %v7519 = vadd.f32 %v7448, %v7518
    %v7520 = vpop.f32.mrb[0].mxu0
    %7521 = vdwg.mxu0
    %v7523 = vrot.slane %v7255, 1
    %7524 = vrot.lane.b32.xlu0 %v7523, 8
    %v7525 = vpop.permute.xlu0 %7524
    %v7527 = vrot.slane %v7255, 2
    %7528 = vrot.lane.b32.xlu0 %v7527, 16
    %v7529 = vpop.permute.xlu0 %7528
    %v7531 = vrot.slane %v7255, 3
    %7532 = vrot.lane.b32.xlu0 %v7531, 24
    %v7533 = vpop.permute.xlu0 %7532
    %v7536 = vrot.slane %v2122, 1
    %v7538 = vrot.slane %v2122, 2
    %v7540 = vrot.slane %v2122, 3
    %v7543 = vrot.slane %v5723, 1
    %v7545 = vrot.slane %v5723, 2
    %v7547 = vrot.slane %v5723, 3
    %v7549 = vsel %vm276, %v7255, %v7525
    %v7550 = vsel %vm198, %v7549, %v7529
    %v7551 = vsel %vm710, %v7550, %v7533
    %v7552 = vsel %vm51, %v7551, %v2122
    %v7553 = vsel %vm694, %v7552, %v7536
    %v7554 = vsel %vm1870, %v7553, %v7538
    %v7555 = vsel %vm7291, %v7554, %v7540
    %v7556 = vsel %vm7293, %v7555, %v5723
    %v7557 = vsel %vm7295, %v7556, %v7543
    %v7558 = vsel %vm7297, %v7557, %v7545
    %v7559 = vsel %vm7299, %v7558, %v7547
    %v7561 = vrot.slane %v7559, 3
    %v7563 = vsel %vm7304, %v7559, %v7561
    %v7564 = vsel %vm7306, %v7563, 0.0
    %7565 = vadd.xlane.f32.xlu0 %v7564
    %v7566 = vpop.xlane.xlu0 %7565
    %v7567 = vmul.f32 %v7566, %v7310
    %v7568 = vsub.f32 %v7563, %v7567
    %v7569 = vmul.f32 %v7568, %v7568
    %v7570 = vsel %vm7306, %v7569, 0.0
    %7571 = vadd.xlane.f32.xlu0 %v7570
    %v7572 = vpop.xlane.xlu0 %7571
    %v7573 = vmul.f32 %v7572, %v7310
    %v7574 = vadd.f32 %v7573, 1e-05
    %v7575 = vrsqrt.pop %v7574
    %v7576 = vmul.f32 %v7568, %v7575
    %v7577 = vld [vmem:[#allocation5 + $0xe8] sm:$0x1]
    %v7578 = vlaneseq
    %v7579 = vshrl.u32 %v7578, 7
    %v7580 = vsub.s32 0, %v7579
    %v7581 = vrot.slane %v7577, %v7580
    %v7582 = vmul.f32 %v7576, %v7581
    %v7583 = vld [vmem:[#allocation5 + $0xe0] sm:$0x1]
    %v7584 = vlaneseq
    %v7585 = vshrl.u32 %v7584, 7
    %v7586 = vsub.s32 0, %v7585
    %v7587 = vrot.slane %v7583, %v7586
    %v7588 = vadd.f32 %v7582, %v7587
    %v7589 = vld [vmem:[#allocation5 + $0xf0] sm:$0xff]
    %v7590 = vld [vmem:[#allocation5 + $0xf8] sm:$0xff]
    %v7591 = vld [vmem:[#allocation5 + $0x100] sm:$0xff]
    %v7592 = vld [vmem:[#allocation5 + $0x108] sm:$0xff]
    %v7593 = vld [vmem:[#allocation5 + $0x110] sm:$0xff]
    %v7594 = vld [vmem:[#allocation5 + $0xd0] sm:$0x1]
    %v7595 = vlaneseq
    %v7596 = vshrl.u32 %v7595, 7
    %v7597 = vsub.s32 0, %v7596
    %v7598 = vrot.slane %v7594, %v7597
    %v7600 = vsel %vm1892, %v7588, 0
    %7602 = vmatprep.subr.mxu0 0.0
    %7603 = vmatpush1.msra.mxu0 %v7589
    %7604 = vmatprep.subr.mxu0 0.0
    %7605 = vmatpush1.msra.mxu0 %v7590
    %7606 = vmatprep.subr.mxu0 0.0
    %7607 = vmatpush1.msra.mxu0 %v7591
    %7608 = vmatprep.subr.mxu0 0.0
    %7609 = vmatpush1.msra.mxu0 %v7592
    %7610 = vmatprep.subr.mxu0 0.0
    %7611 = vmatpush1.msra.mxu0 %v7593
    %7612 = vmatprep.subr.mxu0 0.0
    %7613 = vmatpush1.msra.mxu0 0.0
    %7614 = vmatprep.subr.mxu0 0.0
    %7615 = vmatpush1.msra.mxu0 0.0
    %7616 = vmatprep.subr.mxu0 0.0
    %7617 = vmatpush1.msra.mxu0 0.0
    %7618 = vmatprep.subr.mxu0 0.0
    %7619 = vmatpush1.msra.mxu0 0.0
    %7620 = vmatprep.subr.mxu0 0.0
    %7621 = vmatpush1.msra.mxu0 0.0
    %7622 = vmatprep.subr.mxu0 0.0
    %7623 = vmatpush1.msra.mxu0 0.0
    %7624 = vmatprep.subr.mxu0 0.0
    %7625 = vmatpush1.msra.mxu0 0.0
    %7626 = vmatprep.subr.mxu0 0.0
    %7627 = vmatpush1.msra.mxu0 0.0
    %7628 = vmatprep.subr.mxu0 0.0
    %7629 = vmatpush1.msra.mxu0 0.0
    %7630 = vmatprep.subr.mxu0 0.0
    %7631 = vmatpush1.msra.mxu0 0.0
    %7632 = vmatprep.subr.mxu0 0.0
    %7633 = vmatpush1.msra.mxu0 0.0
    %7634 = vmatprep.subr.mxu0 0.0
    %7635 = vmatpush1.msra.mxu0 0.0
    %7636 = vmatprep.subr.mxu0 0.0
    %7637 = vmatpush1.msra.mxu0 0.0
    %7638 = vmatprep.subr.mxu0 0.0
    %7639 = vmatpush1.msra.mxu0 0.0
    %7640 = vmatprep.subr.mxu0 0.0
    %7641 = vmatpush1.msra.mxu0 0.0
    %7642 = vmatprep.subr.mxu0 0.0
    %7643 = vmatpush1.msra.mxu0 0.0
    %7644 = vmatprep.subr.mxu0 0.0
    %7645 = vmatpush1.msra.mxu0 0.0
    %7646 = vmatprep.subr.mxu0 0.0
    %7647 = vmatpush1.msra.mxu0 0.0
    %7648 = vmatprep.subr.mxu0 0.0
    %7649 = vmatpush1.msra.mxu0 0.0
    %7650 = vmatprep.subr.mxu0 0.0
    %7651 = vmatpush1.msra.mxu0 0.0
    %7652 = vmatprep.subr.mxu0 0.0
    %7653 = vmatpush1.msra.mxu0 0.0
    %7654 = vmatprep.subr.mxu0 0.0
    %7655 = vmatpush1.msra.mxu0 0.0
    %7656 = vmatprep.subr.mxu0 0.0
    %7657 = vmatpush1.msra.mxu0 0.0
    %7658 = vmatprep.subr.mxu0 0.0
    %7659 = vmatpush1.msra.mxu0 0.0
    %7660 = vmatprep.subr.mxu0 0.0
    %7661 = vmatpush1.msra.mxu0 0.0
    %7662 = vmatprep.subr.mxu0 0.0
    %7663 = vmatpush1.msra.mxu0 0.0
    %7664 = vmatprep.subr.mxu0 0.0
    %7665 = vmatpush1.msra.mxu0 0.0
    %7666 = vmatprep.mubr.f32.mxu0 0.0
    %7667 = vmatmul.mubr.f32.gmra.mrb[0].mxu0 %v7600
    %v7668 = vpop.f32.mrb[0].mxu0
    %v7669 = vadd.f32 %v7598, %v7668
    %v7670 = vpop.f32.mrb[0].mxu0
    %7671 = vdwg.mxu0
    %v7672 = vmul.f32 %v7669, 0.5
    %v7673 = vmul.f32 %v7669, 0.70710677
    %vm7674 = vcmp.ge.f32.partialorder %v7673, 0.0
    %v7675 = vsel %vm7674, 1.0, -1.0
    %v7676 = vand.u32 2147483647, %v7673
    %v7677 = vmul.f32 %v7676, 0.3275911
    %v7678 = vadd.f32 %v7677, 1.0
    %v7679 = vrcp.pop %v7678
    %v7680 = vmul.f32 1.0, %v7679
    %v7681 = vmul.f32 %v7680, 1.0614054
    %v7682 = vadd.f32 %v7681, -1.4531521
    %v7683 = vmul.f32 %v7682, %v7680
    %v7684 = vadd.f32 %v7683, 1.4214138
    %v7685 = vmul.f32 %v7684, %v7680
    %v7686 = vadd.f32 %v7685, -0.28449672
    %v7687 = vmul.f32 %v7686, %v7680
    %v7688 = vadd.f32 %v7687, 0.2548296
    %v7689 = vmul.f32 %v7688, %v7680
    %v7690 = vsub.f32 0.0, %v7676
    %v7691 = vmul.f32 %v7690, %v7676
    %v7692 = vmul.f32 %v7691, 1.442695
    %v7693 = vpow.pop %v7692
    %v7694 = vmul.f32 %v7689, %v7693
    %v7695 = vsub.f32 1.0, %v7694
    %v7696 = vmul.f32 %v7675, %v7695
    %v7697 = vadd.f32 %v7696, 1.0
    %v7698 = vmul.f32 %v7672, %v7697
    %v7699 = vld [vmem:[#allocation5 + $0x118] sm:$0xff]
    %v7700 = vld [vmem:[#allocation5 + $0xd8] sm:$0x1]
    %v7701 = vlaneseq
    %v7702 = vshrl.u32 %v7701, 7
    %v7703 = vsub.s32 0, %v7702
    %v7704 = vrot.slane %v7700, %v7703
    %v7706 = vsel %vm276, %v7698, 0
    %7708 = vmatprep.subr.mxu0 0.0
    %7709 = vmatpush1.msra.mxu0 %v7699
    %7710 = vmatprep.subr.mxu0 0.0
    %7711 = vmatpush1.msra.mxu0 0.0
    %7712 = vmatprep.subr.mxu0 0.0
    %7713 = vmatpush1.msra.mxu0 0.0
    %7714 = vmatprep.subr.mxu0 0.0
    %7715 = vmatpush1.msra.mxu0 0.0
    %7716 = vmatprep.subr.mxu0 0.0
    %7717 = vmatpush1.msra.mxu0 0.0
    %7718 = vmatprep.subr.mxu0 0.0
    %7719 = vmatpush1.msra.mxu0 0.0
    %7720 = vmatprep.subr.mxu0 0.0
    %7721 = vmatpush1.msra.mxu0 0.0
    %7722 = vmatprep.subr.mxu0 0.0
    %7723 = vmatpush1.msra.mxu0 0.0
    %7724 = vmatprep.subr.mxu0 0.0
    %7725 = vmatpush1.msra.mxu0 0.0
    %7726 = vmatprep.subr.mxu0 0.0
    %7727 = vmatpush1.msra.mxu0 0.0
    %7728 = vmatprep.subr.mxu0 0.0
    %7729 = vmatpush1.msra.mxu0 0.0
    %7730 = vmatprep.subr.mxu0 0.0
    %7731 = vmatpush1.msra.mxu0 0.0
    %7732 = vmatprep.subr.mxu0 0.0
    %7733 = vmatpush1.msra.mxu0 0.0
    %7734 = vmatprep.subr.mxu0 0.0
    %7735 = vmatpush1.msra.mxu0 0.0
    %7736 = vmatprep.subr.mxu0 0.0
    %7737 = vmatpush1.msra.mxu0 0.0
    %7738 = vmatprep.subr.mxu0 0.0
    %7739 = vmatpush1.msra.mxu0 0.0
    %7740 = vmatprep.subr.mxu0 0.0
    %7741 = vmatpush1.msra.mxu0 0.0
    %7742 = vmatprep.subr.mxu0 0.0
    %7743 = vmatpush1.msra.mxu0 0.0
    %7744 = vmatprep.subr.mxu0 0.0
    %7745 = vmatpush1.msra.mxu0 0.0
    %7746 = vmatprep.subr.mxu0 0.0
    %7747 = vmatpush1.msra.mxu0 0.0
    %7748 = vmatprep.subr.mxu0 0.0
    %7749 = vmatpush1.msra.mxu0 0.0
    %7750 = vmatprep.subr.mxu0 0.0
    %7751 = vmatpush1.msra.mxu0 0.0
    %7752 = vmatprep.subr.mxu0 0.0
    %7753 = vmatpush1.msra.mxu0 0.0
    %7754 = vmatprep.subr.mxu0 0.0
    %7755 = vmatpush1.msra.mxu0 0.0
    %7756 = vmatprep.subr.mxu0 0.0
    %7757 = vmatpush1.msra.mxu0 0.0
    %7758 = vmatprep.subr.mxu0 0.0
    %7759 = vmatpush1.msra.mxu0 0.0
    %7760 = vmatprep.subr.mxu0 0.0
    %7761 = vmatpush1.msra.mxu0 0.0
    %7762 = vmatprep.subr.mxu0 0.0
    %7763 = vmatpush1.msra.mxu0 0.0
    %7764 = vmatprep.subr.mxu0 0.0
    %7765 = vmatpush1.msra.mxu0 0.0
    %7766 = vmatprep.subr.mxu0 0.0
    %7767 = vmatpush1.msra.mxu0 0.0
    %7768 = vmatprep.subr.mxu0 0.0
    %7769 = vmatpush1.msra.mxu0 0.0
    %7770 = vmatprep.subr.mxu0 0.0
    %7771 = vmatpush1.msra.mxu0 0.0
    %7772 = vmatprep.mubr.f32.mxu0 0.0
    %7773 = vmatmul.mubr.f32.gmra.mrb[0].mxu0 %v7706
    %v7774 = vpop.f32.mrb[0].mxu0
    %v7775 = vadd.f32 %v7704, %v7774
    %v7776 = vpop.f32.mrb[0].mxu0
    %7777 = vdwg.mxu0
    %7779 = vrot.lane.b32.xlu0 %v7775, 8
    %v7780 = vpop.permute.xlu0 %7779
    %v7782 = vsel %vm276, %v7519, %v7780
    %vm7783 = vcmask 123904
    %v7784 = vsel %vm7783, %v7782, 0.0
    %7785 = vadd.xlane.f32.xlu0 %v7784
    %v7786 = vpop.xlane.xlu0 %7785
    %v7787 = vmul.f32 %v7786, %v938
    %v7788 = vsub.f32 %v7782, %v7787
    %v7789 = vmul.f32 %v7788, %v7788
    %v7790 = vsel %vm7783, %v7789, 0.0
    %7791 = vadd.xlane.f32.xlu0 %v7790
    %v7792 = vpop.xlane.xlu0 %7791
    %v7793 = vmul.f32 %v7792, %v938
    %v7794 = vadd.f32 %v7793, 1e-05
    %v7795 = vrsqrt.pop %v7794
    %v7796 = vmul.f32 %v7788, %v7795
    %v7797 = vld [vmem:[#allocation5 + $0x4c8] sm:$0x1]
    %v7798 = vlaneseq
    %v7799 = vshrl.u32 %v7798, 7
    %v7800 = vsub.s32 0, %v7799
    %v7801 = vrot.slane %v7797, %v7800
    %v7802 = vmul.f32 %v7796, %v7801
    %v7803 = vld [vmem:[#allocation5 + $0x4c0] sm:$0x1]
    %v7804 = vlaneseq
    %v7805 = vshrl.u32 %v7804, 7
    %v7806 = vsub.s32 0, %v7805
    %v7807 = vrot.slane %v7803, %v7806
    %v7808 = vadd.f32 %v7802, %v7807
    %v7809 = vld [vmem:[#allocation5 + $0x4d0] sm:$0xff]
    %v7810 = vld [vmem:[#allocation5 + $0x4d8] sm:$0xff]
    %v7811 = vld [vmem:[#allocation5 + $0x4b0] sm:$0x1]
    %v7812 = vlaneseq
    %v7813 = vshrl.u32 %v7812, 7
    %v7814 = vsub.s32 0, %v7813
    %v7815 = vrot.slane %v7811, %v7814
    %v7817 = vsel %vm198, %v7808, 0
    %7819 = vmatprep.subr.mxu0 0.0
    %7820 = vmatpush1.msra.mxu0 %v7809
    %7821 = vmatprep.subr.mxu0 0.0
    %7822 = vmatpush1.msra.mxu0 %v7810
    %7823 = vmatprep.subr.mxu0 0.0
    %7824 = vmatpush1.msra.mxu0 0.0
    %7825 = vmatprep.subr.mxu0 0.0
    %7826 = vmatpush1.msra.mxu0 0.0
    %7827 = vmatprep.subr.mxu0 0.0
    %7828 = vmatpush1.msra.mxu0 0.0
    %7829 = vmatprep.subr.mxu0 0.0
    %7830 = vmatpush1.msra.mxu0 0.0
    %7831 = vmatprep.subr.mxu0 0.0
    %7832 = vmatpush1.msra.mxu0 0.0
    %7833 = vmatprep.subr.mxu0 0.0
    %7834 = vmatpush1.msra.mxu0 0.0
    %7835 = vmatprep.subr.mxu0 0.0
    %7836 = vmatpush1.msra.mxu0 0.0
    %7837 = vmatprep.subr.mxu0 0.0
    %7838 = vmatpush1.msra.mxu0 0.0
    %7839 = vmatprep.subr.mxu0 0.0
    %7840 = vmatpush1.msra.mxu0 0.0
    %7841 = vmatprep.subr.mxu0 0.0
    %7842 = vmatpush1.msra.mxu0 0.0
    %7843 = vmatprep.subr.mxu0 0.0
    %7844 = vmatpush1.msra.mxu0 0.0
    %7845 = vmatprep.subr.mxu0 0.0
    %7846 = vmatpush1.msra.mxu0 0.0
    %7847 = vmatprep.subr.mxu0 0.0
    %7848 = vmatpush1.msra.mxu0 0.0
    %7849 = vmatprep.subr.mxu0 0.0
    %7850 = vmatpush1.msra.mxu0 0.0
    %7851 = vmatprep.subr.mxu0 0.0
    %7852 = vmatpush1.msra.mxu0 0.0
    %7853 = vmatprep.subr.mxu0 0.0
    %7854 = vmatpush1.msra.mxu0 0.0
    %7855 = vmatprep.subr.mxu0 0.0
    %7856 = vmatpush1.msra.mxu0 0.0
    %7857 = vmatprep.subr.mxu0 0.0
    %7858 = vmatpush1.msra.mxu0 0.0
    %7859 = vmatprep.subr.mxu0 0.0
    %7860 = vmatpush1.msra.mxu0 0.0
    %7861 = vmatprep.subr.mxu0 0.0
    %7862 = vmatpush1.msra.mxu0 0.0
    %7863 = vmatprep.subr.mxu0 0.0
    %7864 = vmatpush1.msra.mxu0 0.0
    %7865 = vmatprep.subr.mxu0 0.0
    %7866 = vmatpush1.msra.mxu0 0.0
    %7867 = vmatprep.subr.mxu0 0.0
    %7868 = vmatpush1.msra.mxu0 0.0
    %7869 = vmatprep.subr.mxu0 0.0
    %7870 = vmatpush1.msra.mxu0 0.0
    %7871 = vmatprep.subr.mxu0 0.0
    %7872 = vmatpush1.msra.mxu0 0.0
    %7873 = vmatprep.subr.mxu0 0.0
    %7874 = vmatpush1.msra.mxu0 0.0
    %7875 = vmatprep.subr.mxu0 0.0
    %7876 = vmatpush1.msra.mxu0 0.0
    %7877 = vmatprep.subr.mxu0 0.0
    %7878 = vmatpush1.msra.mxu0 0.0
    %7879 = vmatprep.subr.mxu0 0.0
    %7880 = vmatpush1.msra.mxu0 0.0
    %7881 = vmatprep.subr.mxu0 0.0
    %7882 = vmatpush1.msra.mxu0 0.0
    %7883 = vmatprep.mubr.f32.mxu0 0.0
    %7884 = vmatmul.mubr.f32.gmra.mrb[0].mxu0 %v7817
    %v7885 = vpop.f32.mrb[0].mxu0
    %v7886 = vadd.f32 %v7815, %v7885
    %v7887 = vpop.f32.mrb[0].mxu0
    %7888 = vdwg.mxu0
    %v7889 = vmul.f32 %v7886, 0.5
    %v7890 = vmul.f32 %v7886, 0.70710677
    %vm7891 = vcmp.ge.f32.partialorder %v7890, 0.0
    %v7892 = vsel %vm7891, 1.0, -1.0
    %v7893 = vand.u32 2147483647, %v7890
    %v7894 = vmul.f32 %v7893, 0.3275911
    %v7895 = vadd.f32 %v7894, 1.0
    %v7896 = vrcp.pop %v7895
    %v7897 = vmul.f32 1.0, %v7896
    %v7898 = vmul.f32 %v7897, 1.0614054
    %v7899 = vadd.f32 %v7898, -1.4531521
    %v7900 = vmul.f32 %v7899, %v7897
    %v7901 = vadd.f32 %v7900, 1.4214138
    %v7902 = vmul.f32 %v7901, %v7897
    %v7903 = vadd.f32 %v7902, -0.28449672
    %v7904 = vmul.f32 %v7903, %v7897
    %v7905 = vadd.f32 %v7904, 0.2548296
    %v7906 = vmul.f32 %v7905, %v7897
    %v7907 = vsub.f32 0.0, %v7893
    %v7908 = vmul.f32 %v7907, %v7893
    %v7909 = vmul.f32 %v7908, 1.442695
    %v7910 = vpow.pop %v7909
    %v7911 = vmul.f32 %v7906, %v7910
    %v7912 = vsub.f32 1.0, %v7911
    %v7913 = vmul.f32 %v7892, %v7912
    %v7914 = vadd.f32 %v7913, 1.0
    %v7915 = vmul.f32 %v7889, %v7914
    %v7916 = vld [vmem:[#allocation5 + $0x4e0] sm:$0xff]
    %v7917 = vld [vmem:[#allocation5 + $0x4e8] sm:$0xff]
    %v7918 = vld [vmem:[#allocation5 + $0x4b8] sm:$0x1]
    %v7919 = vlaneseq
    %v7920 = vshrl.u32 %v7919, 7
    %v7921 = vsub.s32 0, %v7920
    %v7922 = vrot.slane %v7918, %v7921
    %v7924 = vsel %vm198, %v7915, 0
    %7926 = vmatprep.subr.mxu0 0.0
    %7927 = vmatpush1.msra.mxu0 %v7916
    %7928 = vmatprep.subr.mxu0 0.0
    %7929 = vmatpush1.msra.mxu0 %v7917
    %7930 = vmatprep.subr.mxu0 0.0
    %7931 = vmatpush1.msra.mxu0 0.0
    %7932 = vmatprep.subr.mxu0 0.0
    %7933 = vmatpush1.msra.mxu0 0.0
    %7934 = vmatprep.subr.mxu0 0.0
    %7935 = vmatpush1.msra.mxu0 0.0
    %7936 = vmatprep.subr.mxu0 0.0
    %7937 = vmatpush1.msra.mxu0 0.0
    %7938 = vmatprep.subr.mxu0 0.0
    %7939 = vmatpush1.msra.mxu0 0.0
    %7940 = vmatprep.subr.mxu0 0.0
    %7941 = vmatpush1.msra.mxu0 0.0
    %7942 = vmatprep.subr.mxu0 0.0
    %7943 = vmatpush1.msra.mxu0 0.0
    %7944 = vmatprep.subr.mxu0 0.0
    %7945 = vmatpush1.msra.mxu0 0.0
    %7946 = vmatprep.subr.mxu0 0.0
    %7947 = vmatpush1.msra.mxu0 0.0
    %7948 = vmatprep.subr.mxu0 0.0
    %7949 = vmatpush1.msra.mxu0 0.0
    %7950 = vmatprep.subr.mxu0 0.0
    %7951 = vmatpush1.msra.mxu0 0.0
    %7952 = vmatprep.subr.mxu0 0.0
    %7953 = vmatpush1.msra.mxu0 0.0
    %7954 = vmatprep.subr.mxu0 0.0
    %7955 = vmatpush1.msra.mxu0 0.0
    %7956 = vmatprep.subr.mxu0 0.0
    %7957 = vmatpush1.msra.mxu0 0.0
    %7958 = vmatprep.subr.mxu0 0.0
    %7959 = vmatpush1.msra.mxu0 0.0
    %7960 = vmatprep.subr.mxu0 0.0
    %7961 = vmatpush1.msra.mxu0 0.0
    %7962 = vmatprep.subr.mxu0 0.0
    %7963 = vmatpush1.msra.mxu0 0.0
    %7964 = vmatprep.subr.mxu0 0.0
    %7965 = vmatpush1.msra.mxu0 0.0
    %7966 = vmatprep.subr.mxu0 0.0
    %7967 = vmatpush1.msra.mxu0 0.0
    %7968 = vmatprep.subr.mxu0 0.0
    %7969 = vmatpush1.msra.mxu0 0.0
    %7970 = vmatprep.subr.mxu0 0.0
    %7971 = vmatpush1.msra.mxu0 0.0
    %7972 = vmatprep.subr.mxu0 0.0
    %7973 = vmatpush1.msra.mxu0 0.0
    %7974 = vmatprep.subr.mxu0 0.0
    %7975 = vmatpush1.msra.mxu0 0.0
    %7976 = vmatprep.subr.mxu0 0.0
    %7977 = vmatpush1.msra.mxu0 0.0
    %7978 = vmatprep.subr.mxu0 0.0
    %7979 = vmatpush1.msra.mxu0 0.0
    %7980 = vmatprep.subr.mxu0 0.0
    %7981 = vmatpush1.msra.mxu0 0.0
    %7982 = vmatprep.subr.mxu0 0.0
    %7983 = vmatpush1.msra.mxu0 0.0
    %7984 = vmatprep.subr.mxu0 0.0
    %7985 = vmatpush1.msra.mxu0 0.0
    %7986 = vmatprep.subr.mxu0 0.0
    %7987 = vmatpush1.msra.mxu0 0.0
    %7988 = vmatprep.subr.mxu0 0.0
    %7989 = vmatpush1.msra.mxu0 0.0
    %7990 = vmatprep.mubr.f32.mxu0 0.0
    %7991 = vmatmul.mubr.f32.gmra.mrb[0].mxu0 %v7924
    %v7992 = vpop.f32.mrb[0].mxu0
    %v7993 = vadd.f32 %v7922, %v7992
    %v7994 = vpop.f32.mrb[0].mxu0
    %7995 = vdwg.mxu0
    %vm7996 = vcmask 74752
    %7997 = vst.msk [vmem:[#allocation7] sm:$0x3] %vm7996, %v7993
    // Predicated region
    $region22: #{_lambda_.1} parent=1 // pred_check
      _
    $region23: #{_lambda_.1} parent=1 // pred_check_branch
      %7999 = sbr.rel (0) target = $region25
    $region24: #{_lambda_.1} parent=1 // pred_region
      %s8001 = ssub.s32 32, 32
      %8002 = vsyncadd [#allocation4], %s8001
      %s8004 = sshll.u32 [#allocation7], 4
      %s8005 = int_to_ptr.vmem [resolvable:$true] %s8004
      %8007 = dma.vmem_to_hbm [thread:$0]  %s8005, 32, %s3, [#allocation4]
    $region25: #{_lambda_.1} parent=1 // pred_fallthru
      _
    // Predicated region
    $region26: #{_lambda_.1} parent=1 // pred_check
      _
    $region27: #{_lambda_.1} parent=1 // pred_check_branch
      %8009 = sbr.rel (0) target = $region29
    $region28: #{_lambda_.1} parent=1 // pred_region
      %8010 = dma.done [#allocation4], 32
    $region29: #{_lambda_.1} parent=1 // pred_fallthru
      _
    %8011 = vsyncpa [#allocation3], 1
    %8012 = vsyncpa [#allocation6], 1
    %8013 = vsyncpa [#allocation4], 1

</llo_original>
